<compile_context>
chip_gen: v6e
topology: v6e:2x2x1
jax: 0.10.0
libtpu: 0.0.40
codegen_flags: <defaults>
</compile_context>

<pallas_src>
import math

import jax
import jax.numpy as jnp
from jax.experimental import pallas as pl
from jax.experimental.pallas import tpu as pltpu  # noqa: F401  (TPU backend)

D_MODEL = 32
NHEAD = 4
HEAD_DIM = D_MODEL // NHEAD
DIM_FF = 2048          # PyTorch default dim_feedforward
NUM_LAYERS = 2
LN_EPS = 1e-5


# ----------------------------------------------------------------------------
# Single fused kernel: both layers, whole batch, one invocation.
# ----------------------------------------------------------------------------
def make_encoder_kernel(B, S):
    T = B * S
    scale = 1.0 / math.sqrt(HEAD_DIM)

    def kernel(src_ref, pos_ref,
               wqk_ref, bqk_ref, wv_ref, bv_ref, woT_ref, bo_ref,
               w1_ref, b1_ref, w2_ref, b2_ref,
               g1_ref, be1_ref, g2_ref, be2_ref,
               out_ref):
        x = src_ref[...].astype(jnp.float32)        # (T, D) token-major activations
        pos = pos_ref[...].astype(jnp.float32)      # (T, D)

        for l in range(NUM_LAYERS):                 # static unroll over layers
            # ---------------- multi-head self-attention ----------------
            qk_in = x + pos                         # q = k = src + pos ; value = src

            # Fused Q||K projection: (2D, D) @ (T, D)^T -> (2D, T) feature-major.
            qk_fm = jax.lax.dot_general(
                wqk_ref[l], qk_in, (((1,), (1,)), ((), ())),
                preferred_element_type=jnp.float32) + bqk_ref[l]
            v_fm = jax.lax.dot_general(
                wv_ref[l], x, (((1,), (1,)), ((), ())),
                preferred_element_type=jnp.float32) + bv_ref[l]
            q_fm = qk_fm[:D_MODEL, :]               # (D, T), row index = h*HD + e
            k_fm = qk_fm[D_MODEL:, :]               # (D, T)

            # Per (batch, head) score blocks, stacked for ONE softmax pass.
            blocks = []
            for b in range(B):
                for h in range(NHEAD):
                    qs = q_fm[h * HEAD_DIM:(h + 1) * HEAD_DIM, b * S:(b + 1) * S]
                    ks = k_fm[h * HEAD_DIM:(h + 1) * HEAD_DIM, b * S:(b + 1) * S]
                    # scores[t, s] = sum_e q[e, t] * k[e, s]
                    blocks.append(jax.lax.dot_general(
                        qs, ks, (((0,), (0,)), ((), ())),
                        preferred_element_type=jnp.float32) * scale)
            scores = jnp.concatenate(blocks, axis=0)          # (B*H*S, S)
            scores = scores - jnp.max(scores, axis=-1, keepdims=True)
            p = jnp.exp(scores)
            denom = jnp.sum(p, axis=-1, keepdims=True)
            p = p * pl.reciprocal(denom, approx=True)         # divide -> EUP

            # Attention-weighted values, reassembled feature-major (D, T).
            cols = []
            for b in range(B):
                rows = []
                for h in range(NHEAD):
                    idx = b * NHEAD + h
                    pbh = p[idx * S:(idx + 1) * S, :]                         # (S, S)
                    vs = v_fm[h * HEAD_DIM:(h + 1) * HEAD_DIM, b * S:(b + 1) * S]  # (HD, S)
                    # out[e, t] = sum_s v[e, s] * p[t, s]
                    rows.append(jax.lax.dot_general(
                        vs, pbh, (((1,), (1,)), ((), ())),
                        preferred_element_type=jnp.float32))
                cols.append(jnp.concatenate(rows, axis=0))                    # (D, S)
            attn_fm = jnp.concatenate(cols, axis=1)                           # (D, T)

            # Single fused output projection -> token-major (T, D).
            attn = jax.lax.dot_general(
                attn_fm, woT_ref[l], (((0,), (0,)), ((), ())),
                preferred_element_type=jnp.float32) + bo_ref[l]

            # residual + LayerNorm1   (dropout1 identity in eval mode)
            y = x + attn
            mu = jnp.mean(y, axis=-1, keepdims=True)
            var = jnp.mean(jnp.square(y - mu), axis=-1, keepdims=True)
            y = (y - mu) * jax.lax.rsqrt(var + LN_EPS) * g1_ref[l] + be1_ref[l]

            # ---------------- feed-forward ----------------
            # bf16-stored weights (halved HBM traffic), upcast in VMEM; f32 math.
            w1 = w1_ref[l].astype(jnp.float32)
            w2 = w2_ref[l].astype(jnp.float32)
            h1 = jnp.dot(y, w1, preferred_element_type=jnp.float32) + b1_ref[l]
            h1 = jnp.maximum(h1, 0.0)
            h2 = jnp.dot(h1, w2, preferred_element_type=jnp.float32) + b2_ref[l]

            # residual + LayerNorm2   (dropout2 identity in eval mode)
            z = y + h2
            mu = jnp.mean(z, axis=-1, keepdims=True)
            var = jnp.mean(jnp.square(z - mu), axis=-1, keepdims=True)
            x = (z - mu) * jax.lax.rsqrt(var + LN_EPS) * g2_ref[l] + be2_ref[l]

        out_ref[...] = x.astype(out_ref.dtype)

    return kernel


# ----------------------------------------------------------------------------
# Wrapper: ONE pallas_call for the whole encoder (no grid, all VMEM-resident).
# ----------------------------------------------------------------------------
def transformer_encoder_pallas(src, pos, sp):
    B, S, D = src.shape
    src_flat = src.reshape(B * S, D)
    pos_flat = pos.reshape(B * S, D)

    out_flat = pl.pallas_call(
        make_encoder_kernel(B, S),
        out_shape=jax.ShapeDtypeStruct((B * S, D), src.dtype),
    )(src_flat, pos_flat,
      sp["wqk"], sp["bqk"], sp["wv"], sp["bv"], sp["woT"], sp["bo"],
      sp["w1"], sp["b1"], sp["w2"], sp["b2"],
      sp["g1"], sp["be1"], sp["g2"], sp["be2"])

    return out_flat.reshape(B, S, D)


# ----------------------------------------------------------------------------
# Deterministic parameter init (PyTorch-like layouts) + kernel-layout stacking.
# ----------------------------------------------------------------------------
def init_params(key):
    D = D_MODEL
    raw_layers = []
    for lk in jax.random.split(key, NUM_LAYERS):
        ks = jax.random.split(lk, 12)
        n = lambda k, shape, s=0.05: s * jax.random.normal(k, shape, dtype=jnp.float32)
        # FFN weights pre-rounded to bf16-representable values so the bf16
        # kernel storage is exact and the f32 reference uses identical values.
        bf16_round = lambda w: w.astype(jnp.bfloat16).astype(jnp.float32)
        raw = dict(
            in_proj_w=n(ks[0], (3 * D, D)),
            in_proj_b=n(ks[1], (3 * D,), 0.02),
            out_w=n(ks[2], (D, D)),
            out_b=n(ks[3], (D,), 0.02),
            lin1_w=bf16_round(n(ks[4], (DIM_FF, D))),
            lin1_b=n(ks[5], (DIM_FF,), 0.02),
            lin2_w=bf16_round(n(ks[6], (D, DIM_FF))),
            lin2_b=n(ks[7], (D,), 0.02),
            g1=1.0 + n(ks[8], (D,), 0.1),
            be1=n(ks[9], (D,), 0.1),
            g2=1.0 + n(ks[10], (D,), 0.1),
            be2=n(ks[11], (D,), 0.1),
        )
        raw_layers.append(raw)

    def stack(f):
        return jnp.stack([f(r) for r in raw_layers], axis=0)

    stacked = dict(
        # Q||K rows of in_proj, used feature-major: (L, 2D, D) / (L, 2D, 1)
        wqk=stack(lambda r: r["in_proj_w"][:2 * D]),
        bqk=stack(lambda r: r["in_proj_b"][:2 * D].reshape(2 * D, 1)),
        # V rows: (L, D, D) / (L, D, 1)
        wv=stack(lambda r: r["in_proj_w"][2 * D:]),
        bv=stack(lambda r: r["in_proj_b"][2 * D:].reshape(D, 1)),
        # output projection, transposed so the kernel does At.B: (L, D, D)
        woT=stack(lambda r: r["out_w"].T),
        bo=stack(lambda r: r["out_b"].reshape(1, D)),
        # FFN weights stored in bf16 (exact: values are bf16-representable)
        w1=stack(lambda r: r["lin1_w"].T).astype(jnp.bfloat16),   # (L, D, FF)
        b1=stack(lambda r: r["lin1_b"].reshape(1, DIM_FF)),
        w2=stack(lambda r: r["lin2_w"].T).astype(jnp.bfloat16),   # (L, FF, D)
        b2=stack(lambda r: r["lin2_b"].reshape(1, D)),
        g1=stack(lambda r: r["g1"].reshape(1, D)),
        be1=stack(lambda r: r["be1"].reshape(1, D)),
        g2=stack(lambda r: r["g2"].reshape(1, D)),
        be2=stack(lambda r: r["be2"].reshape(1, D)),
    )
    return raw_layers, stacked


# ----------------------------------------------------------------------------
# Pure-JAX reference (mirrors PyTorch forward_post) for correctness check.
# ----------------------------------------------------------------------------
def _layernorm(x, g, b):
    mu = jnp.mean(x, axis=-1, keepdims=True)
    var = jnp.mean(jnp.square(x - mu), axis=-1, keepdims=True)
    return (x - mu) * jax.lax.rsqrt(var + LN_EPS) * g + b


def _mha_ref(q_in, k_in, v_in, raw):
    D = D_MODEL
    wq, wk, wv = raw["in_proj_w"][:D], raw["in_proj_w"][D:2 * D], raw["in_proj_w"][2 * D:]
    bq, bk, bv = raw["in_proj_b"][:D], raw["in_proj_b"][D:2 * D], raw["in_proj_b"][2 * D:]
    B, S, _ = q_in.shape

    def proj(x, w, b):
        return (x @ w.T + b).reshape(B, S, NHEAD, HEAD_DIM).transpose(0, 2, 1, 3)

    q, k, v = proj(q_in, wq, bq), proj(k_in, wk, bk), proj(v_in, wv, bv)
    scores = jnp.einsum("bhqd,bhkd->bhqk", q, k) / math.sqrt(HEAD_DIM)
    p = jax.nn.softmax(scores, axis=-1)
    o = jnp.einsum("bhqk,bhkd->bhqd", p, v).transpose(0, 2, 1, 3).reshape(B, S, D)
    return o @ raw["out_w"].T + raw["out_b"]


def _layer_ref(src, pos, raw):
    qk = src + pos
    x = src + _mha_ref(qk, qk, src, raw)
    x = _layernorm(x, raw["g1"], raw["be1"])
    h = jax.nn.relu(x @ raw["lin1_w"].T + raw["lin1_b"])
    h = h @ raw["lin2_w"].T + raw["lin2_b"]
    return _layernorm(x + h, raw["g2"], raw["be2"])


def transformer_encoder_ref(src, pos, raw_layers):
    out = src
    for raw in raw_layers:
        out = _layer_ref(out, pos, raw)
    return out   # self.norm is None in this configuration


# ----------------------------------------------------------------------------
if __name__ == "__main__":
    B, S = 2, 8
    key = jax.random.PRNGKey(0)
    k_src, k_pos, k_par = jax.random.split(key, 3)

    src = jax.random.normal(k_src, (B, S, D_MODEL), dtype=jnp.float32)
    pos = 0.1 * jax.random.normal(k_pos, (B, S, D_MODEL), dtype=jnp.float32)

    raw_layers, stacked = init_params(k_par)

    out = transformer_encoder_pallas(src, pos, stacked)
    out = jax.block_until_ready(out)

    ref = jax.block_until_ready(transformer_encoder_ref(src, pos, raw_layers))
    assert out.shape == (B, S, D_MODEL)
    # Tolerance covers the EUP approximate reciprocal in the softmax and f32
    # accumulation-order differences; weights are bit-identical in both paths.
    assert jnp.allclose(out, ref, atol=1e-3, rtol=1e-3), (
        f"max abs diff {float(jnp.max(jnp.abs(out - ref)))}")

    print("KERNEL_OK")
</pallas_src>

<mosaic_0001>
module attributes {stable_mosaic.version = 11 : i64} {
  func.func @kernel(%arg0: memref<16x32xf32, #tpu.memory_space<vmem>>, %arg1: memref<16x32xf32, #tpu.memory_space<vmem>>, %arg2: memref<2x64x32xf32, #tpu.memory_space<vmem>>, %arg3: memref<2x64x1xf32, #tpu.memory_space<vmem>>, %arg4: memref<2x32x32xf32, #tpu.memory_space<vmem>>, %arg5: memref<2x32x1xf32, #tpu.memory_space<vmem>>, %arg6: memref<2x32x32xf32, #tpu.memory_space<vmem>>, %arg7: memref<2x1x32xf32, #tpu.memory_space<vmem>>, %arg8: memref<2x32x2048xbf16, #tpu.memory_space<vmem>>, %arg9: memref<2x1x2048xf32, #tpu.memory_space<vmem>>, %arg10: memref<2x2048x32xbf16, #tpu.memory_space<vmem>>, %arg11: memref<2x1x32xf32, #tpu.memory_space<vmem>>, %arg12: memref<2x1x32xf32, #tpu.memory_space<vmem>>, %arg13: memref<2x1x32xf32, #tpu.memory_space<vmem>>, %arg14: memref<2x1x32xf32, #tpu.memory_space<vmem>>, %arg15: memref<2x1x32xf32, #tpu.memory_space<vmem>>, %arg16: memref<16x32xf32, #tpu.memory_space<vmem>>) attributes {dimension_semantics = [], scalar_prefetch = 0 : i64, scratch_operands = 0 : i64, tpu.core_type = #tpu.core_type<tc>} {
    %c0 = arith.constant 0 : index
    %c0_0 = arith.constant 0 : index
    %0 = vector.load %arg0[%c0, %c0_0] : memref<16x32xf32, #tpu.memory_space<vmem>>, vector<16x32xf32>
    %c0_1 = arith.constant 0 : index
    %c0_2 = arith.constant 0 : index
    %1 = vector.load %arg1[%c0_1, %c0_2] : memref<16x32xf32, #tpu.memory_space<vmem>>, vector<16x32xf32>
    %2 = arith.addf %0, %1 : vector<16x32xf32>
    %c0_3 = arith.constant 0 : index
    %c0_4 = arith.constant 0 : index
    %c0_5 = arith.constant 0 : index
    %3 = vector.load %arg2[%c0_3, %c0_4, %c0_5] : memref<2x64x32xf32, #tpu.memory_space<vmem>>, vector<1x64x32xf32>
    %4 = vector.shape_cast %3 : vector<1x64x32xf32> to vector<64x32xf32>
    %cst = arith.constant dense<0.000000e+00> : vector<64x16xf32>
    %5 = tpu.matmul %4, %2, %cst {dimension_numbers = #tpu.dot_dimension_numbers<[1], [1], [0], [0], [0, 0, 1, 0], [], []>} : vector<64x32xf32>, vector<16x32xf32>, vector<64x16xf32> -> vector<64x16xf32>
    %c0_6 = arith.constant 0 : index
    %c0_7 = arith.constant 0 : index
    %c0_8 = arith.constant 0 : index
    %6 = vector.load %arg3[%c0_6, %c0_7, %c0_8] : memref<2x64x1xf32, #tpu.memory_space<vmem>>, vector<1x64x1xf32>
    %7 = vector.shape_cast %6 : vector<1x64x1xf32> to vector<64x1xf32>
    %8 = vector.broadcast %7 : vector<64x1xf32> to vector<64x16xf32>
    %9 = arith.addf %5, %8 : vector<64x16xf32>
    %c0_9 = arith.constant 0 : index
    %c0_10 = arith.constant 0 : index
    %c0_11 = arith.constant 0 : index
    %10 = vector.load %arg4[%c0_9, %c0_10, %c0_11] : memref<2x32x32xf32, #tpu.memory_space<vmem>>, vector<1x32x32xf32>
    %11 = vector.shape_cast %10 : vector<1x32x32xf32> to vector<32x32xf32>
    %cst_12 = arith.constant dense<0.000000e+00> : vector<32x16xf32>
    %12 = tpu.matmul %11, %0, %cst_12 {dimension_numbers = #tpu.dot_dimension_numbers<[1], [1], [0], [0], [0, 0, 1, 0], [], []>} : vector<32x32xf32>, vector<16x32xf32>, vector<32x16xf32> -> vector<32x16xf32>
    %c0_13 = arith.constant 0 : index
    %c0_14 = arith.constant 0 : index
    %c0_15 = arith.constant 0 : index
    %13 = vector.load %arg5[%c0_13, %c0_14, %c0_15] : memref<2x32x1xf32, #tpu.memory_space<vmem>>, vector<1x32x1xf32>
    %14 = vector.shape_cast %13 : vector<1x32x1xf32> to vector<32x1xf32>
    %15 = vector.broadcast %14 : vector<32x1xf32> to vector<32x16xf32>
    %16 = arith.addf %12, %15 : vector<32x16xf32>
    %17 = vector.extract_strided_slice %9 {offsets = [0, 0], sizes = [32, 16], strides = [1, 1]} : vector<64x16xf32> to vector<32x16xf32>
    %18 = vector.extract_strided_slice %9 {offsets = [32, 0], sizes = [32, 16], strides = [1, 1]} : vector<64x16xf32> to vector<32x16xf32>
    %19 = vector.extract_strided_slice %17 {offsets = [0, 0], sizes = [8, 8], strides = [1, 1]} : vector<32x16xf32> to vector<8x8xf32>
    %20 = vector.extract_strided_slice %18 {offsets = [0, 0], sizes = [8, 8], strides = [1, 1]} : vector<32x16xf32> to vector<8x8xf32>
    %cst_16 = arith.constant dense<0.000000e+00> : vector<8x8xf32>
    %21 = tpu.matmul %19, %20, %cst_16 {dimension_numbers = #tpu.dot_dimension_numbers<[0], [0], [1], [1], [0, 1, 1, 1], [], []>} : vector<8x8xf32>, vector<8x8xf32>, vector<8x8xf32> -> vector<8x8xf32>
    %cst_17 = arith.constant 0.353553385 : f32
    %22 = vector.broadcast %cst_17 : f32 to vector<8x8xf32>
    %23 = arith.mulf %21, %22 : vector<8x8xf32>
    %24 = vector.extract_strided_slice %17 {offsets = [8, 0], sizes = [8, 8], strides = [1, 1]} : vector<32x16xf32> to vector<8x8xf32>
    %25 = vector.extract_strided_slice %18 {offsets = [8, 0], sizes = [8, 8], strides = [1, 1]} : vector<32x16xf32> to vector<8x8xf32>
    %cst_18 = arith.constant dense<0.000000e+00> : vector<8x8xf32>
    %26 = tpu.matmul %24, %25, %cst_18 {dimension_numbers = #tpu.dot_dimension_numbers<[0], [0], [1], [1], [0, 1, 1, 1], [], []>} : vector<8x8xf32>, vector<8x8xf32>, vector<8x8xf32> -> vector<8x8xf32>
    %cst_19 = arith.constant 0.353553385 : f32
    %27 = vector.broadcast %cst_19 : f32 to vector<8x8xf32>
    %28 = arith.mulf %26, %27 : vector<8x8xf32>
    %29 = vector.extract_strided_slice %17 {offsets = [16, 0], sizes = [8, 8], strides = [1, 1]} : vector<32x16xf32> to vector<8x8xf32>
    %30 = vector.extract_strided_slice %18 {offsets = [16, 0], sizes = [8, 8], strides = [1, 1]} : vector<32x16xf32> to vector<8x8xf32>
    %cst_20 = arith.constant dense<0.000000e+00> : vector<8x8xf32>
    %31 = tpu.matmul %29, %30, %cst_20 {dimension_numbers = #tpu.dot_dimension_numbers<[0], [0], [1], [1], [0, 1, 1, 1], [], []>} : vector<8x8xf32>, vector<8x8xf32>, vector<8x8xf32> -> vector<8x8xf32>
    %cst_21 = arith.constant 0.353553385 : f32
    %32 = vector.broadcast %cst_21 : f32 to vector<8x8xf32>
    %33 = arith.mulf %31, %32 : vector<8x8xf32>
    %34 = vector.extract_strided_slice %17 {offsets = [24, 0], sizes = [8, 8], strides = [1, 1]} : vector<32x16xf32> to vector<8x8xf32>
    %35 = vector.extract_strided_slice %18 {offsets = [24, 0], sizes = [8, 8], strides = [1, 1]} : vector<32x16xf32> to vector<8x8xf32>
    %cst_22 = arith.constant dense<0.000000e+00> : vector<8x8xf32>
    %36 = tpu.matmul %34, %35, %cst_22 {dimension_numbers = #tpu.dot_dimension_numbers<[0], [0], [1], [1], [0, 1, 1, 1], [], []>} : vector<8x8xf32>, vector<8x8xf32>, vector<8x8xf32> -> vector<8x8xf32>
    %cst_23 = arith.constant 0.353553385 : f32
    %37 = vector.broadcast %cst_23 : f32 to vector<8x8xf32>
    %38 = arith.mulf %36, %37 : vector<8x8xf32>
    %39 = vector.extract_strided_slice %17 {offsets = [0, 8], sizes = [8, 8], strides = [1, 1]} : vector<32x16xf32> to vector<8x8xf32>
    %40 = vector.extract_strided_slice %18 {offsets = [0, 8], sizes = [8, 8], strides = [1, 1]} : vector<32x16xf32> to vector<8x8xf32>
    %cst_24 = arith.constant dense<0.000000e+00> : vector<8x8xf32>
    %41 = tpu.matmul %39, %40, %cst_24 {dimension_numbers = #tpu.dot_dimension_numbers<[0], [0], [1], [1], [0, 1, 1, 1], [], []>} : vector<8x8xf32>, vector<8x8xf32>, vector<8x8xf32> -> vector<8x8xf32>
    %cst_25 = arith.constant 0.353553385 : f32
    %42 = vector.broadcast %cst_25 : f32 to vector<8x8xf32>
    %43 = arith.mulf %41, %42 : vector<8x8xf32>
    %44 = vector.extract_strided_slice %17 {offsets = [8, 8], sizes = [8, 8], strides = [1, 1]} : vector<32x16xf32> to vector<8x8xf32>
    %45 = vector.extract_strided_slice %18 {offsets = [8, 8], sizes = [8, 8], strides = [1, 1]} : vector<32x16xf32> to vector<8x8xf32>
    %cst_26 = arith.constant dense<0.000000e+00> : vector<8x8xf32>
    %46 = tpu.matmul %44, %45, %cst_26 {dimension_numbers = #tpu.dot_dimension_numbers<[0], [0], [1], [1], [0, 1, 1, 1], [], []>} : vector<8x8xf32>, vector<8x8xf32>, vector<8x8xf32> -> vector<8x8xf32>
    %cst_27 = arith.constant 0.353553385 : f32
    %47 = vector.broadcast %cst_27 : f32 to vector<8x8xf32>
    %48 = arith.mulf %46, %47 : vector<8x8xf32>
    %49 = vector.extract_strided_slice %17 {offsets = [16, 8], sizes = [8, 8], strides = [1, 1]} : vector<32x16xf32> to vector<8x8xf32>
    %50 = vector.extract_strided_slice %18 {offsets = [16, 8], sizes = [8, 8], strides = [1, 1]} : vector<32x16xf32> to vector<8x8xf32>
    %cst_28 = arith.constant dense<0.000000e+00> : vector<8x8xf32>
    %51 = tpu.matmul %49, %50, %cst_28 {dimension_numbers = #tpu.dot_dimension_numbers<[0], [0], [1], [1], [0, 1, 1, 1], [], []>} : vector<8x8xf32>, vector<8x8xf32>, vector<8x8xf32> -> vector<8x8xf32>
    %cst_29 = arith.constant 0.353553385 : f32
    %52 = vector.broadcast %cst_29 : f32 to vector<8x8xf32>
    %53 = arith.mulf %51, %52 : vector<8x8xf32>
    %54 = vector.extract_strided_slice %17 {offsets = [24, 8], sizes = [8, 8], strides = [1, 1]} : vector<32x16xf32> to vector<8x8xf32>
    %55 = vector.extract_strided_slice %18 {offsets = [24, 8], sizes = [8, 8], strides = [1, 1]} : vector<32x16xf32> to vector<8x8xf32>
    %cst_30 = arith.constant dense<0.000000e+00> : vector<8x8xf32>
    %56 = tpu.matmul %54, %55, %cst_30 {dimension_numbers = #tpu.dot_dimension_numbers<[0], [0], [1], [1], [0, 1, 1, 1], [], []>} : vector<8x8xf32>, vector<8x8xf32>, vector<8x8xf32> -> vector<8x8xf32>
    %cst_31 = arith.constant 0.353553385 : f32
    %57 = vector.broadcast %cst_31 : f32 to vector<8x8xf32>
    %58 = arith.mulf %56, %57 : vector<8x8xf32>
    %59 = tpu.concatenate %23, %28, %33, %38, %43, %48, %53, %58 in 0 : vector<8x8xf32>, vector<8x8xf32>, vector<8x8xf32>, vector<8x8xf32>, vector<8x8xf32>, vector<8x8xf32>, vector<8x8xf32>, vector<8x8xf32> -> vector<64x8xf32>
    %cst_32 = arith.constant dense<0xFF800000> : vector<64xf32>
    %60 = vector.multi_reduction <maximumf>, %59, %cst_32 [1] : vector<64x8xf32> to vector<64xf32>
    %61 = vector.shape_cast %60 : vector<64xf32> to vector<64x1xf32>
    %62 = vector.broadcast %61 : vector<64x1xf32> to vector<64x8xf32>
    %63 = arith.subf %59, %62 : vector<64x8xf32>
    %64 = math.exp %63 : vector<64x8xf32>
    %cst_33 = arith.constant dense<0.000000e+00> : vector<64xf32>
    %65 = vector.multi_reduction <add>, %64, %cst_33 [1] : vector<64x8xf32> to vector<64xf32>
    %66 = vector.shape_cast %65 : vector<64xf32> to vector<64x1xf32>
    %67 = tpu.reciprocal %66 {approx = true} : vector<64x1xf32> -> vector<64x1xf32>
    %68 = vector.broadcast %67 : vector<64x1xf32> to vector<64x8xf32>
    %69 = arith.mulf %64, %68 : vector<64x8xf32>
    %70 = vector.extract_strided_slice %69 {offsets = [0, 0], sizes = [8, 8], strides = [1, 1]} : vector<64x8xf32> to vector<8x8xf32>
    %71 = vector.extract_strided_slice %16 {offsets = [0, 0], sizes = [8, 8], strides = [1, 1]} : vector<32x16xf32> to vector<8x8xf32>
    %cst_34 = arith.constant dense<0.000000e+00> : vector<8x8xf32>
    %72 = tpu.matmul %71, %70, %cst_34 {dimension_numbers = #tpu.dot_dimension_numbers<[1], [1], [0], [0], [0, 0, 1, 0], [], []>} : vector<8x8xf32>, vector<8x8xf32>, vector<8x8xf32> -> vector<8x8xf32>
    %73 = vector.extract_strided_slice %69 {offsets = [8, 0], sizes = [8, 8], strides = [1, 1]} : vector<64x8xf32> to vector<8x8xf32>
    %74 = vector.extract_strided_slice %16 {offsets = [8, 0], sizes = [8, 8], strides = [1, 1]} : vector<32x16xf32> to vector<8x8xf32>
    %cst_35 = arith.constant dense<0.000000e+00> : vector<8x8xf32>
    %75 = tpu.matmul %74, %73, %cst_35 {dimension_numbers = #tpu.dot_dimension_numbers<[1], [1], [0], [0], [0, 0, 1, 0], [], []>} : vector<8x8xf32>, vector<8x8xf32>, vector<8x8xf32> -> vector<8x8xf32>
    %76 = vector.extract_strided_slice %69 {offsets = [16, 0], sizes = [8, 8], strides = [1, 1]} : vector<64x8xf32> to vector<8x8xf32>
    %77 = vector.extract_strided_slice %16 {offsets = [16, 0], sizes = [8, 8], strides = [1, 1]} : vector<32x16xf32> to vector<8x8xf32>
    %cst_36 = arith.constant dense<0.000000e+00> : vector<8x8xf32>
    %78 = tpu.matmul %77, %76, %cst_36 {dimension_numbers = #tpu.dot_dimension_numbers<[1], [1], [0], [0], [0, 0, 1, 0], [], []>} : vector<8x8xf32>, vector<8x8xf32>, vector<8x8xf32> -> vector<8x8xf32>
    %79 = vector.extract_strided_slice %69 {offsets = [24, 0], sizes = [8, 8], strides = [1, 1]} : vector<64x8xf32> to vector<8x8xf32>
    %80 = vector.extract_strided_slice %16 {offsets = [24, 0], sizes = [8, 8], strides = [1, 1]} : vector<32x16xf32> to vector<8x8xf32>
    %cst_37 = arith.constant dense<0.000000e+00> : vector<8x8xf32>
    %81 = tpu.matmul %80, %79, %cst_37 {dimension_numbers = #tpu.dot_dimension_numbers<[1], [1], [0], [0], [0, 0, 1, 0], [], []>} : vector<8x8xf32>, vector<8x8xf32>, vector<8x8xf32> -> vector<8x8xf32>
    %82 = tpu.concatenate %72, %75, %78, %81 in 0 : vector<8x8xf32>, vector<8x8xf32>, vector<8x8xf32>, vector<8x8xf32> -> vector<32x8xf32>
    %83 = vector.extract_strided_slice %69 {offsets = [32, 0], sizes = [8, 8], strides = [1, 1]} : vector<64x8xf32> to vector<8x8xf32>
    %84 = vector.extract_strided_slice %16 {offsets = [0, 8], sizes = [8, 8], strides = [1, 1]} : vector<32x16xf32> to vector<8x8xf32>
    %cst_38 = arith.constant dense<0.000000e+00> : vector<8x8xf32>
    %85 = tpu.matmul %84, %83, %cst_38 {dimension_numbers = #tpu.dot_dimension_numbers<[1], [1], [0], [0], [0, 0, 1, 0], [], []>} : vector<8x8xf32>, vector<8x8xf32>, vector<8x8xf32> -> vector<8x8xf32>
    %86 = vector.extract_strided_slice %69 {offsets = [40, 0], sizes = [8, 8], strides = [1, 1]} : vector<64x8xf32> to vector<8x8xf32>
    %87 = vector.extract_strided_slice %16 {offsets = [8, 8], sizes = [8, 8], strides = [1, 1]} : vector<32x16xf32> to vector<8x8xf32>
    %cst_39 = arith.constant dense<0.000000e+00> : vector<8x8xf32>
    %88 = tpu.matmul %87, %86, %cst_39 {dimension_numbers = #tpu.dot_dimension_numbers<[1], [1], [0], [0], [0, 0, 1, 0], [], []>} : vector<8x8xf32>, vector<8x8xf32>, vector<8x8xf32> -> vector<8x8xf32>
    %89 = vector.extract_strided_slice %69 {offsets = [48, 0], sizes = [8, 8], strides = [1, 1]} : vector<64x8xf32> to vector<8x8xf32>
    %90 = vector.extract_strided_slice %16 {offsets = [16, 8], sizes = [8, 8], strides = [1, 1]} : vector<32x16xf32> to vector<8x8xf32>
    %cst_40 = arith.constant dense<0.000000e+00> : vector<8x8xf32>
    %91 = tpu.matmul %90, %89, %cst_40 {dimension_numbers = #tpu.dot_dimension_numbers<[1], [1], [0], [0], [0, 0, 1, 0], [], []>} : vector<8x8xf32>, vector<8x8xf32>, vector<8x8xf32> -> vector<8x8xf32>
    %92 = vector.extract_strided_slice %69 {offsets = [56, 0], sizes = [8, 8], strides = [1, 1]} : vector<64x8xf32> to vector<8x8xf32>
    %93 = vector.extract_strided_slice %16 {offsets = [24, 8], sizes = [8, 8], strides = [1, 1]} : vector<32x16xf32> to vector<8x8xf32>
    %cst_41 = arith.constant dense<0.000000e+00> : vector<8x8xf32>
    %94 = tpu.matmul %93, %92, %cst_41 {dimension_numbers = #tpu.dot_dimension_numbers<[1], [1], [0], [0], [0, 0, 1, 0], [], []>} : vector<8x8xf32>, vector<8x8xf32>, vector<8x8xf32> -> vector<8x8xf32>
    %95 = tpu.concatenate %85, %88, %91, %94 in 0 : vector<8x8xf32>, vector<8x8xf32>, vector<8x8xf32>, vector<8x8xf32> -> vector<32x8xf32>
    %96 = tpu.concatenate %82, %95 in 1 : vector<32x8xf32>, vector<32x8xf32> -> vector<32x16xf32>
    %c0_42 = arith.constant 0 : index
    %c0_43 = arith.constant 0 : index
    %c0_44 = arith.constant 0 : index
    %97 = vector.load %arg6[%c0_42, %c0_43, %c0_44] : memref<2x32x32xf32, #tpu.memory_space<vmem>>, vector<1x32x32xf32>
    %98 = vector.shape_cast %97 : vector<1x32x32xf32> to vector<32x32xf32>
    %cst_45 = arith.constant dense<0.000000e+00> : vector<16x32xf32>
    %99 = tpu.matmul %96, %98, %cst_45 {dimension_numbers = #tpu.dot_dimension_numbers<[0], [0], [1], [1], [0, 1, 1, 1], [], []>} : vector<32x16xf32>, vector<32x32xf32>, vector<16x32xf32> -> vector<16x32xf32>
    %c0_46 = arith.constant 0 : index
    %c0_47 = arith.constant 0 : index
    %c0_48 = arith.constant 0 : index
    %100 = vector.load %arg7[%c0_46, %c0_47, %c0_48] : memref<2x1x32xf32, #tpu.memory_space<vmem>>, vector<1x1x32xf32>
    %101 = vector.shape_cast %100 : vector<1x1x32xf32> to vector<1x32xf32>
    %102 = vector.broadcast %101 : vector<1x32xf32> to vector<16x32xf32>
    %103 = arith.addf %99, %102 : vector<16x32xf32>
    %104 = arith.addf %0, %103 : vector<16x32xf32>
    %cst_49 = arith.constant dense<0.000000e+00> : vector<16xf32>
    %105 = vector.multi_reduction <add>, %104, %cst_49 [1] : vector<16x32xf32> to vector<16xf32>
    %106 = vector.shape_cast %105 : vector<16xf32> to vector<16x1xf32>
    %cst_50 = arith.constant 3.200000e+01 : f32
    %107 = vector.broadcast %cst_50 : f32 to vector<16x1xf32>
    %108 = arith.divf %106, %107 : vector<16x1xf32>
    %109 = vector.broadcast %108 : vector<16x1xf32> to vector<16x32xf32>
    %110 = arith.subf %104, %109 : vector<16x32xf32>
    %111 = arith.mulf %110, %110 : vector<16x32xf32>
    %cst_51 = arith.constant dense<0.000000e+00> : vector<16xf32>
    %112 = vector.multi_reduction <add>, %111, %cst_51 [1] : vector<16x32xf32> to vector<16xf32>
    %113 = vector.shape_cast %112 : vector<16xf32> to vector<16x1xf32>
    %cst_52 = arith.constant 3.200000e+01 : f32
    %114 = vector.broadcast %cst_52 : f32 to vector<16x1xf32>
    %115 = arith.divf %113, %114 : vector<16x1xf32>
    %116 = vector.broadcast %108 : vector<16x1xf32> to vector<16x32xf32>
    %117 = arith.subf %104, %116 : vector<16x32xf32>
    %cst_53 = arith.constant 9.99999974E-6 : f32
    %118 = vector.broadcast %cst_53 : f32 to vector<16x1xf32>
    %119 = arith.addf %115, %118 : vector<16x1xf32>
    %120 = math.rsqrt %119 : vector<16x1xf32>
    %121 = vector.broadcast %120 : vector<16x1xf32> to vector<16x32xf32>
    %122 = arith.mulf %117, %121 : vector<16x32xf32>
    %c0_54 = arith.constant 0 : index
    %c0_55 = arith.constant 0 : index
    %c0_56 = arith.constant 0 : index
    %123 = vector.load %arg12[%c0_54, %c0_55, %c0_56] : memref<2x1x32xf32, #tpu.memory_space<vmem>>, vector<1x1x32xf32>
    %124 = vector.shape_cast %123 : vector<1x1x32xf32> to vector<1x32xf32>
    %125 = vector.broadcast %124 : vector<1x32xf32> to vector<16x32xf32>
    %126 = arith.mulf %122, %125 : vector<16x32xf32>
    %c0_57 = arith.constant 0 : index
    %c0_58 = arith.constant 0 : index
    %c0_59 = arith.constant 0 : index
    %127 = vector.load %arg13[%c0_57, %c0_58, %c0_59] : memref<2x1x32xf32, #tpu.memory_space<vmem>>, vector<1x1x32xf32>
    %128 = vector.shape_cast %127 : vector<1x1x32xf32> to vector<1x32xf32>
    %129 = vector.broadcast %128 : vector<1x32xf32> to vector<16x32xf32>
    %130 = arith.addf %126, %129 : vector<16x32xf32>
    %c0_60 = arith.constant 0 : index
    %c0_61 = arith.constant 0 : index
    %c0_62 = arith.constant 0 : index
    %131 = vector.load %arg8[%c0_60, %c0_61, %c0_62] : memref<2x32x2048xbf16, #tpu.memory_space<vmem>>, vector<1x32x2048xbf16>
    %132 = vector.shape_cast %131 : vector<1x32x2048xbf16> to vector<32x2048xbf16>
    %133 = arith.extf %132 : vector<32x2048xbf16> to vector<32x2048xf32>
    %c0_63 = arith.constant 0 : index
    %c0_64 = arith.constant 0 : index
    %c0_65 = arith.constant 0 : index
    %134 = vector.load %arg10[%c0_63, %c0_64, %c0_65] : memref<2x2048x32xbf16, #tpu.memory_space<vmem>>, vector<1x2048x32xbf16>
    %135 = vector.shape_cast %134 : vector<1x2048x32xbf16> to vector<2048x32xbf16>
    %136 = arith.extf %135 : vector<2048x32xbf16> to vector<2048x32xf32>
    %cst_66 = arith.constant dense<0.000000e+00> : vector<16x2048xf32>
    %137 = tpu.matmul %130, %133, %cst_66 {dimension_numbers = #tpu.dot_dimension_numbers<[1], [0], [0], [1], [0, 0, 1, 1], [], []>} : vector<16x32xf32>, vector<32x2048xf32>, vector<16x2048xf32> -> vector<16x2048xf32>
    %c0_67 = arith.constant 0 : index
    %c0_68 = arith.constant 0 : index
    %c0_69 = arith.constant 0 : index
    %138 = vector.load %arg9[%c0_67, %c0_68, %c0_69] : memref<2x1x2048xf32, #tpu.memory_space<vmem>>, vector<1x1x2048xf32>
    %139 = vector.shape_cast %138 : vector<1x1x2048xf32> to vector<1x2048xf32>
    %140 = vector.broadcast %139 : vector<1x2048xf32> to vector<16x2048xf32>
    %141 = arith.addf %137, %140 : vector<16x2048xf32>
    %cst_70 = arith.constant 0.000000e+00 : f32
    %142 = vector.broadcast %cst_70 : f32 to vector<16x2048xf32>
    %143 = arith.maximumf %141, %142 : vector<16x2048xf32>
    %cst_71 = arith.constant dense<0.000000e+00> : vector<16x32xf32>
    %144 = tpu.matmul %143, %136, %cst_71 {dimension_numbers = #tpu.dot_dimension_numbers<[1], [0], [0], [1], [0, 0, 1, 1], [], []>} : vector<16x2048xf32>, vector<2048x32xf32>, vector<16x32xf32> -> vector<16x32xf32>
    %c0_72 = arith.constant 0 : index
    %c0_73 = arith.constant 0 : index
    %c0_74 = arith.constant 0 : index
    %145 = vector.load %arg11[%c0_72, %c0_73, %c0_74] : memref<2x1x32xf32, #tpu.memory_space<vmem>>, vector<1x1x32xf32>
    %146 = vector.shape_cast %145 : vector<1x1x32xf32> to vector<1x32xf32>
    %147 = vector.broadcast %146 : vector<1x32xf32> to vector<16x32xf32>
    %148 = arith.addf %144, %147 : vector<16x32xf32>
    %149 = arith.addf %130, %148 : vector<16x32xf32>
    %cst_75 = arith.constant dense<0.000000e+00> : vector<16xf32>
    %150 = vector.multi_reduction <add>, %149, %cst_75 [1] : vector<16x32xf32> to vector<16xf32>
    %151 = vector.shape_cast %150 : vector<16xf32> to vector<16x1xf32>
    %cst_76 = arith.constant 3.200000e+01 : f32
    %152 = vector.broadcast %cst_76 : f32 to vector<16x1xf32>
    %153 = arith.divf %151, %152 : vector<16x1xf32>
    %154 = vector.broadcast %153 : vector<16x1xf32> to vector<16x32xf32>
    %155 = arith.subf %149, %154 : vector<16x32xf32>
    %156 = arith.mulf %155, %155 : vector<16x32xf32>
    %cst_77 = arith.constant dense<0.000000e+00> : vector<16xf32>
    %157 = vector.multi_reduction <add>, %156, %cst_77 [1] : vector<16x32xf32> to vector<16xf32>
    %158 = vector.shape_cast %157 : vector<16xf32> to vector<16x1xf32>
    %cst_78 = arith.constant 3.200000e+01 : f32
    %159 = vector.broadcast %cst_78 : f32 to vector<16x1xf32>
    %160 = arith.divf %158, %159 : vector<16x1xf32>
    %161 = vector.broadcast %153 : vector<16x1xf32> to vector<16x32xf32>
    %162 = arith.subf %149, %161 : vector<16x32xf32>
    %cst_79 = arith.constant 9.99999974E-6 : f32
    %163 = vector.broadcast %cst_79 : f32 to vector<16x1xf32>
    %164 = arith.addf %160, %163 : vector<16x1xf32>
    %165 = math.rsqrt %164 : vector<16x1xf32>
    %166 = vector.broadcast %165 : vector<16x1xf32> to vector<16x32xf32>
    %167 = arith.mulf %162, %166 : vector<16x32xf32>
    %c0_80 = arith.constant 0 : index
    %c0_81 = arith.constant 0 : index
    %c0_82 = arith.constant 0 : index
    %168 = vector.load %arg14[%c0_80, %c0_81, %c0_82] : memref<2x1x32xf32, #tpu.memory_space<vmem>>, vector<1x1x32xf32>
    %169 = vector.shape_cast %168 : vector<1x1x32xf32> to vector<1x32xf32>
    %170 = vector.broadcast %169 : vector<1x32xf32> to vector<16x32xf32>
    %171 = arith.mulf %167, %170 : vector<16x32xf32>
    %c0_83 = arith.constant 0 : index
    %c0_84 = arith.constant 0 : index
    %c0_85 = arith.constant 0 : index
    %172 = vector.load %arg15[%c0_83, %c0_84, %c0_85] : memref<2x1x32xf32, #tpu.memory_space<vmem>>, vector<1x1x32xf32>
    %173 = vector.shape_cast %172 : vector<1x1x32xf32> to vector<1x32xf32>
    %174 = vector.broadcast %173 : vector<1x32xf32> to vector<16x32xf32>
    %175 = arith.addf %171, %174 : vector<16x32xf32>
    %176 = arith.addf %175, %1 : vector<16x32xf32>
    %c1 = arith.constant 1 : index
    %c0_86 = arith.constant 0 : index
    %c0_87 = arith.constant 0 : index
    %177 = vector.load %arg2[%c1, %c0_86, %c0_87] : memref<2x64x32xf32, #tpu.memory_space<vmem>>, vector<1x64x32xf32>
    %178 = vector.shape_cast %177 : vector<1x64x32xf32> to vector<64x32xf32>
    %cst_88 = arith.constant dense<0.000000e+00> : vector<64x16xf32>
    %179 = tpu.matmul %178, %176, %cst_88 {dimension_numbers = #tpu.dot_dimension_numbers<[1], [1], [0], [0], [0, 0, 1, 0], [], []>} : vector<64x32xf32>, vector<16x32xf32>, vector<64x16xf32> -> vector<64x16xf32>
    %c1_89 = arith.constant 1 : index
    %c0_90 = arith.constant 0 : index
    %c0_91 = arith.constant 0 : index
    %180 = vector.load %arg3[%c1_89, %c0_90, %c0_91] : memref<2x64x1xf32, #tpu.memory_space<vmem>>, vector<1x64x1xf32>
    %181 = vector.shape_cast %180 : vector<1x64x1xf32> to vector<64x1xf32>
    %182 = vector.broadcast %181 : vector<64x1xf32> to vector<64x16xf32>
    %183 = arith.addf %179, %182 : vector<64x16xf32>
    %c1_92 = arith.constant 1 : index
    %c0_93 = arith.constant 0 : index
    %c0_94 = arith.constant 0 : index
    %184 = vector.load %arg4[%c1_92, %c0_93, %c0_94] : memref<2x32x32xf32, #tpu.memory_space<vmem>>, vector<1x32x32xf32>
    %185 = vector.shape_cast %184 : vector<1x32x32xf32> to vector<32x32xf32>
    %cst_95 = arith.constant dense<0.000000e+00> : vector<32x16xf32>
    %186 = tpu.matmul %185, %175, %cst_95 {dimension_numbers = #tpu.dot_dimension_numbers<[1], [1], [0], [0], [0, 0, 1, 0], [], []>} : vector<32x32xf32>, vector<16x32xf32>, vector<32x16xf32> -> vector<32x16xf32>
    %c1_96 = arith.constant 1 : index
    %c0_97 = arith.constant 0 : index
    %c0_98 = arith.constant 0 : index
    %187 = vector.load %arg5[%c1_96, %c0_97, %c0_98] : memref<2x32x1xf32, #tpu.memory_space<vmem>>, vector<1x32x1xf32>
    %188 = vector.shape_cast %187 : vector<1x32x1xf32> to vector<32x1xf32>
    %189 = vector.broadcast %188 : vector<32x1xf32> to vector<32x16xf32>
    %190 = arith.addf %186, %189 : vector<32x16xf32>
    %191 = vector.extract_strided_slice %183 {offsets = [0, 0], sizes = [32, 16], strides = [1, 1]} : vector<64x16xf32> to vector<32x16xf32>
    %192 = vector.extract_strided_slice %183 {offsets = [32, 0], sizes = [32, 16], strides = [1, 1]} : vector<64x16xf32> to vector<32x16xf32>
    %193 = vector.extract_strided_slice %191 {offsets = [0, 0], sizes = [8, 8], strides = [1, 1]} : vector<32x16xf32> to vector<8x8xf32>
    %194 = vector.extract_strided_slice %192 {offsets = [0, 0], sizes = [8, 8], strides = [1, 1]} : vector<32x16xf32> to vector<8x8xf32>
    %cst_99 = arith.constant dense<0.000000e+00> : vector<8x8xf32>
    %195 = tpu.matmul %193, %194, %cst_99 {dimension_numbers = #tpu.dot_dimension_numbers<[0], [0], [1], [1], [0, 1, 1, 1], [], []>} : vector<8x8xf32>, vector<8x8xf32>, vector<8x8xf32> -> vector<8x8xf32>
    %cst_100 = arith.constant 0.353553385 : f32
    %196 = vector.broadcast %cst_100 : f32 to vector<8x8xf32>
    %197 = arith.mulf %195, %196 : vector<8x8xf32>
    %198 = vector.extract_strided_slice %191 {offsets = [8, 0], sizes = [8, 8], strides = [1, 1]} : vector<32x16xf32> to vector<8x8xf32>
    %199 = vector.extract_strided_slice %192 {offsets = [8, 0], sizes = [8, 8], strides = [1, 1]} : vector<32x16xf32> to vector<8x8xf32>
    %cst_101 = arith.constant dense<0.000000e+00> : vector<8x8xf32>
    %200 = tpu.matmul %198, %199, %cst_101 {dimension_numbers = #tpu.dot_dimension_numbers<[0], [0], [1], [1], [0, 1, 1, 1], [], []>} : vector<8x8xf32>, vector<8x8xf32>, vector<8x8xf32> -> vector<8x8xf32>
    %cst_102 = arith.constant 0.353553385 : f32
    %201 = vector.broadcast %cst_102 : f32 to vector<8x8xf32>
    %202 = arith.mulf %200, %201 : vector<8x8xf32>
    %203 = vector.extract_strided_slice %191 {offsets = [16, 0], sizes = [8, 8], strides = [1, 1]} : vector<32x16xf32> to vector<8x8xf32>
    %204 = vector.extract_strided_slice %192 {offsets = [16, 0], sizes = [8, 8], strides = [1, 1]} : vector<32x16xf32> to vector<8x8xf32>
    %cst_103 = arith.constant dense<0.000000e+00> : vector<8x8xf32>
    %205 = tpu.matmul %203, %204, %cst_103 {dimension_numbers = #tpu.dot_dimension_numbers<[0], [0], [1], [1], [0, 1, 1, 1], [], []>} : vector<8x8xf32>, vector<8x8xf32>, vector<8x8xf32> -> vector<8x8xf32>
    %cst_104 = arith.constant 0.353553385 : f32
    %206 = vector.broadcast %cst_104 : f32 to vector<8x8xf32>
    %207 = arith.mulf %205, %206 : vector<8x8xf32>
    %208 = vector.extract_strided_slice %191 {offsets = [24, 0], sizes = [8, 8], strides = [1, 1]} : vector<32x16xf32> to vector<8x8xf32>
    %209 = vector.extract_strided_slice %192 {offsets = [24, 0], sizes = [8, 8], strides = [1, 1]} : vector<32x16xf32> to vector<8x8xf32>
    %cst_105 = arith.constant dense<0.000000e+00> : vector<8x8xf32>
    %210 = tpu.matmul %208, %209, %cst_105 {dimension_numbers = #tpu.dot_dimension_numbers<[0], [0], [1], [1], [0, 1, 1, 1], [], []>} : vector<8x8xf32>, vector<8x8xf32>, vector<8x8xf32> -> vector<8x8xf32>
    %cst_106 = arith.constant 0.353553385 : f32
    %211 = vector.broadcast %cst_106 : f32 to vector<8x8xf32>
    %212 = arith.mulf %210, %211 : vector<8x8xf32>
    %213 = vector.extract_strided_slice %191 {offsets = [0, 8], sizes = [8, 8], strides = [1, 1]} : vector<32x16xf32> to vector<8x8xf32>
    %214 = vector.extract_strided_slice %192 {offsets = [0, 8], sizes = [8, 8], strides = [1, 1]} : vector<32x16xf32> to vector<8x8xf32>
    %cst_107 = arith.constant dense<0.000000e+00> : vector<8x8xf32>
    %215 = tpu.matmul %213, %214, %cst_107 {dimension_numbers = #tpu.dot_dimension_numbers<[0], [0], [1], [1], [0, 1, 1, 1], [], []>} : vector<8x8xf32>, vector<8x8xf32>, vector<8x8xf32> -> vector<8x8xf32>
    %cst_108 = arith.constant 0.353553385 : f32
    %216 = vector.broadcast %cst_108 : f32 to vector<8x8xf32>
    %217 = arith.mulf %215, %216 : vector<8x8xf32>
    %218 = vector.extract_strided_slice %191 {offsets = [8, 8], sizes = [8, 8], strides = [1, 1]} : vector<32x16xf32> to vector<8x8xf32>
    %219 = vector.extract_strided_slice %192 {offsets = [8, 8], sizes = [8, 8], strides = [1, 1]} : vector<32x16xf32> to vector<8x8xf32>
    %cst_109 = arith.constant dense<0.000000e+00> : vector<8x8xf32>
    %220 = tpu.matmul %218, %219, %cst_109 {dimension_numbers = #tpu.dot_dimension_numbers<[0], [0], [1], [1], [0, 1, 1, 1], [], []>} : vector<8x8xf32>, vector<8x8xf32>, vector<8x8xf32> -> vector<8x8xf32>
    %cst_110 = arith.constant 0.353553385 : f32
    %221 = vector.broadcast %cst_110 : f32 to vector<8x8xf32>
    %222 = arith.mulf %220, %221 : vector<8x8xf32>
    %223 = vector.extract_strided_slice %191 {offsets = [16, 8], sizes = [8, 8], strides = [1, 1]} : vector<32x16xf32> to vector<8x8xf32>
    %224 = vector.extract_strided_slice %192 {offsets = [16, 8], sizes = [8, 8], strides = [1, 1]} : vector<32x16xf32> to vector<8x8xf32>
    %cst_111 = arith.constant dense<0.000000e+00> : vector<8x8xf32>
    %225 = tpu.matmul %223, %224, %cst_111 {dimension_numbers = #tpu.dot_dimension_numbers<[0], [0], [1], [1], [0, 1, 1, 1], [], []>} : vector<8x8xf32>, vector<8x8xf32>, vector<8x8xf32> -> vector<8x8xf32>
    %cst_112 = arith.constant 0.353553385 : f32
    %226 = vector.broadcast %cst_112 : f32 to vector<8x8xf32>
    %227 = arith.mulf %225, %226 : vector<8x8xf32>
    %228 = vector.extract_strided_slice %191 {offsets = [24, 8], sizes = [8, 8], strides = [1, 1]} : vector<32x16xf32> to vector<8x8xf32>
    %229 = vector.extract_strided_slice %192 {offsets = [24, 8], sizes = [8, 8], strides = [1, 1]} : vector<32x16xf32> to vector<8x8xf32>
    %cst_113 = arith.constant dense<0.000000e+00> : vector<8x8xf32>
    %230 = tpu.matmul %228, %229, %cst_113 {dimension_numbers = #tpu.dot_dimension_numbers<[0], [0], [1], [1], [0, 1, 1, 1], [], []>} : vector<8x8xf32>, vector<8x8xf32>, vector<8x8xf32> -> vector<8x8xf32>
    %cst_114 = arith.constant 0.353553385 : f32
    %231 = vector.broadcast %cst_114 : f32 to vector<8x8xf32>
    %232 = arith.mulf %230, %231 : vector<8x8xf32>
    %233 = tpu.concatenate %197, %202, %207, %212, %217, %222, %227, %232 in 0 : vector<8x8xf32>, vector<8x8xf32>, vector<8x8xf32>, vector<8x8xf32>, vector<8x8xf32>, vector<8x8xf32>, vector<8x8xf32>, vector<8x8xf32> -> vector<64x8xf32>
    %cst_115 = arith.constant dense<0xFF800000> : vector<64xf32>
    %234 = vector.multi_reduction <maximumf>, %233, %cst_115 [1] : vector<64x8xf32> to vector<64xf32>
    %235 = vector.shape_cast %234 : vector<64xf32> to vector<64x1xf32>
    %236 = vector.broadcast %235 : vector<64x1xf32> to vector<64x8xf32>
    %237 = arith.subf %233, %236 : vector<64x8xf32>
    %238 = math.exp %237 : vector<64x8xf32>
    %cst_116 = arith.constant dense<0.000000e+00> : vector<64xf32>
    %239 = vector.multi_reduction <add>, %238, %cst_116 [1] : vector<64x8xf32> to vector<64xf32>
    %240 = vector.shape_cast %239 : vector<64xf32> to vector<64x1xf32>
    %241 = tpu.reciprocal %240 {approx = true} : vector<64x1xf32> -> vector<64x1xf32>
    %242 = vector.broadcast %241 : vector<64x1xf32> to vector<64x8xf32>
    %243 = arith.mulf %238, %242 : vector<64x8xf32>
    %244 = vector.extract_strided_slice %243 {offsets = [0, 0], sizes = [8, 8], strides = [1, 1]} : vector<64x8xf32> to vector<8x8xf32>
    %245 = vector.extract_strided_slice %190 {offsets = [0, 0], sizes = [8, 8], strides = [1, 1]} : vector<32x16xf32> to vector<8x8xf32>
    %cst_117 = arith.constant dense<0.000000e+00> : vector<8x8xf32>
    %246 = tpu.matmul %245, %244, %cst_117 {dimension_numbers = #tpu.dot_dimension_numbers<[1], [1], [0], [0], [0, 0, 1, 0], [], []>} : vector<8x8xf32>, vector<8x8xf32>, vector<8x8xf32> -> vector<8x8xf32>
    %247 = vector.extract_strided_slice %243 {offsets = [8, 0], sizes = [8, 8], strides = [1, 1]} : vector<64x8xf32> to vector<8x8xf32>
    %248 = vector.extract_strided_slice %190 {offsets = [8, 0], sizes = [8, 8], strides = [1, 1]} : vector<32x16xf32> to vector<8x8xf32>
    %cst_118 = arith.constant dense<0.000000e+00> : vector<8x8xf32>
    %249 = tpu.matmul %248, %247, %cst_118 {dimension_numbers = #tpu.dot_dimension_numbers<[1], [1], [0], [0], [0, 0, 1, 0], [], []>} : vector<8x8xf32>, vector<8x8xf32>, vector<8x8xf32> -> vector<8x8xf32>
    %250 = vector.extract_strided_slice %243 {offsets = [16, 0], sizes = [8, 8], strides = [1, 1]} : vector<64x8xf32> to vector<8x8xf32>
    %251 = vector.extract_strided_slice %190 {offsets = [16, 0], sizes = [8, 8], strides = [1, 1]} : vector<32x16xf32> to vector<8x8xf32>
    %cst_119 = arith.constant dense<0.000000e+00> : vector<8x8xf32>
    %252 = tpu.matmul %251, %250, %cst_119 {dimension_numbers = #tpu.dot_dimension_numbers<[1], [1], [0], [0], [0, 0, 1, 0], [], []>} : vector<8x8xf32>, vector<8x8xf32>, vector<8x8xf32> -> vector<8x8xf32>
    %253 = vector.extract_strided_slice %243 {offsets = [24, 0], sizes = [8, 8], strides = [1, 1]} : vector<64x8xf32> to vector<8x8xf32>
    %254 = vector.extract_strided_slice %190 {offsets = [24, 0], sizes = [8, 8], strides = [1, 1]} : vector<32x16xf32> to vector<8x8xf32>
    %cst_120 = arith.constant dense<0.000000e+00> : vector<8x8xf32>
    %255 = tpu.matmul %254, %253, %cst_120 {dimension_numbers = #tpu.dot_dimension_numbers<[1], [1], [0], [0], [0, 0, 1, 0], [], []>} : vector<8x8xf32>, vector<8x8xf32>, vector<8x8xf32> -> vector<8x8xf32>
    %256 = tpu.concatenate %246, %249, %252, %255 in 0 : vector<8x8xf32>, vector<8x8xf32>, vector<8x8xf32>, vector<8x8xf32> -> vector<32x8xf32>
    %257 = vector.extract_strided_slice %243 {offsets = [32, 0], sizes = [8, 8], strides = [1, 1]} : vector<64x8xf32> to vector<8x8xf32>
    %258 = vector.extract_strided_slice %190 {offsets = [0, 8], sizes = [8, 8], strides = [1, 1]} : vector<32x16xf32> to vector<8x8xf32>
    %cst_121 = arith.constant dense<0.000000e+00> : vector<8x8xf32>
    %259 = tpu.matmul %258, %257, %cst_121 {dimension_numbers = #tpu.dot_dimension_numbers<[1], [1], [0], [0], [0, 0, 1, 0], [], []>} : vector<8x8xf32>, vector<8x8xf32>, vector<8x8xf32> -> vector<8x8xf32>
    %260 = vector.extract_strided_slice %243 {offsets = [40, 0], sizes = [8, 8], strides = [1, 1]} : vector<64x8xf32> to vector<8x8xf32>
    %261 = vector.extract_strided_slice %190 {offsets = [8, 8], sizes = [8, 8], strides = [1, 1]} : vector<32x16xf32> to vector<8x8xf32>
    %cst_122 = arith.constant dense<0.000000e+00> : vector<8x8xf32>
    %262 = tpu.matmul %261, %260, %cst_122 {dimension_numbers = #tpu.dot_dimension_numbers<[1], [1], [0], [0], [0, 0, 1, 0], [], []>} : vector<8x8xf32>, vector<8x8xf32>, vector<8x8xf32> -> vector<8x8xf32>
    %263 = vector.extract_strided_slice %243 {offsets = [48, 0], sizes = [8, 8], strides = [1, 1]} : vector<64x8xf32> to vector<8x8xf32>
    %264 = vector.extract_strided_slice %190 {offsets = [16, 8], sizes = [8, 8], strides = [1, 1]} : vector<32x16xf32> to vector<8x8xf32>
    %cst_123 = arith.constant dense<0.000000e+00> : vector<8x8xf32>
    %265 = tpu.matmul %264, %263, %cst_123 {dimension_numbers = #tpu.dot_dimension_numbers<[1], [1], [0], [0], [0, 0, 1, 0], [], []>} : vector<8x8xf32>, vector<8x8xf32>, vector<8x8xf32> -> vector<8x8xf32>
    %266 = vector.extract_strided_slice %243 {offsets = [56, 0], sizes = [8, 8], strides = [1, 1]} : vector<64x8xf32> to vector<8x8xf32>
    %267 = vector.extract_strided_slice %190 {offsets = [24, 8], sizes = [8, 8], strides = [1, 1]} : vector<32x16xf32> to vector<8x8xf32>
    %cst_124 = arith.constant dense<0.000000e+00> : vector<8x8xf32>
    %268 = tpu.matmul %267, %266, %cst_124 {dimension_numbers = #tpu.dot_dimension_numbers<[1], [1], [0], [0], [0, 0, 1, 0], [], []>} : vector<8x8xf32>, vector<8x8xf32>, vector<8x8xf32> -> vector<8x8xf32>
    %269 = tpu.concatenate %259, %262, %265, %268 in 0 : vector<8x8xf32>, vector<8x8xf32>, vector<8x8xf32>, vector<8x8xf32> -> vector<32x8xf32>
    %270 = tpu.concatenate %256, %269 in 1 : vector<32x8xf32>, vector<32x8xf32> -> vector<32x16xf32>
    %c1_125 = arith.constant 1 : index
    %c0_126 = arith.constant 0 : index
    %c0_127 = arith.constant 0 : index
    %271 = vector.load %arg6[%c1_125, %c0_126, %c0_127] : memref<2x32x32xf32, #tpu.memory_space<vmem>>, vector<1x32x32xf32>
    %272 = vector.shape_cast %271 : vector<1x32x32xf32> to vector<32x32xf32>
    %cst_128 = arith.constant dense<0.000000e+00> : vector<16x32xf32>
    %273 = tpu.matmul %270, %272, %cst_128 {dimension_numbers = #tpu.dot_dimension_numbers<[0], [0], [1], [1], [0, 1, 1, 1], [], []>} : vector<32x16xf32>, vector<32x32xf32>, vector<16x32xf32> -> vector<16x32xf32>
    %c1_129 = arith.constant 1 : index
    %c0_130 = arith.constant 0 : index
    %c0_131 = arith.constant 0 : index
    %274 = vector.load %arg7[%c1_129, %c0_130, %c0_131] : memref<2x1x32xf32, #tpu.memory_space<vmem>>, vector<1x1x32xf32>
    %275 = vector.shape_cast %274 : vector<1x1x32xf32> to vector<1x32xf32>
    %276 = vector.broadcast %275 : vector<1x32xf32> to vector<16x32xf32>
    %277 = arith.addf %273, %276 : vector<16x32xf32>
    %278 = arith.addf %175, %277 : vector<16x32xf32>
    %cst_132 = arith.constant dense<0.000000e+00> : vector<16xf32>
    %279 = vector.multi_reduction <add>, %278, %cst_132 [1] : vector<16x32xf32> to vector<16xf32>
    %280 = vector.shape_cast %279 : vector<16xf32> to vector<16x1xf32>
    %cst_133 = arith.constant 3.200000e+01 : f32
    %281 = vector.broadcast %cst_133 : f32 to vector<16x1xf32>
    %282 = arith.divf %280, %281 : vector<16x1xf32>
    %283 = vector.broadcast %282 : vector<16x1xf32> to vector<16x32xf32>
    %284 = arith.subf %278, %283 : vector<16x32xf32>
    %285 = arith.mulf %284, %284 : vector<16x32xf32>
    %cst_134 = arith.constant dense<0.000000e+00> : vector<16xf32>
    %286 = vector.multi_reduction <add>, %285, %cst_134 [1] : vector<16x32xf32> to vector<16xf32>
    %287 = vector.shape_cast %286 : vector<16xf32> to vector<16x1xf32>
    %cst_135 = arith.constant 3.200000e+01 : f32
    %288 = vector.broadcast %cst_135 : f32 to vector<16x1xf32>
    %289 = arith.divf %287, %288 : vector<16x1xf32>
    %290 = vector.broadcast %282 : vector<16x1xf32> to vector<16x32xf32>
    %291 = arith.subf %278, %290 : vector<16x32xf32>
    %cst_136 = arith.constant 9.99999974E-6 : f32
    %292 = vector.broadcast %cst_136 : f32 to vector<16x1xf32>
    %293 = arith.addf %289, %292 : vector<16x1xf32>
    %294 = math.rsqrt %293 : vector<16x1xf32>
    %295 = vector.broadcast %294 : vector<16x1xf32> to vector<16x32xf32>
    %296 = arith.mulf %291, %295 : vector<16x32xf32>
    %c1_137 = arith.constant 1 : index
    %c0_138 = arith.constant 0 : index
    %c0_139 = arith.constant 0 : index
    %297 = vector.load %arg12[%c1_137, %c0_138, %c0_139] : memref<2x1x32xf32, #tpu.memory_space<vmem>>, vector<1x1x32xf32>
    %298 = vector.shape_cast %297 : vector<1x1x32xf32> to vector<1x32xf32>
    %299 = vector.broadcast %298 : vector<1x32xf32> to vector<16x32xf32>
    %300 = arith.mulf %296, %299 : vector<16x32xf32>
    %c1_140 = arith.constant 1 : index
    %c0_141 = arith.constant 0 : index
    %c0_142 = arith.constant 0 : index
    %301 = vector.load %arg13[%c1_140, %c0_141, %c0_142] : memref<2x1x32xf32, #tpu.memory_space<vmem>>, vector<1x1x32xf32>
    %302 = vector.shape_cast %301 : vector<1x1x32xf32> to vector<1x32xf32>
    %303 = vector.broadcast %302 : vector<1x32xf32> to vector<16x32xf32>
    %304 = arith.addf %300, %303 : vector<16x32xf32>
    %c1_143 = arith.constant 1 : index
    %c0_144 = arith.constant 0 : index
    %c0_145 = arith.constant 0 : index
    %305 = vector.load %arg8[%c1_143, %c0_144, %c0_145] : memref<2x32x2048xbf16, #tpu.memory_space<vmem>>, vector<1x32x2048xbf16>
    %306 = vector.shape_cast %305 : vector<1x32x2048xbf16> to vector<32x2048xbf16>
    %307 = arith.extf %306 : vector<32x2048xbf16> to vector<32x2048xf32>
    %c1_146 = arith.constant 1 : index
    %c0_147 = arith.constant 0 : index
    %c0_148 = arith.constant 0 : index
    %308 = vector.load %arg10[%c1_146, %c0_147, %c0_148] : memref<2x2048x32xbf16, #tpu.memory_space<vmem>>, vector<1x2048x32xbf16>
    %309 = vector.shape_cast %308 : vector<1x2048x32xbf16> to vector<2048x32xbf16>
    %310 = arith.extf %309 : vector<2048x32xbf16> to vector<2048x32xf32>
    %cst_149 = arith.constant dense<0.000000e+00> : vector<16x2048xf32>
    %311 = tpu.matmul %304, %307, %cst_149 {dimension_numbers = #tpu.dot_dimension_numbers<[1], [0], [0], [1], [0, 0, 1, 1], [], []>} : vector<16x32xf32>, vector<32x2048xf32>, vector<16x2048xf32> -> vector<16x2048xf32>
    %c1_150 = arith.constant 1 : index
    %c0_151 = arith.constant 0 : index
    %c0_152 = arith.constant 0 : index
    %312 = vector.load %arg9[%c1_150, %c0_151, %c0_152] : memref<2x1x2048xf32, #tpu.memory_space<vmem>>, vector<1x1x2048xf32>
    %313 = vector.shape_cast %312 : vector<1x1x2048xf32> to vector<1x2048xf32>
    %314 = vector.broadcast %313 : vector<1x2048xf32> to vector<16x2048xf32>
    %315 = arith.addf %311, %314 : vector<16x2048xf32>
    %cst_153 = arith.constant 0.000000e+00 : f32
    %316 = vector.broadcast %cst_153 : f32 to vector<16x2048xf32>
    %317 = arith.maximumf %315, %316 : vector<16x2048xf32>
    %cst_154 = arith.constant dense<0.000000e+00> : vector<16x32xf32>
    %318 = tpu.matmul %317, %310, %cst_154 {dimension_numbers = #tpu.dot_dimension_numbers<[1], [0], [0], [1], [0, 0, 1, 1], [], []>} : vector<16x2048xf32>, vector<2048x32xf32>, vector<16x32xf32> -> vector<16x32xf32>
    %c1_155 = arith.constant 1 : index
    %c0_156 = arith.constant 0 : index
    %c0_157 = arith.constant 0 : index
    %319 = vector.load %arg11[%c1_155, %c0_156, %c0_157] : memref<2x1x32xf32, #tpu.memory_space<vmem>>, vector<1x1x32xf32>
    %320 = vector.shape_cast %319 : vector<1x1x32xf32> to vector<1x32xf32>
    %321 = vector.broadcast %320 : vector<1x32xf32> to vector<16x32xf32>
    %322 = arith.addf %318, %321 : vector<16x32xf32>
    %323 = arith.addf %304, %322 : vector<16x32xf32>
    %cst_158 = arith.constant dense<0.000000e+00> : vector<16xf32>
    %324 = vector.multi_reduction <add>, %323, %cst_158 [1] : vector<16x32xf32> to vector<16xf32>
    %325 = vector.shape_cast %324 : vector<16xf32> to vector<16x1xf32>
    %cst_159 = arith.constant 3.200000e+01 : f32
    %326 = vector.broadcast %cst_159 : f32 to vector<16x1xf32>
    %327 = arith.divf %325, %326 : vector<16x1xf32>
    %328 = vector.broadcast %327 : vector<16x1xf32> to vector<16x32xf32>
    %329 = arith.subf %323, %328 : vector<16x32xf32>
    %330 = arith.mulf %329, %329 : vector<16x32xf32>
    %cst_160 = arith.constant dense<0.000000e+00> : vector<16xf32>
    %331 = vector.multi_reduction <add>, %330, %cst_160 [1] : vector<16x32xf32> to vector<16xf32>
    %332 = vector.shape_cast %331 : vector<16xf32> to vector<16x1xf32>
    %cst_161 = arith.constant 3.200000e+01 : f32
    %333 = vector.broadcast %cst_161 : f32 to vector<16x1xf32>
    %334 = arith.divf %332, %333 : vector<16x1xf32>
    %335 = vector.broadcast %327 : vector<16x1xf32> to vector<16x32xf32>
    %336 = arith.subf %323, %335 : vector<16x32xf32>
    %cst_162 = arith.constant 9.99999974E-6 : f32
    %337 = vector.broadcast %cst_162 : f32 to vector<16x1xf32>
    %338 = arith.addf %334, %337 : vector<16x1xf32>
    %339 = math.rsqrt %338 : vector<16x1xf32>
    %340 = vector.broadcast %339 : vector<16x1xf32> to vector<16x32xf32>
    %341 = arith.mulf %336, %340 : vector<16x32xf32>
    %c1_163 = arith.constant 1 : index
    %c0_164 = arith.constant 0 : index
    %c0_165 = arith.constant 0 : index
    %342 = vector.load %arg14[%c1_163, %c0_164, %c0_165] : memref<2x1x32xf32, #tpu.memory_space<vmem>>, vector<1x1x32xf32>
    %343 = vector.shape_cast %342 : vector<1x1x32xf32> to vector<1x32xf32>
    %344 = vector.broadcast %343 : vector<1x32xf32> to vector<16x32xf32>
    %345 = arith.mulf %341, %344 : vector<16x32xf32>
    %c1_166 = arith.constant 1 : index
    %c0_167 = arith.constant 0 : index
    %c0_168 = arith.constant 0 : index
    %346 = vector.load %arg15[%c1_166, %c0_167, %c0_168] : memref<2x1x32xf32, #tpu.memory_space<vmem>>, vector<1x1x32xf32>
    %347 = vector.shape_cast %346 : vector<1x1x32xf32> to vector<1x32xf32>
    %348 = vector.broadcast %347 : vector<1x32xf32> to vector<16x32xf32>
    %349 = arith.addf %345, %348 : vector<16x32xf32>
    %c0_169 = arith.constant 0 : index
    %c0_170 = arith.constant 0 : index
    %350 = vector.load %arg16[%c0_169, %c0_170] : memref<16x32xf32, #tpu.memory_space<vmem>>, vector<16x32xf32>
    tpu.vector_store %arg16[%c0_169, %c0_170], %349 {strides = array<i32>} : memref<16x32xf32, #tpu.memory_space<vmem>>, vector<16x32xf32>,
    return
  }
}

</mosaic_0001>

<llo_original>
// kernel: tpu_custom_call.1
$region0: #{tpu_custom_call.1}
  #allocation0 [shape = 'u32[]', space=smem, size = 0x4, offset = 0x4, fixed_abs, tag = 'smem constant byte address 0x4 - core index']
  #allocation1 [shape = 'u32[144,128]{1,0:T(1,128)}', space=vmem, size = 0x12000, scoped, tag = 'internal scratch']
  %s0 = inlined_call_operand.vmem [shape: f32[16,32], index: 0, kind: input, shape index: {}]
  %s1 = inlined_call_operand.vmem [shape: f32[16,32], index: 1, kind: input, shape index: {}]
  %s2 = inlined_call_operand.vmem [shape: f32[2,64,32], index: 2, kind: input, shape index: {}]
  %s3 = inlined_call_operand.vmem [shape: f32[2,64,1], index: 3, kind: input, shape index: {}]
  %s4 = inlined_call_operand.vmem [shape: f32[2,32,32], index: 4, kind: input, shape index: {}]
  %s5 = inlined_call_operand.vmem [shape: f32[2,32,1], index: 5, kind: input, shape index: {}]
  %s6 = inlined_call_operand.vmem [shape: f32[2,32,32], index: 6, kind: input, shape index: {}]
  %s7 = inlined_call_operand.vmem [shape: f32[2,1,32], index: 7, kind: input, shape index: {}]
  %s8 = inlined_call_operand.vmem [shape: bf16[2,32,2048], index: 8, kind: input, shape index: {}]
  %s9 = inlined_call_operand.vmem [shape: f32[2,1,2048], index: 9, kind: input, shape index: {}]
  %s10 = inlined_call_operand.vmem [shape: bf16[2,2048,32], index: 10, kind: input, shape index: {}]
  %s11 = inlined_call_operand.vmem [shape: f32[2,1,32], index: 11, kind: input, shape index: {}]
  %s12 = inlined_call_operand.vmem [shape: f32[2,1,32], index: 12, kind: input, shape index: {}]
  %s13 = inlined_call_operand.vmem [shape: f32[2,1,32], index: 13, kind: input, shape index: {}]
  %s14 = inlined_call_operand.vmem [shape: f32[2,1,32], index: 14, kind: input, shape index: {}]
  %s15 = inlined_call_operand.vmem [shape: f32[2,1,32], index: 15, kind: input, shape index: {}]
  %s16 = inlined_call_operand.hbm [shape: f32[16,32], index: 16, kind: output, shape index: {}]
  %s17 = sld [smem:[#allocation0]]
  $region74: #{tpu_custom_call.1} parent=0
    _
  %s19 = ssub.s32 1, %s17
  %s20 = scalar_select 0, %s19, %s17
  $region1: #{tpu_custom_call.1} parent=0
    #allocation2 [shape = 'u8[8192]{0}', space=vmem, size = 0x2000, scoped, tag = 'output window, operand 0, single buffered']
    #allocation3 [shape = 's32[1]{0}', space=sflag, size = 0x4, scoped, tag = 'scoped memory for tpu_custom_call.1']
    %21 = vsyncpa [#allocation3], 0
    // Predicated region
    $region2: #{tpu_custom_call.1} parent=1 // pred_check
      _
    $region3: #{tpu_custom_call.1} parent=1 // pred_check_branch
      %23 = sbr.rel (0) target = $region5
    $region4: #{tpu_custom_call.1} parent=1 // pred_region
      _
    $region5: #{tpu_custom_call.1} parent=1 // pred_fallthru
      _
    // Predicated region
    $region6: #{tpu_custom_call.1} parent=1 // pred_check
      _
    $region7: #{tpu_custom_call.1} parent=1 // pred_check_branch
      %25 = sbr.rel (0) target = $region9
    $region8: #{tpu_custom_call.1} parent=1 // pred_region
      _
    $region9: #{tpu_custom_call.1} parent=1 // pred_fallthru
      _
    // Predicated region
    $region10: #{tpu_custom_call.1} parent=1 // pred_check
      _
    $region11: #{tpu_custom_call.1} parent=1 // pred_check_branch
      %27 = sbr.rel (0) target = $region13
    $region12: #{tpu_custom_call.1} parent=1 // pred_region
      _
    $region13: #{tpu_custom_call.1} parent=1 // pred_fallthru
      _
    // Predicated region
    $region14: #{tpu_custom_call.1} parent=1 // pred_check
      _
    $region15: #{tpu_custom_call.1} parent=1 // pred_check_branch
      %29 = sbr.rel (0) target = $region17
    $region16: #{tpu_custom_call.1} parent=1 // pred_region
      _
    $region17: #{tpu_custom_call.1} parent=1 // pred_fallthru
      _
    // Predicated region
    $region18: #{tpu_custom_call.1} parent=1 // pred_check
      _
    $region19: #{tpu_custom_call.1} parent=1 // pred_check_branch
      %31 = sbr.rel (0) target = $region21
    $region20: #{tpu_custom_call.1} parent=1 // pred_region
      _
    $region21: #{tpu_custom_call.1} parent=1 // pred_fallthru
      _
    // Predicated region
    $region22: #{tpu_custom_call.1} parent=1 // pred_check
      _
    $region23: #{tpu_custom_call.1} parent=1 // pred_check_branch
      %33 = sbr.rel (0) target = $region25
    $region24: #{tpu_custom_call.1} parent=1 // pred_region
      _
    $region25: #{tpu_custom_call.1} parent=1 // pred_fallthru
      _
    // Predicated region
    $region26: #{tpu_custom_call.1} parent=1 // pred_check
      _
    $region27: #{tpu_custom_call.1} parent=1 // pred_check_branch
      %35 = sbr.rel (0) target = $region29
    $region28: #{tpu_custom_call.1} parent=1 // pred_region
      _
    $region29: #{tpu_custom_call.1} parent=1 // pred_fallthru
      _
    // Predicated region
    $region30: #{tpu_custom_call.1} parent=1 // pred_check
      _
    $region31: #{tpu_custom_call.1} parent=1 // pred_check_branch
      %37 = sbr.rel (0) target = $region33
    $region32: #{tpu_custom_call.1} parent=1 // pred_region
      _
    $region33: #{tpu_custom_call.1} parent=1 // pred_fallthru
      _
    // Predicated region
    $region34: #{tpu_custom_call.1} parent=1 // pred_check
      _
    $region35: #{tpu_custom_call.1} parent=1 // pred_check_branch
      %39 = sbr.rel (0) target = $region37
    $region36: #{tpu_custom_call.1} parent=1 // pred_region
      _
    $region37: #{tpu_custom_call.1} parent=1 // pred_fallthru
      _
    // Predicated region
    $region38: #{tpu_custom_call.1} parent=1 // pred_check
      _
    $region39: #{tpu_custom_call.1} parent=1 // pred_check_branch
      %41 = sbr.rel (0) target = $region41
    $region40: #{tpu_custom_call.1} parent=1 // pred_region
      _
    $region41: #{tpu_custom_call.1} parent=1 // pred_fallthru
      _
    // Predicated region
    $region42: #{tpu_custom_call.1} parent=1 // pred_check
      _
    $region43: #{tpu_custom_call.1} parent=1 // pred_check_branch
      %43 = sbr.rel (0) target = $region45
    $region44: #{tpu_custom_call.1} parent=1 // pred_region
      _
    $region45: #{tpu_custom_call.1} parent=1 // pred_fallthru
      _
    // Predicated region
    $region46: #{tpu_custom_call.1} parent=1 // pred_check
      _
    $region47: #{tpu_custom_call.1} parent=1 // pred_check_branch
      %45 = sbr.rel (0) target = $region49
    $region48: #{tpu_custom_call.1} parent=1 // pred_region
      _
    $region49: #{tpu_custom_call.1} parent=1 // pred_fallthru
      _
    // Predicated region
    $region50: #{tpu_custom_call.1} parent=1 // pred_check
      _
    $region51: #{tpu_custom_call.1} parent=1 // pred_check_branch
      %47 = sbr.rel (0) target = $region53
    $region52: #{tpu_custom_call.1} parent=1 // pred_region
      _
    $region53: #{tpu_custom_call.1} parent=1 // pred_fallthru
      _
    // Predicated region
    $region54: #{tpu_custom_call.1} parent=1 // pred_check
      _
    $region55: #{tpu_custom_call.1} parent=1 // pred_check_branch
      %49 = sbr.rel (0) target = $region57
    $region56: #{tpu_custom_call.1} parent=1 // pred_region
      _
    $region57: #{tpu_custom_call.1} parent=1 // pred_fallthru
      _
    // Predicated region
    $region58: #{tpu_custom_call.1} parent=1 // pred_check
      _
    $region59: #{tpu_custom_call.1} parent=1 // pred_check_branch
      %51 = sbr.rel (0) target = $region61
    $region60: #{tpu_custom_call.1} parent=1 // pred_region
      _
    $region61: #{tpu_custom_call.1} parent=1 // pred_fallthru
      _
    // Predicated region
    $region62: #{tpu_custom_call.1} parent=1 // pred_check
      _
    $region63: #{tpu_custom_call.1} parent=1 // pred_check_branch
      %53 = sbr.rel (0) target = $region65
    $region64: #{tpu_custom_call.1} parent=1 // pred_region
      _
    $region65: #{tpu_custom_call.1} parent=1 // pred_fallthru
      _
    %v54 = vld [vmem:[%s0] sm:$0xff]
    %v55 = vld [vmem:[%s0 + $0x8] sm:$0xff]
    %v56 = vld [vmem:[%s1] sm:$0xff]
    %v57 = vld [vmem:[%s1 + $0x8] sm:$0xff]
    %v58 = vadd.f32 %v54, %v56
    %v59 = vadd.f32 %v55, %v57
    %v60 = vld [vmem:[%s2] sm:$0xff]
    %v61 = vld [vmem:[%s2 + $0x8] sm:$0xff]
    %v62 = vld [vmem:[%s2 + $0x10] sm:$0xff]
    %v63 = vld [vmem:[%s2 + $0x18] sm:$0xff]
    %v64 = vld [vmem:[%s2 + $0x20] sm:$0xff]
    %v65 = vld [vmem:[%s2 + $0x28] sm:$0xff]
    %v66 = vld [vmem:[%s2 + $0x30] sm:$0xff]
    %v67 = vld [vmem:[%s2 + $0x38] sm:$0xff]
    %v68 = vld [vmem:[%s3] sm:$0xff]
    %v69 = vld [vmem:[%s3 + $0x8] sm:$0xff]
    %v70 = vld [vmem:[%s3 + $0x10] sm:$0xff]
    %v71 = vld [vmem:[%s3 + $0x18] sm:$0xff]
    %v72 = vld [vmem:[%s3 + $0x20] sm:$0xff]
    %v73 = vld [vmem:[%s3 + $0x28] sm:$0xff]
    %v74 = vld [vmem:[%s3 + $0x30] sm:$0xff]
    %v75 = vld [vmem:[%s3 + $0x38] sm:$0xff]
    %77 = vset.pattern.permute.xlu0 0
    %78 = vperm.xlu0 %77, %v68
    %v79 = vpop.permute.xlu0 %78
    %82 = vset.pattern.permute.xlu0 0
    %83 = vperm.xlu0 %82, %v69
    %v84 = vpop.permute.xlu0 %83
    %87 = vset.pattern.permute.xlu0 0
    %88 = vperm.xlu0 %87, %v70
    %v89 = vpop.permute.xlu0 %88
    %92 = vset.pattern.permute.xlu0 0
    %93 = vperm.xlu0 %92, %v71
    %v94 = vpop.permute.xlu0 %93
    %97 = vset.pattern.permute.xlu0 0
    %98 = vperm.xlu0 %97, %v72
    %v99 = vpop.permute.xlu0 %98
    %102 = vset.pattern.permute.xlu0 0
    %103 = vperm.xlu0 %102, %v73
    %v104 = vpop.permute.xlu0 %103
    %107 = vset.pattern.permute.xlu0 0
    %108 = vperm.xlu0 %107, %v74
    %v109 = vpop.permute.xlu0 %108
    %112 = vset.pattern.permute.xlu0 0
    %113 = vperm.xlu0 %112, %v75
    %v114 = vpop.permute.xlu0 %113
    %vm116 = vcmask 261120
    %v118 = vsel %vm116, %v60, 0
    %v121 = vsel %vm116, %v61, 0
    %v124 = vsel %vm116, %v62, 0
    %v127 = vsel %vm116, %v63, 0
    %v130 = vsel %vm116, %v64, 0
    %v133 = vsel %vm116, %v65, 0
    %v136 = vsel %vm116, %v66, 0
    %v139 = vsel %vm116, %v67, 0
    %v142 = vsel %vm116, %v58, 0
    %v145 = vsel %vm116, %v59, 0
    %147 = vmatprep.subr.mxu0 0.0
    %148 = vmatpush1.xpose.msra.mxu0 0.0
    %149 = vmatprep.subr.mxu0 0.0
    %150 = vmatpush1.xpose.msra.mxu0 0.0
    %151 = vmatprep.subr.mxu0 0.0
    %152 = vmatpush1.xpose.msra.mxu0 0.0
    %153 = vmatprep.subr.mxu0 0.0
    %154 = vmatpush1.xpose.msra.mxu0 0.0
    %155 = vmatprep.subr.mxu0 0.0
    %156 = vmatpush1.xpose.msra.mxu0 0.0
    %157 = vmatprep.subr.mxu0 0.0
    %158 = vmatpush1.xpose.msra.mxu0 0.0
    %159 = vmatprep.subr.mxu0 0.0
    %160 = vmatpush1.xpose.msra.mxu0 0.0
    %161 = vmatprep.subr.mxu0 0.0
    %162 = vmatpush1.xpose.msra.mxu0 0.0
    %163 = vmatprep.subr.mxu0 0.0
    %164 = vmatpush1.xpose.msra.mxu0 0.0
    %165 = vmatprep.subr.mxu0 0.0
    %166 = vmatpush1.xpose.msra.mxu0 0.0
    %167 = vmatprep.subr.mxu0 0.0
    %168 = vmatpush1.xpose.msra.mxu0 0.0
    %169 = vmatprep.subr.mxu0 0.0
    %170 = vmatpush1.xpose.msra.mxu0 0.0
    %171 = vmatprep.subr.mxu0 0.0
    %172 = vmatpush1.xpose.msra.mxu0 0.0
    %173 = vmatprep.subr.mxu0 0.0
    %174 = vmatpush1.xpose.msra.mxu0 0.0
    %175 = vmatprep.subr.mxu0 0.0
    %176 = vmatpush1.xpose.msra.mxu0 %v145
    %177 = vmatprep.subr.mxu0 0.0
    %178 = vmatpush1.xpose.msra.mxu0 %v142
    %179 = vmatprep.subr.mxu0 0.0
    %180 = vmatpush2.xpose.msra.mxu0 0.0
    %181 = vmatprep.subr.mxu0 0.0
    %182 = vmatpush2.xpose.msra.mxu0 0.0
    %183 = vmatprep.subr.mxu0 0.0
    %184 = vmatpush2.xpose.msra.mxu0 0.0
    %185 = vmatprep.subr.mxu0 0.0
    %186 = vmatpush2.xpose.msra.mxu0 0.0
    %187 = vmatprep.subr.mxu0 0.0
    %188 = vmatpush2.xpose.msra.mxu0 0.0
    %189 = vmatprep.subr.mxu0 0.0
    %190 = vmatpush2.xpose.msra.mxu0 0.0
    %191 = vmatprep.subr.mxu0 0.0
    %192 = vmatpush2.xpose.msra.mxu0 0.0
    %193 = vmatprep.subr.mxu0 0.0
    %194 = vmatpush2.xpose.msra.mxu0 0.0
    %195 = vmatprep.subr.mxu0 0.0
    %196 = vmatpush2.xpose.msra.mxu0 0.0
    %197 = vmatprep.subr.mxu0 0.0
    %198 = vmatpush2.xpose.msra.mxu0 0.0
    %199 = vmatprep.subr.mxu0 0.0
    %200 = vmatpush2.xpose.msra.mxu0 0.0
    %201 = vmatprep.subr.mxu0 0.0
    %202 = vmatpush2.xpose.msra.mxu0 0.0
    %203 = vmatprep.subr.mxu0 0.0
    %204 = vmatpush2.xpose.msra.mxu0 0.0
    %205 = vmatprep.subr.mxu0 0.0
    %206 = vmatpush2.xpose.msra.mxu0 0.0
    %207 = vmatprep.subr.mxu0 0.0
    %208 = vmatpush2.xpose.msra.mxu0 0.0
    %209 = vmatprep.subr.mxu0 0.0
    %210 = vmatpush2.xpose.msra.mxu0 0.0
    %211 = vmatprep.mubr.f32.mxu0 0.0
    %212 = vmatmul.mubr.f32.gmra.mxu0 %v118
    %v213 = vpop.f32.mrf.mxu0
    %v214 = vadd.f32 %v79, %v213
    %v215 = vpop.f32.mrf.mxu0
    %216 = vmatprep.mubr.f32.mxu0 0.0
    %217 = vmatmul.mubr.f32.gmra.mxu0 %v121
    %v218 = vpop.f32.mrf.mxu0
    %v219 = vadd.f32 %v84, %v218
    %v220 = vpop.f32.mrf.mxu0
    %221 = vmatprep.mubr.f32.mxu0 0.0
    %222 = vmatmul.mubr.f32.gmra.mxu0 %v124
    %v223 = vpop.f32.mrf.mxu0
    %v224 = vadd.f32 %v89, %v223
    %v225 = vpop.f32.mrf.mxu0
    %226 = vmatprep.mubr.f32.mxu0 0.0
    %227 = vmatmul.mubr.f32.gmra.mxu0 %v127
    %v228 = vpop.f32.mrf.mxu0
    %v229 = vadd.f32 %v94, %v228
    %v230 = vpop.f32.mrf.mxu0
    %231 = vmatprep.mubr.f32.mxu0 0.0
    %232 = vmatmul.mubr.f32.gmra.mxu0 %v130
    %v233 = vpop.f32.mrf.mxu0
    %v234 = vadd.f32 %v99, %v233
    %v235 = vpop.f32.mrf.mxu0
    %236 = vmatprep.mubr.f32.mxu0 0.0
    %237 = vmatmul.mubr.f32.gmra.mxu0 %v133
    %v238 = vpop.f32.mrf.mxu0
    %v239 = vadd.f32 %v104, %v238
    %v240 = vpop.f32.mrf.mxu0
    %241 = vmatprep.mubr.f32.mxu0 0.0
    %242 = vmatmul.mubr.f32.gmra.mxu0 %v136
    %v243 = vpop.f32.mrf.mxu0
    %v244 = vadd.f32 %v109, %v243
    %v245 = vpop.f32.mrf.mxu0
    %246 = vmatprep.mubr.f32.mxu0 0.0
    %247 = vmatmul.mubr.f32.gmra.mxu0 %v139
    %v248 = vpop.f32.mrf.mxu0
    %v249 = vadd.f32 %v114, %v248
    %v250 = vpop.f32.mrf.mxu0
    %251 = vdwg.mxu0
    %v252 = vld [vmem:[%s4] sm:$0xff]
    %v253 = vld [vmem:[%s4 + $0x8] sm:$0xff]
    %v254 = vld [vmem:[%s4 + $0x10] sm:$0xff]
    %v255 = vld [vmem:[%s4 + $0x18] sm:$0xff]
    %v256 = vld [vmem:[%s5] sm:$0xff]
    %v257 = vld [vmem:[%s5 + $0x8] sm:$0xff]
    %v258 = vld [vmem:[%s5 + $0x10] sm:$0xff]
    %v259 = vld [vmem:[%s5 + $0x18] sm:$0xff]
    %261 = vset.pattern.permute.xlu0 0
    %262 = vperm.xlu0 %261, %v256
    %v263 = vpop.permute.xlu0 %262
    %266 = vset.pattern.permute.xlu0 0
    %267 = vperm.xlu0 %266, %v257
    %v268 = vpop.permute.xlu0 %267
    %271 = vset.pattern.permute.xlu0 0
    %272 = vperm.xlu0 %271, %v258
    %v273 = vpop.permute.xlu0 %272
    %276 = vset.pattern.permute.xlu0 0
    %277 = vperm.xlu0 %276, %v259
    %v278 = vpop.permute.xlu0 %277
    %v281 = vsel %vm116, %v252, 0
    %v284 = vsel %vm116, %v253, 0
    %v287 = vsel %vm116, %v254, 0
    %v290 = vsel %vm116, %v255, 0
    %v293 = vsel %vm116, %v54, 0
    %v296 = vsel %vm116, %v55, 0
    %298 = vmatprep.subr.mxu0 0.0
    %299 = vmatpush1.xpose.msra.mxu0 0.0
    %300 = vmatprep.subr.mxu0 0.0
    %301 = vmatpush1.xpose.msra.mxu0 0.0
    %302 = vmatprep.subr.mxu0 0.0
    %303 = vmatpush1.xpose.msra.mxu0 0.0
    %304 = vmatprep.subr.mxu0 0.0
    %305 = vmatpush1.xpose.msra.mxu0 0.0
    %306 = vmatprep.subr.mxu0 0.0
    %307 = vmatpush1.xpose.msra.mxu0 0.0
    %308 = vmatprep.subr.mxu0 0.0
    %309 = vmatpush1.xpose.msra.mxu0 0.0
    %310 = vmatprep.subr.mxu0 0.0
    %311 = vmatpush1.xpose.msra.mxu0 0.0
    %312 = vmatprep.subr.mxu0 0.0
    %313 = vmatpush1.xpose.msra.mxu0 0.0
    %314 = vmatprep.subr.mxu0 0.0
    %315 = vmatpush1.xpose.msra.mxu0 0.0
    %316 = vmatprep.subr.mxu0 0.0
    %317 = vmatpush1.xpose.msra.mxu0 0.0
    %318 = vmatprep.subr.mxu0 0.0
    %319 = vmatpush1.xpose.msra.mxu0 0.0
    %320 = vmatprep.subr.mxu0 0.0
    %321 = vmatpush1.xpose.msra.mxu0 0.0
    %322 = vmatprep.subr.mxu0 0.0
    %323 = vmatpush1.xpose.msra.mxu0 0.0
    %324 = vmatprep.subr.mxu0 0.0
    %325 = vmatpush1.xpose.msra.mxu0 0.0
    %326 = vmatprep.subr.mxu0 0.0
    %327 = vmatpush1.xpose.msra.mxu0 %v296
    %328 = vmatprep.subr.mxu0 0.0
    %329 = vmatpush1.xpose.msra.mxu0 %v293
    %330 = vmatprep.subr.mxu0 0.0
    %331 = vmatpush2.xpose.msra.mxu0 0.0
    %332 = vmatprep.subr.mxu0 0.0
    %333 = vmatpush2.xpose.msra.mxu0 0.0
    %334 = vmatprep.subr.mxu0 0.0
    %335 = vmatpush2.xpose.msra.mxu0 0.0
    %336 = vmatprep.subr.mxu0 0.0
    %337 = vmatpush2.xpose.msra.mxu0 0.0
    %338 = vmatprep.subr.mxu0 0.0
    %339 = vmatpush2.xpose.msra.mxu0 0.0
    %340 = vmatprep.subr.mxu0 0.0
    %341 = vmatpush2.xpose.msra.mxu0 0.0
    %342 = vmatprep.subr.mxu0 0.0
    %343 = vmatpush2.xpose.msra.mxu0 0.0
    %344 = vmatprep.subr.mxu0 0.0
    %345 = vmatpush2.xpose.msra.mxu0 0.0
    %346 = vmatprep.subr.mxu0 0.0
    %347 = vmatpush2.xpose.msra.mxu0 0.0
    %348 = vmatprep.subr.mxu0 0.0
    %349 = vmatpush2.xpose.msra.mxu0 0.0
    %350 = vmatprep.subr.mxu0 0.0
    %351 = vmatpush2.xpose.msra.mxu0 0.0
    %352 = vmatprep.subr.mxu0 0.0
    %353 = vmatpush2.xpose.msra.mxu0 0.0
    %354 = vmatprep.subr.mxu0 0.0
    %355 = vmatpush2.xpose.msra.mxu0 0.0
    %356 = vmatprep.subr.mxu0 0.0
    %357 = vmatpush2.xpose.msra.mxu0 0.0
    %358 = vmatprep.subr.mxu0 0.0
    %359 = vmatpush2.xpose.msra.mxu0 0.0
    %360 = vmatprep.subr.mxu0 0.0
    %361 = vmatpush2.xpose.msra.mxu0 0.0
    %362 = vmatprep.mubr.f32.mxu0 0.0
    %363 = vmatmul.mubr.f32.gmra.mxu0 %v281
    %v364 = vpop.f32.mrf.mxu0
    %v365 = vadd.f32 %v263, %v364
    %v366 = vpop.f32.mrf.mxu0
    %367 = vmatprep.mubr.f32.mxu0 0.0
    %368 = vmatmul.mubr.f32.gmra.mxu0 %v284
    %v369 = vpop.f32.mrf.mxu0
    %v370 = vadd.f32 %v268, %v369
    %v371 = vpop.f32.mrf.mxu0
    %372 = vmatprep.mubr.f32.mxu0 0.0
    %373 = vmatmul.mubr.f32.gmra.mxu0 %v287
    %v374 = vpop.f32.mrf.mxu0
    %v375 = vadd.f32 %v273, %v374
    %v376 = vpop.f32.mrf.mxu0
    %377 = vmatprep.mubr.f32.mxu0 0.0
    %378 = vmatmul.mubr.f32.gmra.mxu0 %v290
    %v379 = vpop.f32.mrf.mxu0
    %v380 = vadd.f32 %v278, %v379
    %v381 = vpop.f32.mrf.mxu0
    %382 = vdwg.mxu0
    %383 = vxpose.xlu0.b32.start [1/16] %v214, 128
    %384 = vxpose.xlu0.b32.cont [2/16] 0.0, 128
    %385 = vxpose.xlu0.b32.cont [3/16] 0.0, 128
    %386 = vxpose.xlu0.b32.cont [4/16] 0.0, 128
    %387 = vxpose.xlu0.b32.cont [5/16] 0.0, 128
    %388 = vxpose.xlu0.b32.cont [6/16] 0.0, 128
    %389 = vxpose.xlu0.b32.cont [7/16] 0.0, 128
    %390 = vxpose.xlu0.b32.cont [8/16] 0.0, 128
    %391 = vxpose.xlu0.b32.cont [9/16] 0.0, 128
    %392 = vxpose.xlu0.b32.cont [10/16] 0.0, 128
    %393 = vxpose.xlu0.b32.cont [11/16] 0.0, 128
    %394 = vxpose.xlu0.b32.cont [12/16] 0.0, 128
    %395 = vxpose.xlu0.b32.cont [13/16] 0.0, 128
    %396 = vxpose.xlu0.b32.cont [14/16] 0.0, 128
    %397 = vxpose.xlu0.b32.cont [15/16] 0.0, 128
    %398 = vxpose.xlu0.b32.end [16/16] 0.0, 128
    %v399 = vpop.trf.xlu0
    %v400 = vpop.trf.xlu0
    %v401 = vpop.trf.xlu0
    %v402 = vpop.trf.xlu0
    %v403 = vpop.trf.xlu0
    %v404 = vpop.trf.xlu0
    %v405 = vpop.trf.xlu0
    %v406 = vpop.trf.xlu0
    %v407 = vpop.trf.xlu0
    %v408 = vpop.trf.xlu0
    %v409 = vpop.trf.xlu0
    %v410 = vpop.trf.xlu0
    %v411 = vpop.trf.xlu0
    %v412 = vpop.trf.xlu0
    %v413 = vpop.trf.xlu0
    %v414 = vpop.trf.xlu0
    %vm415 = vcmask 64512
    %v417 = vsel %vm415, %v399, 0
    %419 = vmatprep.subr.mxu0 0.0
    %420 = vmatpush1.msra.mxu0 0.0
    %421 = vmatprep.subr.mxu0 0.0
    %422 = vmatpush1.msra.mxu0 0.0
    %423 = vmatprep.subr.mxu0 0.0
    %424 = vmatpush1.msra.mxu0 0.0
    %425 = vmatprep.subr.mxu0 0.0
    %426 = vmatpush1.msra.mxu0 0.0
    %427 = vmatprep.subr.mxu0 0.0
    %428 = vmatpush1.msra.mxu0 0.0
    %429 = vmatprep.subr.mxu0 0.0
    %430 = vmatpush1.msra.mxu0 0.0
    %431 = vmatprep.subr.mxu0 0.0
    %432 = vmatpush1.msra.mxu0 0.0
    %433 = vmatprep.subr.mxu0 0.0
    %434 = vmatpush1.msra.mxu0 0.0
    %435 = vmatprep.subr.mxu0 0.0
    %436 = vmatpush1.msra.mxu0 0.0
    %437 = vmatprep.subr.mxu0 0.0
    %438 = vmatpush1.msra.mxu0 0.0
    %439 = vmatprep.subr.mxu0 0.0
    %440 = vmatpush1.msra.mxu0 0.0
    %441 = vmatprep.subr.mxu0 0.0
    %442 = vmatpush1.msra.mxu0 0.0
    %443 = vmatprep.subr.mxu0 0.0
    %444 = vmatpush1.msra.mxu0 0.0
    %445 = vmatprep.subr.mxu0 0.0
    %446 = vmatpush1.msra.mxu0 0.0
    %447 = vmatprep.subr.mxu0 0.0
    %448 = vmatpush1.msra.mxu0 0.0
    %449 = vmatprep.subr.mxu0 0.0
    %450 = vmatpush1.msra.mxu0 %v234
    %451 = vmatprep.subr.mxu0 0.0
    %452 = vmatpush2.msra.mxu0 0.0
    %453 = vmatprep.subr.mxu0 0.0
    %454 = vmatpush2.msra.mxu0 0.0
    %455 = vmatprep.subr.mxu0 0.0
    %456 = vmatpush2.msra.mxu0 0.0
    %457 = vmatprep.subr.mxu0 0.0
    %458 = vmatpush2.msra.mxu0 0.0
    %459 = vmatprep.subr.mxu0 0.0
    %460 = vmatpush2.msra.mxu0 0.0
    %461 = vmatprep.subr.mxu0 0.0
    %462 = vmatpush2.msra.mxu0 0.0
    %463 = vmatprep.subr.mxu0 0.0
    %464 = vmatpush2.msra.mxu0 0.0
    %465 = vmatprep.subr.mxu0 0.0
    %466 = vmatpush2.msra.mxu0 0.0
    %467 = vmatprep.subr.mxu0 0.0
    %468 = vmatpush2.msra.mxu0 0.0
    %469 = vmatprep.subr.mxu0 0.0
    %470 = vmatpush2.msra.mxu0 0.0
    %471 = vmatprep.subr.mxu0 0.0
    %472 = vmatpush2.msra.mxu0 0.0
    %473 = vmatprep.subr.mxu0 0.0
    %474 = vmatpush2.msra.mxu0 0.0
    %475 = vmatprep.subr.mxu0 0.0
    %476 = vmatpush2.msra.mxu0 0.0
    %477 = vmatprep.subr.mxu0 0.0
    %478 = vmatpush2.msra.mxu0 0.0
    %479 = vmatprep.subr.mxu0 0.0
    %480 = vmatpush2.msra.mxu0 0.0
    %481 = vmatprep.subr.mxu0 0.0
    %482 = vmatpush2.msra.mxu0 0.0
    %483 = vmatprep.mubr.f32.mxu0 0.0
    %484 = vmatmul.mubr.f32.gmra.mxu0 %v417
    %v485 = vpop.f32.mrf.mxu0
    %v486 = vadd.f32 0.0, %v485
    %v487 = vpop.f32.mrf.mxu0
    %488 = vdwg.mxu0
    %v489 = vmul.f32 %v486, 0.35355338
    %490 = vxpose.xlu0.b32.start [1/16] %v219, 128
    %491 = vxpose.xlu0.b32.cont [2/16] 0.0, 128
    %492 = vxpose.xlu0.b32.cont [3/16] 0.0, 128
    %493 = vxpose.xlu0.b32.cont [4/16] 0.0, 128
    %494 = vxpose.xlu0.b32.cont [5/16] 0.0, 128
    %495 = vxpose.xlu0.b32.cont [6/16] 0.0, 128
    %496 = vxpose.xlu0.b32.cont [7/16] 0.0, 128
    %497 = vxpose.xlu0.b32.cont [8/16] 0.0, 128
    %498 = vxpose.xlu0.b32.cont [9/16] 0.0, 128
    %499 = vxpose.xlu0.b32.cont [10/16] 0.0, 128
    %500 = vxpose.xlu0.b32.cont [11/16] 0.0, 128
    %501 = vxpose.xlu0.b32.cont [12/16] 0.0, 128
    %502 = vxpose.xlu0.b32.cont [13/16] 0.0, 128
    %503 = vxpose.xlu0.b32.cont [14/16] 0.0, 128
    %504 = vxpose.xlu0.b32.cont [15/16] 0.0, 128
    %505 = vxpose.xlu0.b32.end [16/16] 0.0, 128
    %v506 = vpop.trf.xlu0
    %v507 = vpop.trf.xlu0
    %v508 = vpop.trf.xlu0
    %v509 = vpop.trf.xlu0
    %v510 = vpop.trf.xlu0
    %v511 = vpop.trf.xlu0
    %v512 = vpop.trf.xlu0
    %v513 = vpop.trf.xlu0
    %v514 = vpop.trf.xlu0
    %v515 = vpop.trf.xlu0
    %v516 = vpop.trf.xlu0
    %v517 = vpop.trf.xlu0
    %v518 = vpop.trf.xlu0
    %v519 = vpop.trf.xlu0
    %v520 = vpop.trf.xlu0
    %v521 = vpop.trf.xlu0
    %v523 = vsel %vm415, %v506, 0
    %525 = vmatprep.subr.mxu0 0.0
    %526 = vmatpush1.msra.mxu0 0.0
    %527 = vmatprep.subr.mxu0 0.0
    %528 = vmatpush1.msra.mxu0 0.0
    %529 = vmatprep.subr.mxu0 0.0
    %530 = vmatpush1.msra.mxu0 0.0
    %531 = vmatprep.subr.mxu0 0.0
    %532 = vmatpush1.msra.mxu0 0.0
    %533 = vmatprep.subr.mxu0 0.0
    %534 = vmatpush1.msra.mxu0 0.0
    %535 = vmatprep.subr.mxu0 0.0
    %536 = vmatpush1.msra.mxu0 0.0
    %537 = vmatprep.subr.mxu0 0.0
    %538 = vmatpush1.msra.mxu0 0.0
    %539 = vmatprep.subr.mxu0 0.0
    %540 = vmatpush1.msra.mxu0 0.0
    %541 = vmatprep.subr.mxu0 0.0
    %542 = vmatpush1.msra.mxu0 0.0
    %543 = vmatprep.subr.mxu0 0.0
    %544 = vmatpush1.msra.mxu0 0.0
    %545 = vmatprep.subr.mxu0 0.0
    %546 = vmatpush1.msra.mxu0 0.0
    %547 = vmatprep.subr.mxu0 0.0
    %548 = vmatpush1.msra.mxu0 0.0
    %549 = vmatprep.subr.mxu0 0.0
    %550 = vmatpush1.msra.mxu0 0.0
    %551 = vmatprep.subr.mxu0 0.0
    %552 = vmatpush1.msra.mxu0 0.0
    %553 = vmatprep.subr.mxu0 0.0
    %554 = vmatpush1.msra.mxu0 0.0
    %555 = vmatprep.subr.mxu0 0.0
    %556 = vmatpush1.msra.mxu0 %v239
    %557 = vmatprep.subr.mxu0 0.0
    %558 = vmatpush2.msra.mxu0 0.0
    %559 = vmatprep.subr.mxu0 0.0
    %560 = vmatpush2.msra.mxu0 0.0
    %561 = vmatprep.subr.mxu0 0.0
    %562 = vmatpush2.msra.mxu0 0.0
    %563 = vmatprep.subr.mxu0 0.0
    %564 = vmatpush2.msra.mxu0 0.0
    %565 = vmatprep.subr.mxu0 0.0
    %566 = vmatpush2.msra.mxu0 0.0
    %567 = vmatprep.subr.mxu0 0.0
    %568 = vmatpush2.msra.mxu0 0.0
    %569 = vmatprep.subr.mxu0 0.0
    %570 = vmatpush2.msra.mxu0 0.0
    %571 = vmatprep.subr.mxu0 0.0
    %572 = vmatpush2.msra.mxu0 0.0
    %573 = vmatprep.subr.mxu0 0.0
    %574 = vmatpush2.msra.mxu0 0.0
    %575 = vmatprep.subr.mxu0 0.0
    %576 = vmatpush2.msra.mxu0 0.0
    %577 = vmatprep.subr.mxu0 0.0
    %578 = vmatpush2.msra.mxu0 0.0
    %579 = vmatprep.subr.mxu0 0.0
    %580 = vmatpush2.msra.mxu0 0.0
    %581 = vmatprep.subr.mxu0 0.0
    %582 = vmatpush2.msra.mxu0 0.0
    %583 = vmatprep.subr.mxu0 0.0
    %584 = vmatpush2.msra.mxu0 0.0
    %585 = vmatprep.subr.mxu0 0.0
    %586 = vmatpush2.msra.mxu0 0.0
    %587 = vmatprep.subr.mxu0 0.0
    %588 = vmatpush2.msra.mxu0 0.0
    %589 = vmatprep.mubr.f32.mxu0 0.0
    %590 = vmatmul.mubr.f32.gmra.mxu0 %v523
    %v591 = vpop.f32.mrf.mxu0
    %v592 = vadd.f32 0.0, %v591
    %v593 = vpop.f32.mrf.mxu0
    %594 = vdwg.mxu0
    %v595 = vmul.f32 %v592, 0.35355338
    %596 = vxpose.xlu0.b32.start [1/16] %v224, 128
    %597 = vxpose.xlu0.b32.cont [2/16] 0.0, 128
    %598 = vxpose.xlu0.b32.cont [3/16] 0.0, 128
    %599 = vxpose.xlu0.b32.cont [4/16] 0.0, 128
    %600 = vxpose.xlu0.b32.cont [5/16] 0.0, 128
    %601 = vxpose.xlu0.b32.cont [6/16] 0.0, 128
    %602 = vxpose.xlu0.b32.cont [7/16] 0.0, 128
    %603 = vxpose.xlu0.b32.cont [8/16] 0.0, 128
    %604 = vxpose.xlu0.b32.cont [9/16] 0.0, 128
    %605 = vxpose.xlu0.b32.cont [10/16] 0.0, 128
    %606 = vxpose.xlu0.b32.cont [11/16] 0.0, 128
    %607 = vxpose.xlu0.b32.cont [12/16] 0.0, 128
    %608 = vxpose.xlu0.b32.cont [13/16] 0.0, 128
    %609 = vxpose.xlu0.b32.cont [14/16] 0.0, 128
    %610 = vxpose.xlu0.b32.cont [15/16] 0.0, 128
    %611 = vxpose.xlu0.b32.end [16/16] 0.0, 128
    %v612 = vpop.trf.xlu0
    %v613 = vpop.trf.xlu0
    %v614 = vpop.trf.xlu0
    %v615 = vpop.trf.xlu0
    %v616 = vpop.trf.xlu0
    %v617 = vpop.trf.xlu0
    %v618 = vpop.trf.xlu0
    %v619 = vpop.trf.xlu0
    %v620 = vpop.trf.xlu0
    %v621 = vpop.trf.xlu0
    %v622 = vpop.trf.xlu0
    %v623 = vpop.trf.xlu0
    %v624 = vpop.trf.xlu0
    %v625 = vpop.trf.xlu0
    %v626 = vpop.trf.xlu0
    %v627 = vpop.trf.xlu0
    %v629 = vsel %vm415, %v612, 0
    %631 = vmatprep.subr.mxu0 0.0
    %632 = vmatpush1.msra.mxu0 0.0
    %633 = vmatprep.subr.mxu0 0.0
    %634 = vmatpush1.msra.mxu0 0.0
    %635 = vmatprep.subr.mxu0 0.0
    %636 = vmatpush1.msra.mxu0 0.0
    %637 = vmatprep.subr.mxu0 0.0
    %638 = vmatpush1.msra.mxu0 0.0
    %639 = vmatprep.subr.mxu0 0.0
    %640 = vmatpush1.msra.mxu0 0.0
    %641 = vmatprep.subr.mxu0 0.0
    %642 = vmatpush1.msra.mxu0 0.0
    %643 = vmatprep.subr.mxu0 0.0
    %644 = vmatpush1.msra.mxu0 0.0
    %645 = vmatprep.subr.mxu0 0.0
    %646 = vmatpush1.msra.mxu0 0.0
    %647 = vmatprep.subr.mxu0 0.0
    %648 = vmatpush1.msra.mxu0 0.0
    %649 = vmatprep.subr.mxu0 0.0
    %650 = vmatpush1.msra.mxu0 0.0
    %651 = vmatprep.subr.mxu0 0.0
    %652 = vmatpush1.msra.mxu0 0.0
    %653 = vmatprep.subr.mxu0 0.0
    %654 = vmatpush1.msra.mxu0 0.0
    %655 = vmatprep.subr.mxu0 0.0
    %656 = vmatpush1.msra.mxu0 0.0
    %657 = vmatprep.subr.mxu0 0.0
    %658 = vmatpush1.msra.mxu0 0.0
    %659 = vmatprep.subr.mxu0 0.0
    %660 = vmatpush1.msra.mxu0 0.0
    %661 = vmatprep.subr.mxu0 0.0
    %662 = vmatpush1.msra.mxu0 %v244
    %663 = vmatprep.subr.mxu0 0.0
    %664 = vmatpush2.msra.mxu0 0.0
    %665 = vmatprep.subr.mxu0 0.0
    %666 = vmatpush2.msra.mxu0 0.0
    %667 = vmatprep.subr.mxu0 0.0
    %668 = vmatpush2.msra.mxu0 0.0
    %669 = vmatprep.subr.mxu0 0.0
    %670 = vmatpush2.msra.mxu0 0.0
    %671 = vmatprep.subr.mxu0 0.0
    %672 = vmatpush2.msra.mxu0 0.0
    %673 = vmatprep.subr.mxu0 0.0
    %674 = vmatpush2.msra.mxu0 0.0
    %675 = vmatprep.subr.mxu0 0.0
    %676 = vmatpush2.msra.mxu0 0.0
    %677 = vmatprep.subr.mxu0 0.0
    %678 = vmatpush2.msra.mxu0 0.0
    %679 = vmatprep.subr.mxu0 0.0
    %680 = vmatpush2.msra.mxu0 0.0
    %681 = vmatprep.subr.mxu0 0.0
    %682 = vmatpush2.msra.mxu0 0.0
    %683 = vmatprep.subr.mxu0 0.0
    %684 = vmatpush2.msra.mxu0 0.0
    %685 = vmatprep.subr.mxu0 0.0
    %686 = vmatpush2.msra.mxu0 0.0
    %687 = vmatprep.subr.mxu0 0.0
    %688 = vmatpush2.msra.mxu0 0.0
    %689 = vmatprep.subr.mxu0 0.0
    %690 = vmatpush2.msra.mxu0 0.0
    %691 = vmatprep.subr.mxu0 0.0
    %692 = vmatpush2.msra.mxu0 0.0
    %693 = vmatprep.subr.mxu0 0.0
    %694 = vmatpush2.msra.mxu0 0.0
    %695 = vmatprep.mubr.f32.mxu0 0.0
    %696 = vmatmul.mubr.f32.gmra.mxu0 %v629
    %v697 = vpop.f32.mrf.mxu0
    %v698 = vadd.f32 0.0, %v697
    %v699 = vpop.f32.mrf.mxu0
    %700 = vdwg.mxu0
    %v701 = vmul.f32 %v698, 0.35355338
    %702 = vxpose.xlu0.b32.start [1/16] %v229, 128
    %703 = vxpose.xlu0.b32.cont [2/16] 0.0, 128
    %704 = vxpose.xlu0.b32.cont [3/16] 0.0, 128
    %705 = vxpose.xlu0.b32.cont [4/16] 0.0, 128
    %706 = vxpose.xlu0.b32.cont [5/16] 0.0, 128
    %707 = vxpose.xlu0.b32.cont [6/16] 0.0, 128
    %708 = vxpose.xlu0.b32.cont [7/16] 0.0, 128
    %709 = vxpose.xlu0.b32.cont [8/16] 0.0, 128
    %710 = vxpose.xlu0.b32.cont [9/16] 0.0, 128
    %711 = vxpose.xlu0.b32.cont [10/16] 0.0, 128
    %712 = vxpose.xlu0.b32.cont [11/16] 0.0, 128
    %713 = vxpose.xlu0.b32.cont [12/16] 0.0, 128
    %714 = vxpose.xlu0.b32.cont [13/16] 0.0, 128
    %715 = vxpose.xlu0.b32.cont [14/16] 0.0, 128
    %716 = vxpose.xlu0.b32.cont [15/16] 0.0, 128
    %717 = vxpose.xlu0.b32.end [16/16] 0.0, 128
    %v718 = vpop.trf.xlu0
    %v719 = vpop.trf.xlu0
    %v720 = vpop.trf.xlu0
    %v721 = vpop.trf.xlu0
    %v722 = vpop.trf.xlu0
    %v723 = vpop.trf.xlu0
    %v724 = vpop.trf.xlu0
    %v725 = vpop.trf.xlu0
    %v726 = vpop.trf.xlu0
    %v727 = vpop.trf.xlu0
    %v728 = vpop.trf.xlu0
    %v729 = vpop.trf.xlu0
    %v730 = vpop.trf.xlu0
    %v731 = vpop.trf.xlu0
    %v732 = vpop.trf.xlu0
    %v733 = vpop.trf.xlu0
    %v735 = vsel %vm415, %v718, 0
    %737 = vmatprep.subr.mxu0 0.0
    %738 = vmatpush1.msra.mxu0 0.0
    %739 = vmatprep.subr.mxu0 0.0
    %740 = vmatpush1.msra.mxu0 0.0
    %741 = vmatprep.subr.mxu0 0.0
    %742 = vmatpush1.msra.mxu0 0.0
    %743 = vmatprep.subr.mxu0 0.0
    %744 = vmatpush1.msra.mxu0 0.0
    %745 = vmatprep.subr.mxu0 0.0
    %746 = vmatpush1.msra.mxu0 0.0
    %747 = vmatprep.subr.mxu0 0.0
    %748 = vmatpush1.msra.mxu0 0.0
    %749 = vmatprep.subr.mxu0 0.0
    %750 = vmatpush1.msra.mxu0 0.0
    %751 = vmatprep.subr.mxu0 0.0
    %752 = vmatpush1.msra.mxu0 0.0
    %753 = vmatprep.subr.mxu0 0.0
    %754 = vmatpush1.msra.mxu0 0.0
    %755 = vmatprep.subr.mxu0 0.0
    %756 = vmatpush1.msra.mxu0 0.0
    %757 = vmatprep.subr.mxu0 0.0
    %758 = vmatpush1.msra.mxu0 0.0
    %759 = vmatprep.subr.mxu0 0.0
    %760 = vmatpush1.msra.mxu0 0.0
    %761 = vmatprep.subr.mxu0 0.0
    %762 = vmatpush1.msra.mxu0 0.0
    %763 = vmatprep.subr.mxu0 0.0
    %764 = vmatpush1.msra.mxu0 0.0
    %765 = vmatprep.subr.mxu0 0.0
    %766 = vmatpush1.msra.mxu0 0.0
    %767 = vmatprep.subr.mxu0 0.0
    %768 = vmatpush1.msra.mxu0 %v249
    %769 = vmatprep.subr.mxu0 0.0
    %770 = vmatpush2.msra.mxu0 0.0
    %771 = vmatprep.subr.mxu0 0.0
    %772 = vmatpush2.msra.mxu0 0.0
    %773 = vmatprep.subr.mxu0 0.0
    %774 = vmatpush2.msra.mxu0 0.0
    %775 = vmatprep.subr.mxu0 0.0
    %776 = vmatpush2.msra.mxu0 0.0
    %777 = vmatprep.subr.mxu0 0.0
    %778 = vmatpush2.msra.mxu0 0.0
    %779 = vmatprep.subr.mxu0 0.0
    %780 = vmatpush2.msra.mxu0 0.0
    %781 = vmatprep.subr.mxu0 0.0
    %782 = vmatpush2.msra.mxu0 0.0
    %783 = vmatprep.subr.mxu0 0.0
    %784 = vmatpush2.msra.mxu0 0.0
    %785 = vmatprep.subr.mxu0 0.0
    %786 = vmatpush2.msra.mxu0 0.0
    %787 = vmatprep.subr.mxu0 0.0
    %788 = vmatpush2.msra.mxu0 0.0
    %789 = vmatprep.subr.mxu0 0.0
    %790 = vmatpush2.msra.mxu0 0.0
    %791 = vmatprep.subr.mxu0 0.0
    %792 = vmatpush2.msra.mxu0 0.0
    %793 = vmatprep.subr.mxu0 0.0
    %794 = vmatpush2.msra.mxu0 0.0
    %795 = vmatprep.subr.mxu0 0.0
    %796 = vmatpush2.msra.mxu0 0.0
    %797 = vmatprep.subr.mxu0 0.0
    %798 = vmatpush2.msra.mxu0 0.0
    %799 = vmatprep.subr.mxu0 0.0
    %800 = vmatpush2.msra.mxu0 0.0
    %801 = vmatprep.mubr.f32.mxu0 0.0
    %802 = vmatmul.mubr.f32.gmra.mxu0 %v735
    %v803 = vpop.f32.mrf.mxu0
    %v804 = vadd.f32 0.0, %v803
    %v805 = vpop.f32.mrf.mxu0
    %806 = vdwg.mxu0
    %v807 = vmul.f32 %v804, 0.35355338
    %809 = vrot.lane.b32.xlu0 %v214, 120
    %v810 = vpop.permute.xlu0 %809
    %812 = vxpose.xlu0.b32.start [1/16] %v810, 128
    %813 = vxpose.xlu0.b32.cont [2/16] 0.0, 128
    %814 = vxpose.xlu0.b32.cont [3/16] 0.0, 128
    %815 = vxpose.xlu0.b32.cont [4/16] 0.0, 128
    %816 = vxpose.xlu0.b32.cont [5/16] 0.0, 128
    %817 = vxpose.xlu0.b32.cont [6/16] 0.0, 128
    %818 = vxpose.xlu0.b32.cont [7/16] 0.0, 128
    %819 = vxpose.xlu0.b32.cont [8/16] 0.0, 128
    %820 = vxpose.xlu0.b32.cont [9/16] 0.0, 128
    %821 = vxpose.xlu0.b32.cont [10/16] 0.0, 128
    %822 = vxpose.xlu0.b32.cont [11/16] 0.0, 128
    %823 = vxpose.xlu0.b32.cont [12/16] 0.0, 128
    %824 = vxpose.xlu0.b32.cont [13/16] 0.0, 128
    %825 = vxpose.xlu0.b32.cont [14/16] 0.0, 128
    %826 = vxpose.xlu0.b32.cont [15/16] 0.0, 128
    %827 = vxpose.xlu0.b32.end [16/16] 0.0, 128
    %v828 = vpop.trf.xlu0
    %v829 = vpop.trf.xlu0
    %v830 = vpop.trf.xlu0
    %v831 = vpop.trf.xlu0
    %v832 = vpop.trf.xlu0
    %v833 = vpop.trf.xlu0
    %v834 = vpop.trf.xlu0
    %v835 = vpop.trf.xlu0
    %v836 = vpop.trf.xlu0
    %v837 = vpop.trf.xlu0
    %v838 = vpop.trf.xlu0
    %v839 = vpop.trf.xlu0
    %v840 = vpop.trf.xlu0
    %v841 = vpop.trf.xlu0
    %v842 = vpop.trf.xlu0
    %v843 = vpop.trf.xlu0
    %845 = vrot.lane.b32.xlu0 %v234, 120
    %v846 = vpop.permute.xlu0 %845
    %v849 = vsel %vm415, %v828, 0
    %851 = vmatprep.subr.mxu0 0.0
    %852 = vmatpush1.msra.mxu0 0.0
    %853 = vmatprep.subr.mxu0 0.0
    %854 = vmatpush1.msra.mxu0 0.0
    %855 = vmatprep.subr.mxu0 0.0
    %856 = vmatpush1.msra.mxu0 0.0
    %857 = vmatprep.subr.mxu0 0.0
    %858 = vmatpush1.msra.mxu0 0.0
    %859 = vmatprep.subr.mxu0 0.0
    %860 = vmatpush1.msra.mxu0 0.0
    %861 = vmatprep.subr.mxu0 0.0
    %862 = vmatpush1.msra.mxu0 0.0
    %863 = vmatprep.subr.mxu0 0.0
    %864 = vmatpush1.msra.mxu0 0.0
    %865 = vmatprep.subr.mxu0 0.0
    %866 = vmatpush1.msra.mxu0 0.0
    %867 = vmatprep.subr.mxu0 0.0
    %868 = vmatpush1.msra.mxu0 0.0
    %869 = vmatprep.subr.mxu0 0.0
    %870 = vmatpush1.msra.mxu0 0.0
    %871 = vmatprep.subr.mxu0 0.0
    %872 = vmatpush1.msra.mxu0 0.0
    %873 = vmatprep.subr.mxu0 0.0
    %874 = vmatpush1.msra.mxu0 0.0
    %875 = vmatprep.subr.mxu0 0.0
    %876 = vmatpush1.msra.mxu0 0.0
    %877 = vmatprep.subr.mxu0 0.0
    %878 = vmatpush1.msra.mxu0 0.0
    %879 = vmatprep.subr.mxu0 0.0
    %880 = vmatpush1.msra.mxu0 0.0
    %881 = vmatprep.subr.mxu0 0.0
    %882 = vmatpush1.msra.mxu0 %v846
    %883 = vmatprep.subr.mxu0 0.0
    %884 = vmatpush2.msra.mxu0 0.0
    %885 = vmatprep.subr.mxu0 0.0
    %886 = vmatpush2.msra.mxu0 0.0
    %887 = vmatprep.subr.mxu0 0.0
    %888 = vmatpush2.msra.mxu0 0.0
    %889 = vmatprep.subr.mxu0 0.0
    %890 = vmatpush2.msra.mxu0 0.0
    %891 = vmatprep.subr.mxu0 0.0
    %892 = vmatpush2.msra.mxu0 0.0
    %893 = vmatprep.subr.mxu0 0.0
    %894 = vmatpush2.msra.mxu0 0.0
    %895 = vmatprep.subr.mxu0 0.0
    %896 = vmatpush2.msra.mxu0 0.0
    %897 = vmatprep.subr.mxu0 0.0
    %898 = vmatpush2.msra.mxu0 0.0
    %899 = vmatprep.subr.mxu0 0.0
    %900 = vmatpush2.msra.mxu0 0.0
    %901 = vmatprep.subr.mxu0 0.0
    %902 = vmatpush2.msra.mxu0 0.0
    %903 = vmatprep.subr.mxu0 0.0
    %904 = vmatpush2.msra.mxu0 0.0
    %905 = vmatprep.subr.mxu0 0.0
    %906 = vmatpush2.msra.mxu0 0.0
    %907 = vmatprep.subr.mxu0 0.0
    %908 = vmatpush2.msra.mxu0 0.0
    %909 = vmatprep.subr.mxu0 0.0
    %910 = vmatpush2.msra.mxu0 0.0
    %911 = vmatprep.subr.mxu0 0.0
    %912 = vmatpush2.msra.mxu0 0.0
    %913 = vmatprep.subr.mxu0 0.0
    %914 = vmatpush2.msra.mxu0 0.0
    %915 = vmatprep.mubr.f32.mxu0 0.0
    %916 = vmatmul.mubr.f32.gmra.mxu0 %v849
    %v917 = vpop.f32.mrf.mxu0
    %v918 = vadd.f32 0.0, %v917
    %v919 = vpop.f32.mrf.mxu0
    %920 = vdwg.mxu0
    %v921 = vmul.f32 %v918, 0.35355338
    %923 = vrot.lane.b32.xlu0 %v219, 120
    %v924 = vpop.permute.xlu0 %923
    %926 = vxpose.xlu0.b32.start [1/16] %v924, 128
    %927 = vxpose.xlu0.b32.cont [2/16] 0.0, 128
    %928 = vxpose.xlu0.b32.cont [3/16] 0.0, 128
    %929 = vxpose.xlu0.b32.cont [4/16] 0.0, 128
    %930 = vxpose.xlu0.b32.cont [5/16] 0.0, 128
    %931 = vxpose.xlu0.b32.cont [6/16] 0.0, 128
    %932 = vxpose.xlu0.b32.cont [7/16] 0.0, 128
    %933 = vxpose.xlu0.b32.cont [8/16] 0.0, 128
    %934 = vxpose.xlu0.b32.cont [9/16] 0.0, 128
    %935 = vxpose.xlu0.b32.cont [10/16] 0.0, 128
    %936 = vxpose.xlu0.b32.cont [11/16] 0.0, 128
    %937 = vxpose.xlu0.b32.cont [12/16] 0.0, 128
    %938 = vxpose.xlu0.b32.cont [13/16] 0.0, 128
    %939 = vxpose.xlu0.b32.cont [14/16] 0.0, 128
    %940 = vxpose.xlu0.b32.cont [15/16] 0.0, 128
    %941 = vxpose.xlu0.b32.end [16/16] 0.0, 128
    %v942 = vpop.trf.xlu0
    %v943 = vpop.trf.xlu0
    %v944 = vpop.trf.xlu0
    %v945 = vpop.trf.xlu0
    %v946 = vpop.trf.xlu0
    %v947 = vpop.trf.xlu0
    %v948 = vpop.trf.xlu0
    %v949 = vpop.trf.xlu0
    %v950 = vpop.trf.xlu0
    %v951 = vpop.trf.xlu0
    %v952 = vpop.trf.xlu0
    %v953 = vpop.trf.xlu0
    %v954 = vpop.trf.xlu0
    %v955 = vpop.trf.xlu0
    %v956 = vpop.trf.xlu0
    %v957 = vpop.trf.xlu0
    %959 = vrot.lane.b32.xlu0 %v239, 120
    %v960 = vpop.permute.xlu0 %959
    %v963 = vsel %vm415, %v942, 0
    %965 = vmatprep.subr.mxu0 0.0
    %966 = vmatpush1.msra.mxu0 0.0
    %967 = vmatprep.subr.mxu0 0.0
    %968 = vmatpush1.msra.mxu0 0.0
    %969 = vmatprep.subr.mxu0 0.0
    %970 = vmatpush1.msra.mxu0 0.0
    %971 = vmatprep.subr.mxu0 0.0
    %972 = vmatpush1.msra.mxu0 0.0
    %973 = vmatprep.subr.mxu0 0.0
    %974 = vmatpush1.msra.mxu0 0.0
    %975 = vmatprep.subr.mxu0 0.0
    %976 = vmatpush1.msra.mxu0 0.0
    %977 = vmatprep.subr.mxu0 0.0
    %978 = vmatpush1.msra.mxu0 0.0
    %979 = vmatprep.subr.mxu0 0.0
    %980 = vmatpush1.msra.mxu0 0.0
    %981 = vmatprep.subr.mxu0 0.0
    %982 = vmatpush1.msra.mxu0 0.0
    %983 = vmatprep.subr.mxu0 0.0
    %984 = vmatpush1.msra.mxu0 0.0
    %985 = vmatprep.subr.mxu0 0.0
    %986 = vmatpush1.msra.mxu0 0.0
    %987 = vmatprep.subr.mxu0 0.0
    %988 = vmatpush1.msra.mxu0 0.0
    %989 = vmatprep.subr.mxu0 0.0
    %990 = vmatpush1.msra.mxu0 0.0
    %991 = vmatprep.subr.mxu0 0.0
    %992 = vmatpush1.msra.mxu0 0.0
    %993 = vmatprep.subr.mxu0 0.0
    %994 = vmatpush1.msra.mxu0 0.0
    %995 = vmatprep.subr.mxu0 0.0
    %996 = vmatpush1.msra.mxu0 %v960
    %997 = vmatprep.subr.mxu0 0.0
    %998 = vmatpush2.msra.mxu0 0.0
    %999 = vmatprep.subr.mxu0 0.0
    %1000 = vmatpush2.msra.mxu0 0.0
    %1001 = vmatprep.subr.mxu0 0.0
    %1002 = vmatpush2.msra.mxu0 0.0
    %1003 = vmatprep.subr.mxu0 0.0
    %1004 = vmatpush2.msra.mxu0 0.0
    %1005 = vmatprep.subr.mxu0 0.0
    %1006 = vmatpush2.msra.mxu0 0.0
    %1007 = vmatprep.subr.mxu0 0.0
    %1008 = vmatpush2.msra.mxu0 0.0
    %1009 = vmatprep.subr.mxu0 0.0
    %1010 = vmatpush2.msra.mxu0 0.0
    %1011 = vmatprep.subr.mxu0 0.0
    %1012 = vmatpush2.msra.mxu0 0.0
    %1013 = vmatprep.subr.mxu0 0.0
    %1014 = vmatpush2.msra.mxu0 0.0
    %1015 = vmatprep.subr.mxu0 0.0
    %1016 = vmatpush2.msra.mxu0 0.0
    %1017 = vmatprep.subr.mxu0 0.0
    %1018 = vmatpush2.msra.mxu0 0.0
    %1019 = vmatprep.subr.mxu0 0.0
    %1020 = vmatpush2.msra.mxu0 0.0
    %1021 = vmatprep.subr.mxu0 0.0
    %1022 = vmatpush2.msra.mxu0 0.0
    %1023 = vmatprep.subr.mxu0 0.0
    %1024 = vmatpush2.msra.mxu0 0.0
    %1025 = vmatprep.subr.mxu0 0.0
    %1026 = vmatpush2.msra.mxu0 0.0
    %1027 = vmatprep.subr.mxu0 0.0
    %1028 = vmatpush2.msra.mxu0 0.0
    %1029 = vmatprep.mubr.f32.mxu0 0.0
    %1030 = vmatmul.mubr.f32.gmra.mxu0 %v963
    %v1031 = vpop.f32.mrf.mxu0
    %v1032 = vadd.f32 0.0, %v1031
    %v1033 = vpop.f32.mrf.mxu0
    %1034 = vdwg.mxu0
    %v1035 = vmul.f32 %v1032, 0.35355338
    %1037 = vrot.lane.b32.xlu0 %v224, 120
    %v1038 = vpop.permute.xlu0 %1037
    %1040 = vxpose.xlu0.b32.start [1/16] %v1038, 128
    %1041 = vxpose.xlu0.b32.cont [2/16] 0.0, 128
    %1042 = vxpose.xlu0.b32.cont [3/16] 0.0, 128
    %1043 = vxpose.xlu0.b32.cont [4/16] 0.0, 128
    %1044 = vxpose.xlu0.b32.cont [5/16] 0.0, 128
    %1045 = vxpose.xlu0.b32.cont [6/16] 0.0, 128
    %1046 = vxpose.xlu0.b32.cont [7/16] 0.0, 128
    %1047 = vxpose.xlu0.b32.cont [8/16] 0.0, 128
    %1048 = vxpose.xlu0.b32.cont [9/16] 0.0, 128
    %1049 = vxpose.xlu0.b32.cont [10/16] 0.0, 128
    %1050 = vxpose.xlu0.b32.cont [11/16] 0.0, 128
    %1051 = vxpose.xlu0.b32.cont [12/16] 0.0, 128
    %1052 = vxpose.xlu0.b32.cont [13/16] 0.0, 128
    %1053 = vxpose.xlu0.b32.cont [14/16] 0.0, 128
    %1054 = vxpose.xlu0.b32.cont [15/16] 0.0, 128
    %1055 = vxpose.xlu0.b32.end [16/16] 0.0, 128
    %v1056 = vpop.trf.xlu0
    %v1057 = vpop.trf.xlu0
    %v1058 = vpop.trf.xlu0
    %v1059 = vpop.trf.xlu0
    %v1060 = vpop.trf.xlu0
    %v1061 = vpop.trf.xlu0
    %v1062 = vpop.trf.xlu0
    %v1063 = vpop.trf.xlu0
    %v1064 = vpop.trf.xlu0
    %v1065 = vpop.trf.xlu0
    %v1066 = vpop.trf.xlu0
    %v1067 = vpop.trf.xlu0
    %v1068 = vpop.trf.xlu0
    %v1069 = vpop.trf.xlu0
    %v1070 = vpop.trf.xlu0
    %v1071 = vpop.trf.xlu0
    %1073 = vrot.lane.b32.xlu0 %v244, 120
    %v1074 = vpop.permute.xlu0 %1073
    %v1077 = vsel %vm415, %v1056, 0
    %1079 = vmatprep.subr.mxu0 0.0
    %1080 = vmatpush1.msra.mxu0 0.0
    %1081 = vmatprep.subr.mxu0 0.0
    %1082 = vmatpush1.msra.mxu0 0.0
    %1083 = vmatprep.subr.mxu0 0.0
    %1084 = vmatpush1.msra.mxu0 0.0
    %1085 = vmatprep.subr.mxu0 0.0
    %1086 = vmatpush1.msra.mxu0 0.0
    %1087 = vmatprep.subr.mxu0 0.0
    %1088 = vmatpush1.msra.mxu0 0.0
    %1089 = vmatprep.subr.mxu0 0.0
    %1090 = vmatpush1.msra.mxu0 0.0
    %1091 = vmatprep.subr.mxu0 0.0
    %1092 = vmatpush1.msra.mxu0 0.0
    %1093 = vmatprep.subr.mxu0 0.0
    %1094 = vmatpush1.msra.mxu0 0.0
    %1095 = vmatprep.subr.mxu0 0.0
    %1096 = vmatpush1.msra.mxu0 0.0
    %1097 = vmatprep.subr.mxu0 0.0
    %1098 = vmatpush1.msra.mxu0 0.0
    %1099 = vmatprep.subr.mxu0 0.0
    %1100 = vmatpush1.msra.mxu0 0.0
    %1101 = vmatprep.subr.mxu0 0.0
    %1102 = vmatpush1.msra.mxu0 0.0
    %1103 = vmatprep.subr.mxu0 0.0
    %1104 = vmatpush1.msra.mxu0 0.0
    %1105 = vmatprep.subr.mxu0 0.0
    %1106 = vmatpush1.msra.mxu0 0.0
    %1107 = vmatprep.subr.mxu0 0.0
    %1108 = vmatpush1.msra.mxu0 0.0
    %1109 = vmatprep.subr.mxu0 0.0
    %1110 = vmatpush1.msra.mxu0 %v1074
    %1111 = vmatprep.subr.mxu0 0.0
    %1112 = vmatpush2.msra.mxu0 0.0
    %1113 = vmatprep.subr.mxu0 0.0
    %1114 = vmatpush2.msra.mxu0 0.0
    %1115 = vmatprep.subr.mxu0 0.0
    %1116 = vmatpush2.msra.mxu0 0.0
    %1117 = vmatprep.subr.mxu0 0.0
    %1118 = vmatpush2.msra.mxu0 0.0
    %1119 = vmatprep.subr.mxu0 0.0
    %1120 = vmatpush2.msra.mxu0 0.0
    %1121 = vmatprep.subr.mxu0 0.0
    %1122 = vmatpush2.msra.mxu0 0.0
    %1123 = vmatprep.subr.mxu0 0.0
    %1124 = vmatpush2.msra.mxu0 0.0
    %1125 = vmatprep.subr.mxu0 0.0
    %1126 = vmatpush2.msra.mxu0 0.0
    %1127 = vmatprep.subr.mxu0 0.0
    %1128 = vmatpush2.msra.mxu0 0.0
    %1129 = vmatprep.subr.mxu0 0.0
    %1130 = vmatpush2.msra.mxu0 0.0
    %1131 = vmatprep.subr.mxu0 0.0
    %1132 = vmatpush2.msra.mxu0 0.0
    %1133 = vmatprep.subr.mxu0 0.0
    %1134 = vmatpush2.msra.mxu0 0.0
    %1135 = vmatprep.subr.mxu0 0.0
    %1136 = vmatpush2.msra.mxu0 0.0
    %1137 = vmatprep.subr.mxu0 0.0
    %1138 = vmatpush2.msra.mxu0 0.0
    %1139 = vmatprep.subr.mxu0 0.0
    %1140 = vmatpush2.msra.mxu0 0.0
    %1141 = vmatprep.subr.mxu0 0.0
    %1142 = vmatpush2.msra.mxu0 0.0
    %1143 = vmatprep.mubr.f32.mxu0 0.0
    %1144 = vmatmul.mubr.f32.gmra.mxu0 %v1077
    %v1145 = vpop.f32.mrf.mxu0
    %v1146 = vadd.f32 0.0, %v1145
    %v1147 = vpop.f32.mrf.mxu0
    %1148 = vdwg.mxu0
    %v1149 = vmul.f32 %v1146, 0.35355338
    %1151 = vrot.lane.b32.xlu0 %v229, 120
    %v1152 = vpop.permute.xlu0 %1151
    %1154 = vxpose.xlu0.b32.start [1/16] %v1152, 128
    %1155 = vxpose.xlu0.b32.cont [2/16] 0.0, 128
    %1156 = vxpose.xlu0.b32.cont [3/16] 0.0, 128
    %1157 = vxpose.xlu0.b32.cont [4/16] 0.0, 128
    %1158 = vxpose.xlu0.b32.cont [5/16] 0.0, 128
    %1159 = vxpose.xlu0.b32.cont [6/16] 0.0, 128
    %1160 = vxpose.xlu0.b32.cont [7/16] 0.0, 128
    %1161 = vxpose.xlu0.b32.cont [8/16] 0.0, 128
    %1162 = vxpose.xlu0.b32.cont [9/16] 0.0, 128
    %1163 = vxpose.xlu0.b32.cont [10/16] 0.0, 128
    %1164 = vxpose.xlu0.b32.cont [11/16] 0.0, 128
    %1165 = vxpose.xlu0.b32.cont [12/16] 0.0, 128
    %1166 = vxpose.xlu0.b32.cont [13/16] 0.0, 128
    %1167 = vxpose.xlu0.b32.cont [14/16] 0.0, 128
    %1168 = vxpose.xlu0.b32.cont [15/16] 0.0, 128
    %1169 = vxpose.xlu0.b32.end [16/16] 0.0, 128
    %v1170 = vpop.trf.xlu0
    %v1171 = vpop.trf.xlu0
    %v1172 = vpop.trf.xlu0
    %v1173 = vpop.trf.xlu0
    %v1174 = vpop.trf.xlu0
    %v1175 = vpop.trf.xlu0
    %v1176 = vpop.trf.xlu0
    %v1177 = vpop.trf.xlu0
    %v1178 = vpop.trf.xlu0
    %v1179 = vpop.trf.xlu0
    %v1180 = vpop.trf.xlu0
    %v1181 = vpop.trf.xlu0
    %v1182 = vpop.trf.xlu0
    %v1183 = vpop.trf.xlu0
    %v1184 = vpop.trf.xlu0
    %v1185 = vpop.trf.xlu0
    %1187 = vrot.lane.b32.xlu0 %v249, 120
    %v1188 = vpop.permute.xlu0 %1187
    %v1191 = vsel %vm415, %v1170, 0
    %1193 = vmatprep.subr.mxu0 0.0
    %1194 = vmatpush1.msra.mxu0 0.0
    %1195 = vmatprep.subr.mxu0 0.0
    %1196 = vmatpush1.msra.mxu0 0.0
    %1197 = vmatprep.subr.mxu0 0.0
    %1198 = vmatpush1.msra.mxu0 0.0
    %1199 = vmatprep.subr.mxu0 0.0
    %1200 = vmatpush1.msra.mxu0 0.0
    %1201 = vmatprep.subr.mxu0 0.0
    %1202 = vmatpush1.msra.mxu0 0.0
    %1203 = vmatprep.subr.mxu0 0.0
    %1204 = vmatpush1.msra.mxu0 0.0
    %1205 = vmatprep.subr.mxu0 0.0
    %1206 = vmatpush1.msra.mxu0 0.0
    %1207 = vmatprep.subr.mxu0 0.0
    %1208 = vmatpush1.msra.mxu0 0.0
    %1209 = vmatprep.subr.mxu0 0.0
    %1210 = vmatpush1.msra.mxu0 0.0
    %1211 = vmatprep.subr.mxu0 0.0
    %1212 = vmatpush1.msra.mxu0 0.0
    %1213 = vmatprep.subr.mxu0 0.0
    %1214 = vmatpush1.msra.mxu0 0.0
    %1215 = vmatprep.subr.mxu0 0.0
    %1216 = vmatpush1.msra.mxu0 0.0
    %1217 = vmatprep.subr.mxu0 0.0
    %1218 = vmatpush1.msra.mxu0 0.0
    %1219 = vmatprep.subr.mxu0 0.0
    %1220 = vmatpush1.msra.mxu0 0.0
    %1221 = vmatprep.subr.mxu0 0.0
    %1222 = vmatpush1.msra.mxu0 0.0
    %1223 = vmatprep.subr.mxu0 0.0
    %1224 = vmatpush1.msra.mxu0 %v1188
    %1225 = vmatprep.subr.mxu0 0.0
    %1226 = vmatpush2.msra.mxu0 0.0
    %1227 = vmatprep.subr.mxu0 0.0
    %1228 = vmatpush2.msra.mxu0 0.0
    %1229 = vmatprep.subr.mxu0 0.0
    %1230 = vmatpush2.msra.mxu0 0.0
    %1231 = vmatprep.subr.mxu0 0.0
    %1232 = vmatpush2.msra.mxu0 0.0
    %1233 = vmatprep.subr.mxu0 0.0
    %1234 = vmatpush2.msra.mxu0 0.0
    %1235 = vmatprep.subr.mxu0 0.0
    %1236 = vmatpush2.msra.mxu0 0.0
    %1237 = vmatprep.subr.mxu0 0.0
    %1238 = vmatpush2.msra.mxu0 0.0
    %1239 = vmatprep.subr.mxu0 0.0
    %1240 = vmatpush2.msra.mxu0 0.0
    %1241 = vmatprep.subr.mxu0 0.0
    %1242 = vmatpush2.msra.mxu0 0.0
    %1243 = vmatprep.subr.mxu0 0.0
    %1244 = vmatpush2.msra.mxu0 0.0
    %1245 = vmatprep.subr.mxu0 0.0
    %1246 = vmatpush2.msra.mxu0 0.0
    %1247 = vmatprep.subr.mxu0 0.0
    %1248 = vmatpush2.msra.mxu0 0.0
    %1249 = vmatprep.subr.mxu0 0.0
    %1250 = vmatpush2.msra.mxu0 0.0
    %1251 = vmatprep.subr.mxu0 0.0
    %1252 = vmatpush2.msra.mxu0 0.0
    %1253 = vmatprep.subr.mxu0 0.0
    %1254 = vmatpush2.msra.mxu0 0.0
    %1255 = vmatprep.subr.mxu0 0.0
    %1256 = vmatpush2.msra.mxu0 0.0
    %1257 = vmatprep.mubr.f32.mxu0 0.0
    %1258 = vmatmul.mubr.f32.gmra.mxu0 %v1191
    %v1259 = vpop.f32.mrf.mxu0
    %v1260 = vadd.f32 0.0, %v1259
    %v1261 = vpop.f32.mrf.mxu0
    %1262 = vdwg.mxu0
    %v1263 = vmul.f32 %v1260, 0.35355338
    %v1264 = vsel %vm415, %v489, -inf
    %1265 = vmax.xlane.f32.xlu0 %v1264
    %v1266 = vpop.xlane.xlu0 %1265
    %v1267 = vsel %vm415, %v595, -inf
    %1268 = vmax.xlane.f32.xlu0 %v1267
    %v1269 = vpop.xlane.xlu0 %1268
    %v1270 = vsel %vm415, %v701, -inf
    %1271 = vmax.xlane.f32.xlu0 %v1270
    %v1272 = vpop.xlane.xlu0 %1271
    %v1273 = vsel %vm415, %v807, -inf
    %1274 = vmax.xlane.f32.xlu0 %v1273
    %v1275 = vpop.xlane.xlu0 %1274
    %v1276 = vsel %vm415, %v921, -inf
    %1277 = vmax.xlane.f32.xlu0 %v1276
    %v1278 = vpop.xlane.xlu0 %1277
    %v1279 = vsel %vm415, %v1035, -inf
    %1280 = vmax.xlane.f32.xlu0 %v1279
    %v1281 = vpop.xlane.xlu0 %1280
    %v1282 = vsel %vm415, %v1149, -inf
    %1283 = vmax.xlane.f32.xlu0 %v1282
    %v1284 = vpop.xlane.xlu0 %1283
    %v1285 = vsel %vm415, %v1263, -inf
    %1286 = vmax.xlane.f32.xlu0 %v1285
    %v1287 = vpop.xlane.xlu0 %1286
    %v1288 = vsub.f32 %v489, %v1266
    %v1289 = vsub.f32 %v595, %v1269
    %v1290 = vsub.f32 %v701, %v1272
    %v1291 = vsub.f32 %v807, %v1275
    %v1292 = vsub.f32 %v921, %v1278
    %v1293 = vsub.f32 %v1035, %v1281
    %v1294 = vsub.f32 %v1149, %v1284
    %v1295 = vsub.f32 %v1263, %v1287
    %v1296 = vmul.f32 %v1288, 1.442695
    %v1297 = vpow.pop %v1296
    %v1298 = vmul.f32 %v1289, 1.442695
    %v1299 = vpow.pop %v1298
    %v1300 = vmul.f32 %v1290, 1.442695
    %v1301 = vpow.pop %v1300
    %v1302 = vmul.f32 %v1291, 1.442695
    %v1303 = vpow.pop %v1302
    %v1304 = vmul.f32 %v1292, 1.442695
    %v1305 = vpow.pop %v1304
    %v1306 = vmul.f32 %v1293, 1.442695
    %v1307 = vpow.pop %v1306
    %v1308 = vmul.f32 %v1294, 1.442695
    %v1309 = vpow.pop %v1308
    %v1310 = vmul.f32 %v1295, 1.442695
    %v1311 = vpow.pop %v1310
    %v1312 = vsel %vm415, %v1297, 0.0
    %1313 = vadd.xlane.f32.xlu0 %v1312
    %v1314 = vpop.xlane.xlu0 %1313
    %v1315 = vsel %vm415, %v1299, 0.0
    %1316 = vadd.xlane.f32.xlu0 %v1315
    %v1317 = vpop.xlane.xlu0 %1316
    %v1318 = vsel %vm415, %v1301, 0.0
    %1319 = vadd.xlane.f32.xlu0 %v1318
    %v1320 = vpop.xlane.xlu0 %1319
    %v1321 = vsel %vm415, %v1303, 0.0
    %1322 = vadd.xlane.f32.xlu0 %v1321
    %v1323 = vpop.xlane.xlu0 %1322
    %v1324 = vsel %vm415, %v1305, 0.0
    %1325 = vadd.xlane.f32.xlu0 %v1324
    %v1326 = vpop.xlane.xlu0 %1325
    %v1327 = vsel %vm415, %v1307, 0.0
    %1328 = vadd.xlane.f32.xlu0 %v1327
    %v1329 = vpop.xlane.xlu0 %1328
    %v1330 = vsel %vm415, %v1309, 0.0
    %1331 = vadd.xlane.f32.xlu0 %v1330
    %v1332 = vpop.xlane.xlu0 %1331
    %v1333 = vsel %vm415, %v1311, 0.0
    %1334 = vadd.xlane.f32.xlu0 %v1333
    %v1335 = vpop.xlane.xlu0 %1334
    %v1336 = vrcp.pop %v1314
    %v1337 = vrcp.pop %v1317
    %v1338 = vrcp.pop %v1320
    %v1339 = vrcp.pop %v1323
    %v1340 = vrcp.pop %v1326
    %v1341 = vrcp.pop %v1329
    %v1342 = vrcp.pop %v1332
    %v1343 = vrcp.pop %v1335
    %v1344 = vmul.f32 %v1297, %v1336
    %v1345 = vmul.f32 %v1299, %v1337
    %v1346 = vmul.f32 %v1301, %v1338
    %v1347 = vmul.f32 %v1303, %v1339
    %v1348 = vmul.f32 %v1305, %v1340
    %v1349 = vmul.f32 %v1307, %v1341
    %v1350 = vmul.f32 %v1309, %v1342
    %v1351 = vmul.f32 %v1311, %v1343
    %v1353 = vsel %vm415, %v365, 0
    %v1356 = vsel %vm415, %v1344, 0
    %1358 = vmatprep.subr.mxu0 0.0
    %1359 = vmatpush1.xpose.msra.mxu0 0.0
    %1360 = vmatprep.subr.mxu0 0.0
    %1361 = vmatpush1.xpose.msra.mxu0 0.0
    %1362 = vmatprep.subr.mxu0 0.0
    %1363 = vmatpush1.xpose.msra.mxu0 0.0
    %1364 = vmatprep.subr.mxu0 0.0
    %1365 = vmatpush1.xpose.msra.mxu0 0.0
    %1366 = vmatprep.subr.mxu0 0.0
    %1367 = vmatpush1.xpose.msra.mxu0 0.0
    %1368 = vmatprep.subr.mxu0 0.0
    %1369 = vmatpush1.xpose.msra.mxu0 0.0
    %1370 = vmatprep.subr.mxu0 0.0
    %1371 = vmatpush1.xpose.msra.mxu0 0.0
    %1372 = vmatprep.subr.mxu0 0.0
    %1373 = vmatpush1.xpose.msra.mxu0 0.0
    %1374 = vmatprep.subr.mxu0 0.0
    %1375 = vmatpush1.xpose.msra.mxu0 0.0
    %1376 = vmatprep.subr.mxu0 0.0
    %1377 = vmatpush1.xpose.msra.mxu0 0.0
    %1378 = vmatprep.subr.mxu0 0.0
    %1379 = vmatpush1.xpose.msra.mxu0 0.0
    %1380 = vmatprep.subr.mxu0 0.0
    %1381 = vmatpush1.xpose.msra.mxu0 0.0
    %1382 = vmatprep.subr.mxu0 0.0
    %1383 = vmatpush1.xpose.msra.mxu0 0.0
    %1384 = vmatprep.subr.mxu0 0.0
    %1385 = vmatpush1.xpose.msra.mxu0 0.0
    %1386 = vmatprep.subr.mxu0 0.0
    %1387 = vmatpush1.xpose.msra.mxu0 0.0
    %1388 = vmatprep.subr.mxu0 0.0
    %1389 = vmatpush1.xpose.msra.mxu0 %v1356
    %1390 = vmatprep.subr.mxu0 0.0
    %1391 = vmatpush2.xpose.msra.mxu0 0.0
    %1392 = vmatprep.subr.mxu0 0.0
    %1393 = vmatpush2.xpose.msra.mxu0 0.0
    %1394 = vmatprep.subr.mxu0 0.0
    %1395 = vmatpush2.xpose.msra.mxu0 0.0
    %1396 = vmatprep.subr.mxu0 0.0
    %1397 = vmatpush2.xpose.msra.mxu0 0.0
    %1398 = vmatprep.subr.mxu0 0.0
    %1399 = vmatpush2.xpose.msra.mxu0 0.0
    %1400 = vmatprep.subr.mxu0 0.0
    %1401 = vmatpush2.xpose.msra.mxu0 0.0
    %1402 = vmatprep.subr.mxu0 0.0
    %1403 = vmatpush2.xpose.msra.mxu0 0.0
    %1404 = vmatprep.subr.mxu0 0.0
    %1405 = vmatpush2.xpose.msra.mxu0 0.0
    %1406 = vmatprep.subr.mxu0 0.0
    %1407 = vmatpush2.xpose.msra.mxu0 0.0
    %1408 = vmatprep.subr.mxu0 0.0
    %1409 = vmatpush2.xpose.msra.mxu0 0.0
    %1410 = vmatprep.subr.mxu0 0.0
    %1411 = vmatpush2.xpose.msra.mxu0 0.0
    %1412 = vmatprep.subr.mxu0 0.0
    %1413 = vmatpush2.xpose.msra.mxu0 0.0
    %1414 = vmatprep.subr.mxu0 0.0
    %1415 = vmatpush2.xpose.msra.mxu0 0.0
    %1416 = vmatprep.subr.mxu0 0.0
    %1417 = vmatpush2.xpose.msra.mxu0 0.0
    %1418 = vmatprep.subr.mxu0 0.0
    %1419 = vmatpush2.xpose.msra.mxu0 0.0
    %1420 = vmatprep.subr.mxu0 0.0
    %1421 = vmatpush2.xpose.msra.mxu0 0.0
    %1422 = vmatprep.mubr.f32.mxu0 0.0
    %1423 = vmatmul.mubr.f32.gmra.mxu0 %v1353
    %v1424 = vpop.f32.mrf.mxu0
    %v1425 = vadd.f32 0.0, %v1424
    %v1426 = vpop.f32.mrf.mxu0
    %1427 = vdwg.mxu0
    %v1429 = vsel %vm415, %v370, 0
    %v1432 = vsel %vm415, %v1345, 0
    %1434 = vmatprep.subr.mxu0 0.0
    %1435 = vmatpush1.xpose.msra.mxu0 0.0
    %1436 = vmatprep.subr.mxu0 0.0
    %1437 = vmatpush1.xpose.msra.mxu0 0.0
    %1438 = vmatprep.subr.mxu0 0.0
    %1439 = vmatpush1.xpose.msra.mxu0 0.0
    %1440 = vmatprep.subr.mxu0 0.0
    %1441 = vmatpush1.xpose.msra.mxu0 0.0
    %1442 = vmatprep.subr.mxu0 0.0
    %1443 = vmatpush1.xpose.msra.mxu0 0.0
    %1444 = vmatprep.subr.mxu0 0.0
    %1445 = vmatpush1.xpose.msra.mxu0 0.0
    %1446 = vmatprep.subr.mxu0 0.0
    %1447 = vmatpush1.xpose.msra.mxu0 0.0
    %1448 = vmatprep.subr.mxu0 0.0
    %1449 = vmatpush1.xpose.msra.mxu0 0.0
    %1450 = vmatprep.subr.mxu0 0.0
    %1451 = vmatpush1.xpose.msra.mxu0 0.0
    %1452 = vmatprep.subr.mxu0 0.0
    %1453 = vmatpush1.xpose.msra.mxu0 0.0
    %1454 = vmatprep.subr.mxu0 0.0
    %1455 = vmatpush1.xpose.msra.mxu0 0.0
    %1456 = vmatprep.subr.mxu0 0.0
    %1457 = vmatpush1.xpose.msra.mxu0 0.0
    %1458 = vmatprep.subr.mxu0 0.0
    %1459 = vmatpush1.xpose.msra.mxu0 0.0
    %1460 = vmatprep.subr.mxu0 0.0
    %1461 = vmatpush1.xpose.msra.mxu0 0.0
    %1462 = vmatprep.subr.mxu0 0.0
    %1463 = vmatpush1.xpose.msra.mxu0 0.0
    %1464 = vmatprep.subr.mxu0 0.0
    %1465 = vmatpush1.xpose.msra.mxu0 %v1432
    %1466 = vmatprep.subr.mxu0 0.0
    %1467 = vmatpush2.xpose.msra.mxu0 0.0
    %1468 = vmatprep.subr.mxu0 0.0
    %1469 = vmatpush2.xpose.msra.mxu0 0.0
    %1470 = vmatprep.subr.mxu0 0.0
    %1471 = vmatpush2.xpose.msra.mxu0 0.0
    %1472 = vmatprep.subr.mxu0 0.0
    %1473 = vmatpush2.xpose.msra.mxu0 0.0
    %1474 = vmatprep.subr.mxu0 0.0
    %1475 = vmatpush2.xpose.msra.mxu0 0.0
    %1476 = vmatprep.subr.mxu0 0.0
    %1477 = vmatpush2.xpose.msra.mxu0 0.0
    %1478 = vmatprep.subr.mxu0 0.0
    %1479 = vmatpush2.xpose.msra.mxu0 0.0
    %1480 = vmatprep.subr.mxu0 0.0
    %1481 = vmatpush2.xpose.msra.mxu0 0.0
    %1482 = vmatprep.subr.mxu0 0.0
    %1483 = vmatpush2.xpose.msra.mxu0 0.0
    %1484 = vmatprep.subr.mxu0 0.0
    %1485 = vmatpush2.xpose.msra.mxu0 0.0
    %1486 = vmatprep.subr.mxu0 0.0
    %1487 = vmatpush2.xpose.msra.mxu0 0.0
    %1488 = vmatprep.subr.mxu0 0.0
    %1489 = vmatpush2.xpose.msra.mxu0 0.0
    %1490 = vmatprep.subr.mxu0 0.0
    %1491 = vmatpush2.xpose.msra.mxu0 0.0
    %1492 = vmatprep.subr.mxu0 0.0
    %1493 = vmatpush2.xpose.msra.mxu0 0.0
    %1494 = vmatprep.subr.mxu0 0.0
    %1495 = vmatpush2.xpose.msra.mxu0 0.0
    %1496 = vmatprep.subr.mxu0 0.0
    %1497 = vmatpush2.xpose.msra.mxu0 0.0
    %1498 = vmatprep.mubr.f32.mxu0 0.0
    %1499 = vmatmul.mubr.f32.gmra.mxu0 %v1429
    %v1500 = vpop.f32.mrf.mxu0
    %v1501 = vadd.f32 0.0, %v1500
    %v1502 = vpop.f32.mrf.mxu0
    %1503 = vdwg.mxu0
    %v1505 = vsel %vm415, %v375, 0
    %v1508 = vsel %vm415, %v1346, 0
    %1510 = vmatprep.subr.mxu0 0.0
    %1511 = vmatpush1.xpose.msra.mxu0 0.0
    %1512 = vmatprep.subr.mxu0 0.0
    %1513 = vmatpush1.xpose.msra.mxu0 0.0
    %1514 = vmatprep.subr.mxu0 0.0
    %1515 = vmatpush1.xpose.msra.mxu0 0.0
    %1516 = vmatprep.subr.mxu0 0.0
    %1517 = vmatpush1.xpose.msra.mxu0 0.0
    %1518 = vmatprep.subr.mxu0 0.0
    %1519 = vmatpush1.xpose.msra.mxu0 0.0
    %1520 = vmatprep.subr.mxu0 0.0
    %1521 = vmatpush1.xpose.msra.mxu0 0.0
    %1522 = vmatprep.subr.mxu0 0.0
    %1523 = vmatpush1.xpose.msra.mxu0 0.0
    %1524 = vmatprep.subr.mxu0 0.0
    %1525 = vmatpush1.xpose.msra.mxu0 0.0
    %1526 = vmatprep.subr.mxu0 0.0
    %1527 = vmatpush1.xpose.msra.mxu0 0.0
    %1528 = vmatprep.subr.mxu0 0.0
    %1529 = vmatpush1.xpose.msra.mxu0 0.0
    %1530 = vmatprep.subr.mxu0 0.0
    %1531 = vmatpush1.xpose.msra.mxu0 0.0
    %1532 = vmatprep.subr.mxu0 0.0
    %1533 = vmatpush1.xpose.msra.mxu0 0.0
    %1534 = vmatprep.subr.mxu0 0.0
    %1535 = vmatpush1.xpose.msra.mxu0 0.0
    %1536 = vmatprep.subr.mxu0 0.0
    %1537 = vmatpush1.xpose.msra.mxu0 0.0
    %1538 = vmatprep.subr.mxu0 0.0
    %1539 = vmatpush1.xpose.msra.mxu0 0.0
    %1540 = vmatprep.subr.mxu0 0.0
    %1541 = vmatpush1.xpose.msra.mxu0 %v1508
    %1542 = vmatprep.subr.mxu0 0.0
    %1543 = vmatpush2.xpose.msra.mxu0 0.0
    %1544 = vmatprep.subr.mxu0 0.0
    %1545 = vmatpush2.xpose.msra.mxu0 0.0
    %1546 = vmatprep.subr.mxu0 0.0
    %1547 = vmatpush2.xpose.msra.mxu0 0.0
    %1548 = vmatprep.subr.mxu0 0.0
    %1549 = vmatpush2.xpose.msra.mxu0 0.0
    %1550 = vmatprep.subr.mxu0 0.0
    %1551 = vmatpush2.xpose.msra.mxu0 0.0
    %1552 = vmatprep.subr.mxu0 0.0
    %1553 = vmatpush2.xpose.msra.mxu0 0.0
    %1554 = vmatprep.subr.mxu0 0.0
    %1555 = vmatpush2.xpose.msra.mxu0 0.0
    %1556 = vmatprep.subr.mxu0 0.0
    %1557 = vmatpush2.xpose.msra.mxu0 0.0
    %1558 = vmatprep.subr.mxu0 0.0
    %1559 = vmatpush2.xpose.msra.mxu0 0.0
    %1560 = vmatprep.subr.mxu0 0.0
    %1561 = vmatpush2.xpose.msra.mxu0 0.0
    %1562 = vmatprep.subr.mxu0 0.0
    %1563 = vmatpush2.xpose.msra.mxu0 0.0
    %1564 = vmatprep.subr.mxu0 0.0
    %1565 = vmatpush2.xpose.msra.mxu0 0.0
    %1566 = vmatprep.subr.mxu0 0.0
    %1567 = vmatpush2.xpose.msra.mxu0 0.0
    %1568 = vmatprep.subr.mxu0 0.0
    %1569 = vmatpush2.xpose.msra.mxu0 0.0
    %1570 = vmatprep.subr.mxu0 0.0
    %1571 = vmatpush2.xpose.msra.mxu0 0.0
    %1572 = vmatprep.subr.mxu0 0.0
    %1573 = vmatpush2.xpose.msra.mxu0 0.0
    %1574 = vmatprep.mubr.f32.mxu0 0.0
    %1575 = vmatmul.mubr.f32.gmra.mxu0 %v1505
    %v1576 = vpop.f32.mrf.mxu0
    %v1577 = vadd.f32 0.0, %v1576
    %v1578 = vpop.f32.mrf.mxu0
    %1579 = vdwg.mxu0
    %v1581 = vsel %vm415, %v380, 0
    %v1584 = vsel %vm415, %v1347, 0
    %1586 = vmatprep.subr.mxu0 0.0
    %1587 = vmatpush1.xpose.msra.mxu0 0.0
    %1588 = vmatprep.subr.mxu0 0.0
    %1589 = vmatpush1.xpose.msra.mxu0 0.0
    %1590 = vmatprep.subr.mxu0 0.0
    %1591 = vmatpush1.xpose.msra.mxu0 0.0
    %1592 = vmatprep.subr.mxu0 0.0
    %1593 = vmatpush1.xpose.msra.mxu0 0.0
    %1594 = vmatprep.subr.mxu0 0.0
    %1595 = vmatpush1.xpose.msra.mxu0 0.0
    %1596 = vmatprep.subr.mxu0 0.0
    %1597 = vmatpush1.xpose.msra.mxu0 0.0
    %1598 = vmatprep.subr.mxu0 0.0
    %1599 = vmatpush1.xpose.msra.mxu0 0.0
    %1600 = vmatprep.subr.mxu0 0.0
    %1601 = vmatpush1.xpose.msra.mxu0 0.0
    %1602 = vmatprep.subr.mxu0 0.0
    %1603 = vmatpush1.xpose.msra.mxu0 0.0
    %1604 = vmatprep.subr.mxu0 0.0
    %1605 = vmatpush1.xpose.msra.mxu0 0.0
    %1606 = vmatprep.subr.mxu0 0.0
    %1607 = vmatpush1.xpose.msra.mxu0 0.0
    %1608 = vmatprep.subr.mxu0 0.0
    %1609 = vmatpush1.xpose.msra.mxu0 0.0
    %1610 = vmatprep.subr.mxu0 0.0
    %1611 = vmatpush1.xpose.msra.mxu0 0.0
    %1612 = vmatprep.subr.mxu0 0.0
    %1613 = vmatpush1.xpose.msra.mxu0 0.0
    %1614 = vmatprep.subr.mxu0 0.0
    %1615 = vmatpush1.xpose.msra.mxu0 0.0
    %1616 = vmatprep.subr.mxu0 0.0
    %1617 = vmatpush1.xpose.msra.mxu0 %v1584
    %1618 = vmatprep.subr.mxu0 0.0
    %1619 = vmatpush2.xpose.msra.mxu0 0.0
    %1620 = vmatprep.subr.mxu0 0.0
    %1621 = vmatpush2.xpose.msra.mxu0 0.0
    %1622 = vmatprep.subr.mxu0 0.0
    %1623 = vmatpush2.xpose.msra.mxu0 0.0
    %1624 = vmatprep.subr.mxu0 0.0
    %1625 = vmatpush2.xpose.msra.mxu0 0.0
    %1626 = vmatprep.subr.mxu0 0.0
    %1627 = vmatpush2.xpose.msra.mxu0 0.0
    %1628 = vmatprep.subr.mxu0 0.0
    %1629 = vmatpush2.xpose.msra.mxu0 0.0
    %1630 = vmatprep.subr.mxu0 0.0
    %1631 = vmatpush2.xpose.msra.mxu0 0.0
    %1632 = vmatprep.subr.mxu0 0.0
    %1633 = vmatpush2.xpose.msra.mxu0 0.0
    %1634 = vmatprep.subr.mxu0 0.0
    %1635 = vmatpush2.xpose.msra.mxu0 0.0
    %1636 = vmatprep.subr.mxu0 0.0
    %1637 = vmatpush2.xpose.msra.mxu0 0.0
    %1638 = vmatprep.subr.mxu0 0.0
    %1639 = vmatpush2.xpose.msra.mxu0 0.0
    %1640 = vmatprep.subr.mxu0 0.0
    %1641 = vmatpush2.xpose.msra.mxu0 0.0
    %1642 = vmatprep.subr.mxu0 0.0
    %1643 = vmatpush2.xpose.msra.mxu0 0.0
    %1644 = vmatprep.subr.mxu0 0.0
    %1645 = vmatpush2.xpose.msra.mxu0 0.0
    %1646 = vmatprep.subr.mxu0 0.0
    %1647 = vmatpush2.xpose.msra.mxu0 0.0
    %1648 = vmatprep.subr.mxu0 0.0
    %1649 = vmatpush2.xpose.msra.mxu0 0.0
    %1650 = vmatprep.mubr.f32.mxu0 0.0
    %1651 = vmatmul.mubr.f32.gmra.mxu0 %v1581
    %v1652 = vpop.f32.mrf.mxu0
    %v1653 = vadd.f32 0.0, %v1652
    %v1654 = vpop.f32.mrf.mxu0
    %1655 = vdwg.mxu0
    %1656 = vrot.lane.b32.xlu0 %v365, 120
    %v1657 = vpop.permute.xlu0 %1656
    %v1658 = vsel %vm415, %v1657, 0
    %v1661 = vsel %vm415, %v1348, 0
    %1663 = vmatprep.subr.mxu0 0.0
    %1664 = vmatpush1.xpose.msra.mxu0 0.0
    %1665 = vmatprep.subr.mxu0 0.0
    %1666 = vmatpush1.xpose.msra.mxu0 0.0
    %1667 = vmatprep.subr.mxu0 0.0
    %1668 = vmatpush1.xpose.msra.mxu0 0.0
    %1669 = vmatprep.subr.mxu0 0.0
    %1670 = vmatpush1.xpose.msra.mxu0 0.0
    %1671 = vmatprep.subr.mxu0 0.0
    %1672 = vmatpush1.xpose.msra.mxu0 0.0
    %1673 = vmatprep.subr.mxu0 0.0
    %1674 = vmatpush1.xpose.msra.mxu0 0.0
    %1675 = vmatprep.subr.mxu0 0.0
    %1676 = vmatpush1.xpose.msra.mxu0 0.0
    %1677 = vmatprep.subr.mxu0 0.0
    %1678 = vmatpush1.xpose.msra.mxu0 0.0
    %1679 = vmatprep.subr.mxu0 0.0
    %1680 = vmatpush1.xpose.msra.mxu0 0.0
    %1681 = vmatprep.subr.mxu0 0.0
    %1682 = vmatpush1.xpose.msra.mxu0 0.0
    %1683 = vmatprep.subr.mxu0 0.0
    %1684 = vmatpush1.xpose.msra.mxu0 0.0
    %1685 = vmatprep.subr.mxu0 0.0
    %1686 = vmatpush1.xpose.msra.mxu0 0.0
    %1687 = vmatprep.subr.mxu0 0.0
    %1688 = vmatpush1.xpose.msra.mxu0 0.0
    %1689 = vmatprep.subr.mxu0 0.0
    %1690 = vmatpush1.xpose.msra.mxu0 0.0
    %1691 = vmatprep.subr.mxu0 0.0
    %1692 = vmatpush1.xpose.msra.mxu0 0.0
    %1693 = vmatprep.subr.mxu0 0.0
    %1694 = vmatpush1.xpose.msra.mxu0 %v1661
    %1695 = vmatprep.subr.mxu0 0.0
    %1696 = vmatpush2.xpose.msra.mxu0 0.0
    %1697 = vmatprep.subr.mxu0 0.0
    %1698 = vmatpush2.xpose.msra.mxu0 0.0
    %1699 = vmatprep.subr.mxu0 0.0
    %1700 = vmatpush2.xpose.msra.mxu0 0.0
    %1701 = vmatprep.subr.mxu0 0.0
    %1702 = vmatpush2.xpose.msra.mxu0 0.0
    %1703 = vmatprep.subr.mxu0 0.0
    %1704 = vmatpush2.xpose.msra.mxu0 0.0
    %1705 = vmatprep.subr.mxu0 0.0
    %1706 = vmatpush2.xpose.msra.mxu0 0.0
    %1707 = vmatprep.subr.mxu0 0.0
    %1708 = vmatpush2.xpose.msra.mxu0 0.0
    %1709 = vmatprep.subr.mxu0 0.0
    %1710 = vmatpush2.xpose.msra.mxu0 0.0
    %1711 = vmatprep.subr.mxu0 0.0
    %1712 = vmatpush2.xpose.msra.mxu0 0.0
    %1713 = vmatprep.subr.mxu0 0.0
    %1714 = vmatpush2.xpose.msra.mxu0 0.0
    %1715 = vmatprep.subr.mxu0 0.0
    %1716 = vmatpush2.xpose.msra.mxu0 0.0
    %1717 = vmatprep.subr.mxu0 0.0
    %1718 = vmatpush2.xpose.msra.mxu0 0.0
    %1719 = vmatprep.subr.mxu0 0.0
    %1720 = vmatpush2.xpose.msra.mxu0 0.0
    %1721 = vmatprep.subr.mxu0 0.0
    %1722 = vmatpush2.xpose.msra.mxu0 0.0
    %1723 = vmatprep.subr.mxu0 0.0
    %1724 = vmatpush2.xpose.msra.mxu0 0.0
    %1725 = vmatprep.subr.mxu0 0.0
    %1726 = vmatpush2.xpose.msra.mxu0 0.0
    %1727 = vmatprep.mubr.f32.mxu0 0.0
    %1728 = vmatmul.mubr.f32.gmra.mxu0 %v1658
    %v1729 = vpop.f32.mrf.mxu0
    %v1730 = vadd.f32 0.0, %v1729
    %v1731 = vpop.f32.mrf.mxu0
    %1732 = vdwg.mxu0
    %1733 = vrot.lane.b32.xlu0 %v370, 120
    %v1734 = vpop.permute.xlu0 %1733
    %v1735 = vsel %vm415, %v1734, 0
    %v1738 = vsel %vm415, %v1349, 0
    %1740 = vmatprep.subr.mxu0 0.0
    %1741 = vmatpush1.xpose.msra.mxu0 0.0
    %1742 = vmatprep.subr.mxu0 0.0
    %1743 = vmatpush1.xpose.msra.mxu0 0.0
    %1744 = vmatprep.subr.mxu0 0.0
    %1745 = vmatpush1.xpose.msra.mxu0 0.0
    %1746 = vmatprep.subr.mxu0 0.0
    %1747 = vmatpush1.xpose.msra.mxu0 0.0
    %1748 = vmatprep.subr.mxu0 0.0
    %1749 = vmatpush1.xpose.msra.mxu0 0.0
    %1750 = vmatprep.subr.mxu0 0.0
    %1751 = vmatpush1.xpose.msra.mxu0 0.0
    %1752 = vmatprep.subr.mxu0 0.0
    %1753 = vmatpush1.xpose.msra.mxu0 0.0
    %1754 = vmatprep.subr.mxu0 0.0
    %1755 = vmatpush1.xpose.msra.mxu0 0.0
    %1756 = vmatprep.subr.mxu0 0.0
    %1757 = vmatpush1.xpose.msra.mxu0 0.0
    %1758 = vmatprep.subr.mxu0 0.0
    %1759 = vmatpush1.xpose.msra.mxu0 0.0
    %1760 = vmatprep.subr.mxu0 0.0
    %1761 = vmatpush1.xpose.msra.mxu0 0.0
    %1762 = vmatprep.subr.mxu0 0.0
    %1763 = vmatpush1.xpose.msra.mxu0 0.0
    %1764 = vmatprep.subr.mxu0 0.0
    %1765 = vmatpush1.xpose.msra.mxu0 0.0
    %1766 = vmatprep.subr.mxu0 0.0
    %1767 = vmatpush1.xpose.msra.mxu0 0.0
    %1768 = vmatprep.subr.mxu0 0.0
    %1769 = vmatpush1.xpose.msra.mxu0 0.0
    %1770 = vmatprep.subr.mxu0 0.0
    %1771 = vmatpush1.xpose.msra.mxu0 %v1738
    %1772 = vmatprep.subr.mxu0 0.0
    %1773 = vmatpush2.xpose.msra.mxu0 0.0
    %1774 = vmatprep.subr.mxu0 0.0
    %1775 = vmatpush2.xpose.msra.mxu0 0.0
    %1776 = vmatprep.subr.mxu0 0.0
    %1777 = vmatpush2.xpose.msra.mxu0 0.0
    %1778 = vmatprep.subr.mxu0 0.0
    %1779 = vmatpush2.xpose.msra.mxu0 0.0
    %1780 = vmatprep.subr.mxu0 0.0
    %1781 = vmatpush2.xpose.msra.mxu0 0.0
    %1782 = vmatprep.subr.mxu0 0.0
    %1783 = vmatpush2.xpose.msra.mxu0 0.0
    %1784 = vmatprep.subr.mxu0 0.0
    %1785 = vmatpush2.xpose.msra.mxu0 0.0
    %1786 = vmatprep.subr.mxu0 0.0
    %1787 = vmatpush2.xpose.msra.mxu0 0.0
    %1788 = vmatprep.subr.mxu0 0.0
    %1789 = vmatpush2.xpose.msra.mxu0 0.0
    %1790 = vmatprep.subr.mxu0 0.0
    %1791 = vmatpush2.xpose.msra.mxu0 0.0
    %1792 = vmatprep.subr.mxu0 0.0
    %1793 = vmatpush2.xpose.msra.mxu0 0.0
    %1794 = vmatprep.subr.mxu0 0.0
    %1795 = vmatpush2.xpose.msra.mxu0 0.0
    %1796 = vmatprep.subr.mxu0 0.0
    %1797 = vmatpush2.xpose.msra.mxu0 0.0
    %1798 = vmatprep.subr.mxu0 0.0
    %1799 = vmatpush2.xpose.msra.mxu0 0.0
    %1800 = vmatprep.subr.mxu0 0.0
    %1801 = vmatpush2.xpose.msra.mxu0 0.0
    %1802 = vmatprep.subr.mxu0 0.0
    %1803 = vmatpush2.xpose.msra.mxu0 0.0
    %1804 = vmatprep.mubr.f32.mxu0 0.0
    %1805 = vmatmul.mubr.f32.gmra.mxu0 %v1735
    %v1806 = vpop.f32.mrf.mxu0
    %v1807 = vadd.f32 0.0, %v1806
    %v1808 = vpop.f32.mrf.mxu0
    %1809 = vdwg.mxu0
    %1810 = vrot.lane.b32.xlu0 %v375, 120
    %v1811 = vpop.permute.xlu0 %1810
    %v1812 = vsel %vm415, %v1811, 0
    %v1815 = vsel %vm415, %v1350, 0
    %1817 = vmatprep.subr.mxu0 0.0
    %1818 = vmatpush1.xpose.msra.mxu0 0.0
    %1819 = vmatprep.subr.mxu0 0.0
    %1820 = vmatpush1.xpose.msra.mxu0 0.0
    %1821 = vmatprep.subr.mxu0 0.0
    %1822 = vmatpush1.xpose.msra.mxu0 0.0
    %1823 = vmatprep.subr.mxu0 0.0
    %1824 = vmatpush1.xpose.msra.mxu0 0.0
    %1825 = vmatprep.subr.mxu0 0.0
    %1826 = vmatpush1.xpose.msra.mxu0 0.0
    %1827 = vmatprep.subr.mxu0 0.0
    %1828 = vmatpush1.xpose.msra.mxu0 0.0
    %1829 = vmatprep.subr.mxu0 0.0
    %1830 = vmatpush1.xpose.msra.mxu0 0.0
    %1831 = vmatprep.subr.mxu0 0.0
    %1832 = vmatpush1.xpose.msra.mxu0 0.0
    %1833 = vmatprep.subr.mxu0 0.0
    %1834 = vmatpush1.xpose.msra.mxu0 0.0
    %1835 = vmatprep.subr.mxu0 0.0
    %1836 = vmatpush1.xpose.msra.mxu0 0.0
    %1837 = vmatprep.subr.mxu0 0.0
    %1838 = vmatpush1.xpose.msra.mxu0 0.0
    %1839 = vmatprep.subr.mxu0 0.0
    %1840 = vmatpush1.xpose.msra.mxu0 0.0
    %1841 = vmatprep.subr.mxu0 0.0
    %1842 = vmatpush1.xpose.msra.mxu0 0.0
    %1843 = vmatprep.subr.mxu0 0.0
    %1844 = vmatpush1.xpose.msra.mxu0 0.0
    %1845 = vmatprep.subr.mxu0 0.0
    %1846 = vmatpush1.xpose.msra.mxu0 0.0
    %1847 = vmatprep.subr.mxu0 0.0
    %1848 = vmatpush1.xpose.msra.mxu0 %v1815
    %1849 = vmatprep.subr.mxu0 0.0
    %1850 = vmatpush2.xpose.msra.mxu0 0.0
    %1851 = vmatprep.subr.mxu0 0.0
    %1852 = vmatpush2.xpose.msra.mxu0 0.0
    %1853 = vmatprep.subr.mxu0 0.0
    %1854 = vmatpush2.xpose.msra.mxu0 0.0
    %1855 = vmatprep.subr.mxu0 0.0
    %1856 = vmatpush2.xpose.msra.mxu0 0.0
    %1857 = vmatprep.subr.mxu0 0.0
    %1858 = vmatpush2.xpose.msra.mxu0 0.0
    %1859 = vmatprep.subr.mxu0 0.0
    %1860 = vmatpush2.xpose.msra.mxu0 0.0
    %1861 = vmatprep.subr.mxu0 0.0
    %1862 = vmatpush2.xpose.msra.mxu0 0.0
    %1863 = vmatprep.subr.mxu0 0.0
    %1864 = vmatpush2.xpose.msra.mxu0 0.0
    %1865 = vmatprep.subr.mxu0 0.0
    %1866 = vmatpush2.xpose.msra.mxu0 0.0
    %1867 = vmatprep.subr.mxu0 0.0
    %1868 = vmatpush2.xpose.msra.mxu0 0.0
    %1869 = vmatprep.subr.mxu0 0.0
    %1870 = vmatpush2.xpose.msra.mxu0 0.0
    %1871 = vmatprep.subr.mxu0 0.0
    %1872 = vmatpush2.xpose.msra.mxu0 0.0
    %1873 = vmatprep.subr.mxu0 0.0
    %1874 = vmatpush2.xpose.msra.mxu0 0.0
    %1875 = vmatprep.subr.mxu0 0.0
    %1876 = vmatpush2.xpose.msra.mxu0 0.0
    %1877 = vmatprep.subr.mxu0 0.0
    %1878 = vmatpush2.xpose.msra.mxu0 0.0
    %1879 = vmatprep.subr.mxu0 0.0
    %1880 = vmatpush2.xpose.msra.mxu0 0.0
    %1881 = vmatprep.mubr.f32.mxu0 0.0
    %1882 = vmatmul.mubr.f32.gmra.mxu0 %v1812
    %v1883 = vpop.f32.mrf.mxu0
    %v1884 = vadd.f32 0.0, %v1883
    %v1885 = vpop.f32.mrf.mxu0
    %1886 = vdwg.mxu0
    %1887 = vrot.lane.b32.xlu0 %v380, 120
    %v1888 = vpop.permute.xlu0 %1887
    %v1889 = vsel %vm415, %v1888, 0
    %v1892 = vsel %vm415, %v1351, 0
    %1894 = vmatprep.subr.mxu0 0.0
    %1895 = vmatpush1.xpose.msra.mxu0 0.0
    %1896 = vmatprep.subr.mxu0 0.0
    %1897 = vmatpush1.xpose.msra.mxu0 0.0
    %1898 = vmatprep.subr.mxu0 0.0
    %1899 = vmatpush1.xpose.msra.mxu0 0.0
    %1900 = vmatprep.subr.mxu0 0.0
    %1901 = vmatpush1.xpose.msra.mxu0 0.0
    %1902 = vmatprep.subr.mxu0 0.0
    %1903 = vmatpush1.xpose.msra.mxu0 0.0
    %1904 = vmatprep.subr.mxu0 0.0
    %1905 = vmatpush1.xpose.msra.mxu0 0.0
    %1906 = vmatprep.subr.mxu0 0.0
    %1907 = vmatpush1.xpose.msra.mxu0 0.0
    %1908 = vmatprep.subr.mxu0 0.0
    %1909 = vmatpush1.xpose.msra.mxu0 0.0
    %1910 = vmatprep.subr.mxu0 0.0
    %1911 = vmatpush1.xpose.msra.mxu0 0.0
    %1912 = vmatprep.subr.mxu0 0.0
    %1913 = vmatpush1.xpose.msra.mxu0 0.0
    %1914 = vmatprep.subr.mxu0 0.0
    %1915 = vmatpush1.xpose.msra.mxu0 0.0
    %1916 = vmatprep.subr.mxu0 0.0
    %1917 = vmatpush1.xpose.msra.mxu0 0.0
    %1918 = vmatprep.subr.mxu0 0.0
    %1919 = vmatpush1.xpose.msra.mxu0 0.0
    %1920 = vmatprep.subr.mxu0 0.0
    %1921 = vmatpush1.xpose.msra.mxu0 0.0
    %1922 = vmatprep.subr.mxu0 0.0
    %1923 = vmatpush1.xpose.msra.mxu0 0.0
    %1924 = vmatprep.subr.mxu0 0.0
    %1925 = vmatpush1.xpose.msra.mxu0 %v1892
    %1926 = vmatprep.subr.mxu0 0.0
    %1927 = vmatpush2.xpose.msra.mxu0 0.0
    %1928 = vmatprep.subr.mxu0 0.0
    %1929 = vmatpush2.xpose.msra.mxu0 0.0
    %1930 = vmatprep.subr.mxu0 0.0
    %1931 = vmatpush2.xpose.msra.mxu0 0.0
    %1932 = vmatprep.subr.mxu0 0.0
    %1933 = vmatpush2.xpose.msra.mxu0 0.0
    %1934 = vmatprep.subr.mxu0 0.0
    %1935 = vmatpush2.xpose.msra.mxu0 0.0
    %1936 = vmatprep.subr.mxu0 0.0
    %1937 = vmatpush2.xpose.msra.mxu0 0.0
    %1938 = vmatprep.subr.mxu0 0.0
    %1939 = vmatpush2.xpose.msra.mxu0 0.0
    %1940 = vmatprep.subr.mxu0 0.0
    %1941 = vmatpush2.xpose.msra.mxu0 0.0
    %1942 = vmatprep.subr.mxu0 0.0
    %1943 = vmatpush2.xpose.msra.mxu0 0.0
    %1944 = vmatprep.subr.mxu0 0.0
    %1945 = vmatpush2.xpose.msra.mxu0 0.0
    %1946 = vmatprep.subr.mxu0 0.0
    %1947 = vmatpush2.xpose.msra.mxu0 0.0
    %1948 = vmatprep.subr.mxu0 0.0
    %1949 = vmatpush2.xpose.msra.mxu0 0.0
    %1950 = vmatprep.subr.mxu0 0.0
    %1951 = vmatpush2.xpose.msra.mxu0 0.0
    %1952 = vmatprep.subr.mxu0 0.0
    %1953 = vmatpush2.xpose.msra.mxu0 0.0
    %1954 = vmatprep.subr.mxu0 0.0
    %1955 = vmatpush2.xpose.msra.mxu0 0.0
    %1956 = vmatprep.subr.mxu0 0.0
    %1957 = vmatpush2.xpose.msra.mxu0 0.0
    %1958 = vmatprep.mubr.f32.mxu0 0.0
    %1959 = vmatmul.mubr.f32.gmra.mxu0 %v1889
    %v1960 = vpop.f32.mrf.mxu0
    %v1961 = vadd.f32 0.0, %v1960
    %v1962 = vpop.f32.mrf.mxu0
    %1963 = vdwg.mxu0
    %1968 = vrot.lane.b32.xlu0 %v1730, 8
    %v1969 = vpop.permute.xlu0 %1968
    %1970 = vrot.lane.b32.xlu0 %v1807, 8
    %v1971 = vpop.permute.xlu0 %1970
    %1972 = vrot.lane.b32.xlu0 %v1884, 8
    %v1973 = vpop.permute.xlu0 %1972
    %1974 = vrot.lane.b32.xlu0 %v1961, 8
    %v1975 = vpop.permute.xlu0 %1974
    %v1980 = vsel %vm415, %v1425, %v1969
    %v1981 = vsel %vm415, %v1501, %v1971
    %v1982 = vsel %vm415, %v1577, %v1973
    %v1983 = vsel %vm415, %v1653, %v1975
    %v1984 = vld [vmem:[%s6] sm:$0xff]
    %v1985 = vld [vmem:[%s6 + $0x8] sm:$0xff]
    %v1986 = vld [vmem:[%s6 + $0x10] sm:$0xff]
    %v1987 = vld [vmem:[%s6 + $0x18] sm:$0xff]
    %v1988 = vld [vmem:[%s7] sm:$0x1]
    %v1990 = vlaneseq
    %v1991 = vshrl.u32 %v1990, 7
    %v1992 = vsub.s32 0, %v1991
    %v1993 = vrot.slane %v1988, %v1992
    %1995 = vxpose.xlu0.b32.start [1/16] %v1980, 128
    %1996 = vxpose.xlu0.b32.cont [2/16] %v1981, 128
    %1997 = vxpose.xlu0.b32.cont [3/16] %v1982, 128
    %1998 = vxpose.xlu0.b32.cont [4/16] %v1983, 128
    %1999 = vxpose.xlu0.b32.cont [5/16] 0.0, 128
    %2000 = vxpose.xlu0.b32.cont [6/16] 0.0, 128
    %2001 = vxpose.xlu0.b32.cont [7/16] 0.0, 128
    %2002 = vxpose.xlu0.b32.cont [8/16] 0.0, 128
    %2003 = vxpose.xlu0.b32.cont [9/16] 0.0, 128
    %2004 = vxpose.xlu0.b32.cont [10/16] 0.0, 128
    %2005 = vxpose.xlu0.b32.cont [11/16] 0.0, 128
    %2006 = vxpose.xlu0.b32.cont [12/16] 0.0, 128
    %2007 = vxpose.xlu0.b32.cont [13/16] 0.0, 128
    %2008 = vxpose.xlu0.b32.cont [14/16] 0.0, 128
    %2009 = vxpose.xlu0.b32.cont [15/16] 0.0, 128
    %2010 = vxpose.xlu0.b32.end [16/16] 0.0, 128
    %v2011 = vpop.trf.xlu0
    %v2012 = vpop.trf.xlu0
    %v2013 = vpop.trf.xlu0
    %v2014 = vpop.trf.xlu0
    %v2015 = vpop.trf.xlu0
    %v2016 = vpop.trf.xlu0
    %v2017 = vpop.trf.xlu0
    %v2018 = vpop.trf.xlu0
    %v2019 = vpop.trf.xlu0
    %v2020 = vpop.trf.xlu0
    %v2021 = vpop.trf.xlu0
    %v2022 = vpop.trf.xlu0
    %v2023 = vpop.trf.xlu0
    %v2024 = vpop.trf.xlu0
    %v2025 = vpop.trf.xlu0
    %v2026 = vpop.trf.xlu0
    %v2028 = vsel %vm116, %v2011, 0
    %v2031 = vsel %vm116, %v2012, 0
    %2033 = vmatprep.subr.mxu0 0.0
    %2034 = vmatpush1.msra.mxu0 0.0
    %2035 = vmatprep.subr.mxu0 0.0
    %2036 = vmatpush1.msra.mxu0 0.0
    %2037 = vmatprep.subr.mxu0 0.0
    %2038 = vmatpush1.msra.mxu0 0.0
    %2039 = vmatprep.subr.mxu0 0.0
    %2040 = vmatpush1.msra.mxu0 0.0
    %2041 = vmatprep.subr.mxu0 0.0
    %2042 = vmatpush1.msra.mxu0 0.0
    %2043 = vmatprep.subr.mxu0 0.0
    %2044 = vmatpush1.msra.mxu0 0.0
    %2045 = vmatprep.subr.mxu0 0.0
    %2046 = vmatpush1.msra.mxu0 0.0
    %2047 = vmatprep.subr.mxu0 0.0
    %2048 = vmatpush1.msra.mxu0 0.0
    %2049 = vmatprep.subr.mxu0 0.0
    %2050 = vmatpush1.msra.mxu0 0.0
    %2051 = vmatprep.subr.mxu0 0.0
    %2052 = vmatpush1.msra.mxu0 0.0
    %2053 = vmatprep.subr.mxu0 0.0
    %2054 = vmatpush1.msra.mxu0 0.0
    %2055 = vmatprep.subr.mxu0 0.0
    %2056 = vmatpush1.msra.mxu0 0.0
    %2057 = vmatprep.subr.mxu0 0.0
    %2058 = vmatpush1.msra.mxu0 %v1987
    %2059 = vmatprep.subr.mxu0 0.0
    %2060 = vmatpush1.msra.mxu0 %v1986
    %2061 = vmatprep.subr.mxu0 0.0
    %2062 = vmatpush1.msra.mxu0 %v1985
    %2063 = vmatprep.subr.mxu0 0.0
    %2064 = vmatpush1.msra.mxu0 %v1984
    %2065 = vmatprep.subr.mxu0 0.0
    %2066 = vmatpush2.msra.mxu0 0.0
    %2067 = vmatprep.subr.mxu0 0.0
    %2068 = vmatpush2.msra.mxu0 0.0
    %2069 = vmatprep.subr.mxu0 0.0
    %2070 = vmatpush2.msra.mxu0 0.0
    %2071 = vmatprep.subr.mxu0 0.0
    %2072 = vmatpush2.msra.mxu0 0.0
    %2073 = vmatprep.subr.mxu0 0.0
    %2074 = vmatpush2.msra.mxu0 0.0
    %2075 = vmatprep.subr.mxu0 0.0
    %2076 = vmatpush2.msra.mxu0 0.0
    %2077 = vmatprep.subr.mxu0 0.0
    %2078 = vmatpush2.msra.mxu0 0.0
    %2079 = vmatprep.subr.mxu0 0.0
    %2080 = vmatpush2.msra.mxu0 0.0
    %2081 = vmatprep.subr.mxu0 0.0
    %2082 = vmatpush2.msra.mxu0 0.0
    %2083 = vmatprep.subr.mxu0 0.0
    %2084 = vmatpush2.msra.mxu0 0.0
    %2085 = vmatprep.subr.mxu0 0.0
    %2086 = vmatpush2.msra.mxu0 0.0
    %2087 = vmatprep.subr.mxu0 0.0
    %2088 = vmatpush2.msra.mxu0 0.0
    %2089 = vmatprep.subr.mxu0 0.0
    %2090 = vmatpush2.msra.mxu0 0.0
    %2091 = vmatprep.subr.mxu0 0.0
    %2092 = vmatpush2.msra.mxu0 0.0
    %2093 = vmatprep.subr.mxu0 0.0
    %2094 = vmatpush2.msra.mxu0 0.0
    %2095 = vmatprep.subr.mxu0 0.0
    %2096 = vmatpush2.msra.mxu0 0.0
    %2097 = vmatprep.mubr.f32.mxu0 0.0
    %2098 = vmatmul.mubr.f32.gmra.mxu0 %v2028
    %v2099 = vpop.f32.mrf.mxu0
    %v2100 = vadd.f32 %v1993, %v2099
    %v2101 = vpop.f32.mrf.mxu0
    %2102 = vmatprep.mubr.f32.mxu0 0.0
    %2103 = vmatmul.mubr.f32.gmra.mxu0 %v2031
    %v2104 = vpop.f32.mrf.mxu0
    %v2105 = vadd.f32 %v1993, %v2104
    %v2106 = vpop.f32.mrf.mxu0
    %2107 = vdwg.mxu0
    %v2108 = vadd.f32 %v54, %v2100
    %v2109 = vadd.f32 %v55, %v2105
    %v2110 = vsel %vm116, %v2108, 0.0
    %2111 = vadd.xlane.f32.xlu0 %v2110
    %v2112 = vpop.xlane.xlu0 %2111
    %v2113 = vsel %vm116, %v2109, 0.0
    %2114 = vadd.xlane.f32.xlu0 %v2113
    %v2115 = vpop.xlane.xlu0 %2114
    %v2116 = vrcp.pop 32.0
    %v2117 = vmul.f32 %v2112, %v2116
    %v2118 = vmul.f32 %v2115, %v2116
    %v2119 = vsub.f32 %v2108, %v2117
    %v2120 = vsub.f32 %v2109, %v2118
    %v2121 = vmul.f32 %v2119, %v2119
    %v2122 = vmul.f32 %v2120, %v2120
    %v2123 = vsel %vm116, %v2121, 0.0
    %2124 = vadd.xlane.f32.xlu0 %v2123
    %v2125 = vpop.xlane.xlu0 %2124
    %v2126 = vsel %vm116, %v2122, 0.0
    %2127 = vadd.xlane.f32.xlu0 %v2126
    %v2128 = vpop.xlane.xlu0 %2127
    %v2129 = vmul.f32 %v2125, %v2116
    %v2130 = vmul.f32 %v2128, %v2116
    %v2131 = vadd.f32 %v2129, 1e-05
    %v2132 = vadd.f32 %v2130, 1e-05
    %v2133 = vrsqrt.pop %v2131
    %v2134 = vrsqrt.pop %v2132
    %v2135 = vmul.f32 %v2119, %v2133
    %v2136 = vmul.f32 %v2120, %v2134
    %v2137 = vld [vmem:[%s12] sm:$0x1]
    %v2139 = vlaneseq
    %v2140 = vshrl.u32 %v2139, 7
    %v2141 = vsub.s32 0, %v2140
    %v2142 = vrot.slane %v2137, %v2141
    %v2144 = vmul.f32 %v2135, %v2142
    %v2145 = vmul.f32 %v2136, %v2142
    %v2146 = vld [vmem:[%s13] sm:$0x1]
    %v2148 = vlaneseq
    %v2149 = vshrl.u32 %v2148, 7
    %v2150 = vsub.s32 0, %v2149
    %v2151 = vrot.slane %v2146, %v2150
    %v2153 = vadd.f32 %v2144, %v2151
    %v2154 = vadd.f32 %v2145, %v2151
    %v2155 = vld [vmem:[%s8] sm:$0xff]
    %v2156 = vld [vmem:[%s8 + $0x8] sm:$0xff]
    %v2157 = vld [vmem:[%s8 + $0x10] sm:$0xff]
    %v2158 = vld [vmem:[%s8 + $0x18] sm:$0xff]
    %v2159 = vld [vmem:[%s8 + $0x20] sm:$0xff]
    %v2160 = vld [vmem:[%s8 + $0x28] sm:$0xff]
    %v2161 = vld [vmem:[%s8 + $0x30] sm:$0xff]
    %v2162 = vld [vmem:[%s8 + $0x38] sm:$0xff]
    %v2163 = vld [vmem:[%s8 + $0x40] sm:$0xff]
    %v2164 = vld [vmem:[%s8 + $0x48] sm:$0xff]
    %v2165 = vld [vmem:[%s8 + $0x50] sm:$0xff]
    %v2166 = vld [vmem:[%s8 + $0x58] sm:$0xff]
    %v2167 = vld [vmem:[%s8 + $0x60] sm:$0xff]
    %v2168 = vld [vmem:[%s8 + $0x68] sm:$0xff]
    %v2169 = vld [vmem:[%s8 + $0x70] sm:$0xff]
    %v2170 = vld [vmem:[%s8 + $0x78] sm:$0xff]
    %v2171 = vld [vmem:[%s8 + $0x80] sm:$0xff]
    %v2172 = vld [vmem:[%s8 + $0x88] sm:$0xff]
    %v2173 = vld [vmem:[%s8 + $0x90] sm:$0xff]
    %v2174 = vld [vmem:[%s8 + $0x98] sm:$0xff]
    %v2175 = vld [vmem:[%s8 + $0xa0] sm:$0xff]
    %v2176 = vld [vmem:[%s8 + $0xa8] sm:$0xff]
    %v2177 = vld [vmem:[%s8 + $0xb0] sm:$0xff]
    %v2178 = vld [vmem:[%s8 + $0xb8] sm:$0xff]
    %v2179 = vld [vmem:[%s8 + $0xc0] sm:$0xff]
    %v2180 = vld [vmem:[%s8 + $0xc8] sm:$0xff]
    %v2181 = vld [vmem:[%s8 + $0xd0] sm:$0xff]
    %v2182 = vld [vmem:[%s8 + $0xd8] sm:$0xff]
    %v2183 = vld [vmem:[%s8 + $0xe0] sm:$0xff]
    %v2184 = vld [vmem:[%s8 + $0xe8] sm:$0xff]
    %v2185 = vld [vmem:[%s8 + $0xf0] sm:$0xff]
    %v2186 = vld [vmem:[%s8 + $0xf8] sm:$0xff]
    %v2187 = vunpack.c.l.bf16 %v2155
    %v2188 = vunpack.c.h.bf16 %v2155
    %v2189 = vunpack.c.l.bf16 %v2156
    %v2190 = vunpack.c.h.bf16 %v2156
    %v2191 = vunpack.c.l.bf16 %v2157
    %v2192 = vunpack.c.h.bf16 %v2157
    %v2193 = vunpack.c.l.bf16 %v2158
    %v2194 = vunpack.c.h.bf16 %v2158
    %v2195 = vunpack.c.l.bf16 %v2159
    %v2196 = vunpack.c.h.bf16 %v2159
    %v2197 = vunpack.c.l.bf16 %v2160
    %v2198 = vunpack.c.h.bf16 %v2160
    %v2199 = vunpack.c.l.bf16 %v2161
    %v2200 = vunpack.c.h.bf16 %v2161
    %v2201 = vunpack.c.l.bf16 %v2162
    %v2202 = vunpack.c.h.bf16 %v2162
    %v2203 = vunpack.c.l.bf16 %v2163
    %v2204 = vunpack.c.h.bf16 %v2163
    %v2205 = vunpack.c.l.bf16 %v2164
    %v2206 = vunpack.c.h.bf16 %v2164
    %v2207 = vunpack.c.l.bf16 %v2165
    %v2208 = vunpack.c.h.bf16 %v2165
    %v2209 = vunpack.c.l.bf16 %v2166
    %v2210 = vunpack.c.h.bf16 %v2166
    %v2211 = vunpack.c.l.bf16 %v2167
    %v2212 = vunpack.c.h.bf16 %v2167
    %v2213 = vunpack.c.l.bf16 %v2168
    %v2214 = vunpack.c.h.bf16 %v2168
    %v2215 = vunpack.c.l.bf16 %v2169
    %v2216 = vunpack.c.h.bf16 %v2169
    %v2217 = vunpack.c.l.bf16 %v2170
    %v2218 = vunpack.c.h.bf16 %v2170
    %v2219 = vunpack.c.l.bf16 %v2171
    %v2220 = vunpack.c.h.bf16 %v2171
    %v2221 = vunpack.c.l.bf16 %v2172
    %v2222 = vunpack.c.h.bf16 %v2172
    %v2223 = vunpack.c.l.bf16 %v2173
    %v2224 = vunpack.c.h.bf16 %v2173
    %v2225 = vunpack.c.l.bf16 %v2174
    %v2226 = vunpack.c.h.bf16 %v2174
    %v2227 = vunpack.c.l.bf16 %v2175
    %v2228 = vunpack.c.h.bf16 %v2175
    %v2229 = vunpack.c.l.bf16 %v2176
    %v2230 = vunpack.c.h.bf16 %v2176
    %v2231 = vunpack.c.l.bf16 %v2177
    %v2232 = vunpack.c.h.bf16 %v2177
    %v2233 = vunpack.c.l.bf16 %v2178
    %v2234 = vunpack.c.h.bf16 %v2178
    %v2235 = vunpack.c.l.bf16 %v2179
    %v2236 = vunpack.c.h.bf16 %v2179
    %v2237 = vunpack.c.l.bf16 %v2180
    %v2238 = vunpack.c.h.bf16 %v2180
    %v2239 = vunpack.c.l.bf16 %v2181
    %v2240 = vunpack.c.h.bf16 %v2181
    %v2241 = vunpack.c.l.bf16 %v2182
    %v2242 = vunpack.c.h.bf16 %v2182
    %v2243 = vunpack.c.l.bf16 %v2183
    %v2244 = vunpack.c.h.bf16 %v2183
    %v2245 = vunpack.c.l.bf16 %v2184
    %v2246 = vunpack.c.h.bf16 %v2184
    %v2247 = vunpack.c.l.bf16 %v2185
    %v2248 = vunpack.c.h.bf16 %v2185
    %v2249 = vunpack.c.l.bf16 %v2186
    %v2250 = vunpack.c.h.bf16 %v2186
    %v2251 = vld [vmem:[%s10] sm:$0xf]
    %v2252 = vld [vmem:[%s10 + $0x4] sm:$0xf]
    %v2253 = vld [vmem:[%s10 + $0x8] sm:$0xf]
    %v2254 = vld [vmem:[%s10 + $0xc] sm:$0xf]
    %v2255 = vld [vmem:[%s10 + $0x10] sm:$0xf]
    %v2256 = vld [vmem:[%s10 + $0x14] sm:$0xf]
    %v2257 = vld [vmem:[%s10 + $0x18] sm:$0xf]
    %v2258 = vld [vmem:[%s10 + $0x1c] sm:$0xf]
    %v2259 = vld [vmem:[%s10 + $0x20] sm:$0xf]
    %v2260 = vld [vmem:[%s10 + $0x24] sm:$0xf]
    %v2261 = vld [vmem:[%s10 + $0x28] sm:$0xf]
    %v2262 = vld [vmem:[%s10 + $0x2c] sm:$0xf]
    %v2263 = vld [vmem:[%s10 + $0x30] sm:$0xf]
    %v2264 = vld [vmem:[%s10 + $0x34] sm:$0xf]
    %v2265 = vld [vmem:[%s10 + $0x38] sm:$0xf]
    %v2266 = vld [vmem:[%s10 + $0x3c] sm:$0xf]
    %v2267 = vld [vmem:[%s10 + $0x40] sm:$0xf]
    %v2268 = vld [vmem:[%s10 + $0x44] sm:$0xf]
    %v2269 = vld [vmem:[%s10 + $0x48] sm:$0xf]
    %v2270 = vld [vmem:[%s10 + $0x4c] sm:$0xf]
    %v2271 = vld [vmem:[%s10 + $0x50] sm:$0xf]
    %v2272 = vld [vmem:[%s10 + $0x54] sm:$0xf]
    %v2273 = vld [vmem:[%s10 + $0x58] sm:$0xf]
    %v2274 = vld [vmem:[%s10 + $0x5c] sm:$0xf]
    %v2275 = vld [vmem:[%s10 + $0x60] sm:$0xf]
    %v2276 = vld [vmem:[%s10 + $0x64] sm:$0xf]
    %v2277 = vld [vmem:[%s10 + $0x68] sm:$0xf]
    %v2278 = vld [vmem:[%s10 + $0x6c] sm:$0xf]
    %v2279 = vld [vmem:[%s10 + $0x70] sm:$0xf]
    %v2280 = vld [vmem:[%s10 + $0x74] sm:$0xf]
    %v2281 = vld [vmem:[%s10 + $0x78] sm:$0xf]
    %v2282 = vld [vmem:[%s10 + $0x7c] sm:$0xf]
    %v2283 = vld [vmem:[%s10 + $0x80] sm:$0xf]
    %v2284 = vld [vmem:[%s10 + $0x84] sm:$0xf]
    %v2285 = vld [vmem:[%s10 + $0x88] sm:$0xf]
    %v2286 = vld [vmem:[%s10 + $0x8c] sm:$0xf]
    %v2287 = vld [vmem:[%s10 + $0x90] sm:$0xf]
    %v2288 = vld [vmem:[%s10 + $0x94] sm:$0xf]
    %v2289 = vld [vmem:[%s10 + $0x98] sm:$0xf]
    %v2290 = vld [vmem:[%s10 + $0x9c] sm:$0xf]
    %v2291 = vld [vmem:[%s10 + $0xa0] sm:$0xf]
    %v2292 = vld [vmem:[%s10 + $0xa4] sm:$0xf]
    %v2293 = vld [vmem:[%s10 + $0xa8] sm:$0xf]
    %v2294 = vld [vmem:[%s10 + $0xac] sm:$0xf]
    %v2295 = vld [vmem:[%s10 + $0xb0] sm:$0xf]
    %v2296 = vld [vmem:[%s10 + $0xb4] sm:$0xf]
    %v2297 = vld [vmem:[%s10 + $0xb8] sm:$0xf]
    %v2298 = vld [vmem:[%s10 + $0xbc] sm:$0xf]
    %v2299 = vld [vmem:[%s10 + $0xc0] sm:$0xf]
    %v2300 = vld [vmem:[%s10 + $0xc4] sm:$0xf]
    %v2301 = vld [vmem:[%s10 + $0xc8] sm:$0xf]
    %v2302 = vld [vmem:[%s10 + $0xcc] sm:$0xf]
    %v2303 = vld [vmem:[%s10 + $0xd0] sm:$0xf]
    %v2304 = vld [vmem:[%s10 + $0xd4] sm:$0xf]
    %v2305 = vld [vmem:[%s10 + $0xd8] sm:$0xf]
    %v2306 = vld [vmem:[%s10 + $0xdc] sm:$0xf]
    %v2307 = vld [vmem:[%s10 + $0xe0] sm:$0xf]
    %v2308 = vld [vmem:[%s10 + $0xe4] sm:$0xf]
    %v2309 = vld [vmem:[%s10 + $0xe8] sm:$0xf]
    %v2310 = vld [vmem:[%s10 + $0xec] sm:$0xf]
    %v2311 = vld [vmem:[%s10 + $0xf0] sm:$0xf]
    %v2312 = vld [vmem:[%s10 + $0xf4] sm:$0xf]
    %v2313 = vld [vmem:[%s10 + $0xf8] sm:$0xf]
    %v2314 = vld [vmem:[%s10 + $0xfc] sm:$0xf]
    %v2315 = vld [vmem:[%s10 + $0x100] sm:$0xf]
    %v2316 = vld [vmem:[%s10 + $0x104] sm:$0xf]
    %v2317 = vld [vmem:[%s10 + $0x108] sm:$0xf]
    %v2318 = vld [vmem:[%s10 + $0x10c] sm:$0xf]
    %v2319 = vld [vmem:[%s10 + $0x110] sm:$0xf]
    %v2320 = vld [vmem:[%s10 + $0x114] sm:$0xf]
    %v2321 = vld [vmem:[%s10 + $0x118] sm:$0xf]
    %v2322 = vld [vmem:[%s10 + $0x11c] sm:$0xf]
    %v2323 = vld [vmem:[%s10 + $0x120] sm:$0xf]
    %v2324 = vld [vmem:[%s10 + $0x124] sm:$0xf]
    %v2325 = vld [vmem:[%s10 + $0x128] sm:$0xf]
    %v2326 = vld [vmem:[%s10 + $0x12c] sm:$0xf]
    %v2327 = vld [vmem:[%s10 + $0x130] sm:$0xf]
    %v2328 = vld [vmem:[%s10 + $0x134] sm:$0xf]
    %v2329 = vld [vmem:[%s10 + $0x138] sm:$0xf]
    %v2330 = vld [vmem:[%s10 + $0x13c] sm:$0xf]
    %v2331 = vld [vmem:[%s10 + $0x140] sm:$0xf]
    %v2332 = vld [vmem:[%s10 + $0x144] sm:$0xf]
    %v2333 = vld [vmem:[%s10 + $0x148] sm:$0xf]
    %v2334 = vld [vmem:[%s10 + $0x14c] sm:$0xf]
    %v2335 = vld [vmem:[%s10 + $0x150] sm:$0xf]
    %v2336 = vld [vmem:[%s10 + $0x154] sm:$0xf]
    %v2337 = vld [vmem:[%s10 + $0x158] sm:$0xf]
    %v2338 = vld [vmem:[%s10 + $0x15c] sm:$0xf]
    %v2339 = vld [vmem:[%s10 + $0x160] sm:$0xf]
    %v2340 = vld [vmem:[%s10 + $0x164] sm:$0xf]
    %v2341 = vld [vmem:[%s10 + $0x168] sm:$0xf]
    %v2342 = vld [vmem:[%s10 + $0x16c] sm:$0xf]
    %v2343 = vld [vmem:[%s10 + $0x170] sm:$0xf]
    %v2344 = vld [vmem:[%s10 + $0x174] sm:$0xf]
    %v2345 = vld [vmem:[%s10 + $0x178] sm:$0xf]
    %v2346 = vld [vmem:[%s10 + $0x17c] sm:$0xf]
    %v2347 = vld [vmem:[%s10 + $0x180] sm:$0xf]
    %v2348 = vld [vmem:[%s10 + $0x184] sm:$0xf]
    %v2349 = vld [vmem:[%s10 + $0x188] sm:$0xf]
    %v2350 = vld [vmem:[%s10 + $0x18c] sm:$0xf]
    %v2351 = vld [vmem:[%s10 + $0x190] sm:$0xf]
    %v2352 = vld [vmem:[%s10 + $0x194] sm:$0xf]
    %v2353 = vld [vmem:[%s10 + $0x198] sm:$0xf]
    %v2354 = vld [vmem:[%s10 + $0x19c] sm:$0xf]
    %v2355 = vld [vmem:[%s10 + $0x1a0] sm:$0xf]
    %v2356 = vld [vmem:[%s10 + $0x1a4] sm:$0xf]
    %v2357 = vld [vmem:[%s10 + $0x1a8] sm:$0xf]
    %v2358 = vld [vmem:[%s10 + $0x1ac] sm:$0xf]
    %v2359 = vld [vmem:[%s10 + $0x1b0] sm:$0xf]
    %v2360 = vld [vmem:[%s10 + $0x1b4] sm:$0xf]
    %v2361 = vld [vmem:[%s10 + $0x1b8] sm:$0xf]
    %v2362 = vld [vmem:[%s10 + $0x1bc] sm:$0xf]
    %v2363 = vld [vmem:[%s10 + $0x1c0] sm:$0xf]
    %v2364 = vld [vmem:[%s10 + $0x1c4] sm:$0xf]
    %v2365 = vld [vmem:[%s10 + $0x1c8] sm:$0xf]
    %v2366 = vld [vmem:[%s10 + $0x1cc] sm:$0xf]
    %v2367 = vld [vmem:[%s10 + $0x1d0] sm:$0xf]
    %v2368 = vld [vmem:[%s10 + $0x1d4] sm:$0xf]
    %v2369 = vld [vmem:[%s10 + $0x1d8] sm:$0xf]
    %v2370 = vld [vmem:[%s10 + $0x1dc] sm:$0xf]
    %v2371 = vld [vmem:[%s10 + $0x1e0] sm:$0xf]
    %v2372 = vld [vmem:[%s10 + $0x1e4] sm:$0xf]
    %v2373 = vld [vmem:[%s10 + $0x1e8] sm:$0xf]
    %v2374 = vld [vmem:[%s10 + $0x1ec] sm:$0xf]
    %v2375 = vld [vmem:[%s10 + $0x1f0] sm:$0xf]
    %v2376 = vld [vmem:[%s10 + $0x1f4] sm:$0xf]
    %v2377 = vld [vmem:[%s10 + $0x1f8] sm:$0xf]
    %v2378 = vld [vmem:[%s10 + $0x1fc] sm:$0xf]
    %v2379 = vld [vmem:[%s10 + $0x200] sm:$0xf]
    %v2380 = vld [vmem:[%s10 + $0x204] sm:$0xf]
    %v2381 = vld [vmem:[%s10 + $0x208] sm:$0xf]
    %v2382 = vld [vmem:[%s10 + $0x20c] sm:$0xf]
    %v2383 = vld [vmem:[%s10 + $0x210] sm:$0xf]
    %v2384 = vld [vmem:[%s10 + $0x214] sm:$0xf]
    %v2385 = vld [vmem:[%s10 + $0x218] sm:$0xf]
    %v2386 = vld [vmem:[%s10 + $0x21c] sm:$0xf]
    %v2387 = vld [vmem:[%s10 + $0x220] sm:$0xf]
    %v2388 = vld [vmem:[%s10 + $0x224] sm:$0xf]
    %v2389 = vld [vmem:[%s10 + $0x228] sm:$0xf]
    %v2390 = vld [vmem:[%s10 + $0x22c] sm:$0xf]
    %v2391 = vld [vmem:[%s10 + $0x230] sm:$0xf]
    %v2392 = vld [vmem:[%s10 + $0x234] sm:$0xf]
    %v2393 = vld [vmem:[%s10 + $0x238] sm:$0xf]
    %v2394 = vld [vmem:[%s10 + $0x23c] sm:$0xf]
    %v2395 = vld [vmem:[%s10 + $0x240] sm:$0xf]
    %v2396 = vld [vmem:[%s10 + $0x244] sm:$0xf]
    %v2397 = vld [vmem:[%s10 + $0x248] sm:$0xf]
    %v2398 = vld [vmem:[%s10 + $0x24c] sm:$0xf]
    %v2399 = vld [vmem:[%s10 + $0x250] sm:$0xf]
    %v2400 = vld [vmem:[%s10 + $0x254] sm:$0xf]
    %v2401 = vld [vmem:[%s10 + $0x258] sm:$0xf]
    %v2402 = vld [vmem:[%s10 + $0x25c] sm:$0xf]
    %v2403 = vld [vmem:[%s10 + $0x260] sm:$0xf]
    %v2404 = vld [vmem:[%s10 + $0x264] sm:$0xf]
    %v2405 = vld [vmem:[%s10 + $0x268] sm:$0xf]
    %v2406 = vld [vmem:[%s10 + $0x26c] sm:$0xf]
    %v2407 = vld [vmem:[%s10 + $0x270] sm:$0xf]
    %v2408 = vld [vmem:[%s10 + $0x274] sm:$0xf]
    %v2409 = vld [vmem:[%s10 + $0x278] sm:$0xf]
    %v2410 = vld [vmem:[%s10 + $0x27c] sm:$0xf]
    %v2411 = vld [vmem:[%s10 + $0x280] sm:$0xf]
    %v2412 = vld [vmem:[%s10 + $0x284] sm:$0xf]
    %v2413 = vld [vmem:[%s10 + $0x288] sm:$0xf]
    %v2414 = vld [vmem:[%s10 + $0x28c] sm:$0xf]
    %v2415 = vld [vmem:[%s10 + $0x290] sm:$0xf]
    %v2416 = vld [vmem:[%s10 + $0x294] sm:$0xf]
    %v2417 = vld [vmem:[%s10 + $0x298] sm:$0xf]
    %v2418 = vld [vmem:[%s10 + $0x29c] sm:$0xf]
    %v2419 = vld [vmem:[%s10 + $0x2a0] sm:$0xf]
    %v2420 = vld [vmem:[%s10 + $0x2a4] sm:$0xf]
    %v2421 = vld [vmem:[%s10 + $0x2a8] sm:$0xf]
    %v2422 = vld [vmem:[%s10 + $0x2ac] sm:$0xf]
    %v2423 = vld [vmem:[%s10 + $0x2b0] sm:$0xf]
    %v2424 = vld [vmem:[%s10 + $0x2b4] sm:$0xf]
    %v2425 = vld [vmem:[%s10 + $0x2b8] sm:$0xf]
    %v2426 = vld [vmem:[%s10 + $0x2bc] sm:$0xf]
    %v2427 = vld [vmem:[%s10 + $0x2c0] sm:$0xf]
    %v2428 = vld [vmem:[%s10 + $0x2c4] sm:$0xf]
    %v2429 = vld [vmem:[%s10 + $0x2c8] sm:$0xf]
    %v2430 = vld [vmem:[%s10 + $0x2cc] sm:$0xf]
    %v2431 = vld [vmem:[%s10 + $0x2d0] sm:$0xf]
    %v2432 = vld [vmem:[%s10 + $0x2d4] sm:$0xf]
    %v2433 = vld [vmem:[%s10 + $0x2d8] sm:$0xf]
    %v2434 = vld [vmem:[%s10 + $0x2dc] sm:$0xf]
    %v2435 = vld [vmem:[%s10 + $0x2e0] sm:$0xf]
    %v2436 = vld [vmem:[%s10 + $0x2e4] sm:$0xf]
    %v2437 = vld [vmem:[%s10 + $0x2e8] sm:$0xf]
    %v2438 = vld [vmem:[%s10 + $0x2ec] sm:$0xf]
    %v2439 = vld [vmem:[%s10 + $0x2f0] sm:$0xf]
    %v2440 = vld [vmem:[%s10 + $0x2f4] sm:$0xf]
    %v2441 = vld [vmem:[%s10 + $0x2f8] sm:$0xf]
    %v2442 = vld [vmem:[%s10 + $0x2fc] sm:$0xf]
    %v2443 = vld [vmem:[%s10 + $0x300] sm:$0xf]
    %v2444 = vld [vmem:[%s10 + $0x304] sm:$0xf]
    %v2445 = vld [vmem:[%s10 + $0x308] sm:$0xf]
    %v2446 = vld [vmem:[%s10 + $0x30c] sm:$0xf]
    %v2447 = vld [vmem:[%s10 + $0x310] sm:$0xf]
    %v2448 = vld [vmem:[%s10 + $0x314] sm:$0xf]
    %v2449 = vld [vmem:[%s10 + $0x318] sm:$0xf]
    %v2450 = vld [vmem:[%s10 + $0x31c] sm:$0xf]
    %v2451 = vld [vmem:[%s10 + $0x320] sm:$0xf]
    %v2452 = vld [vmem:[%s10 + $0x324] sm:$0xf]
    %v2453 = vld [vmem:[%s10 + $0x328] sm:$0xf]
    %v2454 = vld [vmem:[%s10 + $0x32c] sm:$0xf]
    %v2455 = vld [vmem:[%s10 + $0x330] sm:$0xf]
    %v2456 = vld [vmem:[%s10 + $0x334] sm:$0xf]
    %v2457 = vld [vmem:[%s10 + $0x338] sm:$0xf]
    %v2458 = vld [vmem:[%s10 + $0x33c] sm:$0xf]
    %v2459 = vld [vmem:[%s10 + $0x340] sm:$0xf]
    %v2460 = vld [vmem:[%s10 + $0x344] sm:$0xf]
    %v2461 = vld [vmem:[%s10 + $0x348] sm:$0xf]
    %v2462 = vld [vmem:[%s10 + $0x34c] sm:$0xf]
    %v2463 = vld [vmem:[%s10 + $0x350] sm:$0xf]
    %v2464 = vld [vmem:[%s10 + $0x354] sm:$0xf]
    %v2465 = vld [vmem:[%s10 + $0x358] sm:$0xf]
    %v2466 = vld [vmem:[%s10 + $0x35c] sm:$0xf]
    %v2467 = vld [vmem:[%s10 + $0x360] sm:$0xf]
    %v2468 = vld [vmem:[%s10 + $0x364] sm:$0xf]
    %v2469 = vld [vmem:[%s10 + $0x368] sm:$0xf]
    %v2470 = vld [vmem:[%s10 + $0x36c] sm:$0xf]
    %v2471 = vld [vmem:[%s10 + $0x370] sm:$0xf]
    %v2472 = vld [vmem:[%s10 + $0x374] sm:$0xf]
    %v2473 = vld [vmem:[%s10 + $0x378] sm:$0xf]
    %v2474 = vld [vmem:[%s10 + $0x37c] sm:$0xf]
    %v2475 = vld [vmem:[%s10 + $0x380] sm:$0xf]
    %v2476 = vld [vmem:[%s10 + $0x384] sm:$0xf]
    %v2477 = vld [vmem:[%s10 + $0x388] sm:$0xf]
    %v2478 = vld [vmem:[%s10 + $0x38c] sm:$0xf]
    %v2479 = vld [vmem:[%s10 + $0x390] sm:$0xf]
    %v2480 = vld [vmem:[%s10 + $0x394] sm:$0xf]
    %v2481 = vld [vmem:[%s10 + $0x398] sm:$0xf]
    %v2482 = vld [vmem:[%s10 + $0x39c] sm:$0xf]
    %v2483 = vld [vmem:[%s10 + $0x3a0] sm:$0xf]
    %v2484 = vld [vmem:[%s10 + $0x3a4] sm:$0xf]
    %v2485 = vld [vmem:[%s10 + $0x3a8] sm:$0xf]
    %v2486 = vld [vmem:[%s10 + $0x3ac] sm:$0xf]
    %v2487 = vld [vmem:[%s10 + $0x3b0] sm:$0xf]
    %v2488 = vld [vmem:[%s10 + $0x3b4] sm:$0xf]
    %v2489 = vld [vmem:[%s10 + $0x3b8] sm:$0xf]
    %v2490 = vld [vmem:[%s10 + $0x3bc] sm:$0xf]
    %v2491 = vld [vmem:[%s10 + $0x3c0] sm:$0xf]
    %v2492 = vld [vmem:[%s10 + $0x3c4] sm:$0xf]
    %v2493 = vld [vmem:[%s10 + $0x3c8] sm:$0xf]
    %v2494 = vld [vmem:[%s10 + $0x3cc] sm:$0xf]
    %v2495 = vld [vmem:[%s10 + $0x3d0] sm:$0xf]
    %v2496 = vld [vmem:[%s10 + $0x3d4] sm:$0xf]
    %v2497 = vld [vmem:[%s10 + $0x3d8] sm:$0xf]
    %v2498 = vld [vmem:[%s10 + $0x3dc] sm:$0xf]
    %v2499 = vld [vmem:[%s10 + $0x3e0] sm:$0xf]
    %v2500 = vld [vmem:[%s10 + $0x3e4] sm:$0xf]
    %v2501 = vld [vmem:[%s10 + $0x3e8] sm:$0xf]
    %v2502 = vld [vmem:[%s10 + $0x3ec] sm:$0xf]
    %v2503 = vld [vmem:[%s10 + $0x3f0] sm:$0xf]
    %v2504 = vld [vmem:[%s10 + $0x3f4] sm:$0xf]
    %v2505 = vld [vmem:[%s10 + $0x3f8] sm:$0xf]
    %v2506 = vld [vmem:[%s10 + $0x3fc] sm:$0xf]
    %v2507 = vunpack.c.l.bf16 %v2251
    %v2508 = vunpack.c.l.bf16 %v2252
    %v2509 = vunpack.c.l.bf16 %v2253
    %v2510 = vunpack.c.l.bf16 %v2254
    %v2511 = vunpack.c.l.bf16 %v2255
    %v2512 = vunpack.c.l.bf16 %v2256
    %v2513 = vunpack.c.l.bf16 %v2257
    %v2514 = vunpack.c.l.bf16 %v2258
    %v2515 = vunpack.c.l.bf16 %v2259
    %v2516 = vunpack.c.l.bf16 %v2260
    %v2517 = vunpack.c.l.bf16 %v2261
    %v2518 = vunpack.c.l.bf16 %v2262
    %v2519 = vunpack.c.l.bf16 %v2263
    %v2520 = vunpack.c.l.bf16 %v2264
    %v2521 = vunpack.c.l.bf16 %v2265
    %v2522 = vunpack.c.l.bf16 %v2266
    %v2523 = vunpack.c.l.bf16 %v2267
    %v2524 = vunpack.c.l.bf16 %v2268
    %v2525 = vunpack.c.l.bf16 %v2269
    %v2526 = vunpack.c.l.bf16 %v2270
    %v2527 = vunpack.c.l.bf16 %v2271
    %v2528 = vunpack.c.l.bf16 %v2272
    %v2529 = vunpack.c.l.bf16 %v2273
    %v2530 = vunpack.c.l.bf16 %v2274
    %v2531 = vunpack.c.l.bf16 %v2275
    %v2532 = vunpack.c.l.bf16 %v2276
    %v2533 = vunpack.c.l.bf16 %v2277
    %v2534 = vunpack.c.l.bf16 %v2278
    %v2535 = vunpack.c.l.bf16 %v2279
    %v2536 = vunpack.c.l.bf16 %v2280
    %v2537 = vunpack.c.l.bf16 %v2281
    %v2538 = vunpack.c.l.bf16 %v2282
    %v2539 = vunpack.c.l.bf16 %v2283
    %v2540 = vunpack.c.l.bf16 %v2284
    %v2541 = vunpack.c.l.bf16 %v2285
    %v2542 = vunpack.c.l.bf16 %v2286
    %v2543 = vunpack.c.l.bf16 %v2287
    %v2544 = vunpack.c.l.bf16 %v2288
    %v2545 = vunpack.c.l.bf16 %v2289
    %v2546 = vunpack.c.l.bf16 %v2290
    %v2547 = vunpack.c.l.bf16 %v2291
    %v2548 = vunpack.c.l.bf16 %v2292
    %v2549 = vunpack.c.l.bf16 %v2293
    %v2550 = vunpack.c.l.bf16 %v2294
    %v2551 = vunpack.c.l.bf16 %v2295
    %v2552 = vunpack.c.l.bf16 %v2296
    %v2553 = vunpack.c.l.bf16 %v2297
    %v2554 = vunpack.c.l.bf16 %v2298
    %v2555 = vunpack.c.l.bf16 %v2299
    %v2556 = vunpack.c.l.bf16 %v2300
    %v2557 = vunpack.c.l.bf16 %v2301
    %v2558 = vunpack.c.l.bf16 %v2302
    %v2559 = vunpack.c.l.bf16 %v2303
    %v2560 = vunpack.c.l.bf16 %v2304
    %v2561 = vunpack.c.l.bf16 %v2305
    %v2562 = vunpack.c.l.bf16 %v2306
    %v2563 = vunpack.c.l.bf16 %v2307
    %v2564 = vunpack.c.l.bf16 %v2308
    %v2565 = vunpack.c.l.bf16 %v2309
    %v2566 = vunpack.c.l.bf16 %v2310
    %v2567 = vunpack.c.l.bf16 %v2311
    %v2568 = vunpack.c.l.bf16 %v2312
    %v2569 = vunpack.c.l.bf16 %v2313
    %v2570 = vunpack.c.l.bf16 %v2314
    %v2571 = vunpack.c.l.bf16 %v2315
    %v2572 = vunpack.c.l.bf16 %v2316
    %v2573 = vunpack.c.l.bf16 %v2317
    %v2574 = vunpack.c.l.bf16 %v2318
    %v2575 = vunpack.c.l.bf16 %v2319
    %v2576 = vunpack.c.l.bf16 %v2320
    %v2577 = vunpack.c.l.bf16 %v2321
    %v2578 = vunpack.c.l.bf16 %v2322
    %v2579 = vunpack.c.l.bf16 %v2323
    %v2580 = vunpack.c.l.bf16 %v2324
    %v2581 = vunpack.c.l.bf16 %v2325
    %v2582 = vunpack.c.l.bf16 %v2326
    %v2583 = vunpack.c.l.bf16 %v2327
    %v2584 = vunpack.c.l.bf16 %v2328
    %v2585 = vunpack.c.l.bf16 %v2329
    %v2586 = vunpack.c.l.bf16 %v2330
    %v2587 = vunpack.c.l.bf16 %v2331
    %v2588 = vunpack.c.l.bf16 %v2332
    %v2589 = vunpack.c.l.bf16 %v2333
    %v2590 = vunpack.c.l.bf16 %v2334
    %v2591 = vunpack.c.l.bf16 %v2335
    %v2592 = vunpack.c.l.bf16 %v2336
    %v2593 = vunpack.c.l.bf16 %v2337
    %v2594 = vunpack.c.l.bf16 %v2338
    %v2595 = vunpack.c.l.bf16 %v2339
    %v2596 = vunpack.c.l.bf16 %v2340
    %v2597 = vunpack.c.l.bf16 %v2341
    %v2598 = vunpack.c.l.bf16 %v2342
    %v2599 = vunpack.c.l.bf16 %v2343
    %v2600 = vunpack.c.l.bf16 %v2344
    %v2601 = vunpack.c.l.bf16 %v2345
    %v2602 = vunpack.c.l.bf16 %v2346
    %v2603 = vunpack.c.l.bf16 %v2347
    %v2604 = vunpack.c.l.bf16 %v2348
    %v2605 = vunpack.c.l.bf16 %v2349
    %v2606 = vunpack.c.l.bf16 %v2350
    %v2607 = vunpack.c.l.bf16 %v2351
    %v2608 = vunpack.c.l.bf16 %v2352
    %v2609 = vunpack.c.l.bf16 %v2353
    %v2610 = vunpack.c.l.bf16 %v2354
    %v2611 = vunpack.c.l.bf16 %v2355
    %v2612 = vunpack.c.l.bf16 %v2356
    %v2613 = vunpack.c.l.bf16 %v2357
    %v2614 = vunpack.c.l.bf16 %v2358
    %v2615 = vunpack.c.l.bf16 %v2359
    %v2616 = vunpack.c.l.bf16 %v2360
    %v2617 = vunpack.c.l.bf16 %v2361
    %v2618 = vunpack.c.l.bf16 %v2362
    %v2619 = vunpack.c.l.bf16 %v2363
    %v2620 = vunpack.c.l.bf16 %v2364
    %v2621 = vunpack.c.l.bf16 %v2365
    %v2622 = vunpack.c.l.bf16 %v2366
    %v2623 = vunpack.c.l.bf16 %v2367
    %v2624 = vunpack.c.l.bf16 %v2368
    %v2625 = vunpack.c.l.bf16 %v2369
    %v2626 = vunpack.c.l.bf16 %v2370
    %v2627 = vunpack.c.l.bf16 %v2371
    %v2628 = vunpack.c.l.bf16 %v2372
    %v2629 = vunpack.c.l.bf16 %v2373
    %v2630 = vunpack.c.l.bf16 %v2374
    %v2631 = vunpack.c.l.bf16 %v2375
    %v2632 = vunpack.c.l.bf16 %v2376
    %v2633 = vunpack.c.l.bf16 %v2377
    %v2634 = vunpack.c.l.bf16 %v2378
    %v2635 = vunpack.c.l.bf16 %v2379
    %v2636 = vunpack.c.l.bf16 %v2380
    %v2637 = vunpack.c.l.bf16 %v2381
    %v2638 = vunpack.c.l.bf16 %v2382
    %v2639 = vunpack.c.l.bf16 %v2383
    %v2640 = vunpack.c.l.bf16 %v2384
    %v2641 = vunpack.c.l.bf16 %v2385
    %v2642 = vunpack.c.l.bf16 %v2386
    %v2643 = vunpack.c.l.bf16 %v2387
    %v2644 = vunpack.c.l.bf16 %v2388
    %v2645 = vunpack.c.l.bf16 %v2389
    %v2646 = vunpack.c.l.bf16 %v2390
    %v2647 = vunpack.c.l.bf16 %v2391
    %v2648 = vunpack.c.l.bf16 %v2392
    %v2649 = vunpack.c.l.bf16 %v2393
    %v2650 = vunpack.c.l.bf16 %v2394
    %v2651 = vunpack.c.l.bf16 %v2395
    %v2652 = vunpack.c.l.bf16 %v2396
    %v2653 = vunpack.c.l.bf16 %v2397
    %v2654 = vunpack.c.l.bf16 %v2398
    %v2655 = vunpack.c.l.bf16 %v2399
    %v2656 = vunpack.c.l.bf16 %v2400
    %v2657 = vunpack.c.l.bf16 %v2401
    %v2658 = vunpack.c.l.bf16 %v2402
    %v2659 = vunpack.c.l.bf16 %v2403
    %v2660 = vunpack.c.l.bf16 %v2404
    %v2661 = vunpack.c.l.bf16 %v2405
    %v2662 = vunpack.c.l.bf16 %v2406
    %v2663 = vunpack.c.l.bf16 %v2407
    %v2664 = vunpack.c.l.bf16 %v2408
    %v2665 = vunpack.c.l.bf16 %v2409
    %v2666 = vunpack.c.l.bf16 %v2410
    %v2667 = vunpack.c.l.bf16 %v2411
    %v2668 = vunpack.c.l.bf16 %v2412
    %v2669 = vunpack.c.l.bf16 %v2413
    %v2670 = vunpack.c.l.bf16 %v2414
    %v2671 = vunpack.c.l.bf16 %v2415
    %v2672 = vunpack.c.l.bf16 %v2416
    %v2673 = vunpack.c.l.bf16 %v2417
    %v2674 = vunpack.c.l.bf16 %v2418
    %v2675 = vunpack.c.l.bf16 %v2419
    %v2676 = vunpack.c.l.bf16 %v2420
    %v2677 = vunpack.c.l.bf16 %v2421
    %v2678 = vunpack.c.l.bf16 %v2422
    %v2679 = vunpack.c.l.bf16 %v2423
    %v2680 = vunpack.c.l.bf16 %v2424
    %v2681 = vunpack.c.l.bf16 %v2425
    %v2682 = vunpack.c.l.bf16 %v2426
    %v2683 = vunpack.c.l.bf16 %v2427
    %v2684 = vunpack.c.l.bf16 %v2428
    %v2685 = vunpack.c.l.bf16 %v2429
    %v2686 = vunpack.c.l.bf16 %v2430
    %v2687 = vunpack.c.l.bf16 %v2431
    %v2688 = vunpack.c.l.bf16 %v2432
    %v2689 = vunpack.c.l.bf16 %v2433
    %v2690 = vunpack.c.l.bf16 %v2434
    %v2691 = vunpack.c.l.bf16 %v2435
    %v2692 = vunpack.c.l.bf16 %v2436
    %v2693 = vunpack.c.l.bf16 %v2437
    %v2694 = vunpack.c.l.bf16 %v2438
    %v2695 = vunpack.c.l.bf16 %v2439
    %v2696 = vunpack.c.l.bf16 %v2440
    %v2697 = vunpack.c.l.bf16 %v2441
    %v2698 = vunpack.c.l.bf16 %v2442
    %v2699 = vunpack.c.l.bf16 %v2443
    %v2700 = vunpack.c.l.bf16 %v2444
    %v2701 = vunpack.c.l.bf16 %v2445
    %v2702 = vunpack.c.l.bf16 %v2446
    %v2703 = vunpack.c.l.bf16 %v2447
    %v2704 = vunpack.c.l.bf16 %v2448
    %v2705 = vunpack.c.l.bf16 %v2449
    %v2706 = vunpack.c.l.bf16 %v2450
    %v2707 = vunpack.c.l.bf16 %v2451
    %v2708 = vunpack.c.l.bf16 %v2452
    %v2709 = vunpack.c.l.bf16 %v2453
    %v2710 = vunpack.c.l.bf16 %v2454
    %v2711 = vunpack.c.l.bf16 %v2455
    %v2712 = vunpack.c.l.bf16 %v2456
    %v2713 = vunpack.c.l.bf16 %v2457
    %v2714 = vunpack.c.l.bf16 %v2458
    %v2715 = vunpack.c.l.bf16 %v2459
    %v2716 = vunpack.c.l.bf16 %v2460
    %v2717 = vunpack.c.l.bf16 %v2461
    %v2718 = vunpack.c.l.bf16 %v2462
    %v2719 = vunpack.c.l.bf16 %v2463
    %v2720 = vunpack.c.l.bf16 %v2464
    %v2721 = vunpack.c.l.bf16 %v2465
    %v2722 = vunpack.c.l.bf16 %v2466
    %v2723 = vunpack.c.l.bf16 %v2467
    %v2724 = vunpack.c.l.bf16 %v2468
    %v2725 = vunpack.c.l.bf16 %v2469
    %v2726 = vunpack.c.l.bf16 %v2470
    %v2727 = vunpack.c.l.bf16 %v2471
    %v2728 = vunpack.c.l.bf16 %v2472
    %v2729 = vunpack.c.l.bf16 %v2473
    %v2730 = vunpack.c.l.bf16 %v2474
    %v2731 = vunpack.c.l.bf16 %v2475
    %v2732 = vunpack.c.l.bf16 %v2476
    %v2733 = vunpack.c.l.bf16 %v2477
    %v2734 = vunpack.c.l.bf16 %v2478
    %v2735 = vunpack.c.l.bf16 %v2479
    %v2736 = vunpack.c.l.bf16 %v2480
    %v2737 = vunpack.c.l.bf16 %v2481
    %v2738 = vunpack.c.l.bf16 %v2482
    %v2739 = vunpack.c.l.bf16 %v2483
    %v2740 = vunpack.c.l.bf16 %v2484
    %v2741 = vunpack.c.l.bf16 %v2485
    %v2742 = vunpack.c.l.bf16 %v2486
    %v2743 = vunpack.c.l.bf16 %v2487
    %v2744 = vunpack.c.l.bf16 %v2488
    %v2745 = vunpack.c.l.bf16 %v2489
    %v2746 = vunpack.c.l.bf16 %v2490
    %v2747 = vunpack.c.l.bf16 %v2491
    %v2748 = vunpack.c.l.bf16 %v2492
    %v2749 = vunpack.c.l.bf16 %v2493
    %v2750 = vunpack.c.l.bf16 %v2494
    %v2751 = vunpack.c.l.bf16 %v2495
    %v2752 = vunpack.c.l.bf16 %v2496
    %v2753 = vunpack.c.l.bf16 %v2497
    %v2754 = vunpack.c.l.bf16 %v2498
    %v2755 = vunpack.c.l.bf16 %v2499
    %v2756 = vunpack.c.l.bf16 %v2500
    %v2757 = vunpack.c.l.bf16 %v2501
    %v2758 = vunpack.c.l.bf16 %v2502
    %v2759 = vunpack.c.l.bf16 %v2503
    %v2760 = vunpack.c.l.bf16 %v2504
    %v2761 = vunpack.c.l.bf16 %v2505
    %v2762 = vunpack.c.l.bf16 %v2506
    %v2763 = vld [vmem:[%s9] sm:$0xff]
    %v2764 = vld [vmem:[%s9 + $0x8] sm:$0xff]
    %v2767 = vlaneseq
    %v2768 = vshrl.u32 %v2767, 7
    %v2769 = vsub.s32 0, %v2768
    %v2770 = vrot.slane %v2763, %v2769
    %v2771 = vlaneseq
    %v2772 = vshrl.u32 %v2771, 7
    %v2773 = vsub.s32 1, %v2772
    %v2774 = vrot.slane %v2763, %v2773
    %v2775 = vlaneseq
    %v2776 = vshrl.u32 %v2775, 7
    %v2777 = vsub.s32 2, %v2776
    %v2778 = vrot.slane %v2763, %v2777
    %v2779 = vlaneseq
    %v2780 = vshrl.u32 %v2779, 7
    %v2781 = vsub.s32 3, %v2780
    %v2782 = vrot.slane %v2763, %v2781
    %v2783 = vlaneseq
    %v2784 = vshrl.u32 %v2783, 7
    %v2785 = vsub.s32 4, %v2784
    %v2786 = vrot.slane %v2763, %v2785
    %v2787 = vlaneseq
    %v2788 = vshrl.u32 %v2787, 7
    %v2789 = vsub.s32 5, %v2788
    %v2790 = vrot.slane %v2763, %v2789
    %v2791 = vlaneseq
    %v2792 = vshrl.u32 %v2791, 7
    %v2793 = vsub.s32 6, %v2792
    %v2794 = vrot.slane %v2763, %v2793
    %v2795 = vlaneseq
    %v2796 = vshrl.u32 %v2795, 7
    %v2797 = vsub.s32 7, %v2796
    %v2798 = vrot.slane %v2763, %v2797
    %v2799 = vlaneseq
    %v2800 = vshrl.u32 %v2799, 7
    %v2801 = vsub.s32 0, %v2800
    %v2802 = vrot.slane %v2764, %v2801
    %v2803 = vlaneseq
    %v2804 = vshrl.u32 %v2803, 7
    %v2805 = vsub.s32 1, %v2804
    %v2806 = vrot.slane %v2764, %v2805
    %v2807 = vlaneseq
    %v2808 = vshrl.u32 %v2807, 7
    %v2809 = vsub.s32 2, %v2808
    %v2810 = vrot.slane %v2764, %v2809
    %v2811 = vlaneseq
    %v2812 = vshrl.u32 %v2811, 7
    %v2813 = vsub.s32 3, %v2812
    %v2814 = vrot.slane %v2764, %v2813
    %v2815 = vlaneseq
    %v2816 = vshrl.u32 %v2815, 7
    %v2817 = vsub.s32 4, %v2816
    %v2818 = vrot.slane %v2764, %v2817
    %v2819 = vlaneseq
    %v2820 = vshrl.u32 %v2819, 7
    %v2821 = vsub.s32 5, %v2820
    %v2822 = vrot.slane %v2764, %v2821
    %v2823 = vlaneseq
    %v2824 = vshrl.u32 %v2823, 7
    %v2825 = vsub.s32 6, %v2824
    %v2826 = vrot.slane %v2764, %v2825
    %v2827 = vlaneseq
    %v2828 = vshrl.u32 %v2827, 7
    %v2829 = vsub.s32 7, %v2828
    %v2830 = vrot.slane %v2764, %v2829
    %v2848 = vsel %vm116, %v2153, 0
    %v2851 = vsel %vm116, %v2154, 0
    %2853 = vmatprep.subr.mxu0 0.0
    %2854 = vmatpush1.msra.mxu0 0.0
    %2855 = vmatprep.subr.mxu0 0.0
    %2856 = vmatpush1.msra.mxu0 0.0
    %2857 = vmatprep.subr.mxu0 0.0
    %2858 = vmatpush1.msra.mxu0 0.0
    %2859 = vmatprep.subr.mxu0 0.0
    %2860 = vmatpush1.msra.mxu0 0.0
    %2861 = vmatprep.subr.mxu0 0.0
    %2862 = vmatpush1.msra.mxu0 0.0
    %2863 = vmatprep.subr.mxu0 0.0
    %2864 = vmatpush1.msra.mxu0 0.0
    %2865 = vmatprep.subr.mxu0 0.0
    %2866 = vmatpush1.msra.mxu0 0.0
    %2867 = vmatprep.subr.mxu0 0.0
    %2868 = vmatpush1.msra.mxu0 0.0
    %2869 = vmatprep.subr.mxu0 0.0
    %2870 = vmatpush1.msra.mxu0 0.0
    %2871 = vmatprep.subr.mxu0 0.0
    %2872 = vmatpush1.msra.mxu0 0.0
    %2873 = vmatprep.subr.mxu0 0.0
    %2874 = vmatpush1.msra.mxu0 0.0
    %2875 = vmatprep.subr.mxu0 0.0
    %2876 = vmatpush1.msra.mxu0 0.0
    %2877 = vmatprep.subr.mxu0 %v2236
    %2878 = vmatpush1.msra.mxu0 %v2235
    %2879 = vmatprep.subr.mxu0 %v2220
    %2880 = vmatpush1.msra.mxu0 %v2219
    %2881 = vmatprep.subr.mxu0 %v2204
    %2882 = vmatpush1.msra.mxu0 %v2203
    %2883 = vmatprep.subr.mxu0 %v2188
    %2884 = vmatpush1.msra.mxu0 %v2187
    %2885 = vmatprep.subr.mxu0 0.0
    %2886 = vmatpush2.msra.mxu0 0.0
    %2887 = vmatprep.subr.mxu0 0.0
    %2888 = vmatpush2.msra.mxu0 0.0
    %2889 = vmatprep.subr.mxu0 0.0
    %2890 = vmatpush2.msra.mxu0 0.0
    %2891 = vmatprep.subr.mxu0 0.0
    %2892 = vmatpush2.msra.mxu0 0.0
    %2893 = vmatprep.subr.mxu0 0.0
    %2894 = vmatpush2.msra.mxu0 0.0
    %2895 = vmatprep.subr.mxu0 0.0
    %2896 = vmatpush2.msra.mxu0 0.0
    %2897 = vmatprep.subr.mxu0 0.0
    %2898 = vmatpush2.msra.mxu0 0.0
    %2899 = vmatprep.subr.mxu0 0.0
    %2900 = vmatpush2.msra.mxu0 0.0
    %2901 = vmatprep.subr.mxu0 0.0
    %2902 = vmatpush2.msra.mxu0 0.0
    %2903 = vmatprep.subr.mxu0 0.0
    %2904 = vmatpush2.msra.mxu0 0.0
    %2905 = vmatprep.subr.mxu0 0.0
    %2906 = vmatpush2.msra.mxu0 0.0
    %2907 = vmatprep.subr.mxu0 0.0
    %2908 = vmatpush2.msra.mxu0 0.0
    %2909 = vmatprep.subr.mxu0 0.0
    %2910 = vmatpush2.msra.mxu0 0.0
    %2911 = vmatprep.subr.mxu0 0.0
    %2912 = vmatpush2.msra.mxu0 0.0
    %2913 = vmatprep.subr.mxu0 0.0
    %2914 = vmatpush2.msra.mxu0 0.0
    %2915 = vmatprep.subr.mxu0 0.0
    %2916 = vmatpush2.msra.mxu0 0.0
    %2917 = vmatprep.mubr.f32.mxu0 0.0
    %2918 = vmatmul.mubr.f32.gmra.mxu0 %v2848
    %v2919 = vpop.f32.mrf.mxu0
    %v2920 = vadd.f32 %v2770, %v2919
    %v2921 = vpop.f32.mrf.mxu0
    %v2922 = vadd.f32 %v2774, %v2921
    %2923 = vmatprep.mubr.f32.mxu0 0.0
    %2924 = vmatmul.mubr.f32.gmra.mxu0 %v2851
    %v2925 = vpop.f32.mrf.mxu0
    %v2926 = vadd.f32 %v2770, %v2925
    %v2927 = vpop.f32.mrf.mxu0
    %v2928 = vadd.f32 %v2774, %v2927
    %2929 = vdwg.mxu0
    %2930 = vmatprep.subr.mxu0 0.0
    %2931 = vmatpush1.msra.mxu0 0.0
    %2932 = vmatprep.subr.mxu0 0.0
    %2933 = vmatpush1.msra.mxu0 0.0
    %2934 = vmatprep.subr.mxu0 0.0
    %2935 = vmatpush1.msra.mxu0 0.0
    %2936 = vmatprep.subr.mxu0 0.0
    %2937 = vmatpush1.msra.mxu0 0.0
    %2938 = vmatprep.subr.mxu0 0.0
    %2939 = vmatpush1.msra.mxu0 0.0
    %2940 = vmatprep.subr.mxu0 0.0
    %2941 = vmatpush1.msra.mxu0 0.0
    %2942 = vmatprep.subr.mxu0 0.0
    %2943 = vmatpush1.msra.mxu0 0.0
    %2944 = vmatprep.subr.mxu0 0.0
    %2945 = vmatpush1.msra.mxu0 0.0
    %2946 = vmatprep.subr.mxu0 0.0
    %2947 = vmatpush1.msra.mxu0 0.0
    %2948 = vmatprep.subr.mxu0 0.0
    %2949 = vmatpush1.msra.mxu0 0.0
    %2950 = vmatprep.subr.mxu0 0.0
    %2951 = vmatpush1.msra.mxu0 0.0
    %2952 = vmatprep.subr.mxu0 0.0
    %2953 = vmatpush1.msra.mxu0 0.0
    %2954 = vmatprep.subr.mxu0 %v2238
    %2955 = vmatpush1.msra.mxu0 %v2237
    %2956 = vmatprep.subr.mxu0 %v2222
    %2957 = vmatpush1.msra.mxu0 %v2221
    %2958 = vmatprep.subr.mxu0 %v2206
    %2959 = vmatpush1.msra.mxu0 %v2205
    %2960 = vmatprep.subr.mxu0 %v2190
    %2961 = vmatpush1.msra.mxu0 %v2189
    %2962 = vmatprep.subr.mxu0 0.0
    %2963 = vmatpush2.msra.mxu0 0.0
    %2964 = vmatprep.subr.mxu0 0.0
    %2965 = vmatpush2.msra.mxu0 0.0
    %2966 = vmatprep.subr.mxu0 0.0
    %2967 = vmatpush2.msra.mxu0 0.0
    %2968 = vmatprep.subr.mxu0 0.0
    %2969 = vmatpush2.msra.mxu0 0.0
    %2970 = vmatprep.subr.mxu0 0.0
    %2971 = vmatpush2.msra.mxu0 0.0
    %2972 = vmatprep.subr.mxu0 0.0
    %2973 = vmatpush2.msra.mxu0 0.0
    %2974 = vmatprep.subr.mxu0 0.0
    %2975 = vmatpush2.msra.mxu0 0.0
    %2976 = vmatprep.subr.mxu0 0.0
    %2977 = vmatpush2.msra.mxu0 0.0
    %2978 = vmatprep.subr.mxu0 0.0
    %2979 = vmatpush2.msra.mxu0 0.0
    %2980 = vmatprep.subr.mxu0 0.0
    %2981 = vmatpush2.msra.mxu0 0.0
    %2982 = vmatprep.subr.mxu0 0.0
    %2983 = vmatpush2.msra.mxu0 0.0
    %2984 = vmatprep.subr.mxu0 0.0
    %2985 = vmatpush2.msra.mxu0 0.0
    %2986 = vmatprep.subr.mxu0 0.0
    %2987 = vmatpush2.msra.mxu0 0.0
    %2988 = vmatprep.subr.mxu0 0.0
    %2989 = vmatpush2.msra.mxu0 0.0
    %2990 = vmatprep.subr.mxu0 0.0
    %2991 = vmatpush2.msra.mxu0 0.0
    %2992 = vmatprep.subr.mxu0 0.0
    %2993 = vmatpush2.msra.mxu0 0.0
    %2994 = vmatprep.mubr.f32.mxu0 0.0
    %2995 = vmatmul.mubr.f32.gmra.mxu0 %v2848
    %v2996 = vpop.f32.mrf.mxu0
    %v2997 = vadd.f32 %v2778, %v2996
    %v2998 = vpop.f32.mrf.mxu0
    %v2999 = vadd.f32 %v2782, %v2998
    %3000 = vmatprep.mubr.f32.mxu0 0.0
    %3001 = vmatmul.mubr.f32.gmra.mxu0 %v2851
    %v3002 = vpop.f32.mrf.mxu0
    %v3003 = vadd.f32 %v2778, %v3002
    %v3004 = vpop.f32.mrf.mxu0
    %v3005 = vadd.f32 %v2782, %v3004
    %3006 = vdwg.mxu0
    %3007 = vmatprep.subr.mxu0 0.0
    %3008 = vmatpush1.msra.mxu0 0.0
    %3009 = vmatprep.subr.mxu0 0.0
    %3010 = vmatpush1.msra.mxu0 0.0
    %3011 = vmatprep.subr.mxu0 0.0
    %3012 = vmatpush1.msra.mxu0 0.0
    %3013 = vmatprep.subr.mxu0 0.0
    %3014 = vmatpush1.msra.mxu0 0.0
    %3015 = vmatprep.subr.mxu0 0.0
    %3016 = vmatpush1.msra.mxu0 0.0
    %3017 = vmatprep.subr.mxu0 0.0
    %3018 = vmatpush1.msra.mxu0 0.0
    %3019 = vmatprep.subr.mxu0 0.0
    %3020 = vmatpush1.msra.mxu0 0.0
    %3021 = vmatprep.subr.mxu0 0.0
    %3022 = vmatpush1.msra.mxu0 0.0
    %3023 = vmatprep.subr.mxu0 0.0
    %3024 = vmatpush1.msra.mxu0 0.0
    %3025 = vmatprep.subr.mxu0 0.0
    %3026 = vmatpush1.msra.mxu0 0.0
    %3027 = vmatprep.subr.mxu0 0.0
    %3028 = vmatpush1.msra.mxu0 0.0
    %3029 = vmatprep.subr.mxu0 0.0
    %3030 = vmatpush1.msra.mxu0 0.0
    %3031 = vmatprep.subr.mxu0 %v2240
    %3032 = vmatpush1.msra.mxu0 %v2239
    %3033 = vmatprep.subr.mxu0 %v2224
    %3034 = vmatpush1.msra.mxu0 %v2223
    %3035 = vmatprep.subr.mxu0 %v2208
    %3036 = vmatpush1.msra.mxu0 %v2207
    %3037 = vmatprep.subr.mxu0 %v2192
    %3038 = vmatpush1.msra.mxu0 %v2191
    %3039 = vmatprep.subr.mxu0 0.0
    %3040 = vmatpush2.msra.mxu0 0.0
    %3041 = vmatprep.subr.mxu0 0.0
    %3042 = vmatpush2.msra.mxu0 0.0
    %3043 = vmatprep.subr.mxu0 0.0
    %3044 = vmatpush2.msra.mxu0 0.0
    %3045 = vmatprep.subr.mxu0 0.0
    %3046 = vmatpush2.msra.mxu0 0.0
    %3047 = vmatprep.subr.mxu0 0.0
    %3048 = vmatpush2.msra.mxu0 0.0
    %3049 = vmatprep.subr.mxu0 0.0
    %3050 = vmatpush2.msra.mxu0 0.0
    %3051 = vmatprep.subr.mxu0 0.0
    %3052 = vmatpush2.msra.mxu0 0.0
    %3053 = vmatprep.subr.mxu0 0.0
    %3054 = vmatpush2.msra.mxu0 0.0
    %3055 = vmatprep.subr.mxu0 0.0
    %3056 = vmatpush2.msra.mxu0 0.0
    %3057 = vmatprep.subr.mxu0 0.0
    %3058 = vmatpush2.msra.mxu0 0.0
    %3059 = vmatprep.subr.mxu0 0.0
    %3060 = vmatpush2.msra.mxu0 0.0
    %3061 = vmatprep.subr.mxu0 0.0
    %3062 = vmatpush2.msra.mxu0 0.0
    %3063 = vmatprep.subr.mxu0 0.0
    %3064 = vmatpush2.msra.mxu0 0.0
    %3065 = vmatprep.subr.mxu0 0.0
    %3066 = vmatpush2.msra.mxu0 0.0
    %3067 = vmatprep.subr.mxu0 0.0
    %3068 = vmatpush2.msra.mxu0 0.0
    %3069 = vmatprep.subr.mxu0 0.0
    %3070 = vmatpush2.msra.mxu0 0.0
    %3071 = vmatprep.mubr.f32.mxu0 0.0
    %3072 = vmatmul.mubr.f32.gmra.mxu0 %v2848
    %v3073 = vpop.f32.mrf.mxu0
    %v3074 = vadd.f32 %v2786, %v3073
    %v3075 = vpop.f32.mrf.mxu0
    %v3076 = vadd.f32 %v2790, %v3075
    %3077 = vmatprep.mubr.f32.mxu0 0.0
    %3078 = vmatmul.mubr.f32.gmra.mxu0 %v2851
    %v3079 = vpop.f32.mrf.mxu0
    %v3080 = vadd.f32 %v2786, %v3079
    %v3081 = vpop.f32.mrf.mxu0
    %v3082 = vadd.f32 %v2790, %v3081
    %3083 = vdwg.mxu0
    %3084 = vmatprep.subr.mxu0 0.0
    %3085 = vmatpush1.msra.mxu0 0.0
    %3086 = vmatprep.subr.mxu0 0.0
    %3087 = vmatpush1.msra.mxu0 0.0
    %3088 = vmatprep.subr.mxu0 0.0
    %3089 = vmatpush1.msra.mxu0 0.0
    %3090 = vmatprep.subr.mxu0 0.0
    %3091 = vmatpush1.msra.mxu0 0.0
    %3092 = vmatprep.subr.mxu0 0.0
    %3093 = vmatpush1.msra.mxu0 0.0
    %3094 = vmatprep.subr.mxu0 0.0
    %3095 = vmatpush1.msra.mxu0 0.0
    %3096 = vmatprep.subr.mxu0 0.0
    %3097 = vmatpush1.msra.mxu0 0.0
    %3098 = vmatprep.subr.mxu0 0.0
    %3099 = vmatpush1.msra.mxu0 0.0
    %3100 = vmatprep.subr.mxu0 0.0
    %3101 = vmatpush1.msra.mxu0 0.0
    %3102 = vmatprep.subr.mxu0 0.0
    %3103 = vmatpush1.msra.mxu0 0.0
    %3104 = vmatprep.subr.mxu0 0.0
    %3105 = vmatpush1.msra.mxu0 0.0
    %3106 = vmatprep.subr.mxu0 0.0
    %3107 = vmatpush1.msra.mxu0 0.0
    %3108 = vmatprep.subr.mxu0 %v2242
    %3109 = vmatpush1.msra.mxu0 %v2241
    %3110 = vmatprep.subr.mxu0 %v2226
    %3111 = vmatpush1.msra.mxu0 %v2225
    %3112 = vmatprep.subr.mxu0 %v2210
    %3113 = vmatpush1.msra.mxu0 %v2209
    %3114 = vmatprep.subr.mxu0 %v2194
    %3115 = vmatpush1.msra.mxu0 %v2193
    %3116 = vmatprep.subr.mxu0 0.0
    %3117 = vmatpush2.msra.mxu0 0.0
    %3118 = vmatprep.subr.mxu0 0.0
    %3119 = vmatpush2.msra.mxu0 0.0
    %3120 = vmatprep.subr.mxu0 0.0
    %3121 = vmatpush2.msra.mxu0 0.0
    %3122 = vmatprep.subr.mxu0 0.0
    %3123 = vmatpush2.msra.mxu0 0.0
    %3124 = vmatprep.subr.mxu0 0.0
    %3125 = vmatpush2.msra.mxu0 0.0
    %3126 = vmatprep.subr.mxu0 0.0
    %3127 = vmatpush2.msra.mxu0 0.0
    %3128 = vmatprep.subr.mxu0 0.0
    %3129 = vmatpush2.msra.mxu0 0.0
    %3130 = vmatprep.subr.mxu0 0.0
    %3131 = vmatpush2.msra.mxu0 0.0
    %3132 = vmatprep.subr.mxu0 0.0
    %3133 = vmatpush2.msra.mxu0 0.0
    %3134 = vmatprep.subr.mxu0 0.0
    %3135 = vmatpush2.msra.mxu0 0.0
    %3136 = vmatprep.subr.mxu0 0.0
    %3137 = vmatpush2.msra.mxu0 0.0
    %3138 = vmatprep.subr.mxu0 0.0
    %3139 = vmatpush2.msra.mxu0 0.0
    %3140 = vmatprep.subr.mxu0 0.0
    %3141 = vmatpush2.msra.mxu0 0.0
    %3142 = vmatprep.subr.mxu0 0.0
    %3143 = vmatpush2.msra.mxu0 0.0
    %3144 = vmatprep.subr.mxu0 0.0
    %3145 = vmatpush2.msra.mxu0 0.0
    %3146 = vmatprep.subr.mxu0 0.0
    %3147 = vmatpush2.msra.mxu0 0.0
    %3148 = vmatprep.mubr.f32.mxu0 0.0
    %3149 = vmatmul.mubr.f32.gmra.mxu0 %v2848
    %v3150 = vpop.f32.mrf.mxu0
    %v3151 = vadd.f32 %v2794, %v3150
    %v3152 = vpop.f32.mrf.mxu0
    %v3153 = vadd.f32 %v2798, %v3152
    %3154 = vmatprep.mubr.f32.mxu0 0.0
    %3155 = vmatmul.mubr.f32.gmra.mxu0 %v2851
    %v3156 = vpop.f32.mrf.mxu0
    %v3157 = vadd.f32 %v2794, %v3156
    %v3158 = vpop.f32.mrf.mxu0
    %v3159 = vadd.f32 %v2798, %v3158
    %3160 = vdwg.mxu0
    %3161 = vmatprep.subr.mxu0 0.0
    %3162 = vmatpush1.msra.mxu0 0.0
    %3163 = vmatprep.subr.mxu0 0.0
    %3164 = vmatpush1.msra.mxu0 0.0
    %3165 = vmatprep.subr.mxu0 0.0
    %3166 = vmatpush1.msra.mxu0 0.0
    %3167 = vmatprep.subr.mxu0 0.0
    %3168 = vmatpush1.msra.mxu0 0.0
    %3169 = vmatprep.subr.mxu0 0.0
    %3170 = vmatpush1.msra.mxu0 0.0
    %3171 = vmatprep.subr.mxu0 0.0
    %3172 = vmatpush1.msra.mxu0 0.0
    %3173 = vmatprep.subr.mxu0 0.0
    %3174 = vmatpush1.msra.mxu0 0.0
    %3175 = vmatprep.subr.mxu0 0.0
    %3176 = vmatpush1.msra.mxu0 0.0
    %3177 = vmatprep.subr.mxu0 0.0
    %3178 = vmatpush1.msra.mxu0 0.0
    %3179 = vmatprep.subr.mxu0 0.0
    %3180 = vmatpush1.msra.mxu0 0.0
    %3181 = vmatprep.subr.mxu0 0.0
    %3182 = vmatpush1.msra.mxu0 0.0
    %3183 = vmatprep.subr.mxu0 0.0
    %3184 = vmatpush1.msra.mxu0 0.0
    %3185 = vmatprep.subr.mxu0 %v2244
    %3186 = vmatpush1.msra.mxu0 %v2243
    %3187 = vmatprep.subr.mxu0 %v2228
    %3188 = vmatpush1.msra.mxu0 %v2227
    %3189 = vmatprep.subr.mxu0 %v2212
    %3190 = vmatpush1.msra.mxu0 %v2211
    %3191 = vmatprep.subr.mxu0 %v2196
    %3192 = vmatpush1.msra.mxu0 %v2195
    %3193 = vmatprep.subr.mxu0 0.0
    %3194 = vmatpush2.msra.mxu0 0.0
    %3195 = vmatprep.subr.mxu0 0.0
    %3196 = vmatpush2.msra.mxu0 0.0
    %3197 = vmatprep.subr.mxu0 0.0
    %3198 = vmatpush2.msra.mxu0 0.0
    %3199 = vmatprep.subr.mxu0 0.0
    %3200 = vmatpush2.msra.mxu0 0.0
    %3201 = vmatprep.subr.mxu0 0.0
    %3202 = vmatpush2.msra.mxu0 0.0
    %3203 = vmatprep.subr.mxu0 0.0
    %3204 = vmatpush2.msra.mxu0 0.0
    %3205 = vmatprep.subr.mxu0 0.0
    %3206 = vmatpush2.msra.mxu0 0.0
    %3207 = vmatprep.subr.mxu0 0.0
    %3208 = vmatpush2.msra.mxu0 0.0
    %3209 = vmatprep.subr.mxu0 0.0
    %3210 = vmatpush2.msra.mxu0 0.0
    %3211 = vmatprep.subr.mxu0 0.0
    %3212 = vmatpush2.msra.mxu0 0.0
    %3213 = vmatprep.subr.mxu0 0.0
    %3214 = vmatpush2.msra.mxu0 0.0
    %3215 = vmatprep.subr.mxu0 0.0
    %3216 = vmatpush2.msra.mxu0 0.0
    %3217 = vmatprep.subr.mxu0 0.0
    %3218 = vmatpush2.msra.mxu0 0.0
    %3219 = vmatprep.subr.mxu0 0.0
    %3220 = vmatpush2.msra.mxu0 0.0
    %3221 = vmatprep.subr.mxu0 0.0
    %3222 = vmatpush2.msra.mxu0 0.0
    %3223 = vmatprep.subr.mxu0 0.0
    %3224 = vmatpush2.msra.mxu0 0.0
    %3225 = vmatprep.mubr.f32.mxu0 0.0
    %3226 = vmatmul.mubr.f32.gmra.mxu0 %v2848
    %v3227 = vpop.f32.mrf.mxu0
    %v3228 = vadd.f32 %v2802, %v3227
    %v3229 = vpop.f32.mrf.mxu0
    %v3230 = vadd.f32 %v2806, %v3229
    %3231 = vmatprep.mubr.f32.mxu0 0.0
    %3232 = vmatmul.mubr.f32.gmra.mxu0 %v2851
    %v3233 = vpop.f32.mrf.mxu0
    %v3234 = vadd.f32 %v2802, %v3233
    %v3235 = vpop.f32.mrf.mxu0
    %v3236 = vadd.f32 %v2806, %v3235
    %3237 = vdwg.mxu0
    %3238 = vmatprep.subr.mxu0 0.0
    %3239 = vmatpush1.msra.mxu0 0.0
    %3240 = vmatprep.subr.mxu0 0.0
    %3241 = vmatpush1.msra.mxu0 0.0
    %3242 = vmatprep.subr.mxu0 0.0
    %3243 = vmatpush1.msra.mxu0 0.0
    %3244 = vmatprep.subr.mxu0 0.0
    %3245 = vmatpush1.msra.mxu0 0.0
    %3246 = vmatprep.subr.mxu0 0.0
    %3247 = vmatpush1.msra.mxu0 0.0
    %3248 = vmatprep.subr.mxu0 0.0
    %3249 = vmatpush1.msra.mxu0 0.0
    %3250 = vmatprep.subr.mxu0 0.0
    %3251 = vmatpush1.msra.mxu0 0.0
    %3252 = vmatprep.subr.mxu0 0.0
    %3253 = vmatpush1.msra.mxu0 0.0
    %3254 = vmatprep.subr.mxu0 0.0
    %3255 = vmatpush1.msra.mxu0 0.0
    %3256 = vmatprep.subr.mxu0 0.0
    %3257 = vmatpush1.msra.mxu0 0.0
    %3258 = vmatprep.subr.mxu0 0.0
    %3259 = vmatpush1.msra.mxu0 0.0
    %3260 = vmatprep.subr.mxu0 0.0
    %3261 = vmatpush1.msra.mxu0 0.0
    %3262 = vmatprep.subr.mxu0 %v2246
    %3263 = vmatpush1.msra.mxu0 %v2245
    %3264 = vmatprep.subr.mxu0 %v2230
    %3265 = vmatpush1.msra.mxu0 %v2229
    %3266 = vmatprep.subr.mxu0 %v2214
    %3267 = vmatpush1.msra.mxu0 %v2213
    %3268 = vmatprep.subr.mxu0 %v2198
    %3269 = vmatpush1.msra.mxu0 %v2197
    %3270 = vmatprep.subr.mxu0 0.0
    %3271 = vmatpush2.msra.mxu0 0.0
    %3272 = vmatprep.subr.mxu0 0.0
    %3273 = vmatpush2.msra.mxu0 0.0
    %3274 = vmatprep.subr.mxu0 0.0
    %3275 = vmatpush2.msra.mxu0 0.0
    %3276 = vmatprep.subr.mxu0 0.0
    %3277 = vmatpush2.msra.mxu0 0.0
    %3278 = vmatprep.subr.mxu0 0.0
    %3279 = vmatpush2.msra.mxu0 0.0
    %3280 = vmatprep.subr.mxu0 0.0
    %3281 = vmatpush2.msra.mxu0 0.0
    %3282 = vmatprep.subr.mxu0 0.0
    %3283 = vmatpush2.msra.mxu0 0.0
    %3284 = vmatprep.subr.mxu0 0.0
    %3285 = vmatpush2.msra.mxu0 0.0
    %3286 = vmatprep.subr.mxu0 0.0
    %3287 = vmatpush2.msra.mxu0 0.0
    %3288 = vmatprep.subr.mxu0 0.0
    %3289 = vmatpush2.msra.mxu0 0.0
    %3290 = vmatprep.subr.mxu0 0.0
    %3291 = vmatpush2.msra.mxu0 0.0
    %3292 = vmatprep.subr.mxu0 0.0
    %3293 = vmatpush2.msra.mxu0 0.0
    %3294 = vmatprep.subr.mxu0 0.0
    %3295 = vmatpush2.msra.mxu0 0.0
    %3296 = vmatprep.subr.mxu0 0.0
    %3297 = vmatpush2.msra.mxu0 0.0
    %3298 = vmatprep.subr.mxu0 0.0
    %3299 = vmatpush2.msra.mxu0 0.0
    %3300 = vmatprep.subr.mxu0 0.0
    %3301 = vmatpush2.msra.mxu0 0.0
    %3302 = vmatprep.mubr.f32.mxu0 0.0
    %3303 = vmatmul.mubr.f32.gmra.mxu0 %v2848
    %v3304 = vpop.f32.mrf.mxu0
    %v3305 = vadd.f32 %v2810, %v3304
    %v3306 = vpop.f32.mrf.mxu0
    %v3307 = vadd.f32 %v2814, %v3306
    %3308 = vmatprep.mubr.f32.mxu0 0.0
    %3309 = vmatmul.mubr.f32.gmra.mxu0 %v2851
    %v3310 = vpop.f32.mrf.mxu0
    %v3311 = vadd.f32 %v2810, %v3310
    %v3312 = vpop.f32.mrf.mxu0
    %v3313 = vadd.f32 %v2814, %v3312
    %3314 = vdwg.mxu0
    %3315 = vmatprep.subr.mxu0 0.0
    %3316 = vmatpush1.msra.mxu0 0.0
    %3317 = vmatprep.subr.mxu0 0.0
    %3318 = vmatpush1.msra.mxu0 0.0
    %3319 = vmatprep.subr.mxu0 0.0
    %3320 = vmatpush1.msra.mxu0 0.0
    %3321 = vmatprep.subr.mxu0 0.0
    %3322 = vmatpush1.msra.mxu0 0.0
    %3323 = vmatprep.subr.mxu0 0.0
    %3324 = vmatpush1.msra.mxu0 0.0
    %3325 = vmatprep.subr.mxu0 0.0
    %3326 = vmatpush1.msra.mxu0 0.0
    %3327 = vmatprep.subr.mxu0 0.0
    %3328 = vmatpush1.msra.mxu0 0.0
    %3329 = vmatprep.subr.mxu0 0.0
    %3330 = vmatpush1.msra.mxu0 0.0
    %3331 = vmatprep.subr.mxu0 0.0
    %3332 = vmatpush1.msra.mxu0 0.0
    %3333 = vmatprep.subr.mxu0 0.0
    %3334 = vmatpush1.msra.mxu0 0.0
    %3335 = vmatprep.subr.mxu0 0.0
    %3336 = vmatpush1.msra.mxu0 0.0
    %3337 = vmatprep.subr.mxu0 0.0
    %3338 = vmatpush1.msra.mxu0 0.0
    %3339 = vmatprep.subr.mxu0 %v2248
    %3340 = vmatpush1.msra.mxu0 %v2247
    %3341 = vmatprep.subr.mxu0 %v2232
    %3342 = vmatpush1.msra.mxu0 %v2231
    %3343 = vmatprep.subr.mxu0 %v2216
    %3344 = vmatpush1.msra.mxu0 %v2215
    %3345 = vmatprep.subr.mxu0 %v2200
    %3346 = vmatpush1.msra.mxu0 %v2199
    %3347 = vmatprep.subr.mxu0 0.0
    %3348 = vmatpush2.msra.mxu0 0.0
    %3349 = vmatprep.subr.mxu0 0.0
    %3350 = vmatpush2.msra.mxu0 0.0
    %3351 = vmatprep.subr.mxu0 0.0
    %3352 = vmatpush2.msra.mxu0 0.0
    %3353 = vmatprep.subr.mxu0 0.0
    %3354 = vmatpush2.msra.mxu0 0.0
    %3355 = vmatprep.subr.mxu0 0.0
    %3356 = vmatpush2.msra.mxu0 0.0
    %3357 = vmatprep.subr.mxu0 0.0
    %3358 = vmatpush2.msra.mxu0 0.0
    %3359 = vmatprep.subr.mxu0 0.0
    %3360 = vmatpush2.msra.mxu0 0.0
    %3361 = vmatprep.subr.mxu0 0.0
    %3362 = vmatpush2.msra.mxu0 0.0
    %3363 = vmatprep.subr.mxu0 0.0
    %3364 = vmatpush2.msra.mxu0 0.0
    %3365 = vmatprep.subr.mxu0 0.0
    %3366 = vmatpush2.msra.mxu0 0.0
    %3367 = vmatprep.subr.mxu0 0.0
    %3368 = vmatpush2.msra.mxu0 0.0
    %3369 = vmatprep.subr.mxu0 0.0
    %3370 = vmatpush2.msra.mxu0 0.0
    %3371 = vmatprep.subr.mxu0 0.0
    %3372 = vmatpush2.msra.mxu0 0.0
    %3373 = vmatprep.subr.mxu0 0.0
    %3374 = vmatpush2.msra.mxu0 0.0
    %3375 = vmatprep.subr.mxu0 0.0
    %3376 = vmatpush2.msra.mxu0 0.0
    %3377 = vmatprep.subr.mxu0 0.0
    %3378 = vmatpush2.msra.mxu0 0.0
    %3379 = vmatprep.mubr.f32.mxu0 0.0
    %3380 = vmatmul.mubr.f32.gmra.mxu0 %v2848
    %v3381 = vpop.f32.mrf.mxu0
    %v3382 = vadd.f32 %v2818, %v3381
    %v3383 = vpop.f32.mrf.mxu0
    %v3384 = vadd.f32 %v2822, %v3383
    %3385 = vmatprep.mubr.f32.mxu0 0.0
    %3386 = vmatmul.mubr.f32.gmra.mxu0 %v2851
    %v3387 = vpop.f32.mrf.mxu0
    %v3388 = vadd.f32 %v2818, %v3387
    %v3389 = vpop.f32.mrf.mxu0
    %v3390 = vadd.f32 %v2822, %v3389
    %3391 = vdwg.mxu0
    %3392 = vmatprep.subr.mxu0 0.0
    %3393 = vmatpush1.msra.mxu0 0.0
    %3394 = vmatprep.subr.mxu0 0.0
    %3395 = vmatpush1.msra.mxu0 0.0
    %3396 = vmatprep.subr.mxu0 0.0
    %3397 = vmatpush1.msra.mxu0 0.0
    %3398 = vmatprep.subr.mxu0 0.0
    %3399 = vmatpush1.msra.mxu0 0.0
    %3400 = vmatprep.subr.mxu0 0.0
    %3401 = vmatpush1.msra.mxu0 0.0
    %3402 = vmatprep.subr.mxu0 0.0
    %3403 = vmatpush1.msra.mxu0 0.0
    %3404 = vmatprep.subr.mxu0 0.0
    %3405 = vmatpush1.msra.mxu0 0.0
    %3406 = vmatprep.subr.mxu0 0.0
    %3407 = vmatpush1.msra.mxu0 0.0
    %3408 = vmatprep.subr.mxu0 0.0
    %3409 = vmatpush1.msra.mxu0 0.0
    %3410 = vmatprep.subr.mxu0 0.0
    %3411 = vmatpush1.msra.mxu0 0.0
    %3412 = vmatprep.subr.mxu0 0.0
    %3413 = vmatpush1.msra.mxu0 0.0
    %3414 = vmatprep.subr.mxu0 0.0
    %3415 = vmatpush1.msra.mxu0 0.0
    %3416 = vmatprep.subr.mxu0 %v2250
    %3417 = vmatpush1.msra.mxu0 %v2249
    %3418 = vmatprep.subr.mxu0 %v2234
    %3419 = vmatpush1.msra.mxu0 %v2233
    %3420 = vmatprep.subr.mxu0 %v2218
    %3421 = vmatpush1.msra.mxu0 %v2217
    %3422 = vmatprep.subr.mxu0 %v2202
    %3423 = vmatpush1.msra.mxu0 %v2201
    %3424 = vmatprep.subr.mxu0 0.0
    %3425 = vmatpush2.msra.mxu0 0.0
    %3426 = vmatprep.subr.mxu0 0.0
    %3427 = vmatpush2.msra.mxu0 0.0
    %3428 = vmatprep.subr.mxu0 0.0
    %3429 = vmatpush2.msra.mxu0 0.0
    %3430 = vmatprep.subr.mxu0 0.0
    %3431 = vmatpush2.msra.mxu0 0.0
    %3432 = vmatprep.subr.mxu0 0.0
    %3433 = vmatpush2.msra.mxu0 0.0
    %3434 = vmatprep.subr.mxu0 0.0
    %3435 = vmatpush2.msra.mxu0 0.0
    %3436 = vmatprep.subr.mxu0 0.0
    %3437 = vmatpush2.msra.mxu0 0.0
    %3438 = vmatprep.subr.mxu0 0.0
    %3439 = vmatpush2.msra.mxu0 0.0
    %3440 = vmatprep.subr.mxu0 0.0
    %3441 = vmatpush2.msra.mxu0 0.0
    %3442 = vmatprep.subr.mxu0 0.0
    %3443 = vmatpush2.msra.mxu0 0.0
    %3444 = vmatprep.subr.mxu0 0.0
    %3445 = vmatpush2.msra.mxu0 0.0
    %3446 = vmatprep.subr.mxu0 0.0
    %3447 = vmatpush2.msra.mxu0 0.0
    %3448 = vmatprep.subr.mxu0 0.0
    %3449 = vmatpush2.msra.mxu0 0.0
    %3450 = vmatprep.subr.mxu0 0.0
    %3451 = vmatpush2.msra.mxu0 0.0
    %3452 = vmatprep.subr.mxu0 0.0
    %3453 = vmatpush2.msra.mxu0 0.0
    %3454 = vmatprep.subr.mxu0 0.0
    %3455 = vmatpush2.msra.mxu0 0.0
    %3456 = vmatprep.mubr.f32.mxu0 0.0
    %3457 = vmatmul.mubr.f32.gmra.mxu0 %v2848
    %v3458 = vpop.f32.mrf.mxu0
    %v3459 = vadd.f32 %v2826, %v3458
    %v3460 = vpop.f32.mrf.mxu0
    %v3461 = vadd.f32 %v2830, %v3460
    %3462 = vmatprep.mubr.f32.mxu0 0.0
    %3463 = vmatmul.mubr.f32.gmra.mxu0 %v2851
    %v3464 = vpop.f32.mrf.mxu0
    %v3465 = vadd.f32 %v2826, %v3464
    %v3466 = vpop.f32.mrf.mxu0
    %v3467 = vadd.f32 %v2830, %v3466
    %3468 = vdwg.mxu0
    %v3469 = vmax.f32 %v2920, 0.0
    %v3470 = vmax.f32 %v2922, 0.0
    %v3471 = vmax.f32 %v2997, 0.0
    %v3472 = vmax.f32 %v2999, 0.0
    %v3473 = vmax.f32 %v3074, 0.0
    %v3474 = vmax.f32 %v3076, 0.0
    %v3475 = vmax.f32 %v3151, 0.0
    %v3476 = vmax.f32 %v3153, 0.0
    %v3477 = vmax.f32 %v3228, 0.0
    %v3478 = vmax.f32 %v3230, 0.0
    %v3479 = vmax.f32 %v3305, 0.0
    %v3480 = vmax.f32 %v3307, 0.0
    %v3481 = vmax.f32 %v3382, 0.0
    %v3482 = vmax.f32 %v3384, 0.0
    %v3483 = vmax.f32 %v3459, 0.0
    %v3484 = vmax.f32 %v3461, 0.0
    %v3485 = vmax.f32 %v2926, 0.0
    %v3486 = vmax.f32 %v2928, 0.0
    %v3487 = vmax.f32 %v3003, 0.0
    %v3488 = vmax.f32 %v3005, 0.0
    %v3489 = vmax.f32 %v3080, 0.0
    %v3490 = vmax.f32 %v3082, 0.0
    %v3491 = vmax.f32 %v3157, 0.0
    %v3492 = vmax.f32 %v3159, 0.0
    %v3493 = vmax.f32 %v3234, 0.0
    %v3494 = vmax.f32 %v3236, 0.0
    %v3495 = vmax.f32 %v3311, 0.0
    %v3496 = vmax.f32 %v3313, 0.0
    %v3497 = vmax.f32 %v3388, 0.0
    %v3498 = vmax.f32 %v3390, 0.0
    %v3499 = vmax.f32 %v3465, 0.0
    %v3500 = vmax.f32 %v3467, 0.0
    %v3501 = vld [vmem:[%s11] sm:$0x1]
    %v3503 = vlaneseq
    %v3504 = vshrl.u32 %v3503, 7
    %v3505 = vsub.s32 0, %v3504
    %v3506 = vrot.slane %v3501, %v3505
    %3508 = vmatprep.subr.mxu0 0.0
    %3509 = vmatpush1.msra.mxu0 %v2522
    %3510 = vmatprep.subr.mxu0 0.0
    %3511 = vmatpush1.msra.mxu0 %v2521
    %3512 = vmatprep.subr.mxu0 0.0
    %3513 = vmatpush1.msra.mxu0 %v2520
    %3514 = vmatprep.subr.mxu0 0.0
    %3515 = vmatpush1.msra.mxu0 %v2519
    %3516 = vmatprep.subr.mxu0 0.0
    %3517 = vmatpush1.msra.mxu0 %v2518
    %3518 = vmatprep.subr.mxu0 0.0
    %3519 = vmatpush1.msra.mxu0 %v2517
    %3520 = vmatprep.subr.mxu0 0.0
    %3521 = vmatpush1.msra.mxu0 %v2516
    %3522 = vmatprep.subr.mxu0 0.0
    %3523 = vmatpush1.msra.mxu0 %v2515
    %3524 = vmatprep.subr.mxu0 0.0
    %3525 = vmatpush1.msra.mxu0 %v2514
    %3526 = vmatprep.subr.mxu0 0.0
    %3527 = vmatpush1.msra.mxu0 %v2513
    %3528 = vmatprep.subr.mxu0 0.0
    %3529 = vmatpush1.msra.mxu0 %v2512
    %3530 = vmatprep.subr.mxu0 0.0
    %3531 = vmatpush1.msra.mxu0 %v2511
    %3532 = vmatprep.subr.mxu0 0.0
    %3533 = vmatpush1.msra.mxu0 %v2510
    %3534 = vmatprep.subr.mxu0 0.0
    %3535 = vmatpush1.msra.mxu0 %v2509
    %3536 = vmatprep.subr.mxu0 0.0
    %3537 = vmatpush1.msra.mxu0 %v2508
    %3538 = vmatprep.subr.mxu0 0.0
    %3539 = vmatpush1.msra.mxu0 %v2507
    %3540 = vmatprep.subr.mxu0 0.0
    %3541 = vmatpush2.msra.mxu0 %v2538
    %3542 = vmatprep.subr.mxu0 0.0
    %3543 = vmatpush2.msra.mxu0 %v2537
    %3544 = vmatprep.subr.mxu0 0.0
    %3545 = vmatpush2.msra.mxu0 %v2536
    %3546 = vmatprep.subr.mxu0 0.0
    %3547 = vmatpush2.msra.mxu0 %v2535
    %3548 = vmatprep.subr.mxu0 0.0
    %3549 = vmatpush2.msra.mxu0 %v2534
    %3550 = vmatprep.subr.mxu0 0.0
    %3551 = vmatpush2.msra.mxu0 %v2533
    %3552 = vmatprep.subr.mxu0 0.0
    %3553 = vmatpush2.msra.mxu0 %v2532
    %3554 = vmatprep.subr.mxu0 0.0
    %3555 = vmatpush2.msra.mxu0 %v2531
    %3556 = vmatprep.subr.mxu0 0.0
    %3557 = vmatpush2.msra.mxu0 %v2530
    %3558 = vmatprep.subr.mxu0 0.0
    %3559 = vmatpush2.msra.mxu0 %v2529
    %3560 = vmatprep.subr.mxu0 0.0
    %3561 = vmatpush2.msra.mxu0 %v2528
    %3562 = vmatprep.subr.mxu0 0.0
    %3563 = vmatpush2.msra.mxu0 %v2527
    %3564 = vmatprep.subr.mxu0 0.0
    %3565 = vmatpush2.msra.mxu0 %v2526
    %3566 = vmatprep.subr.mxu0 0.0
    %3567 = vmatpush2.msra.mxu0 %v2525
    %3568 = vmatprep.subr.mxu0 0.0
    %3569 = vmatpush2.msra.mxu0 %v2524
    %3570 = vmatprep.subr.mxu0 0.0
    %3571 = vmatpush2.msra.mxu0 %v2523
    %3572 = vmatprep.mubr.f32.mxu0 %v3470
    %3573 = vmatmul.mubr.f32.gmra.mxu0 %v3469
    %v3574 = vpop.f32.mrf.mxu0
    %v3575 = vadd.f32 %v3506, %v3574
    %v3576 = vpop.f32.mrf.mxu0
    %3577 = vmatprep.mubr.f32.mxu0 %v3486
    %3578 = vmatmul.mubr.f32.gmra.mxu0 %v3485
    %v3579 = vpop.f32.mrf.mxu0
    %v3580 = vadd.f32 %v3506, %v3579
    %v3581 = vpop.f32.mrf.mxu0
    %3582 = vdwg.mxu0
    %3583 = vmatprep.subr.mxu0 0.0
    %3584 = vmatpush1.msra.mxu0 %v2554
    %3585 = vmatprep.subr.mxu0 0.0
    %3586 = vmatpush1.msra.mxu0 %v2553
    %3587 = vmatprep.subr.mxu0 0.0
    %3588 = vmatpush1.msra.mxu0 %v2552
    %3589 = vmatprep.subr.mxu0 0.0
    %3590 = vmatpush1.msra.mxu0 %v2551
    %3591 = vmatprep.subr.mxu0 0.0
    %3592 = vmatpush1.msra.mxu0 %v2550
    %3593 = vmatprep.subr.mxu0 0.0
    %3594 = vmatpush1.msra.mxu0 %v2549
    %3595 = vmatprep.subr.mxu0 0.0
    %3596 = vmatpush1.msra.mxu0 %v2548
    %3597 = vmatprep.subr.mxu0 0.0
    %3598 = vmatpush1.msra.mxu0 %v2547
    %3599 = vmatprep.subr.mxu0 0.0
    %3600 = vmatpush1.msra.mxu0 %v2546
    %3601 = vmatprep.subr.mxu0 0.0
    %3602 = vmatpush1.msra.mxu0 %v2545
    %3603 = vmatprep.subr.mxu0 0.0
    %3604 = vmatpush1.msra.mxu0 %v2544
    %3605 = vmatprep.subr.mxu0 0.0
    %3606 = vmatpush1.msra.mxu0 %v2543
    %3607 = vmatprep.subr.mxu0 0.0
    %3608 = vmatpush1.msra.mxu0 %v2542
    %3609 = vmatprep.subr.mxu0 0.0
    %3610 = vmatpush1.msra.mxu0 %v2541
    %3611 = vmatprep.subr.mxu0 0.0
    %3612 = vmatpush1.msra.mxu0 %v2540
    %3613 = vmatprep.subr.mxu0 0.0
    %3614 = vmatpush1.msra.mxu0 %v2539
    %3615 = vmatprep.subr.mxu0 0.0
    %3616 = vmatpush2.msra.mxu0 %v2570
    %3617 = vmatprep.subr.mxu0 0.0
    %3618 = vmatpush2.msra.mxu0 %v2569
    %3619 = vmatprep.subr.mxu0 0.0
    %3620 = vmatpush2.msra.mxu0 %v2568
    %3621 = vmatprep.subr.mxu0 0.0
    %3622 = vmatpush2.msra.mxu0 %v2567
    %3623 = vmatprep.subr.mxu0 0.0
    %3624 = vmatpush2.msra.mxu0 %v2566
    %3625 = vmatprep.subr.mxu0 0.0
    %3626 = vmatpush2.msra.mxu0 %v2565
    %3627 = vmatprep.subr.mxu0 0.0
    %3628 = vmatpush2.msra.mxu0 %v2564
    %3629 = vmatprep.subr.mxu0 0.0
    %3630 = vmatpush2.msra.mxu0 %v2563
    %3631 = vmatprep.subr.mxu0 0.0
    %3632 = vmatpush2.msra.mxu0 %v2562
    %3633 = vmatprep.subr.mxu0 0.0
    %3634 = vmatpush2.msra.mxu0 %v2561
    %3635 = vmatprep.subr.mxu0 0.0
    %3636 = vmatpush2.msra.mxu0 %v2560
    %3637 = vmatprep.subr.mxu0 0.0
    %3638 = vmatpush2.msra.mxu0 %v2559
    %3639 = vmatprep.subr.mxu0 0.0
    %3640 = vmatpush2.msra.mxu0 %v2558
    %3641 = vmatprep.subr.mxu0 0.0
    %3642 = vmatpush2.msra.mxu0 %v2557
    %3643 = vmatprep.subr.mxu0 0.0
    %3644 = vmatpush2.msra.mxu0 %v2556
    %3645 = vmatprep.subr.mxu0 0.0
    %3646 = vmatpush2.msra.mxu0 %v2555
    %3647 = vmatprep.mubr.f32.mxu0 %v3472
    %3648 = vmatmul.mubr.f32.gmra.mxu0 %v3471
    %v3649 = vpop.f32.mrf.mxu0
    %v3650 = vadd.f32 %v3575, %v3649
    %v3651 = vpop.f32.mrf.mxu0
    %3652 = vmatprep.mubr.f32.mxu0 %v3488
    %3653 = vmatmul.mubr.f32.gmra.mxu0 %v3487
    %v3654 = vpop.f32.mrf.mxu0
    %v3655 = vadd.f32 %v3580, %v3654
    %v3656 = vpop.f32.mrf.mxu0
    %3657 = vdwg.mxu0
    %3658 = vmatprep.subr.mxu0 0.0
    %3659 = vmatpush1.msra.mxu0 %v2586
    %3660 = vmatprep.subr.mxu0 0.0
    %3661 = vmatpush1.msra.mxu0 %v2585
    %3662 = vmatprep.subr.mxu0 0.0
    %3663 = vmatpush1.msra.mxu0 %v2584
    %3664 = vmatprep.subr.mxu0 0.0
    %3665 = vmatpush1.msra.mxu0 %v2583
    %3666 = vmatprep.subr.mxu0 0.0
    %3667 = vmatpush1.msra.mxu0 %v2582
    %3668 = vmatprep.subr.mxu0 0.0
    %3669 = vmatpush1.msra.mxu0 %v2581
    %3670 = vmatprep.subr.mxu0 0.0
    %3671 = vmatpush1.msra.mxu0 %v2580
    %3672 = vmatprep.subr.mxu0 0.0
    %3673 = vmatpush1.msra.mxu0 %v2579
    %3674 = vmatprep.subr.mxu0 0.0
    %3675 = vmatpush1.msra.mxu0 %v2578
    %3676 = vmatprep.subr.mxu0 0.0
    %3677 = vmatpush1.msra.mxu0 %v2577
    %3678 = vmatprep.subr.mxu0 0.0
    %3679 = vmatpush1.msra.mxu0 %v2576
    %3680 = vmatprep.subr.mxu0 0.0
    %3681 = vmatpush1.msra.mxu0 %v2575
    %3682 = vmatprep.subr.mxu0 0.0
    %3683 = vmatpush1.msra.mxu0 %v2574
    %3684 = vmatprep.subr.mxu0 0.0
    %3685 = vmatpush1.msra.mxu0 %v2573
    %3686 = vmatprep.subr.mxu0 0.0
    %3687 = vmatpush1.msra.mxu0 %v2572
    %3688 = vmatprep.subr.mxu0 0.0
    %3689 = vmatpush1.msra.mxu0 %v2571
    %3690 = vmatprep.subr.mxu0 0.0
    %3691 = vmatpush2.msra.mxu0 %v2602
    %3692 = vmatprep.subr.mxu0 0.0
    %3693 = vmatpush2.msra.mxu0 %v2601
    %3694 = vmatprep.subr.mxu0 0.0
    %3695 = vmatpush2.msra.mxu0 %v2600
    %3696 = vmatprep.subr.mxu0 0.0
    %3697 = vmatpush2.msra.mxu0 %v2599
    %3698 = vmatprep.subr.mxu0 0.0
    %3699 = vmatpush2.msra.mxu0 %v2598
    %3700 = vmatprep.subr.mxu0 0.0
    %3701 = vmatpush2.msra.mxu0 %v2597
    %3702 = vmatprep.subr.mxu0 0.0
    %3703 = vmatpush2.msra.mxu0 %v2596
    %3704 = vmatprep.subr.mxu0 0.0
    %3705 = vmatpush2.msra.mxu0 %v2595
    %3706 = vmatprep.subr.mxu0 0.0
    %3707 = vmatpush2.msra.mxu0 %v2594
    %3708 = vmatprep.subr.mxu0 0.0
    %3709 = vmatpush2.msra.mxu0 %v2593
    %3710 = vmatprep.subr.mxu0 0.0
    %3711 = vmatpush2.msra.mxu0 %v2592
    %3712 = vmatprep.subr.mxu0 0.0
    %3713 = vmatpush2.msra.mxu0 %v2591
    %3714 = vmatprep.subr.mxu0 0.0
    %3715 = vmatpush2.msra.mxu0 %v2590
    %3716 = vmatprep.subr.mxu0 0.0
    %3717 = vmatpush2.msra.mxu0 %v2589
    %3718 = vmatprep.subr.mxu0 0.0
    %3719 = vmatpush2.msra.mxu0 %v2588
    %3720 = vmatprep.subr.mxu0 0.0
    %3721 = vmatpush2.msra.mxu0 %v2587
    %3722 = vmatprep.mubr.f32.mxu0 %v3474
    %3723 = vmatmul.mubr.f32.gmra.mxu0 %v3473
    %v3724 = vpop.f32.mrf.mxu0
    %v3725 = vadd.f32 %v3650, %v3724
    %v3726 = vpop.f32.mrf.mxu0
    %3727 = vmatprep.mubr.f32.mxu0 %v3490
    %3728 = vmatmul.mubr.f32.gmra.mxu0 %v3489
    %v3729 = vpop.f32.mrf.mxu0
    %v3730 = vadd.f32 %v3655, %v3729
    %v3731 = vpop.f32.mrf.mxu0
    %3732 = vdwg.mxu0
    %3733 = vmatprep.subr.mxu0 0.0
    %3734 = vmatpush1.msra.mxu0 %v2618
    %3735 = vmatprep.subr.mxu0 0.0
    %3736 = vmatpush1.msra.mxu0 %v2617
    %3737 = vmatprep.subr.mxu0 0.0
    %3738 = vmatpush1.msra.mxu0 %v2616
    %3739 = vmatprep.subr.mxu0 0.0
    %3740 = vmatpush1.msra.mxu0 %v2615
    %3741 = vmatprep.subr.mxu0 0.0
    %3742 = vmatpush1.msra.mxu0 %v2614
    %3743 = vmatprep.subr.mxu0 0.0
    %3744 = vmatpush1.msra.mxu0 %v2613
    %3745 = vmatprep.subr.mxu0 0.0
    %3746 = vmatpush1.msra.mxu0 %v2612
    %3747 = vmatprep.subr.mxu0 0.0
    %3748 = vmatpush1.msra.mxu0 %v2611
    %3749 = vmatprep.subr.mxu0 0.0
    %3750 = vmatpush1.msra.mxu0 %v2610
    %3751 = vmatprep.subr.mxu0 0.0
    %3752 = vmatpush1.msra.mxu0 %v2609
    %3753 = vmatprep.subr.mxu0 0.0
    %3754 = vmatpush1.msra.mxu0 %v2608
    %3755 = vmatprep.subr.mxu0 0.0
    %3756 = vmatpush1.msra.mxu0 %v2607
    %3757 = vmatprep.subr.mxu0 0.0
    %3758 = vmatpush1.msra.mxu0 %v2606
    %3759 = vmatprep.subr.mxu0 0.0
    %3760 = vmatpush1.msra.mxu0 %v2605
    %3761 = vmatprep.subr.mxu0 0.0
    %3762 = vmatpush1.msra.mxu0 %v2604
    %3763 = vmatprep.subr.mxu0 0.0
    %3764 = vmatpush1.msra.mxu0 %v2603
    %3765 = vmatprep.subr.mxu0 0.0
    %3766 = vmatpush2.msra.mxu0 %v2634
    %3767 = vmatprep.subr.mxu0 0.0
    %3768 = vmatpush2.msra.mxu0 %v2633
    %3769 = vmatprep.subr.mxu0 0.0
    %3770 = vmatpush2.msra.mxu0 %v2632
    %3771 = vmatprep.subr.mxu0 0.0
    %3772 = vmatpush2.msra.mxu0 %v2631
    %3773 = vmatprep.subr.mxu0 0.0
    %3774 = vmatpush2.msra.mxu0 %v2630
    %3775 = vmatprep.subr.mxu0 0.0
    %3776 = vmatpush2.msra.mxu0 %v2629
    %3777 = vmatprep.subr.mxu0 0.0
    %3778 = vmatpush2.msra.mxu0 %v2628
    %3779 = vmatprep.subr.mxu0 0.0
    %3780 = vmatpush2.msra.mxu0 %v2627
    %3781 = vmatprep.subr.mxu0 0.0
    %3782 = vmatpush2.msra.mxu0 %v2626
    %3783 = vmatprep.subr.mxu0 0.0
    %3784 = vmatpush2.msra.mxu0 %v2625
    %3785 = vmatprep.subr.mxu0 0.0
    %3786 = vmatpush2.msra.mxu0 %v2624
    %3787 = vmatprep.subr.mxu0 0.0
    %3788 = vmatpush2.msra.mxu0 %v2623
    %3789 = vmatprep.subr.mxu0 0.0
    %3790 = vmatpush2.msra.mxu0 %v2622
    %3791 = vmatprep.subr.mxu0 0.0
    %3792 = vmatpush2.msra.mxu0 %v2621
    %3793 = vmatprep.subr.mxu0 0.0
    %3794 = vmatpush2.msra.mxu0 %v2620
    %3795 = vmatprep.subr.mxu0 0.0
    %3796 = vmatpush2.msra.mxu0 %v2619
    %3797 = vmatprep.mubr.f32.mxu0 %v3476
    %3798 = vmatmul.mubr.f32.gmra.mxu0 %v3475
    %v3799 = vpop.f32.mrf.mxu0
    %v3800 = vadd.f32 %v3725, %v3799
    %v3801 = vpop.f32.mrf.mxu0
    %3802 = vmatprep.mubr.f32.mxu0 %v3492
    %3803 = vmatmul.mubr.f32.gmra.mxu0 %v3491
    %v3804 = vpop.f32.mrf.mxu0
    %v3805 = vadd.f32 %v3730, %v3804
    %v3806 = vpop.f32.mrf.mxu0
    %3807 = vdwg.mxu0
    %3808 = vmatprep.subr.mxu0 0.0
    %3809 = vmatpush1.msra.mxu0 %v2650
    %3810 = vmatprep.subr.mxu0 0.0
    %3811 = vmatpush1.msra.mxu0 %v2649
    %3812 = vmatprep.subr.mxu0 0.0
    %3813 = vmatpush1.msra.mxu0 %v2648
    %3814 = vmatprep.subr.mxu0 0.0
    %3815 = vmatpush1.msra.mxu0 %v2647
    %3816 = vmatprep.subr.mxu0 0.0
    %3817 = vmatpush1.msra.mxu0 %v2646
    %3818 = vmatprep.subr.mxu0 0.0
    %3819 = vmatpush1.msra.mxu0 %v2645
    %3820 = vmatprep.subr.mxu0 0.0
    %3821 = vmatpush1.msra.mxu0 %v2644
    %3822 = vmatprep.subr.mxu0 0.0
    %3823 = vmatpush1.msra.mxu0 %v2643
    %3824 = vmatprep.subr.mxu0 0.0
    %3825 = vmatpush1.msra.mxu0 %v2642
    %3826 = vmatprep.subr.mxu0 0.0
    %3827 = vmatpush1.msra.mxu0 %v2641
    %3828 = vmatprep.subr.mxu0 0.0
    %3829 = vmatpush1.msra.mxu0 %v2640
    %3830 = vmatprep.subr.mxu0 0.0
    %3831 = vmatpush1.msra.mxu0 %v2639
    %3832 = vmatprep.subr.mxu0 0.0
    %3833 = vmatpush1.msra.mxu0 %v2638
    %3834 = vmatprep.subr.mxu0 0.0
    %3835 = vmatpush1.msra.mxu0 %v2637
    %3836 = vmatprep.subr.mxu0 0.0
    %3837 = vmatpush1.msra.mxu0 %v2636
    %3838 = vmatprep.subr.mxu0 0.0
    %3839 = vmatpush1.msra.mxu0 %v2635
    %3840 = vmatprep.subr.mxu0 0.0
    %3841 = vmatpush2.msra.mxu0 %v2666
    %3842 = vmatprep.subr.mxu0 0.0
    %3843 = vmatpush2.msra.mxu0 %v2665
    %3844 = vmatprep.subr.mxu0 0.0
    %3845 = vmatpush2.msra.mxu0 %v2664
    %3846 = vmatprep.subr.mxu0 0.0
    %3847 = vmatpush2.msra.mxu0 %v2663
    %3848 = vmatprep.subr.mxu0 0.0
    %3849 = vmatpush2.msra.mxu0 %v2662
    %3850 = vmatprep.subr.mxu0 0.0
    %3851 = vmatpush2.msra.mxu0 %v2661
    %3852 = vmatprep.subr.mxu0 0.0
    %3853 = vmatpush2.msra.mxu0 %v2660
    %3854 = vmatprep.subr.mxu0 0.0
    %3855 = vmatpush2.msra.mxu0 %v2659
    %3856 = vmatprep.subr.mxu0 0.0
    %3857 = vmatpush2.msra.mxu0 %v2658
    %3858 = vmatprep.subr.mxu0 0.0
    %3859 = vmatpush2.msra.mxu0 %v2657
    %3860 = vmatprep.subr.mxu0 0.0
    %3861 = vmatpush2.msra.mxu0 %v2656
    %3862 = vmatprep.subr.mxu0 0.0
    %3863 = vmatpush2.msra.mxu0 %v2655
    %3864 = vmatprep.subr.mxu0 0.0
    %3865 = vmatpush2.msra.mxu0 %v2654
    %3866 = vmatprep.subr.mxu0 0.0
    %3867 = vmatpush2.msra.mxu0 %v2653
    %3868 = vmatprep.subr.mxu0 0.0
    %3869 = vmatpush2.msra.mxu0 %v2652
    %3870 = vmatprep.subr.mxu0 0.0
    %3871 = vmatpush2.msra.mxu0 %v2651
    %3872 = vmatprep.mubr.f32.mxu0 %v3478
    %3873 = vmatmul.mubr.f32.gmra.mxu0 %v3477
    %v3874 = vpop.f32.mrf.mxu0
    %v3875 = vadd.f32 %v3800, %v3874
    %v3876 = vpop.f32.mrf.mxu0
    %3877 = vmatprep.mubr.f32.mxu0 %v3494
    %3878 = vmatmul.mubr.f32.gmra.mxu0 %v3493
    %v3879 = vpop.f32.mrf.mxu0
    %v3880 = vadd.f32 %v3805, %v3879
    %v3881 = vpop.f32.mrf.mxu0
    %3882 = vdwg.mxu0
    %3883 = vmatprep.subr.mxu0 0.0
    %3884 = vmatpush1.msra.mxu0 %v2682
    %3885 = vmatprep.subr.mxu0 0.0
    %3886 = vmatpush1.msra.mxu0 %v2681
    %3887 = vmatprep.subr.mxu0 0.0
    %3888 = vmatpush1.msra.mxu0 %v2680
    %3889 = vmatprep.subr.mxu0 0.0
    %3890 = vmatpush1.msra.mxu0 %v2679
    %3891 = vmatprep.subr.mxu0 0.0
    %3892 = vmatpush1.msra.mxu0 %v2678
    %3893 = vmatprep.subr.mxu0 0.0
    %3894 = vmatpush1.msra.mxu0 %v2677
    %3895 = vmatprep.subr.mxu0 0.0
    %3896 = vmatpush1.msra.mxu0 %v2676
    %3897 = vmatprep.subr.mxu0 0.0
    %3898 = vmatpush1.msra.mxu0 %v2675
    %3899 = vmatprep.subr.mxu0 0.0
    %3900 = vmatpush1.msra.mxu0 %v2674
    %3901 = vmatprep.subr.mxu0 0.0
    %3902 = vmatpush1.msra.mxu0 %v2673
    %3903 = vmatprep.subr.mxu0 0.0
    %3904 = vmatpush1.msra.mxu0 %v2672
    %3905 = vmatprep.subr.mxu0 0.0
    %3906 = vmatpush1.msra.mxu0 %v2671
    %3907 = vmatprep.subr.mxu0 0.0
    %3908 = vmatpush1.msra.mxu0 %v2670
    %3909 = vmatprep.subr.mxu0 0.0
    %3910 = vmatpush1.msra.mxu0 %v2669
    %3911 = vmatprep.subr.mxu0 0.0
    %3912 = vmatpush1.msra.mxu0 %v2668
    %3913 = vmatprep.subr.mxu0 0.0
    %3914 = vmatpush1.msra.mxu0 %v2667
    %3915 = vmatprep.subr.mxu0 0.0
    %3916 = vmatpush2.msra.mxu0 %v2698
    %3917 = vmatprep.subr.mxu0 0.0
    %3918 = vmatpush2.msra.mxu0 %v2697
    %3919 = vmatprep.subr.mxu0 0.0
    %3920 = vmatpush2.msra.mxu0 %v2696
    %3921 = vmatprep.subr.mxu0 0.0
    %3922 = vmatpush2.msra.mxu0 %v2695
    %3923 = vmatprep.subr.mxu0 0.0
    %3924 = vmatpush2.msra.mxu0 %v2694
    %3925 = vmatprep.subr.mxu0 0.0
    %3926 = vmatpush2.msra.mxu0 %v2693
    %3927 = vmatprep.subr.mxu0 0.0
    %3928 = vmatpush2.msra.mxu0 %v2692
    %3929 = vmatprep.subr.mxu0 0.0
    %3930 = vmatpush2.msra.mxu0 %v2691
    %3931 = vmatprep.subr.mxu0 0.0
    %3932 = vmatpush2.msra.mxu0 %v2690
    %3933 = vmatprep.subr.mxu0 0.0
    %3934 = vmatpush2.msra.mxu0 %v2689
    %3935 = vmatprep.subr.mxu0 0.0
    %3936 = vmatpush2.msra.mxu0 %v2688
    %3937 = vmatprep.subr.mxu0 0.0
    %3938 = vmatpush2.msra.mxu0 %v2687
    %3939 = vmatprep.subr.mxu0 0.0
    %3940 = vmatpush2.msra.mxu0 %v2686
    %3941 = vmatprep.subr.mxu0 0.0
    %3942 = vmatpush2.msra.mxu0 %v2685
    %3943 = vmatprep.subr.mxu0 0.0
    %3944 = vmatpush2.msra.mxu0 %v2684
    %3945 = vmatprep.subr.mxu0 0.0
    %3946 = vmatpush2.msra.mxu0 %v2683
    %3947 = vmatprep.mubr.f32.mxu0 %v3480
    %3948 = vmatmul.mubr.f32.gmra.mxu0 %v3479
    %v3949 = vpop.f32.mrf.mxu0
    %v3950 = vadd.f32 %v3875, %v3949
    %v3951 = vpop.f32.mrf.mxu0
    %3952 = vmatprep.mubr.f32.mxu0 %v3496
    %3953 = vmatmul.mubr.f32.gmra.mxu0 %v3495
    %v3954 = vpop.f32.mrf.mxu0
    %v3955 = vadd.f32 %v3880, %v3954
    %v3956 = vpop.f32.mrf.mxu0
    %3957 = vdwg.mxu0
    %3958 = vmatprep.subr.mxu0 0.0
    %3959 = vmatpush1.msra.mxu0 %v2714
    %3960 = vmatprep.subr.mxu0 0.0
    %3961 = vmatpush1.msra.mxu0 %v2713
    %3962 = vmatprep.subr.mxu0 0.0
    %3963 = vmatpush1.msra.mxu0 %v2712
    %3964 = vmatprep.subr.mxu0 0.0
    %3965 = vmatpush1.msra.mxu0 %v2711
    %3966 = vmatprep.subr.mxu0 0.0
    %3967 = vmatpush1.msra.mxu0 %v2710
    %3968 = vmatprep.subr.mxu0 0.0
    %3969 = vmatpush1.msra.mxu0 %v2709
    %3970 = vmatprep.subr.mxu0 0.0
    %3971 = vmatpush1.msra.mxu0 %v2708
    %3972 = vmatprep.subr.mxu0 0.0
    %3973 = vmatpush1.msra.mxu0 %v2707
    %3974 = vmatprep.subr.mxu0 0.0
    %3975 = vmatpush1.msra.mxu0 %v2706
    %3976 = vmatprep.subr.mxu0 0.0
    %3977 = vmatpush1.msra.mxu0 %v2705
    %3978 = vmatprep.subr.mxu0 0.0
    %3979 = vmatpush1.msra.mxu0 %v2704
    %3980 = vmatprep.subr.mxu0 0.0
    %3981 = vmatpush1.msra.mxu0 %v2703
    %3982 = vmatprep.subr.mxu0 0.0
    %3983 = vmatpush1.msra.mxu0 %v2702
    %3984 = vmatprep.subr.mxu0 0.0
    %3985 = vmatpush1.msra.mxu0 %v2701
    %3986 = vmatprep.subr.mxu0 0.0
    %3987 = vmatpush1.msra.mxu0 %v2700
    %3988 = vmatprep.subr.mxu0 0.0
    %3989 = vmatpush1.msra.mxu0 %v2699
    %3990 = vmatprep.subr.mxu0 0.0
    %3991 = vmatpush2.msra.mxu0 %v2730
    %3992 = vmatprep.subr.mxu0 0.0
    %3993 = vmatpush2.msra.mxu0 %v2729
    %3994 = vmatprep.subr.mxu0 0.0
    %3995 = vmatpush2.msra.mxu0 %v2728
    %3996 = vmatprep.subr.mxu0 0.0
    %3997 = vmatpush2.msra.mxu0 %v2727
    %3998 = vmatprep.subr.mxu0 0.0
    %3999 = vmatpush2.msra.mxu0 %v2726
    %4000 = vmatprep.subr.mxu0 0.0
    %4001 = vmatpush2.msra.mxu0 %v2725
    %4002 = vmatprep.subr.mxu0 0.0
    %4003 = vmatpush2.msra.mxu0 %v2724
    %4004 = vmatprep.subr.mxu0 0.0
    %4005 = vmatpush2.msra.mxu0 %v2723
    %4006 = vmatprep.subr.mxu0 0.0
    %4007 = vmatpush2.msra.mxu0 %v2722
    %4008 = vmatprep.subr.mxu0 0.0
    %4009 = vmatpush2.msra.mxu0 %v2721
    %4010 = vmatprep.subr.mxu0 0.0
    %4011 = vmatpush2.msra.mxu0 %v2720
    %4012 = vmatprep.subr.mxu0 0.0
    %4013 = vmatpush2.msra.mxu0 %v2719
    %4014 = vmatprep.subr.mxu0 0.0
    %4015 = vmatpush2.msra.mxu0 %v2718
    %4016 = vmatprep.subr.mxu0 0.0
    %4017 = vmatpush2.msra.mxu0 %v2717
    %4018 = vmatprep.subr.mxu0 0.0
    %4019 = vmatpush2.msra.mxu0 %v2716
    %4020 = vmatprep.subr.mxu0 0.0
    %4021 = vmatpush2.msra.mxu0 %v2715
    %4022 = vmatprep.mubr.f32.mxu0 %v3482
    %4023 = vmatmul.mubr.f32.gmra.mxu0 %v3481
    %v4024 = vpop.f32.mrf.mxu0
    %v4025 = vadd.f32 %v3950, %v4024
    %v4026 = vpop.f32.mrf.mxu0
    %4027 = vmatprep.mubr.f32.mxu0 %v3498
    %4028 = vmatmul.mubr.f32.gmra.mxu0 %v3497
    %v4029 = vpop.f32.mrf.mxu0
    %v4030 = vadd.f32 %v3955, %v4029
    %v4031 = vpop.f32.mrf.mxu0
    %4032 = vdwg.mxu0
    %4033 = vmatprep.subr.mxu0 0.0
    %4034 = vmatpush1.msra.mxu0 %v2746
    %4035 = vmatprep.subr.mxu0 0.0
    %4036 = vmatpush1.msra.mxu0 %v2745
    %4037 = vmatprep.subr.mxu0 0.0
    %4038 = vmatpush1.msra.mxu0 %v2744
    %4039 = vmatprep.subr.mxu0 0.0
    %4040 = vmatpush1.msra.mxu0 %v2743
    %4041 = vmatprep.subr.mxu0 0.0
    %4042 = vmatpush1.msra.mxu0 %v2742
    %4043 = vmatprep.subr.mxu0 0.0
    %4044 = vmatpush1.msra.mxu0 %v2741
    %4045 = vmatprep.subr.mxu0 0.0
    %4046 = vmatpush1.msra.mxu0 %v2740
    %4047 = vmatprep.subr.mxu0 0.0
    %4048 = vmatpush1.msra.mxu0 %v2739
    %4049 = vmatprep.subr.mxu0 0.0
    %4050 = vmatpush1.msra.mxu0 %v2738
    %4051 = vmatprep.subr.mxu0 0.0
    %4052 = vmatpush1.msra.mxu0 %v2737
    %4053 = vmatprep.subr.mxu0 0.0
    %4054 = vmatpush1.msra.mxu0 %v2736
    %4055 = vmatprep.subr.mxu0 0.0
    %4056 = vmatpush1.msra.mxu0 %v2735
    %4057 = vmatprep.subr.mxu0 0.0
    %4058 = vmatpush1.msra.mxu0 %v2734
    %4059 = vmatprep.subr.mxu0 0.0
    %4060 = vmatpush1.msra.mxu0 %v2733
    %4061 = vmatprep.subr.mxu0 0.0
    %4062 = vmatpush1.msra.mxu0 %v2732
    %4063 = vmatprep.subr.mxu0 0.0
    %4064 = vmatpush1.msra.mxu0 %v2731
    %4065 = vmatprep.subr.mxu0 0.0
    %4066 = vmatpush2.msra.mxu0 %v2762
    %4067 = vmatprep.subr.mxu0 0.0
    %4068 = vmatpush2.msra.mxu0 %v2761
    %4069 = vmatprep.subr.mxu0 0.0
    %4070 = vmatpush2.msra.mxu0 %v2760
    %4071 = vmatprep.subr.mxu0 0.0
    %4072 = vmatpush2.msra.mxu0 %v2759
    %4073 = vmatprep.subr.mxu0 0.0
    %4074 = vmatpush2.msra.mxu0 %v2758
    %4075 = vmatprep.subr.mxu0 0.0
    %4076 = vmatpush2.msra.mxu0 %v2757
    %4077 = vmatprep.subr.mxu0 0.0
    %4078 = vmatpush2.msra.mxu0 %v2756
    %4079 = vmatprep.subr.mxu0 0.0
    %4080 = vmatpush2.msra.mxu0 %v2755
    %4081 = vmatprep.subr.mxu0 0.0
    %4082 = vmatpush2.msra.mxu0 %v2754
    %4083 = vmatprep.subr.mxu0 0.0
    %4084 = vmatpush2.msra.mxu0 %v2753
    %4085 = vmatprep.subr.mxu0 0.0
    %4086 = vmatpush2.msra.mxu0 %v2752
    %4087 = vmatprep.subr.mxu0 0.0
    %4088 = vmatpush2.msra.mxu0 %v2751
    %4089 = vmatprep.subr.mxu0 0.0
    %4090 = vmatpush2.msra.mxu0 %v2750
    %4091 = vmatprep.subr.mxu0 0.0
    %4092 = vmatpush2.msra.mxu0 %v2749
    %4093 = vmatprep.subr.mxu0 0.0
    %4094 = vmatpush2.msra.mxu0 %v2748
    %4095 = vmatprep.subr.mxu0 0.0
    %4096 = vmatpush2.msra.mxu0 %v2747
    %4097 = vmatprep.mubr.f32.mxu0 %v3484
    %4098 = vmatmul.mubr.f32.gmra.mxu0 %v3483
    %v4099 = vpop.f32.mrf.mxu0
    %v4100 = vadd.f32 %v4025, %v4099
    %v4101 = vpop.f32.mrf.mxu0
    %4102 = vmatprep.mubr.f32.mxu0 %v3500
    %4103 = vmatmul.mubr.f32.gmra.mxu0 %v3499
    %v4104 = vpop.f32.mrf.mxu0
    %v4105 = vadd.f32 %v4030, %v4104
    %v4106 = vpop.f32.mrf.mxu0
    %4107 = vdwg.mxu0
    %v4108 = vadd.f32 %v2153, %v4100
    %v4109 = vadd.f32 %v2154, %v4105
    %v4110 = vsel %vm116, %v4108, 0.0
    %4111 = vadd.xlane.f32.xlu0 %v4110
    %v4112 = vpop.xlane.xlu0 %4111
    %v4113 = vsel %vm116, %v4109, 0.0
    %4114 = vadd.xlane.f32.xlu0 %v4113
    %v4115 = vpop.xlane.xlu0 %4114
    %v4116 = vmul.f32 %v4112, %v2116
    %v4117 = vmul.f32 %v4115, %v2116
    %v4118 = vsub.f32 %v4108, %v4116
    %v4119 = vsub.f32 %v4109, %v4117
    %v4120 = vmul.f32 %v4118, %v4118
    %v4121 = vmul.f32 %v4119, %v4119
    %v4122 = vsel %vm116, %v4120, 0.0
    %4123 = vadd.xlane.f32.xlu0 %v4122
    %v4124 = vpop.xlane.xlu0 %4123
    %v4125 = vsel %vm116, %v4121, 0.0
    %4126 = vadd.xlane.f32.xlu0 %v4125
    %v4127 = vpop.xlane.xlu0 %4126
    %v4128 = vmul.f32 %v4124, %v2116
    %v4129 = vmul.f32 %v4127, %v2116
    %v4130 = vadd.f32 %v4128, 1e-05
    %v4131 = vadd.f32 %v4129, 1e-05
    %v4132 = vrsqrt.pop %v4130
    %v4133 = vrsqrt.pop %v4131
    %v4134 = vmul.f32 %v4118, %v4132
    %v4135 = vmul.f32 %v4119, %v4133
    %v4136 = vld [vmem:[%s14] sm:$0x1]
    %v4138 = vlaneseq
    %v4139 = vshrl.u32 %v4138, 7
    %v4140 = vsub.s32 0, %v4139
    %v4141 = vrot.slane %v4136, %v4140
    %v4143 = vmul.f32 %v4134, %v4141
    %v4144 = vmul.f32 %v4135, %v4141
    %v4145 = vld [vmem:[%s15] sm:$0x1]
    %v4147 = vlaneseq
    %v4148 = vshrl.u32 %v4147, 7
    %v4149 = vsub.s32 0, %v4148
    %v4150 = vrot.slane %v4145, %v4149
    %v4152 = vadd.f32 %v4143, %v4150
    %v4153 = vadd.f32 %v4144, %v4150
    %v4154 = vadd.f32 %v4152, %v56
    %v4155 = vadd.f32 %v4153, %v57
    %s4156 = scalar_lea.vmem %s2, 64
    %v4157 = vld [vmem:[%s4156] sm:$0xff]
    %v4158 = vld [vmem:[%s4156 + $0x8] sm:$0xff]
    %v4159 = vld [vmem:[%s4156 + $0x10] sm:$0xff]
    %v4160 = vld [vmem:[%s4156 + $0x18] sm:$0xff]
    %v4161 = vld [vmem:[%s4156 + $0x20] sm:$0xff]
    %v4162 = vld [vmem:[%s4156 + $0x28] sm:$0xff]
    %v4163 = vld [vmem:[%s4156 + $0x30] sm:$0xff]
    %v4164 = vld [vmem:[%s4156 + $0x38] sm:$0xff]
    %s4165 = scalar_lea.vmem %s3, 64
    %v4166 = vld [vmem:[%s4165] sm:$0xff]
    %v4167 = vld [vmem:[%s4165 + $0x8] sm:$0xff]
    %v4168 = vld [vmem:[%s4165 + $0x10] sm:$0xff]
    %v4169 = vld [vmem:[%s4165 + $0x18] sm:$0xff]
    %v4170 = vld [vmem:[%s4165 + $0x20] sm:$0xff]
    %v4171 = vld [vmem:[%s4165 + $0x28] sm:$0xff]
    %v4172 = vld [vmem:[%s4165 + $0x30] sm:$0xff]
    %v4173 = vld [vmem:[%s4165 + $0x38] sm:$0xff]
    %4175 = vset.pattern.permute.xlu0 0
    %4176 = vperm.xlu0 %4175, %v4166
    %v4177 = vpop.permute.xlu0 %4176
    %4180 = vset.pattern.permute.xlu0 0
    %4181 = vperm.xlu0 %4180, %v4167
    %v4182 = vpop.permute.xlu0 %4181
    %4185 = vset.pattern.permute.xlu0 0
    %4186 = vperm.xlu0 %4185, %v4168
    %v4187 = vpop.permute.xlu0 %4186
    %4190 = vset.pattern.permute.xlu0 0
    %4191 = vperm.xlu0 %4190, %v4169
    %v4192 = vpop.permute.xlu0 %4191
    %4195 = vset.pattern.permute.xlu0 0
    %4196 = vperm.xlu0 %4195, %v4170
    %v4197 = vpop.permute.xlu0 %4196
    %4200 = vset.pattern.permute.xlu0 0
    %4201 = vperm.xlu0 %4200, %v4171
    %v4202 = vpop.permute.xlu0 %4201
    %4205 = vset.pattern.permute.xlu0 0
    %4206 = vperm.xlu0 %4205, %v4172
    %v4207 = vpop.permute.xlu0 %4206
    %4210 = vset.pattern.permute.xlu0 0
    %4211 = vperm.xlu0 %4210, %v4173
    %v4212 = vpop.permute.xlu0 %4211
    %v4215 = vsel %vm116, %v4157, 0
    %v4218 = vsel %vm116, %v4158, 0
    %v4221 = vsel %vm116, %v4159, 0
    %v4224 = vsel %vm116, %v4160, 0
    %v4227 = vsel %vm116, %v4161, 0
    %v4230 = vsel %vm116, %v4162, 0
    %v4233 = vsel %vm116, %v4163, 0
    %v4236 = vsel %vm116, %v4164, 0
    %v4239 = vsel %vm116, %v4154, 0
    %v4242 = vsel %vm116, %v4155, 0
    %4244 = vmatprep.subr.mxu0 0.0
    %4245 = vmatpush1.xpose.msra.mxu0 0.0
    %4246 = vmatprep.subr.mxu0 0.0
    %4247 = vmatpush1.xpose.msra.mxu0 0.0
    %4248 = vmatprep.subr.mxu0 0.0
    %4249 = vmatpush1.xpose.msra.mxu0 0.0
    %4250 = vmatprep.subr.mxu0 0.0
    %4251 = vmatpush1.xpose.msra.mxu0 0.0
    %4252 = vmatprep.subr.mxu0 0.0
    %4253 = vmatpush1.xpose.msra.mxu0 0.0
    %4254 = vmatprep.subr.mxu0 0.0
    %4255 = vmatpush1.xpose.msra.mxu0 0.0
    %4256 = vmatprep.subr.mxu0 0.0
    %4257 = vmatpush1.xpose.msra.mxu0 0.0
    %4258 = vmatprep.subr.mxu0 0.0
    %4259 = vmatpush1.xpose.msra.mxu0 0.0
    %4260 = vmatprep.subr.mxu0 0.0
    %4261 = vmatpush1.xpose.msra.mxu0 0.0
    %4262 = vmatprep.subr.mxu0 0.0
    %4263 = vmatpush1.xpose.msra.mxu0 0.0
    %4264 = vmatprep.subr.mxu0 0.0
    %4265 = vmatpush1.xpose.msra.mxu0 0.0
    %4266 = vmatprep.subr.mxu0 0.0
    %4267 = vmatpush1.xpose.msra.mxu0 0.0
    %4268 = vmatprep.subr.mxu0 0.0
    %4269 = vmatpush1.xpose.msra.mxu0 0.0
    %4270 = vmatprep.subr.mxu0 0.0
    %4271 = vmatpush1.xpose.msra.mxu0 0.0
    %4272 = vmatprep.subr.mxu0 0.0
    %4273 = vmatpush1.xpose.msra.mxu0 %v4242
    %4274 = vmatprep.subr.mxu0 0.0
    %4275 = vmatpush1.xpose.msra.mxu0 %v4239
    %4276 = vmatprep.subr.mxu0 0.0
    %4277 = vmatpush2.xpose.msra.mxu0 0.0
    %4278 = vmatprep.subr.mxu0 0.0
    %4279 = vmatpush2.xpose.msra.mxu0 0.0
    %4280 = vmatprep.subr.mxu0 0.0
    %4281 = vmatpush2.xpose.msra.mxu0 0.0
    %4282 = vmatprep.subr.mxu0 0.0
    %4283 = vmatpush2.xpose.msra.mxu0 0.0
    %4284 = vmatprep.subr.mxu0 0.0
    %4285 = vmatpush2.xpose.msra.mxu0 0.0
    %4286 = vmatprep.subr.mxu0 0.0
    %4287 = vmatpush2.xpose.msra.mxu0 0.0
    %4288 = vmatprep.subr.mxu0 0.0
    %4289 = vmatpush2.xpose.msra.mxu0 0.0
    %4290 = vmatprep.subr.mxu0 0.0
    %4291 = vmatpush2.xpose.msra.mxu0 0.0
    %4292 = vmatprep.subr.mxu0 0.0
    %4293 = vmatpush2.xpose.msra.mxu0 0.0
    %4294 = vmatprep.subr.mxu0 0.0
    %4295 = vmatpush2.xpose.msra.mxu0 0.0
    %4296 = vmatprep.subr.mxu0 0.0
    %4297 = vmatpush2.xpose.msra.mxu0 0.0
    %4298 = vmatprep.subr.mxu0 0.0
    %4299 = vmatpush2.xpose.msra.mxu0 0.0
    %4300 = vmatprep.subr.mxu0 0.0
    %4301 = vmatpush2.xpose.msra.mxu0 0.0
    %4302 = vmatprep.subr.mxu0 0.0
    %4303 = vmatpush2.xpose.msra.mxu0 0.0
    %4304 = vmatprep.subr.mxu0 0.0
    %4305 = vmatpush2.xpose.msra.mxu0 0.0
    %4306 = vmatprep.subr.mxu0 0.0
    %4307 = vmatpush2.xpose.msra.mxu0 0.0
    %4308 = vmatprep.mubr.f32.mxu0 0.0
    %4309 = vmatmul.mubr.f32.gmra.mxu0 %v4215
    %v4310 = vpop.f32.mrf.mxu0
    %v4311 = vadd.f32 %v4177, %v4310
    %v4312 = vpop.f32.mrf.mxu0
    %4313 = vmatprep.mubr.f32.mxu0 0.0
    %4314 = vmatmul.mubr.f32.gmra.mxu0 %v4218
    %v4315 = vpop.f32.mrf.mxu0
    %v4316 = vadd.f32 %v4182, %v4315
    %v4317 = vpop.f32.mrf.mxu0
    %4318 = vmatprep.mubr.f32.mxu0 0.0
    %4319 = vmatmul.mubr.f32.gmra.mxu0 %v4221
    %v4320 = vpop.f32.mrf.mxu0
    %v4321 = vadd.f32 %v4187, %v4320
    %v4322 = vpop.f32.mrf.mxu0
    %4323 = vmatprep.mubr.f32.mxu0 0.0
    %4324 = vmatmul.mubr.f32.gmra.mxu0 %v4224
    %v4325 = vpop.f32.mrf.mxu0
    %v4326 = vadd.f32 %v4192, %v4325
    %v4327 = vpop.f32.mrf.mxu0
    %4328 = vmatprep.mubr.f32.mxu0 0.0
    %4329 = vmatmul.mubr.f32.gmra.mxu0 %v4227
    %v4330 = vpop.f32.mrf.mxu0
    %v4331 = vadd.f32 %v4197, %v4330
    %v4332 = vpop.f32.mrf.mxu0
    %4333 = vmatprep.mubr.f32.mxu0 0.0
    %4334 = vmatmul.mubr.f32.gmra.mxu0 %v4230
    %v4335 = vpop.f32.mrf.mxu0
    %v4336 = vadd.f32 %v4202, %v4335
    %v4337 = vpop.f32.mrf.mxu0
    %4338 = vmatprep.mubr.f32.mxu0 0.0
    %4339 = vmatmul.mubr.f32.gmra.mxu0 %v4233
    %v4340 = vpop.f32.mrf.mxu0
    %v4341 = vadd.f32 %v4207, %v4340
    %v4342 = vpop.f32.mrf.mxu0
    %4343 = vmatprep.mubr.f32.mxu0 0.0
    %4344 = vmatmul.mubr.f32.gmra.mxu0 %v4236
    %v4345 = vpop.f32.mrf.mxu0
    %v4346 = vadd.f32 %v4212, %v4345
    %v4347 = vpop.f32.mrf.mxu0
    %4348 = vdwg.mxu0
    %s4349 = scalar_lea.vmem %s4, 32
    %v4350 = vld [vmem:[%s4349] sm:$0xff]
    %v4351 = vld [vmem:[%s4349 + $0x8] sm:$0xff]
    %v4352 = vld [vmem:[%s4349 + $0x10] sm:$0xff]
    %v4353 = vld [vmem:[%s4349 + $0x18] sm:$0xff]
    %s4354 = scalar_lea.vmem %s5, 32
    %v4355 = vld [vmem:[%s4354] sm:$0xff]
    %v4356 = vld [vmem:[%s4354 + $0x8] sm:$0xff]
    %v4357 = vld [vmem:[%s4354 + $0x10] sm:$0xff]
    %v4358 = vld [vmem:[%s4354 + $0x18] sm:$0xff]
    %4360 = vset.pattern.permute.xlu0 0
    %4361 = vperm.xlu0 %4360, %v4355
    %v4362 = vpop.permute.xlu0 %4361
    %4365 = vset.pattern.permute.xlu0 0
    %4366 = vperm.xlu0 %4365, %v4356
    %v4367 = vpop.permute.xlu0 %4366
    %4370 = vset.pattern.permute.xlu0 0
    %4371 = vperm.xlu0 %4370, %v4357
    %v4372 = vpop.permute.xlu0 %4371
    %4375 = vset.pattern.permute.xlu0 0
    %4376 = vperm.xlu0 %4375, %v4358
    %v4377 = vpop.permute.xlu0 %4376
    %v4380 = vsel %vm116, %v4350, 0
    %v4383 = vsel %vm116, %v4351, 0
    %v4386 = vsel %vm116, %v4352, 0
    %v4389 = vsel %vm116, %v4353, 0
    %v4392 = vsel %vm116, %v4152, 0
    %v4395 = vsel %vm116, %v4153, 0
    %4397 = vmatprep.subr.mxu0 0.0
    %4398 = vmatpush1.xpose.msra.mxu0 0.0
    %4399 = vmatprep.subr.mxu0 0.0
    %4400 = vmatpush1.xpose.msra.mxu0 0.0
    %4401 = vmatprep.subr.mxu0 0.0
    %4402 = vmatpush1.xpose.msra.mxu0 0.0
    %4403 = vmatprep.subr.mxu0 0.0
    %4404 = vmatpush1.xpose.msra.mxu0 0.0
    %4405 = vmatprep.subr.mxu0 0.0
    %4406 = vmatpush1.xpose.msra.mxu0 0.0
    %4407 = vmatprep.subr.mxu0 0.0
    %4408 = vmatpush1.xpose.msra.mxu0 0.0
    %4409 = vmatprep.subr.mxu0 0.0
    %4410 = vmatpush1.xpose.msra.mxu0 0.0
    %4411 = vmatprep.subr.mxu0 0.0
    %4412 = vmatpush1.xpose.msra.mxu0 0.0
    %4413 = vmatprep.subr.mxu0 0.0
    %4414 = vmatpush1.xpose.msra.mxu0 0.0
    %4415 = vmatprep.subr.mxu0 0.0
    %4416 = vmatpush1.xpose.msra.mxu0 0.0
    %4417 = vmatprep.subr.mxu0 0.0
    %4418 = vmatpush1.xpose.msra.mxu0 0.0
    %4419 = vmatprep.subr.mxu0 0.0
    %4420 = vmatpush1.xpose.msra.mxu0 0.0
    %4421 = vmatprep.subr.mxu0 0.0
    %4422 = vmatpush1.xpose.msra.mxu0 0.0
    %4423 = vmatprep.subr.mxu0 0.0
    %4424 = vmatpush1.xpose.msra.mxu0 0.0
    %4425 = vmatprep.subr.mxu0 0.0
    %4426 = vmatpush1.xpose.msra.mxu0 %v4395
    %4427 = vmatprep.subr.mxu0 0.0
    %4428 = vmatpush1.xpose.msra.mxu0 %v4392
    %4429 = vmatprep.subr.mxu0 0.0
    %4430 = vmatpush2.xpose.msra.mxu0 0.0
    %4431 = vmatprep.subr.mxu0 0.0
    %4432 = vmatpush2.xpose.msra.mxu0 0.0
    %4433 = vmatprep.subr.mxu0 0.0
    %4434 = vmatpush2.xpose.msra.mxu0 0.0
    %4435 = vmatprep.subr.mxu0 0.0
    %4436 = vmatpush2.xpose.msra.mxu0 0.0
    %4437 = vmatprep.subr.mxu0 0.0
    %4438 = vmatpush2.xpose.msra.mxu0 0.0
    %4439 = vmatprep.subr.mxu0 0.0
    %4440 = vmatpush2.xpose.msra.mxu0 0.0
    %4441 = vmatprep.subr.mxu0 0.0
    %4442 = vmatpush2.xpose.msra.mxu0 0.0
    %4443 = vmatprep.subr.mxu0 0.0
    %4444 = vmatpush2.xpose.msra.mxu0 0.0
    %4445 = vmatprep.subr.mxu0 0.0
    %4446 = vmatpush2.xpose.msra.mxu0 0.0
    %4447 = vmatprep.subr.mxu0 0.0
    %4448 = vmatpush2.xpose.msra.mxu0 0.0
    %4449 = vmatprep.subr.mxu0 0.0
    %4450 = vmatpush2.xpose.msra.mxu0 0.0
    %4451 = vmatprep.subr.mxu0 0.0
    %4452 = vmatpush2.xpose.msra.mxu0 0.0
    %4453 = vmatprep.subr.mxu0 0.0
    %4454 = vmatpush2.xpose.msra.mxu0 0.0
    %4455 = vmatprep.subr.mxu0 0.0
    %4456 = vmatpush2.xpose.msra.mxu0 0.0
    %4457 = vmatprep.subr.mxu0 0.0
    %4458 = vmatpush2.xpose.msra.mxu0 0.0
    %4459 = vmatprep.subr.mxu0 0.0
    %4460 = vmatpush2.xpose.msra.mxu0 0.0
    %4461 = vmatprep.mubr.f32.mxu0 0.0
    %4462 = vmatmul.mubr.f32.gmra.mxu0 %v4380
    %v4463 = vpop.f32.mrf.mxu0
    %v4464 = vadd.f32 %v4362, %v4463
    %v4465 = vpop.f32.mrf.mxu0
    %4466 = vmatprep.mubr.f32.mxu0 0.0
    %4467 = vmatmul.mubr.f32.gmra.mxu0 %v4383
    %v4468 = vpop.f32.mrf.mxu0
    %v4469 = vadd.f32 %v4367, %v4468
    %v4470 = vpop.f32.mrf.mxu0
    %4471 = vmatprep.mubr.f32.mxu0 0.0
    %4472 = vmatmul.mubr.f32.gmra.mxu0 %v4386
    %v4473 = vpop.f32.mrf.mxu0
    %v4474 = vadd.f32 %v4372, %v4473
    %v4475 = vpop.f32.mrf.mxu0
    %4476 = vmatprep.mubr.f32.mxu0 0.0
    %4477 = vmatmul.mubr.f32.gmra.mxu0 %v4389
    %v4478 = vpop.f32.mrf.mxu0
    %v4479 = vadd.f32 %v4377, %v4478
    %v4480 = vpop.f32.mrf.mxu0
    %4481 = vdwg.mxu0
    %4482 = vxpose.xlu0.b32.start [1/16] %v4311, 128
    %4483 = vxpose.xlu0.b32.cont [2/16] 0.0, 128
    %4484 = vxpose.xlu0.b32.cont [3/16] 0.0, 128
    %4485 = vxpose.xlu0.b32.cont [4/16] 0.0, 128
    %4486 = vxpose.xlu0.b32.cont [5/16] 0.0, 128
    %4487 = vxpose.xlu0.b32.cont [6/16] 0.0, 128
    %4488 = vxpose.xlu0.b32.cont [7/16] 0.0, 128
    %4489 = vxpose.xlu0.b32.cont [8/16] 0.0, 128
    %4490 = vxpose.xlu0.b32.cont [9/16] 0.0, 128
    %4491 = vxpose.xlu0.b32.cont [10/16] 0.0, 128
    %4492 = vxpose.xlu0.b32.cont [11/16] 0.0, 128
    %4493 = vxpose.xlu0.b32.cont [12/16] 0.0, 128
    %4494 = vxpose.xlu0.b32.cont [13/16] 0.0, 128
    %4495 = vxpose.xlu0.b32.cont [14/16] 0.0, 128
    %4496 = vxpose.xlu0.b32.cont [15/16] 0.0, 128
    %4497 = vxpose.xlu0.b32.end [16/16] 0.0, 128
    %v4498 = vpop.trf.xlu0
    %v4499 = vpop.trf.xlu0
    %v4500 = vpop.trf.xlu0
    %v4501 = vpop.trf.xlu0
    %v4502 = vpop.trf.xlu0
    %v4503 = vpop.trf.xlu0
    %v4504 = vpop.trf.xlu0
    %v4505 = vpop.trf.xlu0
    %v4506 = vpop.trf.xlu0
    %v4507 = vpop.trf.xlu0
    %v4508 = vpop.trf.xlu0
    %v4509 = vpop.trf.xlu0
    %v4510 = vpop.trf.xlu0
    %v4511 = vpop.trf.xlu0
    %v4512 = vpop.trf.xlu0
    %v4513 = vpop.trf.xlu0
    %v4515 = vsel %vm415, %v4498, 0
    %4517 = vmatprep.subr.mxu0 0.0
    %4518 = vmatpush1.msra.mxu0 0.0
    %4519 = vmatprep.subr.mxu0 0.0
    %4520 = vmatpush1.msra.mxu0 0.0
    %4521 = vmatprep.subr.mxu0 0.0
    %4522 = vmatpush1.msra.mxu0 0.0
    %4523 = vmatprep.subr.mxu0 0.0
    %4524 = vmatpush1.msra.mxu0 0.0
    %4525 = vmatprep.subr.mxu0 0.0
    %4526 = vmatpush1.msra.mxu0 0.0
    %4527 = vmatprep.subr.mxu0 0.0
    %4528 = vmatpush1.msra.mxu0 0.0
    %4529 = vmatprep.subr.mxu0 0.0
    %4530 = vmatpush1.msra.mxu0 0.0
    %4531 = vmatprep.subr.mxu0 0.0
    %4532 = vmatpush1.msra.mxu0 0.0
    %4533 = vmatprep.subr.mxu0 0.0
    %4534 = vmatpush1.msra.mxu0 0.0
    %4535 = vmatprep.subr.mxu0 0.0
    %4536 = vmatpush1.msra.mxu0 0.0
    %4537 = vmatprep.subr.mxu0 0.0
    %4538 = vmatpush1.msra.mxu0 0.0
    %4539 = vmatprep.subr.mxu0 0.0
    %4540 = vmatpush1.msra.mxu0 0.0
    %4541 = vmatprep.subr.mxu0 0.0
    %4542 = vmatpush1.msra.mxu0 0.0
    %4543 = vmatprep.subr.mxu0 0.0
    %4544 = vmatpush1.msra.mxu0 0.0
    %4545 = vmatprep.subr.mxu0 0.0
    %4546 = vmatpush1.msra.mxu0 0.0
    %4547 = vmatprep.subr.mxu0 0.0
    %4548 = vmatpush1.msra.mxu0 %v4331
    %4549 = vmatprep.subr.mxu0 0.0
    %4550 = vmatpush2.msra.mxu0 0.0
    %4551 = vmatprep.subr.mxu0 0.0
    %4552 = vmatpush2.msra.mxu0 0.0
    %4553 = vmatprep.subr.mxu0 0.0
    %4554 = vmatpush2.msra.mxu0 0.0
    %4555 = vmatprep.subr.mxu0 0.0
    %4556 = vmatpush2.msra.mxu0 0.0
    %4557 = vmatprep.subr.mxu0 0.0
    %4558 = vmatpush2.msra.mxu0 0.0
    %4559 = vmatprep.subr.mxu0 0.0
    %4560 = vmatpush2.msra.mxu0 0.0
    %4561 = vmatprep.subr.mxu0 0.0
    %4562 = vmatpush2.msra.mxu0 0.0
    %4563 = vmatprep.subr.mxu0 0.0
    %4564 = vmatpush2.msra.mxu0 0.0
    %4565 = vmatprep.subr.mxu0 0.0
    %4566 = vmatpush2.msra.mxu0 0.0
    %4567 = vmatprep.subr.mxu0 0.0
    %4568 = vmatpush2.msra.mxu0 0.0
    %4569 = vmatprep.subr.mxu0 0.0
    %4570 = vmatpush2.msra.mxu0 0.0
    %4571 = vmatprep.subr.mxu0 0.0
    %4572 = vmatpush2.msra.mxu0 0.0
    %4573 = vmatprep.subr.mxu0 0.0
    %4574 = vmatpush2.msra.mxu0 0.0
    %4575 = vmatprep.subr.mxu0 0.0
    %4576 = vmatpush2.msra.mxu0 0.0
    %4577 = vmatprep.subr.mxu0 0.0
    %4578 = vmatpush2.msra.mxu0 0.0
    %4579 = vmatprep.subr.mxu0 0.0
    %4580 = vmatpush2.msra.mxu0 0.0
    %4581 = vmatprep.mubr.f32.mxu0 0.0
    %4582 = vmatmul.mubr.f32.gmra.mxu0 %v4515
    %v4583 = vpop.f32.mrf.mxu0
    %v4584 = vadd.f32 0.0, %v4583
    %v4585 = vpop.f32.mrf.mxu0
    %4586 = vdwg.mxu0
    %v4587 = vmul.f32 %v4584, 0.35355338
    %4588 = vxpose.xlu0.b32.start [1/16] %v4316, 128
    %4589 = vxpose.xlu0.b32.cont [2/16] 0.0, 128
    %4590 = vxpose.xlu0.b32.cont [3/16] 0.0, 128
    %4591 = vxpose.xlu0.b32.cont [4/16] 0.0, 128
    %4592 = vxpose.xlu0.b32.cont [5/16] 0.0, 128
    %4593 = vxpose.xlu0.b32.cont [6/16] 0.0, 128
    %4594 = vxpose.xlu0.b32.cont [7/16] 0.0, 128
    %4595 = vxpose.xlu0.b32.cont [8/16] 0.0, 128
    %4596 = vxpose.xlu0.b32.cont [9/16] 0.0, 128
    %4597 = vxpose.xlu0.b32.cont [10/16] 0.0, 128
    %4598 = vxpose.xlu0.b32.cont [11/16] 0.0, 128
    %4599 = vxpose.xlu0.b32.cont [12/16] 0.0, 128
    %4600 = vxpose.xlu0.b32.cont [13/16] 0.0, 128
    %4601 = vxpose.xlu0.b32.cont [14/16] 0.0, 128
    %4602 = vxpose.xlu0.b32.cont [15/16] 0.0, 128
    %4603 = vxpose.xlu0.b32.end [16/16] 0.0, 128
    %v4604 = vpop.trf.xlu0
    %v4605 = vpop.trf.xlu0
    %v4606 = vpop.trf.xlu0
    %v4607 = vpop.trf.xlu0
    %v4608 = vpop.trf.xlu0
    %v4609 = vpop.trf.xlu0
    %v4610 = vpop.trf.xlu0
    %v4611 = vpop.trf.xlu0
    %v4612 = vpop.trf.xlu0
    %v4613 = vpop.trf.xlu0
    %v4614 = vpop.trf.xlu0
    %v4615 = vpop.trf.xlu0
    %v4616 = vpop.trf.xlu0
    %v4617 = vpop.trf.xlu0
    %v4618 = vpop.trf.xlu0
    %v4619 = vpop.trf.xlu0
    %v4621 = vsel %vm415, %v4604, 0
    %4623 = vmatprep.subr.mxu0 0.0
    %4624 = vmatpush1.msra.mxu0 0.0
    %4625 = vmatprep.subr.mxu0 0.0
    %4626 = vmatpush1.msra.mxu0 0.0
    %4627 = vmatprep.subr.mxu0 0.0
    %4628 = vmatpush1.msra.mxu0 0.0
    %4629 = vmatprep.subr.mxu0 0.0
    %4630 = vmatpush1.msra.mxu0 0.0
    %4631 = vmatprep.subr.mxu0 0.0
    %4632 = vmatpush1.msra.mxu0 0.0
    %4633 = vmatprep.subr.mxu0 0.0
    %4634 = vmatpush1.msra.mxu0 0.0
    %4635 = vmatprep.subr.mxu0 0.0
    %4636 = vmatpush1.msra.mxu0 0.0
    %4637 = vmatprep.subr.mxu0 0.0
    %4638 = vmatpush1.msra.mxu0 0.0
    %4639 = vmatprep.subr.mxu0 0.0
    %4640 = vmatpush1.msra.mxu0 0.0
    %4641 = vmatprep.subr.mxu0 0.0
    %4642 = vmatpush1.msra.mxu0 0.0
    %4643 = vmatprep.subr.mxu0 0.0
    %4644 = vmatpush1.msra.mxu0 0.0
    %4645 = vmatprep.subr.mxu0 0.0
    %4646 = vmatpush1.msra.mxu0 0.0
    %4647 = vmatprep.subr.mxu0 0.0
    %4648 = vmatpush1.msra.mxu0 0.0
    %4649 = vmatprep.subr.mxu0 0.0
    %4650 = vmatpush1.msra.mxu0 0.0
    %4651 = vmatprep.subr.mxu0 0.0
    %4652 = vmatpush1.msra.mxu0 0.0
    %4653 = vmatprep.subr.mxu0 0.0
    %4654 = vmatpush1.msra.mxu0 %v4336
    %4655 = vmatprep.subr.mxu0 0.0
    %4656 = vmatpush2.msra.mxu0 0.0
    %4657 = vmatprep.subr.mxu0 0.0
    %4658 = vmatpush2.msra.mxu0 0.0
    %4659 = vmatprep.subr.mxu0 0.0
    %4660 = vmatpush2.msra.mxu0 0.0
    %4661 = vmatprep.subr.mxu0 0.0
    %4662 = vmatpush2.msra.mxu0 0.0
    %4663 = vmatprep.subr.mxu0 0.0
    %4664 = vmatpush2.msra.mxu0 0.0
    %4665 = vmatprep.subr.mxu0 0.0
    %4666 = vmatpush2.msra.mxu0 0.0
    %4667 = vmatprep.subr.mxu0 0.0
    %4668 = vmatpush2.msra.mxu0 0.0
    %4669 = vmatprep.subr.mxu0 0.0
    %4670 = vmatpush2.msra.mxu0 0.0
    %4671 = vmatprep.subr.mxu0 0.0
    %4672 = vmatpush2.msra.mxu0 0.0
    %4673 = vmatprep.subr.mxu0 0.0
    %4674 = vmatpush2.msra.mxu0 0.0
    %4675 = vmatprep.subr.mxu0 0.0
    %4676 = vmatpush2.msra.mxu0 0.0
    %4677 = vmatprep.subr.mxu0 0.0
    %4678 = vmatpush2.msra.mxu0 0.0
    %4679 = vmatprep.subr.mxu0 0.0
    %4680 = vmatpush2.msra.mxu0 0.0
    %4681 = vmatprep.subr.mxu0 0.0
    %4682 = vmatpush2.msra.mxu0 0.0
    %4683 = vmatprep.subr.mxu0 0.0
    %4684 = vmatpush2.msra.mxu0 0.0
    %4685 = vmatprep.subr.mxu0 0.0
    %4686 = vmatpush2.msra.mxu0 0.0
    %4687 = vmatprep.mubr.f32.mxu0 0.0
    %4688 = vmatmul.mubr.f32.gmra.mxu0 %v4621
    %v4689 = vpop.f32.mrf.mxu0
    %v4690 = vadd.f32 0.0, %v4689
    %v4691 = vpop.f32.mrf.mxu0
    %4692 = vdwg.mxu0
    %v4693 = vmul.f32 %v4690, 0.35355338
    %4694 = vxpose.xlu0.b32.start [1/16] %v4321, 128
    %4695 = vxpose.xlu0.b32.cont [2/16] 0.0, 128
    %4696 = vxpose.xlu0.b32.cont [3/16] 0.0, 128
    %4697 = vxpose.xlu0.b32.cont [4/16] 0.0, 128
    %4698 = vxpose.xlu0.b32.cont [5/16] 0.0, 128
    %4699 = vxpose.xlu0.b32.cont [6/16] 0.0, 128
    %4700 = vxpose.xlu0.b32.cont [7/16] 0.0, 128
    %4701 = vxpose.xlu0.b32.cont [8/16] 0.0, 128
    %4702 = vxpose.xlu0.b32.cont [9/16] 0.0, 128
    %4703 = vxpose.xlu0.b32.cont [10/16] 0.0, 128
    %4704 = vxpose.xlu0.b32.cont [11/16] 0.0, 128
    %4705 = vxpose.xlu0.b32.cont [12/16] 0.0, 128
    %4706 = vxpose.xlu0.b32.cont [13/16] 0.0, 128
    %4707 = vxpose.xlu0.b32.cont [14/16] 0.0, 128
    %4708 = vxpose.xlu0.b32.cont [15/16] 0.0, 128
    %4709 = vxpose.xlu0.b32.end [16/16] 0.0, 128
    %v4710 = vpop.trf.xlu0
    %v4711 = vpop.trf.xlu0
    %v4712 = vpop.trf.xlu0
    %v4713 = vpop.trf.xlu0
    %v4714 = vpop.trf.xlu0
    %v4715 = vpop.trf.xlu0
    %v4716 = vpop.trf.xlu0
    %v4717 = vpop.trf.xlu0
    %v4718 = vpop.trf.xlu0
    %v4719 = vpop.trf.xlu0
    %v4720 = vpop.trf.xlu0
    %v4721 = vpop.trf.xlu0
    %v4722 = vpop.trf.xlu0
    %v4723 = vpop.trf.xlu0
    %v4724 = vpop.trf.xlu0
    %v4725 = vpop.trf.xlu0
    %v4727 = vsel %vm415, %v4710, 0
    %4729 = vmatprep.subr.mxu0 0.0
    %4730 = vmatpush1.msra.mxu0 0.0
    %4731 = vmatprep.subr.mxu0 0.0
    %4732 = vmatpush1.msra.mxu0 0.0
    %4733 = vmatprep.subr.mxu0 0.0
    %4734 = vmatpush1.msra.mxu0 0.0
    %4735 = vmatprep.subr.mxu0 0.0
    %4736 = vmatpush1.msra.mxu0 0.0
    %4737 = vmatprep.subr.mxu0 0.0
    %4738 = vmatpush1.msra.mxu0 0.0
    %4739 = vmatprep.subr.mxu0 0.0
    %4740 = vmatpush1.msra.mxu0 0.0
    %4741 = vmatprep.subr.mxu0 0.0
    %4742 = vmatpush1.msra.mxu0 0.0
    %4743 = vmatprep.subr.mxu0 0.0
    %4744 = vmatpush1.msra.mxu0 0.0
    %4745 = vmatprep.subr.mxu0 0.0
    %4746 = vmatpush1.msra.mxu0 0.0
    %4747 = vmatprep.subr.mxu0 0.0
    %4748 = vmatpush1.msra.mxu0 0.0
    %4749 = vmatprep.subr.mxu0 0.0
    %4750 = vmatpush1.msra.mxu0 0.0
    %4751 = vmatprep.subr.mxu0 0.0
    %4752 = vmatpush1.msra.mxu0 0.0
    %4753 = vmatprep.subr.mxu0 0.0
    %4754 = vmatpush1.msra.mxu0 0.0
    %4755 = vmatprep.subr.mxu0 0.0
    %4756 = vmatpush1.msra.mxu0 0.0
    %4757 = vmatprep.subr.mxu0 0.0
    %4758 = vmatpush1.msra.mxu0 0.0
    %4759 = vmatprep.subr.mxu0 0.0
    %4760 = vmatpush1.msra.mxu0 %v4341
    %4761 = vmatprep.subr.mxu0 0.0
    %4762 = vmatpush2.msra.mxu0 0.0
    %4763 = vmatprep.subr.mxu0 0.0
    %4764 = vmatpush2.msra.mxu0 0.0
    %4765 = vmatprep.subr.mxu0 0.0
    %4766 = vmatpush2.msra.mxu0 0.0
    %4767 = vmatprep.subr.mxu0 0.0
    %4768 = vmatpush2.msra.mxu0 0.0
    %4769 = vmatprep.subr.mxu0 0.0
    %4770 = vmatpush2.msra.mxu0 0.0
    %4771 = vmatprep.subr.mxu0 0.0
    %4772 = vmatpush2.msra.mxu0 0.0
    %4773 = vmatprep.subr.mxu0 0.0
    %4774 = vmatpush2.msra.mxu0 0.0
    %4775 = vmatprep.subr.mxu0 0.0
    %4776 = vmatpush2.msra.mxu0 0.0
    %4777 = vmatprep.subr.mxu0 0.0
    %4778 = vmatpush2.msra.mxu0 0.0
    %4779 = vmatprep.subr.mxu0 0.0
    %4780 = vmatpush2.msra.mxu0 0.0
    %4781 = vmatprep.subr.mxu0 0.0
    %4782 = vmatpush2.msra.mxu0 0.0
    %4783 = vmatprep.subr.mxu0 0.0
    %4784 = vmatpush2.msra.mxu0 0.0
    %4785 = vmatprep.subr.mxu0 0.0
    %4786 = vmatpush2.msra.mxu0 0.0
    %4787 = vmatprep.subr.mxu0 0.0
    %4788 = vmatpush2.msra.mxu0 0.0
    %4789 = vmatprep.subr.mxu0 0.0
    %4790 = vmatpush2.msra.mxu0 0.0
    %4791 = vmatprep.subr.mxu0 0.0
    %4792 = vmatpush2.msra.mxu0 0.0
    %4793 = vmatprep.mubr.f32.mxu0 0.0
    %4794 = vmatmul.mubr.f32.gmra.mxu0 %v4727
    %v4795 = vpop.f32.mrf.mxu0
    %v4796 = vadd.f32 0.0, %v4795
    %v4797 = vpop.f32.mrf.mxu0
    %4798 = vdwg.mxu0
    %v4799 = vmul.f32 %v4796, 0.35355338
    %4800 = vxpose.xlu0.b32.start [1/16] %v4326, 128
    %4801 = vxpose.xlu0.b32.cont [2/16] 0.0, 128
    %4802 = vxpose.xlu0.b32.cont [3/16] 0.0, 128
    %4803 = vxpose.xlu0.b32.cont [4/16] 0.0, 128
    %4804 = vxpose.xlu0.b32.cont [5/16] 0.0, 128
    %4805 = vxpose.xlu0.b32.cont [6/16] 0.0, 128
    %4806 = vxpose.xlu0.b32.cont [7/16] 0.0, 128
    %4807 = vxpose.xlu0.b32.cont [8/16] 0.0, 128
    %4808 = vxpose.xlu0.b32.cont [9/16] 0.0, 128
    %4809 = vxpose.xlu0.b32.cont [10/16] 0.0, 128
    %4810 = vxpose.xlu0.b32.cont [11/16] 0.0, 128
    %4811 = vxpose.xlu0.b32.cont [12/16] 0.0, 128
    %4812 = vxpose.xlu0.b32.cont [13/16] 0.0, 128
    %4813 = vxpose.xlu0.b32.cont [14/16] 0.0, 128
    %4814 = vxpose.xlu0.b32.cont [15/16] 0.0, 128
    %4815 = vxpose.xlu0.b32.end [16/16] 0.0, 128
    %v4816 = vpop.trf.xlu0
    %v4817 = vpop.trf.xlu0
    %v4818 = vpop.trf.xlu0
    %v4819 = vpop.trf.xlu0
    %v4820 = vpop.trf.xlu0
    %v4821 = vpop.trf.xlu0
    %v4822 = vpop.trf.xlu0
    %v4823 = vpop.trf.xlu0
    %v4824 = vpop.trf.xlu0
    %v4825 = vpop.trf.xlu0
    %v4826 = vpop.trf.xlu0
    %v4827 = vpop.trf.xlu0
    %v4828 = vpop.trf.xlu0
    %v4829 = vpop.trf.xlu0
    %v4830 = vpop.trf.xlu0
    %v4831 = vpop.trf.xlu0
    %v4833 = vsel %vm415, %v4816, 0
    %4835 = vmatprep.subr.mxu0 0.0
    %4836 = vmatpush1.msra.mxu0 0.0
    %4837 = vmatprep.subr.mxu0 0.0
    %4838 = vmatpush1.msra.mxu0 0.0
    %4839 = vmatprep.subr.mxu0 0.0
    %4840 = vmatpush1.msra.mxu0 0.0
    %4841 = vmatprep.subr.mxu0 0.0
    %4842 = vmatpush1.msra.mxu0 0.0
    %4843 = vmatprep.subr.mxu0 0.0
    %4844 = vmatpush1.msra.mxu0 0.0
    %4845 = vmatprep.subr.mxu0 0.0
    %4846 = vmatpush1.msra.mxu0 0.0
    %4847 = vmatprep.subr.mxu0 0.0
    %4848 = vmatpush1.msra.mxu0 0.0
    %4849 = vmatprep.subr.mxu0 0.0
    %4850 = vmatpush1.msra.mxu0 0.0
    %4851 = vmatprep.subr.mxu0 0.0
    %4852 = vmatpush1.msra.mxu0 0.0
    %4853 = vmatprep.subr.mxu0 0.0
    %4854 = vmatpush1.msra.mxu0 0.0
    %4855 = vmatprep.subr.mxu0 0.0
    %4856 = vmatpush1.msra.mxu0 0.0
    %4857 = vmatprep.subr.mxu0 0.0
    %4858 = vmatpush1.msra.mxu0 0.0
    %4859 = vmatprep.subr.mxu0 0.0
    %4860 = vmatpush1.msra.mxu0 0.0
    %4861 = vmatprep.subr.mxu0 0.0
    %4862 = vmatpush1.msra.mxu0 0.0
    %4863 = vmatprep.subr.mxu0 0.0
    %4864 = vmatpush1.msra.mxu0 0.0
    %4865 = vmatprep.subr.mxu0 0.0
    %4866 = vmatpush1.msra.mxu0 %v4346
    %4867 = vmatprep.subr.mxu0 0.0
    %4868 = vmatpush2.msra.mxu0 0.0
    %4869 = vmatprep.subr.mxu0 0.0
    %4870 = vmatpush2.msra.mxu0 0.0
    %4871 = vmatprep.subr.mxu0 0.0
    %4872 = vmatpush2.msra.mxu0 0.0
    %4873 = vmatprep.subr.mxu0 0.0
    %4874 = vmatpush2.msra.mxu0 0.0
    %4875 = vmatprep.subr.mxu0 0.0
    %4876 = vmatpush2.msra.mxu0 0.0
    %4877 = vmatprep.subr.mxu0 0.0
    %4878 = vmatpush2.msra.mxu0 0.0
    %4879 = vmatprep.subr.mxu0 0.0
    %4880 = vmatpush2.msra.mxu0 0.0
    %4881 = vmatprep.subr.mxu0 0.0
    %4882 = vmatpush2.msra.mxu0 0.0
    %4883 = vmatprep.subr.mxu0 0.0
    %4884 = vmatpush2.msra.mxu0 0.0
    %4885 = vmatprep.subr.mxu0 0.0
    %4886 = vmatpush2.msra.mxu0 0.0
    %4887 = vmatprep.subr.mxu0 0.0
    %4888 = vmatpush2.msra.mxu0 0.0
    %4889 = vmatprep.subr.mxu0 0.0
    %4890 = vmatpush2.msra.mxu0 0.0
    %4891 = vmatprep.subr.mxu0 0.0
    %4892 = vmatpush2.msra.mxu0 0.0
    %4893 = vmatprep.subr.mxu0 0.0
    %4894 = vmatpush2.msra.mxu0 0.0
    %4895 = vmatprep.subr.mxu0 0.0
    %4896 = vmatpush2.msra.mxu0 0.0
    %4897 = vmatprep.subr.mxu0 0.0
    %4898 = vmatpush2.msra.mxu0 0.0
    %4899 = vmatprep.mubr.f32.mxu0 0.0
    %4900 = vmatmul.mubr.f32.gmra.mxu0 %v4833
    %v4901 = vpop.f32.mrf.mxu0
    %v4902 = vadd.f32 0.0, %v4901
    %v4903 = vpop.f32.mrf.mxu0
    %4904 = vdwg.mxu0
    %v4905 = vmul.f32 %v4902, 0.35355338
    %4907 = vrot.lane.b32.xlu0 %v4311, 120
    %v4908 = vpop.permute.xlu0 %4907
    %4910 = vxpose.xlu0.b32.start [1/16] %v4908, 128
    %4911 = vxpose.xlu0.b32.cont [2/16] 0.0, 128
    %4912 = vxpose.xlu0.b32.cont [3/16] 0.0, 128
    %4913 = vxpose.xlu0.b32.cont [4/16] 0.0, 128
    %4914 = vxpose.xlu0.b32.cont [5/16] 0.0, 128
    %4915 = vxpose.xlu0.b32.cont [6/16] 0.0, 128
    %4916 = vxpose.xlu0.b32.cont [7/16] 0.0, 128
    %4917 = vxpose.xlu0.b32.cont [8/16] 0.0, 128
    %4918 = vxpose.xlu0.b32.cont [9/16] 0.0, 128
    %4919 = vxpose.xlu0.b32.cont [10/16] 0.0, 128
    %4920 = vxpose.xlu0.b32.cont [11/16] 0.0, 128
    %4921 = vxpose.xlu0.b32.cont [12/16] 0.0, 128
    %4922 = vxpose.xlu0.b32.cont [13/16] 0.0, 128
    %4923 = vxpose.xlu0.b32.cont [14/16] 0.0, 128
    %4924 = vxpose.xlu0.b32.cont [15/16] 0.0, 128
    %4925 = vxpose.xlu0.b32.end [16/16] 0.0, 128
    %v4926 = vpop.trf.xlu0
    %v4927 = vpop.trf.xlu0
    %v4928 = vpop.trf.xlu0
    %v4929 = vpop.trf.xlu0
    %v4930 = vpop.trf.xlu0
    %v4931 = vpop.trf.xlu0
    %v4932 = vpop.trf.xlu0
    %v4933 = vpop.trf.xlu0
    %v4934 = vpop.trf.xlu0
    %v4935 = vpop.trf.xlu0
    %v4936 = vpop.trf.xlu0
    %v4937 = vpop.trf.xlu0
    %v4938 = vpop.trf.xlu0
    %v4939 = vpop.trf.xlu0
    %v4940 = vpop.trf.xlu0
    %v4941 = vpop.trf.xlu0
    %4943 = vrot.lane.b32.xlu0 %v4331, 120
    %v4944 = vpop.permute.xlu0 %4943
    %v4947 = vsel %vm415, %v4926, 0
    %4949 = vmatprep.subr.mxu0 0.0
    %4950 = vmatpush1.msra.mxu0 0.0
    %4951 = vmatprep.subr.mxu0 0.0
    %4952 = vmatpush1.msra.mxu0 0.0
    %4953 = vmatprep.subr.mxu0 0.0
    %4954 = vmatpush1.msra.mxu0 0.0
    %4955 = vmatprep.subr.mxu0 0.0
    %4956 = vmatpush1.msra.mxu0 0.0
    %4957 = vmatprep.subr.mxu0 0.0
    %4958 = vmatpush1.msra.mxu0 0.0
    %4959 = vmatprep.subr.mxu0 0.0
    %4960 = vmatpush1.msra.mxu0 0.0
    %4961 = vmatprep.subr.mxu0 0.0
    %4962 = vmatpush1.msra.mxu0 0.0
    %4963 = vmatprep.subr.mxu0 0.0
    %4964 = vmatpush1.msra.mxu0 0.0
    %4965 = vmatprep.subr.mxu0 0.0
    %4966 = vmatpush1.msra.mxu0 0.0
    %4967 = vmatprep.subr.mxu0 0.0
    %4968 = vmatpush1.msra.mxu0 0.0
    %4969 = vmatprep.subr.mxu0 0.0
    %4970 = vmatpush1.msra.mxu0 0.0
    %4971 = vmatprep.subr.mxu0 0.0
    %4972 = vmatpush1.msra.mxu0 0.0
    %4973 = vmatprep.subr.mxu0 0.0
    %4974 = vmatpush1.msra.mxu0 0.0
    %4975 = vmatprep.subr.mxu0 0.0
    %4976 = vmatpush1.msra.mxu0 0.0
    %4977 = vmatprep.subr.mxu0 0.0
    %4978 = vmatpush1.msra.mxu0 0.0
    %4979 = vmatprep.subr.mxu0 0.0
    %4980 = vmatpush1.msra.mxu0 %v4944
    %4981 = vmatprep.subr.mxu0 0.0
    %4982 = vmatpush2.msra.mxu0 0.0
    %4983 = vmatprep.subr.mxu0 0.0
    %4984 = vmatpush2.msra.mxu0 0.0
    %4985 = vmatprep.subr.mxu0 0.0
    %4986 = vmatpush2.msra.mxu0 0.0
    %4987 = vmatprep.subr.mxu0 0.0
    %4988 = vmatpush2.msra.mxu0 0.0
    %4989 = vmatprep.subr.mxu0 0.0
    %4990 = vmatpush2.msra.mxu0 0.0
    %4991 = vmatprep.subr.mxu0 0.0
    %4992 = vmatpush2.msra.mxu0 0.0
    %4993 = vmatprep.subr.mxu0 0.0
    %4994 = vmatpush2.msra.mxu0 0.0
    %4995 = vmatprep.subr.mxu0 0.0
    %4996 = vmatpush2.msra.mxu0 0.0
    %4997 = vmatprep.subr.mxu0 0.0
    %4998 = vmatpush2.msra.mxu0 0.0
    %4999 = vmatprep.subr.mxu0 0.0
    %5000 = vmatpush2.msra.mxu0 0.0
    %5001 = vmatprep.subr.mxu0 0.0
    %5002 = vmatpush2.msra.mxu0 0.0
    %5003 = vmatprep.subr.mxu0 0.0
    %5004 = vmatpush2.msra.mxu0 0.0
    %5005 = vmatprep.subr.mxu0 0.0
    %5006 = vmatpush2.msra.mxu0 0.0
    %5007 = vmatprep.subr.mxu0 0.0
    %5008 = vmatpush2.msra.mxu0 0.0
    %5009 = vmatprep.subr.mxu0 0.0
    %5010 = vmatpush2.msra.mxu0 0.0
    %5011 = vmatprep.subr.mxu0 0.0
    %5012 = vmatpush2.msra.mxu0 0.0
    %5013 = vmatprep.mubr.f32.mxu0 0.0
    %5014 = vmatmul.mubr.f32.gmra.mxu0 %v4947
    %v5015 = vpop.f32.mrf.mxu0
    %v5016 = vadd.f32 0.0, %v5015
    %v5017 = vpop.f32.mrf.mxu0
    %5018 = vdwg.mxu0
    %v5019 = vmul.f32 %v5016, 0.35355338
    %5021 = vrot.lane.b32.xlu0 %v4316, 120
    %v5022 = vpop.permute.xlu0 %5021
    %5024 = vxpose.xlu0.b32.start [1/16] %v5022, 128
    %5025 = vxpose.xlu0.b32.cont [2/16] 0.0, 128
    %5026 = vxpose.xlu0.b32.cont [3/16] 0.0, 128
    %5027 = vxpose.xlu0.b32.cont [4/16] 0.0, 128
    %5028 = vxpose.xlu0.b32.cont [5/16] 0.0, 128
    %5029 = vxpose.xlu0.b32.cont [6/16] 0.0, 128
    %5030 = vxpose.xlu0.b32.cont [7/16] 0.0, 128
    %5031 = vxpose.xlu0.b32.cont [8/16] 0.0, 128
    %5032 = vxpose.xlu0.b32.cont [9/16] 0.0, 128
    %5033 = vxpose.xlu0.b32.cont [10/16] 0.0, 128
    %5034 = vxpose.xlu0.b32.cont [11/16] 0.0, 128
    %5035 = vxpose.xlu0.b32.cont [12/16] 0.0, 128
    %5036 = vxpose.xlu0.b32.cont [13/16] 0.0, 128
    %5037 = vxpose.xlu0.b32.cont [14/16] 0.0, 128
    %5038 = vxpose.xlu0.b32.cont [15/16] 0.0, 128
    %5039 = vxpose.xlu0.b32.end [16/16] 0.0, 128
    %v5040 = vpop.trf.xlu0
    %v5041 = vpop.trf.xlu0
    %v5042 = vpop.trf.xlu0
    %v5043 = vpop.trf.xlu0
    %v5044 = vpop.trf.xlu0
    %v5045 = vpop.trf.xlu0
    %v5046 = vpop.trf.xlu0
    %v5047 = vpop.trf.xlu0
    %v5048 = vpop.trf.xlu0
    %v5049 = vpop.trf.xlu0
    %v5050 = vpop.trf.xlu0
    %v5051 = vpop.trf.xlu0
    %v5052 = vpop.trf.xlu0
    %v5053 = vpop.trf.xlu0
    %v5054 = vpop.trf.xlu0
    %v5055 = vpop.trf.xlu0
    %5057 = vrot.lane.b32.xlu0 %v4336, 120
    %v5058 = vpop.permute.xlu0 %5057
    %v5061 = vsel %vm415, %v5040, 0
    %5063 = vmatprep.subr.mxu0 0.0
    %5064 = vmatpush1.msra.mxu0 0.0
    %5065 = vmatprep.subr.mxu0 0.0
    %5066 = vmatpush1.msra.mxu0 0.0
    %5067 = vmatprep.subr.mxu0 0.0
    %5068 = vmatpush1.msra.mxu0 0.0
    %5069 = vmatprep.subr.mxu0 0.0
    %5070 = vmatpush1.msra.mxu0 0.0
    %5071 = vmatprep.subr.mxu0 0.0
    %5072 = vmatpush1.msra.mxu0 0.0
    %5073 = vmatprep.subr.mxu0 0.0
    %5074 = vmatpush1.msra.mxu0 0.0
    %5075 = vmatprep.subr.mxu0 0.0
    %5076 = vmatpush1.msra.mxu0 0.0
    %5077 = vmatprep.subr.mxu0 0.0
    %5078 = vmatpush1.msra.mxu0 0.0
    %5079 = vmatprep.subr.mxu0 0.0
    %5080 = vmatpush1.msra.mxu0 0.0
    %5081 = vmatprep.subr.mxu0 0.0
    %5082 = vmatpush1.msra.mxu0 0.0
    %5083 = vmatprep.subr.mxu0 0.0
    %5084 = vmatpush1.msra.mxu0 0.0
    %5085 = vmatprep.subr.mxu0 0.0
    %5086 = vmatpush1.msra.mxu0 0.0
    %5087 = vmatprep.subr.mxu0 0.0
    %5088 = vmatpush1.msra.mxu0 0.0
    %5089 = vmatprep.subr.mxu0 0.0
    %5090 = vmatpush1.msra.mxu0 0.0
    %5091 = vmatprep.subr.mxu0 0.0
    %5092 = vmatpush1.msra.mxu0 0.0
    %5093 = vmatprep.subr.mxu0 0.0
    %5094 = vmatpush1.msra.mxu0 %v5058
    %5095 = vmatprep.subr.mxu0 0.0
    %5096 = vmatpush2.msra.mxu0 0.0
    %5097 = vmatprep.subr.mxu0 0.0
    %5098 = vmatpush2.msra.mxu0 0.0
    %5099 = vmatprep.subr.mxu0 0.0
    %5100 = vmatpush2.msra.mxu0 0.0
    %5101 = vmatprep.subr.mxu0 0.0
    %5102 = vmatpush2.msra.mxu0 0.0
    %5103 = vmatprep.subr.mxu0 0.0
    %5104 = vmatpush2.msra.mxu0 0.0
    %5105 = vmatprep.subr.mxu0 0.0
    %5106 = vmatpush2.msra.mxu0 0.0
    %5107 = vmatprep.subr.mxu0 0.0
    %5108 = vmatpush2.msra.mxu0 0.0
    %5109 = vmatprep.subr.mxu0 0.0
    %5110 = vmatpush2.msra.mxu0 0.0
    %5111 = vmatprep.subr.mxu0 0.0
    %5112 = vmatpush2.msra.mxu0 0.0
    %5113 = vmatprep.subr.mxu0 0.0
    %5114 = vmatpush2.msra.mxu0 0.0
    %5115 = vmatprep.subr.mxu0 0.0
    %5116 = vmatpush2.msra.mxu0 0.0
    %5117 = vmatprep.subr.mxu0 0.0
    %5118 = vmatpush2.msra.mxu0 0.0
    %5119 = vmatprep.subr.mxu0 0.0
    %5120 = vmatpush2.msra.mxu0 0.0
    %5121 = vmatprep.subr.mxu0 0.0
    %5122 = vmatpush2.msra.mxu0 0.0
    %5123 = vmatprep.subr.mxu0 0.0
    %5124 = vmatpush2.msra.mxu0 0.0
    %5125 = vmatprep.subr.mxu0 0.0
    %5126 = vmatpush2.msra.mxu0 0.0
    %5127 = vmatprep.mubr.f32.mxu0 0.0
    %5128 = vmatmul.mubr.f32.gmra.mxu0 %v5061
    %v5129 = vpop.f32.mrf.mxu0
    %v5130 = vadd.f32 0.0, %v5129
    %v5131 = vpop.f32.mrf.mxu0
    %5132 = vdwg.mxu0
    %v5133 = vmul.f32 %v5130, 0.35355338
    %5135 = vrot.lane.b32.xlu0 %v4321, 120
    %v5136 = vpop.permute.xlu0 %5135
    %5138 = vxpose.xlu0.b32.start [1/16] %v5136, 128
    %5139 = vxpose.xlu0.b32.cont [2/16] 0.0, 128
    %5140 = vxpose.xlu0.b32.cont [3/16] 0.0, 128
    %5141 = vxpose.xlu0.b32.cont [4/16] 0.0, 128
    %5142 = vxpose.xlu0.b32.cont [5/16] 0.0, 128
    %5143 = vxpose.xlu0.b32.cont [6/16] 0.0, 128
    %5144 = vxpose.xlu0.b32.cont [7/16] 0.0, 128
    %5145 = vxpose.xlu0.b32.cont [8/16] 0.0, 128
    %5146 = vxpose.xlu0.b32.cont [9/16] 0.0, 128
    %5147 = vxpose.xlu0.b32.cont [10/16] 0.0, 128
    %5148 = vxpose.xlu0.b32.cont [11/16] 0.0, 128
    %5149 = vxpose.xlu0.b32.cont [12/16] 0.0, 128
    %5150 = vxpose.xlu0.b32.cont [13/16] 0.0, 128
    %5151 = vxpose.xlu0.b32.cont [14/16] 0.0, 128
    %5152 = vxpose.xlu0.b32.cont [15/16] 0.0, 128
    %5153 = vxpose.xlu0.b32.end [16/16] 0.0, 128
    %v5154 = vpop.trf.xlu0
    %v5155 = vpop.trf.xlu0
    %v5156 = vpop.trf.xlu0
    %v5157 = vpop.trf.xlu0
    %v5158 = vpop.trf.xlu0
    %v5159 = vpop.trf.xlu0
    %v5160 = vpop.trf.xlu0
    %v5161 = vpop.trf.xlu0
    %v5162 = vpop.trf.xlu0
    %v5163 = vpop.trf.xlu0
    %v5164 = vpop.trf.xlu0
    %v5165 = vpop.trf.xlu0
    %v5166 = vpop.trf.xlu0
    %v5167 = vpop.trf.xlu0
    %v5168 = vpop.trf.xlu0
    %v5169 = vpop.trf.xlu0
    %5171 = vrot.lane.b32.xlu0 %v4341, 120
    %v5172 = vpop.permute.xlu0 %5171
    %v5175 = vsel %vm415, %v5154, 0
    %5177 = vmatprep.subr.mxu0 0.0
    %5178 = vmatpush1.msra.mxu0 0.0
    %5179 = vmatprep.subr.mxu0 0.0
    %5180 = vmatpush1.msra.mxu0 0.0
    %5181 = vmatprep.subr.mxu0 0.0
    %5182 = vmatpush1.msra.mxu0 0.0
    %5183 = vmatprep.subr.mxu0 0.0
    %5184 = vmatpush1.msra.mxu0 0.0
    %5185 = vmatprep.subr.mxu0 0.0
    %5186 = vmatpush1.msra.mxu0 0.0
    %5187 = vmatprep.subr.mxu0 0.0
    %5188 = vmatpush1.msra.mxu0 0.0
    %5189 = vmatprep.subr.mxu0 0.0
    %5190 = vmatpush1.msra.mxu0 0.0
    %5191 = vmatprep.subr.mxu0 0.0
    %5192 = vmatpush1.msra.mxu0 0.0
    %5193 = vmatprep.subr.mxu0 0.0
    %5194 = vmatpush1.msra.mxu0 0.0
    %5195 = vmatprep.subr.mxu0 0.0
    %5196 = vmatpush1.msra.mxu0 0.0
    %5197 = vmatprep.subr.mxu0 0.0
    %5198 = vmatpush1.msra.mxu0 0.0
    %5199 = vmatprep.subr.mxu0 0.0
    %5200 = vmatpush1.msra.mxu0 0.0
    %5201 = vmatprep.subr.mxu0 0.0
    %5202 = vmatpush1.msra.mxu0 0.0
    %5203 = vmatprep.subr.mxu0 0.0
    %5204 = vmatpush1.msra.mxu0 0.0
    %5205 = vmatprep.subr.mxu0 0.0
    %5206 = vmatpush1.msra.mxu0 0.0
    %5207 = vmatprep.subr.mxu0 0.0
    %5208 = vmatpush1.msra.mxu0 %v5172
    %5209 = vmatprep.subr.mxu0 0.0
    %5210 = vmatpush2.msra.mxu0 0.0
    %5211 = vmatprep.subr.mxu0 0.0
    %5212 = vmatpush2.msra.mxu0 0.0
    %5213 = vmatprep.subr.mxu0 0.0
    %5214 = vmatpush2.msra.mxu0 0.0
    %5215 = vmatprep.subr.mxu0 0.0
    %5216 = vmatpush2.msra.mxu0 0.0
    %5217 = vmatprep.subr.mxu0 0.0
    %5218 = vmatpush2.msra.mxu0 0.0
    %5219 = vmatprep.subr.mxu0 0.0
    %5220 = vmatpush2.msra.mxu0 0.0
    %5221 = vmatprep.subr.mxu0 0.0
    %5222 = vmatpush2.msra.mxu0 0.0
    %5223 = vmatprep.subr.mxu0 0.0
    %5224 = vmatpush2.msra.mxu0 0.0
    %5225 = vmatprep.subr.mxu0 0.0
    %5226 = vmatpush2.msra.mxu0 0.0
    %5227 = vmatprep.subr.mxu0 0.0
    %5228 = vmatpush2.msra.mxu0 0.0
    %5229 = vmatprep.subr.mxu0 0.0
    %5230 = vmatpush2.msra.mxu0 0.0
    %5231 = vmatprep.subr.mxu0 0.0
    %5232 = vmatpush2.msra.mxu0 0.0
    %5233 = vmatprep.subr.mxu0 0.0
    %5234 = vmatpush2.msra.mxu0 0.0
    %5235 = vmatprep.subr.mxu0 0.0
    %5236 = vmatpush2.msra.mxu0 0.0
    %5237 = vmatprep.subr.mxu0 0.0
    %5238 = vmatpush2.msra.mxu0 0.0
    %5239 = vmatprep.subr.mxu0 0.0
    %5240 = vmatpush2.msra.mxu0 0.0
    %5241 = vmatprep.mubr.f32.mxu0 0.0
    %5242 = vmatmul.mubr.f32.gmra.mxu0 %v5175
    %v5243 = vpop.f32.mrf.mxu0
    %v5244 = vadd.f32 0.0, %v5243
    %v5245 = vpop.f32.mrf.mxu0
    %5246 = vdwg.mxu0
    %v5247 = vmul.f32 %v5244, 0.35355338
    %5249 = vrot.lane.b32.xlu0 %v4326, 120
    %v5250 = vpop.permute.xlu0 %5249
    %5252 = vxpose.xlu0.b32.start [1/16] %v5250, 128
    %5253 = vxpose.xlu0.b32.cont [2/16] 0.0, 128
    %5254 = vxpose.xlu0.b32.cont [3/16] 0.0, 128
    %5255 = vxpose.xlu0.b32.cont [4/16] 0.0, 128
    %5256 = vxpose.xlu0.b32.cont [5/16] 0.0, 128
    %5257 = vxpose.xlu0.b32.cont [6/16] 0.0, 128
    %5258 = vxpose.xlu0.b32.cont [7/16] 0.0, 128
    %5259 = vxpose.xlu0.b32.cont [8/16] 0.0, 128
    %5260 = vxpose.xlu0.b32.cont [9/16] 0.0, 128
    %5261 = vxpose.xlu0.b32.cont [10/16] 0.0, 128
    %5262 = vxpose.xlu0.b32.cont [11/16] 0.0, 128
    %5263 = vxpose.xlu0.b32.cont [12/16] 0.0, 128
    %5264 = vxpose.xlu0.b32.cont [13/16] 0.0, 128
    %5265 = vxpose.xlu0.b32.cont [14/16] 0.0, 128
    %5266 = vxpose.xlu0.b32.cont [15/16] 0.0, 128
    %5267 = vxpose.xlu0.b32.end [16/16] 0.0, 128
    %v5268 = vpop.trf.xlu0
    %v5269 = vpop.trf.xlu0
    %v5270 = vpop.trf.xlu0
    %v5271 = vpop.trf.xlu0
    %v5272 = vpop.trf.xlu0
    %v5273 = vpop.trf.xlu0
    %v5274 = vpop.trf.xlu0
    %v5275 = vpop.trf.xlu0
    %v5276 = vpop.trf.xlu0
    %v5277 = vpop.trf.xlu0
    %v5278 = vpop.trf.xlu0
    %v5279 = vpop.trf.xlu0
    %v5280 = vpop.trf.xlu0
    %v5281 = vpop.trf.xlu0
    %v5282 = vpop.trf.xlu0
    %v5283 = vpop.trf.xlu0
    %5285 = vrot.lane.b32.xlu0 %v4346, 120
    %v5286 = vpop.permute.xlu0 %5285
    %v5289 = vsel %vm415, %v5268, 0
    %5291 = vmatprep.subr.mxu0 0.0
    %5292 = vmatpush1.msra.mxu0 0.0
    %5293 = vmatprep.subr.mxu0 0.0
    %5294 = vmatpush1.msra.mxu0 0.0
    %5295 = vmatprep.subr.mxu0 0.0
    %5296 = vmatpush1.msra.mxu0 0.0
    %5297 = vmatprep.subr.mxu0 0.0
    %5298 = vmatpush1.msra.mxu0 0.0
    %5299 = vmatprep.subr.mxu0 0.0
    %5300 = vmatpush1.msra.mxu0 0.0
    %5301 = vmatprep.subr.mxu0 0.0
    %5302 = vmatpush1.msra.mxu0 0.0
    %5303 = vmatprep.subr.mxu0 0.0
    %5304 = vmatpush1.msra.mxu0 0.0
    %5305 = vmatprep.subr.mxu0 0.0
    %5306 = vmatpush1.msra.mxu0 0.0
    %5307 = vmatprep.subr.mxu0 0.0
    %5308 = vmatpush1.msra.mxu0 0.0
    %5309 = vmatprep.subr.mxu0 0.0
    %5310 = vmatpush1.msra.mxu0 0.0
    %5311 = vmatprep.subr.mxu0 0.0
    %5312 = vmatpush1.msra.mxu0 0.0
    %5313 = vmatprep.subr.mxu0 0.0
    %5314 = vmatpush1.msra.mxu0 0.0
    %5315 = vmatprep.subr.mxu0 0.0
    %5316 = vmatpush1.msra.mxu0 0.0
    %5317 = vmatprep.subr.mxu0 0.0
    %5318 = vmatpush1.msra.mxu0 0.0
    %5319 = vmatprep.subr.mxu0 0.0
    %5320 = vmatpush1.msra.mxu0 0.0
    %5321 = vmatprep.subr.mxu0 0.0
    %5322 = vmatpush1.msra.mxu0 %v5286
    %5323 = vmatprep.subr.mxu0 0.0
    %5324 = vmatpush2.msra.mxu0 0.0
    %5325 = vmatprep.subr.mxu0 0.0
    %5326 = vmatpush2.msra.mxu0 0.0
    %5327 = vmatprep.subr.mxu0 0.0
    %5328 = vmatpush2.msra.mxu0 0.0
    %5329 = vmatprep.subr.mxu0 0.0
    %5330 = vmatpush2.msra.mxu0 0.0
    %5331 = vmatprep.subr.mxu0 0.0
    %5332 = vmatpush2.msra.mxu0 0.0
    %5333 = vmatprep.subr.mxu0 0.0
    %5334 = vmatpush2.msra.mxu0 0.0
    %5335 = vmatprep.subr.mxu0 0.0
    %5336 = vmatpush2.msra.mxu0 0.0
    %5337 = vmatprep.subr.mxu0 0.0
    %5338 = vmatpush2.msra.mxu0 0.0
    %5339 = vmatprep.subr.mxu0 0.0
    %5340 = vmatpush2.msra.mxu0 0.0
    %5341 = vmatprep.subr.mxu0 0.0
    %5342 = vmatpush2.msra.mxu0 0.0
    %5343 = vmatprep.subr.mxu0 0.0
    %5344 = vmatpush2.msra.mxu0 0.0
    %5345 = vmatprep.subr.mxu0 0.0
    %5346 = vmatpush2.msra.mxu0 0.0
    %5347 = vmatprep.subr.mxu0 0.0
    %5348 = vmatpush2.msra.mxu0 0.0
    %5349 = vmatprep.subr.mxu0 0.0
    %5350 = vmatpush2.msra.mxu0 0.0
    %5351 = vmatprep.subr.mxu0 0.0
    %5352 = vmatpush2.msra.mxu0 0.0
    %5353 = vmatprep.subr.mxu0 0.0
    %5354 = vmatpush2.msra.mxu0 0.0
    %5355 = vmatprep.mubr.f32.mxu0 0.0
    %5356 = vmatmul.mubr.f32.gmra.mxu0 %v5289
    %v5357 = vpop.f32.mrf.mxu0
    %v5358 = vadd.f32 0.0, %v5357
    %v5359 = vpop.f32.mrf.mxu0
    %5360 = vdwg.mxu0
    %v5361 = vmul.f32 %v5358, 0.35355338
    %v5362 = vsel %vm415, %v4587, -inf
    %5363 = vmax.xlane.f32.xlu0 %v5362
    %v5364 = vpop.xlane.xlu0 %5363
    %v5365 = vsel %vm415, %v4693, -inf
    %5366 = vmax.xlane.f32.xlu0 %v5365
    %v5367 = vpop.xlane.xlu0 %5366
    %v5368 = vsel %vm415, %v4799, -inf
    %5369 = vmax.xlane.f32.xlu0 %v5368
    %v5370 = vpop.xlane.xlu0 %5369
    %v5371 = vsel %vm415, %v4905, -inf
    %5372 = vmax.xlane.f32.xlu0 %v5371
    %v5373 = vpop.xlane.xlu0 %5372
    %v5374 = vsel %vm415, %v5019, -inf
    %5375 = vmax.xlane.f32.xlu0 %v5374
    %v5376 = vpop.xlane.xlu0 %5375
    %v5377 = vsel %vm415, %v5133, -inf
    %5378 = vmax.xlane.f32.xlu0 %v5377
    %v5379 = vpop.xlane.xlu0 %5378
    %v5380 = vsel %vm415, %v5247, -inf
    %5381 = vmax.xlane.f32.xlu0 %v5380
    %v5382 = vpop.xlane.xlu0 %5381
    %v5383 = vsel %vm415, %v5361, -inf
    %5384 = vmax.xlane.f32.xlu0 %v5383
    %v5385 = vpop.xlane.xlu0 %5384
    %v5386 = vsub.f32 %v4587, %v5364
    %v5387 = vsub.f32 %v4693, %v5367
    %v5388 = vsub.f32 %v4799, %v5370
    %v5389 = vsub.f32 %v4905, %v5373
    %v5390 = vsub.f32 %v5019, %v5376
    %v5391 = vsub.f32 %v5133, %v5379
    %v5392 = vsub.f32 %v5247, %v5382
    %v5393 = vsub.f32 %v5361, %v5385
    %v5394 = vmul.f32 %v5386, 1.442695
    %v5395 = vpow.pop %v5394
    %v5396 = vmul.f32 %v5387, 1.442695
    %v5397 = vpow.pop %v5396
    %v5398 = vmul.f32 %v5388, 1.442695
    %v5399 = vpow.pop %v5398
    %v5400 = vmul.f32 %v5389, 1.442695
    %v5401 = vpow.pop %v5400
    %v5402 = vmul.f32 %v5390, 1.442695
    %v5403 = vpow.pop %v5402
    %v5404 = vmul.f32 %v5391, 1.442695
    %v5405 = vpow.pop %v5404
    %v5406 = vmul.f32 %v5392, 1.442695
    %v5407 = vpow.pop %v5406
    %v5408 = vmul.f32 %v5393, 1.442695
    %v5409 = vpow.pop %v5408
    %v5410 = vsel %vm415, %v5395, 0.0
    %5411 = vadd.xlane.f32.xlu0 %v5410
    %v5412 = vpop.xlane.xlu0 %5411
    %v5413 = vsel %vm415, %v5397, 0.0
    %5414 = vadd.xlane.f32.xlu0 %v5413
    %v5415 = vpop.xlane.xlu0 %5414
    %v5416 = vsel %vm415, %v5399, 0.0
    %5417 = vadd.xlane.f32.xlu0 %v5416
    %v5418 = vpop.xlane.xlu0 %5417
    %v5419 = vsel %vm415, %v5401, 0.0
    %5420 = vadd.xlane.f32.xlu0 %v5419
    %v5421 = vpop.xlane.xlu0 %5420
    %v5422 = vsel %vm415, %v5403, 0.0
    %5423 = vadd.xlane.f32.xlu0 %v5422
    %v5424 = vpop.xlane.xlu0 %5423
    %v5425 = vsel %vm415, %v5405, 0.0
    %5426 = vadd.xlane.f32.xlu0 %v5425
    %v5427 = vpop.xlane.xlu0 %5426
    %v5428 = vsel %vm415, %v5407, 0.0
    %5429 = vadd.xlane.f32.xlu0 %v5428
    %v5430 = vpop.xlane.xlu0 %5429
    %v5431 = vsel %vm415, %v5409, 0.0
    %5432 = vadd.xlane.f32.xlu0 %v5431
    %v5433 = vpop.xlane.xlu0 %5432
    %v5434 = vrcp.pop %v5412
    %v5435 = vrcp.pop %v5415
    %v5436 = vrcp.pop %v5418
    %v5437 = vrcp.pop %v5421
    %v5438 = vrcp.pop %v5424
    %v5439 = vrcp.pop %v5427
    %v5440 = vrcp.pop %v5430
    %v5441 = vrcp.pop %v5433
    %v5442 = vmul.f32 %v5395, %v5434
    %v5443 = vmul.f32 %v5397, %v5435
    %v5444 = vmul.f32 %v5399, %v5436
    %v5445 = vmul.f32 %v5401, %v5437
    %v5446 = vmul.f32 %v5403, %v5438
    %v5447 = vmul.f32 %v5405, %v5439
    %v5448 = vmul.f32 %v5407, %v5440
    %v5449 = vmul.f32 %v5409, %v5441
    %v5451 = vsel %vm415, %v4464, 0
    %v5454 = vsel %vm415, %v5442, 0
    %5456 = vmatprep.subr.mxu0 0.0
    %5457 = vmatpush1.xpose.msra.mxu0 0.0
    %5458 = vmatprep.subr.mxu0 0.0
    %5459 = vmatpush1.xpose.msra.mxu0 0.0
    %5460 = vmatprep.subr.mxu0 0.0
    %5461 = vmatpush1.xpose.msra.mxu0 0.0
    %5462 = vmatprep.subr.mxu0 0.0
    %5463 = vmatpush1.xpose.msra.mxu0 0.0
    %5464 = vmatprep.subr.mxu0 0.0
    %5465 = vmatpush1.xpose.msra.mxu0 0.0
    %5466 = vmatprep.subr.mxu0 0.0
    %5467 = vmatpush1.xpose.msra.mxu0 0.0
    %5468 = vmatprep.subr.mxu0 0.0
    %5469 = vmatpush1.xpose.msra.mxu0 0.0
    %5470 = vmatprep.subr.mxu0 0.0
    %5471 = vmatpush1.xpose.msra.mxu0 0.0
    %5472 = vmatprep.subr.mxu0 0.0
    %5473 = vmatpush1.xpose.msra.mxu0 0.0
    %5474 = vmatprep.subr.mxu0 0.0
    %5475 = vmatpush1.xpose.msra.mxu0 0.0
    %5476 = vmatprep.subr.mxu0 0.0
    %5477 = vmatpush1.xpose.msra.mxu0 0.0
    %5478 = vmatprep.subr.mxu0 0.0
    %5479 = vmatpush1.xpose.msra.mxu0 0.0
    %5480 = vmatprep.subr.mxu0 0.0
    %5481 = vmatpush1.xpose.msra.mxu0 0.0
    %5482 = vmatprep.subr.mxu0 0.0
    %5483 = vmatpush1.xpose.msra.mxu0 0.0
    %5484 = vmatprep.subr.mxu0 0.0
    %5485 = vmatpush1.xpose.msra.mxu0 0.0
    %5486 = vmatprep.subr.mxu0 0.0
    %5487 = vmatpush1.xpose.msra.mxu0 %v5454
    %5488 = vmatprep.subr.mxu0 0.0
    %5489 = vmatpush2.xpose.msra.mxu0 0.0
    %5490 = vmatprep.subr.mxu0 0.0
    %5491 = vmatpush2.xpose.msra.mxu0 0.0
    %5492 = vmatprep.subr.mxu0 0.0
    %5493 = vmatpush2.xpose.msra.mxu0 0.0
    %5494 = vmatprep.subr.mxu0 0.0
    %5495 = vmatpush2.xpose.msra.mxu0 0.0
    %5496 = vmatprep.subr.mxu0 0.0
    %5497 = vmatpush2.xpose.msra.mxu0 0.0
    %5498 = vmatprep.subr.mxu0 0.0
    %5499 = vmatpush2.xpose.msra.mxu0 0.0
    %5500 = vmatprep.subr.mxu0 0.0
    %5501 = vmatpush2.xpose.msra.mxu0 0.0
    %5502 = vmatprep.subr.mxu0 0.0
    %5503 = vmatpush2.xpose.msra.mxu0 0.0
    %5504 = vmatprep.subr.mxu0 0.0
    %5505 = vmatpush2.xpose.msra.mxu0 0.0
    %5506 = vmatprep.subr.mxu0 0.0
    %5507 = vmatpush2.xpose.msra.mxu0 0.0
    %5508 = vmatprep.subr.mxu0 0.0
    %5509 = vmatpush2.xpose.msra.mxu0 0.0
    %5510 = vmatprep.subr.mxu0 0.0
    %5511 = vmatpush2.xpose.msra.mxu0 0.0
    %5512 = vmatprep.subr.mxu0 0.0
    %5513 = vmatpush2.xpose.msra.mxu0 0.0
    %5514 = vmatprep.subr.mxu0 0.0
    %5515 = vmatpush2.xpose.msra.mxu0 0.0
    %5516 = vmatprep.subr.mxu0 0.0
    %5517 = vmatpush2.xpose.msra.mxu0 0.0
    %5518 = vmatprep.subr.mxu0 0.0
    %5519 = vmatpush2.xpose.msra.mxu0 0.0
    %5520 = vmatprep.mubr.f32.mxu0 0.0
    %5521 = vmatmul.mubr.f32.gmra.mxu0 %v5451
    %v5522 = vpop.f32.mrf.mxu0
    %v5523 = vadd.f32 0.0, %v5522
    %v5524 = vpop.f32.mrf.mxu0
    %5525 = vdwg.mxu0
    %v5527 = vsel %vm415, %v4469, 0
    %v5530 = vsel %vm415, %v5443, 0
    %5532 = vmatprep.subr.mxu0 0.0
    %5533 = vmatpush1.xpose.msra.mxu0 0.0
    %5534 = vmatprep.subr.mxu0 0.0
    %5535 = vmatpush1.xpose.msra.mxu0 0.0
    %5536 = vmatprep.subr.mxu0 0.0
    %5537 = vmatpush1.xpose.msra.mxu0 0.0
    %5538 = vmatprep.subr.mxu0 0.0
    %5539 = vmatpush1.xpose.msra.mxu0 0.0
    %5540 = vmatprep.subr.mxu0 0.0
    %5541 = vmatpush1.xpose.msra.mxu0 0.0
    %5542 = vmatprep.subr.mxu0 0.0
    %5543 = vmatpush1.xpose.msra.mxu0 0.0
    %5544 = vmatprep.subr.mxu0 0.0
    %5545 = vmatpush1.xpose.msra.mxu0 0.0
    %5546 = vmatprep.subr.mxu0 0.0
    %5547 = vmatpush1.xpose.msra.mxu0 0.0
    %5548 = vmatprep.subr.mxu0 0.0
    %5549 = vmatpush1.xpose.msra.mxu0 0.0
    %5550 = vmatprep.subr.mxu0 0.0
    %5551 = vmatpush1.xpose.msra.mxu0 0.0
    %5552 = vmatprep.subr.mxu0 0.0
    %5553 = vmatpush1.xpose.msra.mxu0 0.0
    %5554 = vmatprep.subr.mxu0 0.0
    %5555 = vmatpush1.xpose.msra.mxu0 0.0
    %5556 = vmatprep.subr.mxu0 0.0
    %5557 = vmatpush1.xpose.msra.mxu0 0.0
    %5558 = vmatprep.subr.mxu0 0.0
    %5559 = vmatpush1.xpose.msra.mxu0 0.0
    %5560 = vmatprep.subr.mxu0 0.0
    %5561 = vmatpush1.xpose.msra.mxu0 0.0
    %5562 = vmatprep.subr.mxu0 0.0
    %5563 = vmatpush1.xpose.msra.mxu0 %v5530
    %5564 = vmatprep.subr.mxu0 0.0
    %5565 = vmatpush2.xpose.msra.mxu0 0.0
    %5566 = vmatprep.subr.mxu0 0.0
    %5567 = vmatpush2.xpose.msra.mxu0 0.0
    %5568 = vmatprep.subr.mxu0 0.0
    %5569 = vmatpush2.xpose.msra.mxu0 0.0
    %5570 = vmatprep.subr.mxu0 0.0
    %5571 = vmatpush2.xpose.msra.mxu0 0.0
    %5572 = vmatprep.subr.mxu0 0.0
    %5573 = vmatpush2.xpose.msra.mxu0 0.0
    %5574 = vmatprep.subr.mxu0 0.0
    %5575 = vmatpush2.xpose.msra.mxu0 0.0
    %5576 = vmatprep.subr.mxu0 0.0
    %5577 = vmatpush2.xpose.msra.mxu0 0.0
    %5578 = vmatprep.subr.mxu0 0.0
    %5579 = vmatpush2.xpose.msra.mxu0 0.0
    %5580 = vmatprep.subr.mxu0 0.0
    %5581 = vmatpush2.xpose.msra.mxu0 0.0
    %5582 = vmatprep.subr.mxu0 0.0
    %5583 = vmatpush2.xpose.msra.mxu0 0.0
    %5584 = vmatprep.subr.mxu0 0.0
    %5585 = vmatpush2.xpose.msra.mxu0 0.0
    %5586 = vmatprep.subr.mxu0 0.0
    %5587 = vmatpush2.xpose.msra.mxu0 0.0
    %5588 = vmatprep.subr.mxu0 0.0
    %5589 = vmatpush2.xpose.msra.mxu0 0.0
    %5590 = vmatprep.subr.mxu0 0.0
    %5591 = vmatpush2.xpose.msra.mxu0 0.0
    %5592 = vmatprep.subr.mxu0 0.0
    %5593 = vmatpush2.xpose.msra.mxu0 0.0
    %5594 = vmatprep.subr.mxu0 0.0
    %5595 = vmatpush2.xpose.msra.mxu0 0.0
    %5596 = vmatprep.mubr.f32.mxu0 0.0
    %5597 = vmatmul.mubr.f32.gmra.mxu0 %v5527
    %v5598 = vpop.f32.mrf.mxu0
    %v5599 = vadd.f32 0.0, %v5598
    %v5600 = vpop.f32.mrf.mxu0
    %5601 = vdwg.mxu0
    %v5603 = vsel %vm415, %v4474, 0
    %v5606 = vsel %vm415, %v5444, 0
    %5608 = vmatprep.subr.mxu0 0.0
    %5609 = vmatpush1.xpose.msra.mxu0 0.0
    %5610 = vmatprep.subr.mxu0 0.0
    %5611 = vmatpush1.xpose.msra.mxu0 0.0
    %5612 = vmatprep.subr.mxu0 0.0
    %5613 = vmatpush1.xpose.msra.mxu0 0.0
    %5614 = vmatprep.subr.mxu0 0.0
    %5615 = vmatpush1.xpose.msra.mxu0 0.0
    %5616 = vmatprep.subr.mxu0 0.0
    %5617 = vmatpush1.xpose.msra.mxu0 0.0
    %5618 = vmatprep.subr.mxu0 0.0
    %5619 = vmatpush1.xpose.msra.mxu0 0.0
    %5620 = vmatprep.subr.mxu0 0.0
    %5621 = vmatpush1.xpose.msra.mxu0 0.0
    %5622 = vmatprep.subr.mxu0 0.0
    %5623 = vmatpush1.xpose.msra.mxu0 0.0
    %5624 = vmatprep.subr.mxu0 0.0
    %5625 = vmatpush1.xpose.msra.mxu0 0.0
    %5626 = vmatprep.subr.mxu0 0.0
    %5627 = vmatpush1.xpose.msra.mxu0 0.0
    %5628 = vmatprep.subr.mxu0 0.0
    %5629 = vmatpush1.xpose.msra.mxu0 0.0
    %5630 = vmatprep.subr.mxu0 0.0
    %5631 = vmatpush1.xpose.msra.mxu0 0.0
    %5632 = vmatprep.subr.mxu0 0.0
    %5633 = vmatpush1.xpose.msra.mxu0 0.0
    %5634 = vmatprep.subr.mxu0 0.0
    %5635 = vmatpush1.xpose.msra.mxu0 0.0
    %5636 = vmatprep.subr.mxu0 0.0
    %5637 = vmatpush1.xpose.msra.mxu0 0.0
    %5638 = vmatprep.subr.mxu0 0.0
    %5639 = vmatpush1.xpose.msra.mxu0 %v5606
    %5640 = vmatprep.subr.mxu0 0.0
    %5641 = vmatpush2.xpose.msra.mxu0 0.0
    %5642 = vmatprep.subr.mxu0 0.0
    %5643 = vmatpush2.xpose.msra.mxu0 0.0
    %5644 = vmatprep.subr.mxu0 0.0
    %5645 = vmatpush2.xpose.msra.mxu0 0.0
    %5646 = vmatprep.subr.mxu0 0.0
    %5647 = vmatpush2.xpose.msra.mxu0 0.0
    %5648 = vmatprep.subr.mxu0 0.0
    %5649 = vmatpush2.xpose.msra.mxu0 0.0
    %5650 = vmatprep.subr.mxu0 0.0
    %5651 = vmatpush2.xpose.msra.mxu0 0.0
    %5652 = vmatprep.subr.mxu0 0.0
    %5653 = vmatpush2.xpose.msra.mxu0 0.0
    %5654 = vmatprep.subr.mxu0 0.0
    %5655 = vmatpush2.xpose.msra.mxu0 0.0
    %5656 = vmatprep.subr.mxu0 0.0
    %5657 = vmatpush2.xpose.msra.mxu0 0.0
    %5658 = vmatprep.subr.mxu0 0.0
    %5659 = vmatpush2.xpose.msra.mxu0 0.0
    %5660 = vmatprep.subr.mxu0 0.0
    %5661 = vmatpush2.xpose.msra.mxu0 0.0
    %5662 = vmatprep.subr.mxu0 0.0
    %5663 = vmatpush2.xpose.msra.mxu0 0.0
    %5664 = vmatprep.subr.mxu0 0.0
    %5665 = vmatpush2.xpose.msra.mxu0 0.0
    %5666 = vmatprep.subr.mxu0 0.0
    %5667 = vmatpush2.xpose.msra.mxu0 0.0
    %5668 = vmatprep.subr.mxu0 0.0
    %5669 = vmatpush2.xpose.msra.mxu0 0.0
    %5670 = vmatprep.subr.mxu0 0.0
    %5671 = vmatpush2.xpose.msra.mxu0 0.0
    %5672 = vmatprep.mubr.f32.mxu0 0.0
    %5673 = vmatmul.mubr.f32.gmra.mxu0 %v5603
    %v5674 = vpop.f32.mrf.mxu0
    %v5675 = vadd.f32 0.0, %v5674
    %v5676 = vpop.f32.mrf.mxu0
    %5677 = vdwg.mxu0
    %v5679 = vsel %vm415, %v4479, 0
    %v5682 = vsel %vm415, %v5445, 0
    %5684 = vmatprep.subr.mxu0 0.0
    %5685 = vmatpush1.xpose.msra.mxu0 0.0
    %5686 = vmatprep.subr.mxu0 0.0
    %5687 = vmatpush1.xpose.msra.mxu0 0.0
    %5688 = vmatprep.subr.mxu0 0.0
    %5689 = vmatpush1.xpose.msra.mxu0 0.0
    %5690 = vmatprep.subr.mxu0 0.0
    %5691 = vmatpush1.xpose.msra.mxu0 0.0
    %5692 = vmatprep.subr.mxu0 0.0
    %5693 = vmatpush1.xpose.msra.mxu0 0.0
    %5694 = vmatprep.subr.mxu0 0.0
    %5695 = vmatpush1.xpose.msra.mxu0 0.0
    %5696 = vmatprep.subr.mxu0 0.0
    %5697 = vmatpush1.xpose.msra.mxu0 0.0
    %5698 = vmatprep.subr.mxu0 0.0
    %5699 = vmatpush1.xpose.msra.mxu0 0.0
    %5700 = vmatprep.subr.mxu0 0.0
    %5701 = vmatpush1.xpose.msra.mxu0 0.0
    %5702 = vmatprep.subr.mxu0 0.0
    %5703 = vmatpush1.xpose.msra.mxu0 0.0
    %5704 = vmatprep.subr.mxu0 0.0
    %5705 = vmatpush1.xpose.msra.mxu0 0.0
    %5706 = vmatprep.subr.mxu0 0.0
    %5707 = vmatpush1.xpose.msra.mxu0 0.0
    %5708 = vmatprep.subr.mxu0 0.0
    %5709 = vmatpush1.xpose.msra.mxu0 0.0
    %5710 = vmatprep.subr.mxu0 0.0
    %5711 = vmatpush1.xpose.msra.mxu0 0.0
    %5712 = vmatprep.subr.mxu0 0.0
    %5713 = vmatpush1.xpose.msra.mxu0 0.0
    %5714 = vmatprep.subr.mxu0 0.0
    %5715 = vmatpush1.xpose.msra.mxu0 %v5682
    %5716 = vmatprep.subr.mxu0 0.0
    %5717 = vmatpush2.xpose.msra.mxu0 0.0
    %5718 = vmatprep.subr.mxu0 0.0
    %5719 = vmatpush2.xpose.msra.mxu0 0.0
    %5720 = vmatprep.subr.mxu0 0.0
    %5721 = vmatpush2.xpose.msra.mxu0 0.0
    %5722 = vmatprep.subr.mxu0 0.0
    %5723 = vmatpush2.xpose.msra.mxu0 0.0
    %5724 = vmatprep.subr.mxu0 0.0
    %5725 = vmatpush2.xpose.msra.mxu0 0.0
    %5726 = vmatprep.subr.mxu0 0.0
    %5727 = vmatpush2.xpose.msra.mxu0 0.0
    %5728 = vmatprep.subr.mxu0 0.0
    %5729 = vmatpush2.xpose.msra.mxu0 0.0
    %5730 = vmatprep.subr.mxu0 0.0
    %5731 = vmatpush2.xpose.msra.mxu0 0.0
    %5732 = vmatprep.subr.mxu0 0.0
    %5733 = vmatpush2.xpose.msra.mxu0 0.0
    %5734 = vmatprep.subr.mxu0 0.0
    %5735 = vmatpush2.xpose.msra.mxu0 0.0
    %5736 = vmatprep.subr.mxu0 0.0
    %5737 = vmatpush2.xpose.msra.mxu0 0.0
    %5738 = vmatprep.subr.mxu0 0.0
    %5739 = vmatpush2.xpose.msra.mxu0 0.0
    %5740 = vmatprep.subr.mxu0 0.0
    %5741 = vmatpush2.xpose.msra.mxu0 0.0
    %5742 = vmatprep.subr.mxu0 0.0
    %5743 = vmatpush2.xpose.msra.mxu0 0.0
    %5744 = vmatprep.subr.mxu0 0.0
    %5745 = vmatpush2.xpose.msra.mxu0 0.0
    %5746 = vmatprep.subr.mxu0 0.0
    %5747 = vmatpush2.xpose.msra.mxu0 0.0
    %5748 = vmatprep.mubr.f32.mxu0 0.0
    %5749 = vmatmul.mubr.f32.gmra.mxu0 %v5679
    %v5750 = vpop.f32.mrf.mxu0
    %v5751 = vadd.f32 0.0, %v5750
    %v5752 = vpop.f32.mrf.mxu0
    %5753 = vdwg.mxu0
    %5754 = vrot.lane.b32.xlu0 %v4464, 120
    %v5755 = vpop.permute.xlu0 %5754
    %v5756 = vsel %vm415, %v5755, 0
    %v5759 = vsel %vm415, %v5446, 0
    %5761 = vmatprep.subr.mxu0 0.0
    %5762 = vmatpush1.xpose.msra.mxu0 0.0
    %5763 = vmatprep.subr.mxu0 0.0
    %5764 = vmatpush1.xpose.msra.mxu0 0.0
    %5765 = vmatprep.subr.mxu0 0.0
    %5766 = vmatpush1.xpose.msra.mxu0 0.0
    %5767 = vmatprep.subr.mxu0 0.0
    %5768 = vmatpush1.xpose.msra.mxu0 0.0
    %5769 = vmatprep.subr.mxu0 0.0
    %5770 = vmatpush1.xpose.msra.mxu0 0.0
    %5771 = vmatprep.subr.mxu0 0.0
    %5772 = vmatpush1.xpose.msra.mxu0 0.0
    %5773 = vmatprep.subr.mxu0 0.0
    %5774 = vmatpush1.xpose.msra.mxu0 0.0
    %5775 = vmatprep.subr.mxu0 0.0
    %5776 = vmatpush1.xpose.msra.mxu0 0.0
    %5777 = vmatprep.subr.mxu0 0.0
    %5778 = vmatpush1.xpose.msra.mxu0 0.0
    %5779 = vmatprep.subr.mxu0 0.0
    %5780 = vmatpush1.xpose.msra.mxu0 0.0
    %5781 = vmatprep.subr.mxu0 0.0
    %5782 = vmatpush1.xpose.msra.mxu0 0.0
    %5783 = vmatprep.subr.mxu0 0.0
    %5784 = vmatpush1.xpose.msra.mxu0 0.0
    %5785 = vmatprep.subr.mxu0 0.0
    %5786 = vmatpush1.xpose.msra.mxu0 0.0
    %5787 = vmatprep.subr.mxu0 0.0
    %5788 = vmatpush1.xpose.msra.mxu0 0.0
    %5789 = vmatprep.subr.mxu0 0.0
    %5790 = vmatpush1.xpose.msra.mxu0 0.0
    %5791 = vmatprep.subr.mxu0 0.0
    %5792 = vmatpush1.xpose.msra.mxu0 %v5759
    %5793 = vmatprep.subr.mxu0 0.0
    %5794 = vmatpush2.xpose.msra.mxu0 0.0
    %5795 = vmatprep.subr.mxu0 0.0
    %5796 = vmatpush2.xpose.msra.mxu0 0.0
    %5797 = vmatprep.subr.mxu0 0.0
    %5798 = vmatpush2.xpose.msra.mxu0 0.0
    %5799 = vmatprep.subr.mxu0 0.0
    %5800 = vmatpush2.xpose.msra.mxu0 0.0
    %5801 = vmatprep.subr.mxu0 0.0
    %5802 = vmatpush2.xpose.msra.mxu0 0.0
    %5803 = vmatprep.subr.mxu0 0.0
    %5804 = vmatpush2.xpose.msra.mxu0 0.0
    %5805 = vmatprep.subr.mxu0 0.0
    %5806 = vmatpush2.xpose.msra.mxu0 0.0
    %5807 = vmatprep.subr.mxu0 0.0
    %5808 = vmatpush2.xpose.msra.mxu0 0.0
    %5809 = vmatprep.subr.mxu0 0.0
    %5810 = vmatpush2.xpose.msra.mxu0 0.0
    %5811 = vmatprep.subr.mxu0 0.0
    %5812 = vmatpush2.xpose.msra.mxu0 0.0
    %5813 = vmatprep.subr.mxu0 0.0
    %5814 = vmatpush2.xpose.msra.mxu0 0.0
    %5815 = vmatprep.subr.mxu0 0.0
    %5816 = vmatpush2.xpose.msra.mxu0 0.0
    %5817 = vmatprep.subr.mxu0 0.0
    %5818 = vmatpush2.xpose.msra.mxu0 0.0
    %5819 = vmatprep.subr.mxu0 0.0
    %5820 = vmatpush2.xpose.msra.mxu0 0.0
    %5821 = vmatprep.subr.mxu0 0.0
    %5822 = vmatpush2.xpose.msra.mxu0 0.0
    %5823 = vmatprep.subr.mxu0 0.0
    %5824 = vmatpush2.xpose.msra.mxu0 0.0
    %5825 = vmatprep.mubr.f32.mxu0 0.0
    %5826 = vmatmul.mubr.f32.gmra.mxu0 %v5756
    %v5827 = vpop.f32.mrf.mxu0
    %v5828 = vadd.f32 0.0, %v5827
    %v5829 = vpop.f32.mrf.mxu0
    %5830 = vdwg.mxu0
    %5831 = vrot.lane.b32.xlu0 %v4469, 120
    %v5832 = vpop.permute.xlu0 %5831
    %v5833 = vsel %vm415, %v5832, 0
    %v5836 = vsel %vm415, %v5447, 0
    %5838 = vmatprep.subr.mxu0 0.0
    %5839 = vmatpush1.xpose.msra.mxu0 0.0
    %5840 = vmatprep.subr.mxu0 0.0
    %5841 = vmatpush1.xpose.msra.mxu0 0.0
    %5842 = vmatprep.subr.mxu0 0.0
    %5843 = vmatpush1.xpose.msra.mxu0 0.0
    %5844 = vmatprep.subr.mxu0 0.0
    %5845 = vmatpush1.xpose.msra.mxu0 0.0
    %5846 = vmatprep.subr.mxu0 0.0
    %5847 = vmatpush1.xpose.msra.mxu0 0.0
    %5848 = vmatprep.subr.mxu0 0.0
    %5849 = vmatpush1.xpose.msra.mxu0 0.0
    %5850 = vmatprep.subr.mxu0 0.0
    %5851 = vmatpush1.xpose.msra.mxu0 0.0
    %5852 = vmatprep.subr.mxu0 0.0
    %5853 = vmatpush1.xpose.msra.mxu0 0.0
    %5854 = vmatprep.subr.mxu0 0.0
    %5855 = vmatpush1.xpose.msra.mxu0 0.0
    %5856 = vmatprep.subr.mxu0 0.0
    %5857 = vmatpush1.xpose.msra.mxu0 0.0
    %5858 = vmatprep.subr.mxu0 0.0
    %5859 = vmatpush1.xpose.msra.mxu0 0.0
    %5860 = vmatprep.subr.mxu0 0.0
    %5861 = vmatpush1.xpose.msra.mxu0 0.0
    %5862 = vmatprep.subr.mxu0 0.0
    %5863 = vmatpush1.xpose.msra.mxu0 0.0
    %5864 = vmatprep.subr.mxu0 0.0
    %5865 = vmatpush1.xpose.msra.mxu0 0.0
    %5866 = vmatprep.subr.mxu0 0.0
    %5867 = vmatpush1.xpose.msra.mxu0 0.0
    %5868 = vmatprep.subr.mxu0 0.0
    %5869 = vmatpush1.xpose.msra.mxu0 %v5836
    %5870 = vmatprep.subr.mxu0 0.0
    %5871 = vmatpush2.xpose.msra.mxu0 0.0
    %5872 = vmatprep.subr.mxu0 0.0
    %5873 = vmatpush2.xpose.msra.mxu0 0.0
    %5874 = vmatprep.subr.mxu0 0.0
    %5875 = vmatpush2.xpose.msra.mxu0 0.0
    %5876 = vmatprep.subr.mxu0 0.0
    %5877 = vmatpush2.xpose.msra.mxu0 0.0
    %5878 = vmatprep.subr.mxu0 0.0
    %5879 = vmatpush2.xpose.msra.mxu0 0.0
    %5880 = vmatprep.subr.mxu0 0.0
    %5881 = vmatpush2.xpose.msra.mxu0 0.0
    %5882 = vmatprep.subr.mxu0 0.0
    %5883 = vmatpush2.xpose.msra.mxu0 0.0
    %5884 = vmatprep.subr.mxu0 0.0
    %5885 = vmatpush2.xpose.msra.mxu0 0.0
    %5886 = vmatprep.subr.mxu0 0.0
    %5887 = vmatpush2.xpose.msra.mxu0 0.0
    %5888 = vmatprep.subr.mxu0 0.0
    %5889 = vmatpush2.xpose.msra.mxu0 0.0
    %5890 = vmatprep.subr.mxu0 0.0
    %5891 = vmatpush2.xpose.msra.mxu0 0.0
    %5892 = vmatprep.subr.mxu0 0.0
    %5893 = vmatpush2.xpose.msra.mxu0 0.0
    %5894 = vmatprep.subr.mxu0 0.0
    %5895 = vmatpush2.xpose.msra.mxu0 0.0
    %5896 = vmatprep.subr.mxu0 0.0
    %5897 = vmatpush2.xpose.msra.mxu0 0.0
    %5898 = vmatprep.subr.mxu0 0.0
    %5899 = vmatpush2.xpose.msra.mxu0 0.0
    %5900 = vmatprep.subr.mxu0 0.0
    %5901 = vmatpush2.xpose.msra.mxu0 0.0
    %5902 = vmatprep.mubr.f32.mxu0 0.0
    %5903 = vmatmul.mubr.f32.gmra.mxu0 %v5833
    %v5904 = vpop.f32.mrf.mxu0
    %v5905 = vadd.f32 0.0, %v5904
    %v5906 = vpop.f32.mrf.mxu0
    %5907 = vdwg.mxu0
    %5908 = vrot.lane.b32.xlu0 %v4474, 120
    %v5909 = vpop.permute.xlu0 %5908
    %v5910 = vsel %vm415, %v5909, 0
    %v5913 = vsel %vm415, %v5448, 0
    %5915 = vmatprep.subr.mxu0 0.0
    %5916 = vmatpush1.xpose.msra.mxu0 0.0
    %5917 = vmatprep.subr.mxu0 0.0
    %5918 = vmatpush1.xpose.msra.mxu0 0.0
    %5919 = vmatprep.subr.mxu0 0.0
    %5920 = vmatpush1.xpose.msra.mxu0 0.0
    %5921 = vmatprep.subr.mxu0 0.0
    %5922 = vmatpush1.xpose.msra.mxu0 0.0
    %5923 = vmatprep.subr.mxu0 0.0
    %5924 = vmatpush1.xpose.msra.mxu0 0.0
    %5925 = vmatprep.subr.mxu0 0.0
    %5926 = vmatpush1.xpose.msra.mxu0 0.0
    %5927 = vmatprep.subr.mxu0 0.0
    %5928 = vmatpush1.xpose.msra.mxu0 0.0
    %5929 = vmatprep.subr.mxu0 0.0
    %5930 = vmatpush1.xpose.msra.mxu0 0.0
    %5931 = vmatprep.subr.mxu0 0.0
    %5932 = vmatpush1.xpose.msra.mxu0 0.0
    %5933 = vmatprep.subr.mxu0 0.0
    %5934 = vmatpush1.xpose.msra.mxu0 0.0
    %5935 = vmatprep.subr.mxu0 0.0
    %5936 = vmatpush1.xpose.msra.mxu0 0.0
    %5937 = vmatprep.subr.mxu0 0.0
    %5938 = vmatpush1.xpose.msra.mxu0 0.0
    %5939 = vmatprep.subr.mxu0 0.0
    %5940 = vmatpush1.xpose.msra.mxu0 0.0
    %5941 = vmatprep.subr.mxu0 0.0
    %5942 = vmatpush1.xpose.msra.mxu0 0.0
    %5943 = vmatprep.subr.mxu0 0.0
    %5944 = vmatpush1.xpose.msra.mxu0 0.0
    %5945 = vmatprep.subr.mxu0 0.0
    %5946 = vmatpush1.xpose.msra.mxu0 %v5913
    %5947 = vmatprep.subr.mxu0 0.0
    %5948 = vmatpush2.xpose.msra.mxu0 0.0
    %5949 = vmatprep.subr.mxu0 0.0
    %5950 = vmatpush2.xpose.msra.mxu0 0.0
    %5951 = vmatprep.subr.mxu0 0.0
    %5952 = vmatpush2.xpose.msra.mxu0 0.0
    %5953 = vmatprep.subr.mxu0 0.0
    %5954 = vmatpush2.xpose.msra.mxu0 0.0
    %5955 = vmatprep.subr.mxu0 0.0
    %5956 = vmatpush2.xpose.msra.mxu0 0.0
    %5957 = vmatprep.subr.mxu0 0.0
    %5958 = vmatpush2.xpose.msra.mxu0 0.0
    %5959 = vmatprep.subr.mxu0 0.0
    %5960 = vmatpush2.xpose.msra.mxu0 0.0
    %5961 = vmatprep.subr.mxu0 0.0
    %5962 = vmatpush2.xpose.msra.mxu0 0.0
    %5963 = vmatprep.subr.mxu0 0.0
    %5964 = vmatpush2.xpose.msra.mxu0 0.0
    %5965 = vmatprep.subr.mxu0 0.0
    %5966 = vmatpush2.xpose.msra.mxu0 0.0
    %5967 = vmatprep.subr.mxu0 0.0
    %5968 = vmatpush2.xpose.msra.mxu0 0.0
    %5969 = vmatprep.subr.mxu0 0.0
    %5970 = vmatpush2.xpose.msra.mxu0 0.0
    %5971 = vmatprep.subr.mxu0 0.0
    %5972 = vmatpush2.xpose.msra.mxu0 0.0
    %5973 = vmatprep.subr.mxu0 0.0
    %5974 = vmatpush2.xpose.msra.mxu0 0.0
    %5975 = vmatprep.subr.mxu0 0.0
    %5976 = vmatpush2.xpose.msra.mxu0 0.0
    %5977 = vmatprep.subr.mxu0 0.0
    %5978 = vmatpush2.xpose.msra.mxu0 0.0
    %5979 = vmatprep.mubr.f32.mxu0 0.0
    %5980 = vmatmul.mubr.f32.gmra.mxu0 %v5910
    %v5981 = vpop.f32.mrf.mxu0
    %v5982 = vadd.f32 0.0, %v5981
    %v5983 = vpop.f32.mrf.mxu0
    %5984 = vdwg.mxu0
    %5985 = vrot.lane.b32.xlu0 %v4479, 120
    %v5986 = vpop.permute.xlu0 %5985
    %v5987 = vsel %vm415, %v5986, 0
    %v5990 = vsel %vm415, %v5449, 0
    %5992 = vmatprep.subr.mxu0 0.0
    %5993 = vmatpush1.xpose.msra.mxu0 0.0
    %5994 = vmatprep.subr.mxu0 0.0
    %5995 = vmatpush1.xpose.msra.mxu0 0.0
    %5996 = vmatprep.subr.mxu0 0.0
    %5997 = vmatpush1.xpose.msra.mxu0 0.0
    %5998 = vmatprep.subr.mxu0 0.0
    %5999 = vmatpush1.xpose.msra.mxu0 0.0
    %6000 = vmatprep.subr.mxu0 0.0
    %6001 = vmatpush1.xpose.msra.mxu0 0.0
    %6002 = vmatprep.subr.mxu0 0.0
    %6003 = vmatpush1.xpose.msra.mxu0 0.0
    %6004 = vmatprep.subr.mxu0 0.0
    %6005 = vmatpush1.xpose.msra.mxu0 0.0
    %6006 = vmatprep.subr.mxu0 0.0
    %6007 = vmatpush1.xpose.msra.mxu0 0.0
    %6008 = vmatprep.subr.mxu0 0.0
    %6009 = vmatpush1.xpose.msra.mxu0 0.0
    %6010 = vmatprep.subr.mxu0 0.0
    %6011 = vmatpush1.xpose.msra.mxu0 0.0
    %6012 = vmatprep.subr.mxu0 0.0
    %6013 = vmatpush1.xpose.msra.mxu0 0.0
    %6014 = vmatprep.subr.mxu0 0.0
    %6015 = vmatpush1.xpose.msra.mxu0 0.0
    %6016 = vmatprep.subr.mxu0 0.0
    %6017 = vmatpush1.xpose.msra.mxu0 0.0
    %6018 = vmatprep.subr.mxu0 0.0
    %6019 = vmatpush1.xpose.msra.mxu0 0.0
    %6020 = vmatprep.subr.mxu0 0.0
    %6021 = vmatpush1.xpose.msra.mxu0 0.0
    %6022 = vmatprep.subr.mxu0 0.0
    %6023 = vmatpush1.xpose.msra.mxu0 %v5990
    %6024 = vmatprep.subr.mxu0 0.0
    %6025 = vmatpush2.xpose.msra.mxu0 0.0
    %6026 = vmatprep.subr.mxu0 0.0
    %6027 = vmatpush2.xpose.msra.mxu0 0.0
    %6028 = vmatprep.subr.mxu0 0.0
    %6029 = vmatpush2.xpose.msra.mxu0 0.0
    %6030 = vmatprep.subr.mxu0 0.0
    %6031 = vmatpush2.xpose.msra.mxu0 0.0
    %6032 = vmatprep.subr.mxu0 0.0
    %6033 = vmatpush2.xpose.msra.mxu0 0.0
    %6034 = vmatprep.subr.mxu0 0.0
    %6035 = vmatpush2.xpose.msra.mxu0 0.0
    %6036 = vmatprep.subr.mxu0 0.0
    %6037 = vmatpush2.xpose.msra.mxu0 0.0
    %6038 = vmatprep.subr.mxu0 0.0
    %6039 = vmatpush2.xpose.msra.mxu0 0.0
    %6040 = vmatprep.subr.mxu0 0.0
    %6041 = vmatpush2.xpose.msra.mxu0 0.0
    %6042 = vmatprep.subr.mxu0 0.0
    %6043 = vmatpush2.xpose.msra.mxu0 0.0
    %6044 = vmatprep.subr.mxu0 0.0
    %6045 = vmatpush2.xpose.msra.mxu0 0.0
    %6046 = vmatprep.subr.mxu0 0.0
    %6047 = vmatpush2.xpose.msra.mxu0 0.0
    %6048 = vmatprep.subr.mxu0 0.0
    %6049 = vmatpush2.xpose.msra.mxu0 0.0
    %6050 = vmatprep.subr.mxu0 0.0
    %6051 = vmatpush2.xpose.msra.mxu0 0.0
    %6052 = vmatprep.subr.mxu0 0.0
    %6053 = vmatpush2.xpose.msra.mxu0 0.0
    %6054 = vmatprep.subr.mxu0 0.0
    %6055 = vmatpush2.xpose.msra.mxu0 0.0
    %6056 = vmatprep.mubr.f32.mxu0 0.0
    %6057 = vmatmul.mubr.f32.gmra.mxu0 %v5987
    %v6058 = vpop.f32.mrf.mxu0
    %v6059 = vadd.f32 0.0, %v6058
    %v6060 = vpop.f32.mrf.mxu0
    %6061 = vdwg.mxu0
    %6066 = vrot.lane.b32.xlu0 %v5828, 8
    %v6067 = vpop.permute.xlu0 %6066
    %6068 = vrot.lane.b32.xlu0 %v5905, 8
    %v6069 = vpop.permute.xlu0 %6068
    %6070 = vrot.lane.b32.xlu0 %v5982, 8
    %v6071 = vpop.permute.xlu0 %6070
    %6072 = vrot.lane.b32.xlu0 %v6059, 8
    %v6073 = vpop.permute.xlu0 %6072
    %v6078 = vsel %vm415, %v5523, %v6067
    %v6079 = vsel %vm415, %v5599, %v6069
    %v6080 = vsel %vm415, %v5675, %v6071
    %v6081 = vsel %vm415, %v5751, %v6073
    %s6082 = scalar_lea.vmem %s6, 32
    %v6083 = vld [vmem:[%s6082] sm:$0xff]
    %v6084 = vld [vmem:[%s6082 + $0x8] sm:$0xff]
    %v6085 = vld [vmem:[%s6082 + $0x10] sm:$0xff]
    %v6086 = vld [vmem:[%s6082 + $0x18] sm:$0xff]
    %s6087 = scalar_lea.vmem %s7, 1
    %v6088 = vld [vmem:[%s6087] sm:$0x1]
    %v6090 = vlaneseq
    %v6091 = vshrl.u32 %v6090, 7
    %v6092 = vsub.s32 0, %v6091
    %v6093 = vrot.slane %v6088, %v6092
    %6095 = vxpose.xlu0.b32.start [1/16] %v6078, 128
    %6096 = vxpose.xlu0.b32.cont [2/16] %v6079, 128
    %6097 = vxpose.xlu0.b32.cont [3/16] %v6080, 128
    %6098 = vxpose.xlu0.b32.cont [4/16] %v6081, 128
    %6099 = vxpose.xlu0.b32.cont [5/16] 0.0, 128
    %6100 = vxpose.xlu0.b32.cont [6/16] 0.0, 128
    %6101 = vxpose.xlu0.b32.cont [7/16] 0.0, 128
    %6102 = vxpose.xlu0.b32.cont [8/16] 0.0, 128
    %6103 = vxpose.xlu0.b32.cont [9/16] 0.0, 128
    %6104 = vxpose.xlu0.b32.cont [10/16] 0.0, 128
    %6105 = vxpose.xlu0.b32.cont [11/16] 0.0, 128
    %6106 = vxpose.xlu0.b32.cont [12/16] 0.0, 128
    %6107 = vxpose.xlu0.b32.cont [13/16] 0.0, 128
    %6108 = vxpose.xlu0.b32.cont [14/16] 0.0, 128
    %6109 = vxpose.xlu0.b32.cont [15/16] 0.0, 128
    %6110 = vxpose.xlu0.b32.end [16/16] 0.0, 128
    %v6111 = vpop.trf.xlu0
    %v6112 = vpop.trf.xlu0
    %v6113 = vpop.trf.xlu0
    %v6114 = vpop.trf.xlu0
    %v6115 = vpop.trf.xlu0
    %v6116 = vpop.trf.xlu0
    %v6117 = vpop.trf.xlu0
    %v6118 = vpop.trf.xlu0
    %v6119 = vpop.trf.xlu0
    %v6120 = vpop.trf.xlu0
    %v6121 = vpop.trf.xlu0
    %v6122 = vpop.trf.xlu0
    %v6123 = vpop.trf.xlu0
    %v6124 = vpop.trf.xlu0
    %v6125 = vpop.trf.xlu0
    %v6126 = vpop.trf.xlu0
    %v6128 = vsel %vm116, %v6111, 0
    %v6131 = vsel %vm116, %v6112, 0
    %6133 = vmatprep.subr.mxu0 0.0
    %6134 = vmatpush1.msra.mxu0 0.0
    %6135 = vmatprep.subr.mxu0 0.0
    %6136 = vmatpush1.msra.mxu0 0.0
    %6137 = vmatprep.subr.mxu0 0.0
    %6138 = vmatpush1.msra.mxu0 0.0
    %6139 = vmatprep.subr.mxu0 0.0
    %6140 = vmatpush1.msra.mxu0 0.0
    %6141 = vmatprep.subr.mxu0 0.0
    %6142 = vmatpush1.msra.mxu0 0.0
    %6143 = vmatprep.subr.mxu0 0.0
    %6144 = vmatpush1.msra.mxu0 0.0
    %6145 = vmatprep.subr.mxu0 0.0
    %6146 = vmatpush1.msra.mxu0 0.0
    %6147 = vmatprep.subr.mxu0 0.0
    %6148 = vmatpush1.msra.mxu0 0.0
    %6149 = vmatprep.subr.mxu0 0.0
    %6150 = vmatpush1.msra.mxu0 0.0
    %6151 = vmatprep.subr.mxu0 0.0
    %6152 = vmatpush1.msra.mxu0 0.0
    %6153 = vmatprep.subr.mxu0 0.0
    %6154 = vmatpush1.msra.mxu0 0.0
    %6155 = vmatprep.subr.mxu0 0.0
    %6156 = vmatpush1.msra.mxu0 0.0
    %6157 = vmatprep.subr.mxu0 0.0
    %6158 = vmatpush1.msra.mxu0 %v6086
    %6159 = vmatprep.subr.mxu0 0.0
    %6160 = vmatpush1.msra.mxu0 %v6085
    %6161 = vmatprep.subr.mxu0 0.0
    %6162 = vmatpush1.msra.mxu0 %v6084
    %6163 = vmatprep.subr.mxu0 0.0
    %6164 = vmatpush1.msra.mxu0 %v6083
    %6165 = vmatprep.subr.mxu0 0.0
    %6166 = vmatpush2.msra.mxu0 0.0
    %6167 = vmatprep.subr.mxu0 0.0
    %6168 = vmatpush2.msra.mxu0 0.0
    %6169 = vmatprep.subr.mxu0 0.0
    %6170 = vmatpush2.msra.mxu0 0.0
    %6171 = vmatprep.subr.mxu0 0.0
    %6172 = vmatpush2.msra.mxu0 0.0
    %6173 = vmatprep.subr.mxu0 0.0
    %6174 = vmatpush2.msra.mxu0 0.0
    %6175 = vmatprep.subr.mxu0 0.0
    %6176 = vmatpush2.msra.mxu0 0.0
    %6177 = vmatprep.subr.mxu0 0.0
    %6178 = vmatpush2.msra.mxu0 0.0
    %6179 = vmatprep.subr.mxu0 0.0
    %6180 = vmatpush2.msra.mxu0 0.0
    %6181 = vmatprep.subr.mxu0 0.0
    %6182 = vmatpush2.msra.mxu0 0.0
    %6183 = vmatprep.subr.mxu0 0.0
    %6184 = vmatpush2.msra.mxu0 0.0
    %6185 = vmatprep.subr.mxu0 0.0
    %6186 = vmatpush2.msra.mxu0 0.0
    %6187 = vmatprep.subr.mxu0 0.0
    %6188 = vmatpush2.msra.mxu0 0.0
    %6189 = vmatprep.subr.mxu0 0.0
    %6190 = vmatpush2.msra.mxu0 0.0
    %6191 = vmatprep.subr.mxu0 0.0
    %6192 = vmatpush2.msra.mxu0 0.0
    %6193 = vmatprep.subr.mxu0 0.0
    %6194 = vmatpush2.msra.mxu0 0.0
    %6195 = vmatprep.subr.mxu0 0.0
    %6196 = vmatpush2.msra.mxu0 0.0
    %6197 = vmatprep.mubr.f32.mxu0 0.0
    %6198 = vmatmul.mubr.f32.gmra.mxu0 %v6128
    %v6199 = vpop.f32.mrf.mxu0
    %v6200 = vadd.f32 %v6093, %v6199
    %v6201 = vpop.f32.mrf.mxu0
    %6202 = vmatprep.mubr.f32.mxu0 0.0
    %6203 = vmatmul.mubr.f32.gmra.mxu0 %v6131
    %v6204 = vpop.f32.mrf.mxu0
    %v6205 = vadd.f32 %v6093, %v6204
    %v6206 = vpop.f32.mrf.mxu0
    %6207 = vdwg.mxu0
    %v6208 = vadd.f32 %v4152, %v6200
    %v6209 = vadd.f32 %v4153, %v6205
    %v6210 = vsel %vm116, %v6208, 0.0
    %6211 = vadd.xlane.f32.xlu0 %v6210
    %v6212 = vpop.xlane.xlu0 %6211
    %v6213 = vsel %vm116, %v6209, 0.0
    %6214 = vadd.xlane.f32.xlu0 %v6213
    %v6215 = vpop.xlane.xlu0 %6214
    %v6216 = vmul.f32 %v6212, %v2116
    %v6217 = vmul.f32 %v6215, %v2116
    %v6218 = vsub.f32 %v6208, %v6216
    %v6219 = vsub.f32 %v6209, %v6217
    %v6220 = vmul.f32 %v6218, %v6218
    %v6221 = vmul.f32 %v6219, %v6219
    %v6222 = vsel %vm116, %v6220, 0.0
    %6223 = vadd.xlane.f32.xlu0 %v6222
    %v6224 = vpop.xlane.xlu0 %6223
    %v6225 = vsel %vm116, %v6221, 0.0
    %6226 = vadd.xlane.f32.xlu0 %v6225
    %v6227 = vpop.xlane.xlu0 %6226
    %v6228 = vmul.f32 %v6224, %v2116
    %v6229 = vmul.f32 %v6227, %v2116
    %v6230 = vadd.f32 %v6228, 1e-05
    %v6231 = vadd.f32 %v6229, 1e-05
    %v6232 = vrsqrt.pop %v6230
    %v6233 = vrsqrt.pop %v6231
    %v6234 = vmul.f32 %v6218, %v6232
    %v6235 = vmul.f32 %v6219, %v6233
    %s6236 = scalar_lea.vmem %s12, 1
    %v6237 = vld [vmem:[%s6236] sm:$0x1]
    %v6239 = vlaneseq
    %v6240 = vshrl.u32 %v6239, 7
    %v6241 = vsub.s32 0, %v6240
    %v6242 = vrot.slane %v6237, %v6241
    %v6244 = vmul.f32 %v6234, %v6242
    %v6245 = vmul.f32 %v6235, %v6242
    %s6246 = scalar_lea.vmem %s13, 1
    %v6247 = vld [vmem:[%s6246] sm:$0x1]
    %v6249 = vlaneseq
    %v6250 = vshrl.u32 %v6249, 7
    %v6251 = vsub.s32 0, %v6250
    %v6252 = vrot.slane %v6247, %v6251
    %v6254 = vadd.f32 %v6244, %v6252
    %v6255 = vadd.f32 %v6245, %v6252
    %s6256 = scalar_lea.vmem %s8, 256
    %v6257 = vld [vmem:[%s6256] sm:$0xff]
    %v6258 = vld [vmem:[%s6256 + $0x8] sm:$0xff]
    %v6259 = vld [vmem:[%s6256 + $0x10] sm:$0xff]
    %v6260 = vld [vmem:[%s6256 + $0x18] sm:$0xff]
    %v6261 = vld [vmem:[%s6256 + $0x20] sm:$0xff]
    %v6262 = vld [vmem:[%s6256 + $0x28] sm:$0xff]
    %v6263 = vld [vmem:[%s6256 + $0x30] sm:$0xff]
    %v6264 = vld [vmem:[%s6256 + $0x38] sm:$0xff]
    %v6265 = vld [vmem:[%s6256 + $0x40] sm:$0xff]
    %v6266 = vld [vmem:[%s6256 + $0x48] sm:$0xff]
    %v6267 = vld [vmem:[%s6256 + $0x50] sm:$0xff]
    %v6268 = vld [vmem:[%s6256 + $0x58] sm:$0xff]
    %v6269 = vld [vmem:[%s6256 + $0x60] sm:$0xff]
    %v6270 = vld [vmem:[%s6256 + $0x68] sm:$0xff]
    %v6271 = vld [vmem:[%s6256 + $0x70] sm:$0xff]
    %v6272 = vld [vmem:[%s6256 + $0x78] sm:$0xff]
    %v6273 = vld [vmem:[%s6256 + $0x80] sm:$0xff]
    %v6274 = vld [vmem:[%s6256 + $0x88] sm:$0xff]
    %v6275 = vld [vmem:[%s6256 + $0x90] sm:$0xff]
    %v6276 = vld [vmem:[%s6256 + $0x98] sm:$0xff]
    %v6277 = vld [vmem:[%s6256 + $0xa0] sm:$0xff]
    %v6278 = vld [vmem:[%s6256 + $0xa8] sm:$0xff]
    %v6279 = vld [vmem:[%s6256 + $0xb0] sm:$0xff]
    %v6280 = vld [vmem:[%s6256 + $0xb8] sm:$0xff]
    %v6281 = vld [vmem:[%s6256 + $0xc0] sm:$0xff]
    %v6282 = vld [vmem:[%s6256 + $0xc8] sm:$0xff]
    %v6283 = vld [vmem:[%s6256 + $0xd0] sm:$0xff]
    %v6284 = vld [vmem:[%s6256 + $0xd8] sm:$0xff]
    %v6285 = vld [vmem:[%s6256 + $0xe0] sm:$0xff]
    %v6286 = vld [vmem:[%s6256 + $0xe8] sm:$0xff]
    %v6287 = vld [vmem:[%s6256 + $0xf0] sm:$0xff]
    %v6288 = vld [vmem:[%s6256 + $0xf8] sm:$0xff]
    %v6289 = vunpack.c.l.bf16 %v6257
    %v6290 = vunpack.c.h.bf16 %v6257
    %v6291 = vunpack.c.l.bf16 %v6258
    %v6292 = vunpack.c.h.bf16 %v6258
    %v6293 = vunpack.c.l.bf16 %v6259
    %v6294 = vunpack.c.h.bf16 %v6259
    %v6295 = vunpack.c.l.bf16 %v6260
    %v6296 = vunpack.c.h.bf16 %v6260
    %v6297 = vunpack.c.l.bf16 %v6261
    %v6298 = vunpack.c.h.bf16 %v6261
    %v6299 = vunpack.c.l.bf16 %v6262
    %v6300 = vunpack.c.h.bf16 %v6262
    %v6301 = vunpack.c.l.bf16 %v6263
    %v6302 = vunpack.c.h.bf16 %v6263
    %v6303 = vunpack.c.l.bf16 %v6264
    %v6304 = vunpack.c.h.bf16 %v6264
    %v6305 = vunpack.c.l.bf16 %v6265
    %v6306 = vunpack.c.h.bf16 %v6265
    %v6307 = vunpack.c.l.bf16 %v6266
    %v6308 = vunpack.c.h.bf16 %v6266
    %v6309 = vunpack.c.l.bf16 %v6267
    %v6310 = vunpack.c.h.bf16 %v6267
    %v6311 = vunpack.c.l.bf16 %v6268
    %v6312 = vunpack.c.h.bf16 %v6268
    %v6313 = vunpack.c.l.bf16 %v6269
    %v6314 = vunpack.c.h.bf16 %v6269
    %v6315 = vunpack.c.l.bf16 %v6270
    %v6316 = vunpack.c.h.bf16 %v6270
    %v6317 = vunpack.c.l.bf16 %v6271
    %v6318 = vunpack.c.h.bf16 %v6271
    %v6319 = vunpack.c.l.bf16 %v6272
    %v6320 = vunpack.c.h.bf16 %v6272
    %v6321 = vunpack.c.l.bf16 %v6273
    %v6322 = vunpack.c.h.bf16 %v6273
    %v6323 = vunpack.c.l.bf16 %v6274
    %v6324 = vunpack.c.h.bf16 %v6274
    %v6325 = vunpack.c.l.bf16 %v6275
    %v6326 = vunpack.c.h.bf16 %v6275
    %v6327 = vunpack.c.l.bf16 %v6276
    %v6328 = vunpack.c.h.bf16 %v6276
    %v6329 = vunpack.c.l.bf16 %v6277
    %v6330 = vunpack.c.h.bf16 %v6277
    %v6331 = vunpack.c.l.bf16 %v6278
    %v6332 = vunpack.c.h.bf16 %v6278
    %v6333 = vunpack.c.l.bf16 %v6279
    %v6334 = vunpack.c.h.bf16 %v6279
    %v6335 = vunpack.c.l.bf16 %v6280
    %v6336 = vunpack.c.h.bf16 %v6280
    %v6337 = vunpack.c.l.bf16 %v6281
    %v6338 = vunpack.c.h.bf16 %v6281
    %v6339 = vunpack.c.l.bf16 %v6282
    %v6340 = vunpack.c.h.bf16 %v6282
    %v6341 = vunpack.c.l.bf16 %v6283
    %v6342 = vunpack.c.h.bf16 %v6283
    %v6343 = vunpack.c.l.bf16 %v6284
    %v6344 = vunpack.c.h.bf16 %v6284
    %v6345 = vunpack.c.l.bf16 %v6285
    %v6346 = vunpack.c.h.bf16 %v6285
    %v6347 = vunpack.c.l.bf16 %v6286
    %v6348 = vunpack.c.h.bf16 %v6286
    %v6349 = vunpack.c.l.bf16 %v6287
    %v6350 = vunpack.c.h.bf16 %v6287
    %v6351 = vunpack.c.l.bf16 %v6288
    %v6352 = vunpack.c.h.bf16 %v6288
    %s6353 = scalar_lea.vmem %s10, 1024
    %v6354 = vld [vmem:[%s6353] sm:$0xf]
    %v6355 = vld [vmem:[%s6353 + $0x4] sm:$0xf]
    %v6356 = vld [vmem:[%s6353 + $0x8] sm:$0xf]
    %v6357 = vld [vmem:[%s6353 + $0xc] sm:$0xf]
    %v6358 = vld [vmem:[%s6353 + $0x10] sm:$0xf]
    %v6359 = vld [vmem:[%s6353 + $0x14] sm:$0xf]
    %v6360 = vld [vmem:[%s6353 + $0x18] sm:$0xf]
    %v6361 = vld [vmem:[%s6353 + $0x1c] sm:$0xf]
    %v6362 = vld [vmem:[%s6353 + $0x20] sm:$0xf]
    %v6363 = vld [vmem:[%s6353 + $0x24] sm:$0xf]
    %v6364 = vld [vmem:[%s6353 + $0x28] sm:$0xf]
    %v6365 = vld [vmem:[%s6353 + $0x2c] sm:$0xf]
    %v6366 = vld [vmem:[%s6353 + $0x30] sm:$0xf]
    %v6367 = vld [vmem:[%s6353 + $0x34] sm:$0xf]
    %v6368 = vld [vmem:[%s6353 + $0x38] sm:$0xf]
    %v6369 = vld [vmem:[%s6353 + $0x3c] sm:$0xf]
    %v6370 = vld [vmem:[%s6353 + $0x40] sm:$0xf]
    %v6371 = vld [vmem:[%s6353 + $0x44] sm:$0xf]
    %v6372 = vld [vmem:[%s6353 + $0x48] sm:$0xf]
    %v6373 = vld [vmem:[%s6353 + $0x4c] sm:$0xf]
    %v6374 = vld [vmem:[%s6353 + $0x50] sm:$0xf]
    %v6375 = vld [vmem:[%s6353 + $0x54] sm:$0xf]
    %v6376 = vld [vmem:[%s6353 + $0x58] sm:$0xf]
    %v6377 = vld [vmem:[%s6353 + $0x5c] sm:$0xf]
    %v6378 = vld [vmem:[%s6353 + $0x60] sm:$0xf]
    %v6379 = vld [vmem:[%s6353 + $0x64] sm:$0xf]
    %v6380 = vld [vmem:[%s6353 + $0x68] sm:$0xf]
    %v6381 = vld [vmem:[%s6353 + $0x6c] sm:$0xf]
    %v6382 = vld [vmem:[%s6353 + $0x70] sm:$0xf]
    %v6383 = vld [vmem:[%s6353 + $0x74] sm:$0xf]
    %v6384 = vld [vmem:[%s6353 + $0x78] sm:$0xf]
    %v6385 = vld [vmem:[%s6353 + $0x7c] sm:$0xf]
    %v6386 = vld [vmem:[%s6353 + $0x80] sm:$0xf]
    %v6387 = vld [vmem:[%s6353 + $0x84] sm:$0xf]
    %v6388 = vld [vmem:[%s6353 + $0x88] sm:$0xf]
    %v6389 = vld [vmem:[%s6353 + $0x8c] sm:$0xf]
    %v6390 = vld [vmem:[%s6353 + $0x90] sm:$0xf]
    %v6391 = vld [vmem:[%s6353 + $0x94] sm:$0xf]
    %v6392 = vld [vmem:[%s6353 + $0x98] sm:$0xf]
    %v6393 = vld [vmem:[%s6353 + $0x9c] sm:$0xf]
    %v6394 = vld [vmem:[%s6353 + $0xa0] sm:$0xf]
    %v6395 = vld [vmem:[%s6353 + $0xa4] sm:$0xf]
    %v6396 = vld [vmem:[%s6353 + $0xa8] sm:$0xf]
    %v6397 = vld [vmem:[%s6353 + $0xac] sm:$0xf]
    %v6398 = vld [vmem:[%s6353 + $0xb0] sm:$0xf]
    %v6399 = vld [vmem:[%s6353 + $0xb4] sm:$0xf]
    %v6400 = vld [vmem:[%s6353 + $0xb8] sm:$0xf]
    %v6401 = vld [vmem:[%s6353 + $0xbc] sm:$0xf]
    %v6402 = vld [vmem:[%s6353 + $0xc0] sm:$0xf]
    %v6403 = vld [vmem:[%s6353 + $0xc4] sm:$0xf]
    %v6404 = vld [vmem:[%s6353 + $0xc8] sm:$0xf]
    %v6405 = vld [vmem:[%s6353 + $0xcc] sm:$0xf]
    %v6406 = vld [vmem:[%s6353 + $0xd0] sm:$0xf]
    %v6407 = vld [vmem:[%s6353 + $0xd4] sm:$0xf]
    %v6408 = vld [vmem:[%s6353 + $0xd8] sm:$0xf]
    %v6409 = vld [vmem:[%s6353 + $0xdc] sm:$0xf]
    %v6410 = vld [vmem:[%s6353 + $0xe0] sm:$0xf]
    %v6411 = vld [vmem:[%s6353 + $0xe4] sm:$0xf]
    %v6412 = vld [vmem:[%s6353 + $0xe8] sm:$0xf]
    %v6413 = vld [vmem:[%s6353 + $0xec] sm:$0xf]
    %v6414 = vld [vmem:[%s6353 + $0xf0] sm:$0xf]
    %v6415 = vld [vmem:[%s6353 + $0xf4] sm:$0xf]
    %v6416 = vld [vmem:[%s6353 + $0xf8] sm:$0xf]
    %v6417 = vld [vmem:[%s6353 + $0xfc] sm:$0xf]
    %v6418 = vld [vmem:[%s6353 + $0x100] sm:$0xf]
    %v6419 = vld [vmem:[%s6353 + $0x104] sm:$0xf]
    %v6420 = vld [vmem:[%s6353 + $0x108] sm:$0xf]
    %v6421 = vld [vmem:[%s6353 + $0x10c] sm:$0xf]
    %v6422 = vld [vmem:[%s6353 + $0x110] sm:$0xf]
    %v6423 = vld [vmem:[%s6353 + $0x114] sm:$0xf]
    %v6424 = vld [vmem:[%s6353 + $0x118] sm:$0xf]
    %v6425 = vld [vmem:[%s6353 + $0x11c] sm:$0xf]
    %v6426 = vld [vmem:[%s6353 + $0x120] sm:$0xf]
    %v6427 = vld [vmem:[%s6353 + $0x124] sm:$0xf]
    %v6428 = vld [vmem:[%s6353 + $0x128] sm:$0xf]
    %v6429 = vld [vmem:[%s6353 + $0x12c] sm:$0xf]
    %v6430 = vld [vmem:[%s6353 + $0x130] sm:$0xf]
    %v6431 = vld [vmem:[%s6353 + $0x134] sm:$0xf]
    %v6432 = vld [vmem:[%s6353 + $0x138] sm:$0xf]
    %v6433 = vld [vmem:[%s6353 + $0x13c] sm:$0xf]
    %v6434 = vld [vmem:[%s6353 + $0x140] sm:$0xf]
    %v6435 = vld [vmem:[%s6353 + $0x144] sm:$0xf]
    %v6436 = vld [vmem:[%s6353 + $0x148] sm:$0xf]
    %v6437 = vld [vmem:[%s6353 + $0x14c] sm:$0xf]
    %v6438 = vld [vmem:[%s6353 + $0x150] sm:$0xf]
    %v6439 = vld [vmem:[%s6353 + $0x154] sm:$0xf]
    %v6440 = vld [vmem:[%s6353 + $0x158] sm:$0xf]
    %v6441 = vld [vmem:[%s6353 + $0x15c] sm:$0xf]
    %v6442 = vld [vmem:[%s6353 + $0x160] sm:$0xf]
    %v6443 = vld [vmem:[%s6353 + $0x164] sm:$0xf]
    %v6444 = vld [vmem:[%s6353 + $0x168] sm:$0xf]
    %v6445 = vld [vmem:[%s6353 + $0x16c] sm:$0xf]
    %v6446 = vld [vmem:[%s6353 + $0x170] sm:$0xf]
    %v6447 = vld [vmem:[%s6353 + $0x174] sm:$0xf]
    %v6448 = vld [vmem:[%s6353 + $0x178] sm:$0xf]
    %v6449 = vld [vmem:[%s6353 + $0x17c] sm:$0xf]
    %v6450 = vld [vmem:[%s6353 + $0x180] sm:$0xf]
    %v6451 = vld [vmem:[%s6353 + $0x184] sm:$0xf]
    %v6452 = vld [vmem:[%s6353 + $0x188] sm:$0xf]
    %v6453 = vld [vmem:[%s6353 + $0x18c] sm:$0xf]
    %v6454 = vld [vmem:[%s6353 + $0x190] sm:$0xf]
    %v6455 = vld [vmem:[%s6353 + $0x194] sm:$0xf]
    %v6456 = vld [vmem:[%s6353 + $0x198] sm:$0xf]
    %v6457 = vld [vmem:[%s6353 + $0x19c] sm:$0xf]
    %v6458 = vld [vmem:[%s6353 + $0x1a0] sm:$0xf]
    %v6459 = vld [vmem:[%s6353 + $0x1a4] sm:$0xf]
    %v6460 = vld [vmem:[%s6353 + $0x1a8] sm:$0xf]
    %v6461 = vld [vmem:[%s6353 + $0x1ac] sm:$0xf]
    %v6462 = vld [vmem:[%s6353 + $0x1b0] sm:$0xf]
    %v6463 = vld [vmem:[%s6353 + $0x1b4] sm:$0xf]
    %v6464 = vld [vmem:[%s6353 + $0x1b8] sm:$0xf]
    %v6465 = vld [vmem:[%s6353 + $0x1bc] sm:$0xf]
    %v6466 = vld [vmem:[%s6353 + $0x1c0] sm:$0xf]
    %v6467 = vld [vmem:[%s6353 + $0x1c4] sm:$0xf]
    %v6468 = vld [vmem:[%s6353 + $0x1c8] sm:$0xf]
    %v6469 = vld [vmem:[%s6353 + $0x1cc] sm:$0xf]
    %v6470 = vld [vmem:[%s6353 + $0x1d0] sm:$0xf]
    %v6471 = vld [vmem:[%s6353 + $0x1d4] sm:$0xf]
    %v6472 = vld [vmem:[%s6353 + $0x1d8] sm:$0xf]
    %v6473 = vld [vmem:[%s6353 + $0x1dc] sm:$0xf]
    %v6474 = vld [vmem:[%s6353 + $0x1e0] sm:$0xf]
    %v6475 = vld [vmem:[%s6353 + $0x1e4] sm:$0xf]
    %v6476 = vld [vmem:[%s6353 + $0x1e8] sm:$0xf]
    %v6477 = vld [vmem:[%s6353 + $0x1ec] sm:$0xf]
    %v6478 = vld [vmem:[%s6353 + $0x1f0] sm:$0xf]
    %v6479 = vld [vmem:[%s6353 + $0x1f4] sm:$0xf]
    %v6480 = vld [vmem:[%s6353 + $0x1f8] sm:$0xf]
    %v6481 = vld [vmem:[%s6353 + $0x1fc] sm:$0xf]
    %v6482 = vld [vmem:[%s6353 + $0x200] sm:$0xf]
    %v6483 = vld [vmem:[%s6353 + $0x204] sm:$0xf]
    %v6484 = vld [vmem:[%s6353 + $0x208] sm:$0xf]
    %v6485 = vld [vmem:[%s6353 + $0x20c] sm:$0xf]
    %v6486 = vld [vmem:[%s6353 + $0x210] sm:$0xf]
    %v6487 = vld [vmem:[%s6353 + $0x214] sm:$0xf]
    %v6488 = vld [vmem:[%s6353 + $0x218] sm:$0xf]
    %v6489 = vld [vmem:[%s6353 + $0x21c] sm:$0xf]
    %v6490 = vld [vmem:[%s6353 + $0x220] sm:$0xf]
    %v6491 = vld [vmem:[%s6353 + $0x224] sm:$0xf]
    %v6492 = vld [vmem:[%s6353 + $0x228] sm:$0xf]
    %v6493 = vld [vmem:[%s6353 + $0x22c] sm:$0xf]
    %v6494 = vld [vmem:[%s6353 + $0x230] sm:$0xf]
    %v6495 = vld [vmem:[%s6353 + $0x234] sm:$0xf]
    %v6496 = vld [vmem:[%s6353 + $0x238] sm:$0xf]
    %v6497 = vld [vmem:[%s6353 + $0x23c] sm:$0xf]
    %v6498 = vld [vmem:[%s6353 + $0x240] sm:$0xf]
    %v6499 = vld [vmem:[%s6353 + $0x244] sm:$0xf]
    %v6500 = vld [vmem:[%s6353 + $0x248] sm:$0xf]
    %v6501 = vld [vmem:[%s6353 + $0x24c] sm:$0xf]
    %v6502 = vld [vmem:[%s6353 + $0x250] sm:$0xf]
    %v6503 = vld [vmem:[%s6353 + $0x254] sm:$0xf]
    %v6504 = vld [vmem:[%s6353 + $0x258] sm:$0xf]
    %v6505 = vld [vmem:[%s6353 + $0x25c] sm:$0xf]
    %v6506 = vld [vmem:[%s6353 + $0x260] sm:$0xf]
    %v6507 = vld [vmem:[%s6353 + $0x264] sm:$0xf]
    %v6508 = vld [vmem:[%s6353 + $0x268] sm:$0xf]
    %v6509 = vld [vmem:[%s6353 + $0x26c] sm:$0xf]
    %v6510 = vld [vmem:[%s6353 + $0x270] sm:$0xf]
    %v6511 = vld [vmem:[%s6353 + $0x274] sm:$0xf]
    %v6512 = vld [vmem:[%s6353 + $0x278] sm:$0xf]
    %v6513 = vld [vmem:[%s6353 + $0x27c] sm:$0xf]
    %v6514 = vld [vmem:[%s6353 + $0x280] sm:$0xf]
    %v6515 = vld [vmem:[%s6353 + $0x284] sm:$0xf]
    %v6516 = vld [vmem:[%s6353 + $0x288] sm:$0xf]
    %v6517 = vld [vmem:[%s6353 + $0x28c] sm:$0xf]
    %v6518 = vld [vmem:[%s6353 + $0x290] sm:$0xf]
    %v6519 = vld [vmem:[%s6353 + $0x294] sm:$0xf]
    %v6520 = vld [vmem:[%s6353 + $0x298] sm:$0xf]
    %v6521 = vld [vmem:[%s6353 + $0x29c] sm:$0xf]
    %v6522 = vld [vmem:[%s6353 + $0x2a0] sm:$0xf]
    %v6523 = vld [vmem:[%s6353 + $0x2a4] sm:$0xf]
    %v6524 = vld [vmem:[%s6353 + $0x2a8] sm:$0xf]
    %v6525 = vld [vmem:[%s6353 + $0x2ac] sm:$0xf]
    %v6526 = vld [vmem:[%s6353 + $0x2b0] sm:$0xf]
    %v6527 = vld [vmem:[%s6353 + $0x2b4] sm:$0xf]
    %v6528 = vld [vmem:[%s6353 + $0x2b8] sm:$0xf]
    %v6529 = vld [vmem:[%s6353 + $0x2bc] sm:$0xf]
    %v6530 = vld [vmem:[%s6353 + $0x2c0] sm:$0xf]
    %v6531 = vld [vmem:[%s6353 + $0x2c4] sm:$0xf]
    %v6532 = vld [vmem:[%s6353 + $0x2c8] sm:$0xf]
    %v6533 = vld [vmem:[%s6353 + $0x2cc] sm:$0xf]
    %v6534 = vld [vmem:[%s6353 + $0x2d0] sm:$0xf]
    %v6535 = vld [vmem:[%s6353 + $0x2d4] sm:$0xf]
    %v6536 = vld [vmem:[%s6353 + $0x2d8] sm:$0xf]
    %v6537 = vld [vmem:[%s6353 + $0x2dc] sm:$0xf]
    %v6538 = vld [vmem:[%s6353 + $0x2e0] sm:$0xf]
    %v6539 = vld [vmem:[%s6353 + $0x2e4] sm:$0xf]
    %v6540 = vld [vmem:[%s6353 + $0x2e8] sm:$0xf]
    %v6541 = vld [vmem:[%s6353 + $0x2ec] sm:$0xf]
    %v6542 = vld [vmem:[%s6353 + $0x2f0] sm:$0xf]
    %v6543 = vld [vmem:[%s6353 + $0x2f4] sm:$0xf]
    %v6544 = vld [vmem:[%s6353 + $0x2f8] sm:$0xf]
    %v6545 = vld [vmem:[%s6353 + $0x2fc] sm:$0xf]
    %v6546 = vld [vmem:[%s6353 + $0x300] sm:$0xf]
    %v6547 = vld [vmem:[%s6353 + $0x304] sm:$0xf]
    %v6548 = vld [vmem:[%s6353 + $0x308] sm:$0xf]
    %v6549 = vld [vmem:[%s6353 + $0x30c] sm:$0xf]
    %v6550 = vld [vmem:[%s6353 + $0x310] sm:$0xf]
    %v6551 = vld [vmem:[%s6353 + $0x314] sm:$0xf]
    %v6552 = vld [vmem:[%s6353 + $0x318] sm:$0xf]
    %v6553 = vld [vmem:[%s6353 + $0x31c] sm:$0xf]
    %v6554 = vld [vmem:[%s6353 + $0x320] sm:$0xf]
    %v6555 = vld [vmem:[%s6353 + $0x324] sm:$0xf]
    %v6556 = vld [vmem:[%s6353 + $0x328] sm:$0xf]
    %v6557 = vld [vmem:[%s6353 + $0x32c] sm:$0xf]
    %v6558 = vld [vmem:[%s6353 + $0x330] sm:$0xf]
    %v6559 = vld [vmem:[%s6353 + $0x334] sm:$0xf]
    %v6560 = vld [vmem:[%s6353 + $0x338] sm:$0xf]
    %v6561 = vld [vmem:[%s6353 + $0x33c] sm:$0xf]
    %v6562 = vld [vmem:[%s6353 + $0x340] sm:$0xf]
    %v6563 = vld [vmem:[%s6353 + $0x344] sm:$0xf]
    %v6564 = vld [vmem:[%s6353 + $0x348] sm:$0xf]
    %v6565 = vld [vmem:[%s6353 + $0x34c] sm:$0xf]
    %v6566 = vld [vmem:[%s6353 + $0x350] sm:$0xf]
    %v6567 = vld [vmem:[%s6353 + $0x354] sm:$0xf]
    %v6568 = vld [vmem:[%s6353 + $0x358] sm:$0xf]
    %v6569 = vld [vmem:[%s6353 + $0x35c] sm:$0xf]
    %v6570 = vld [vmem:[%s6353 + $0x360] sm:$0xf]
    %v6571 = vld [vmem:[%s6353 + $0x364] sm:$0xf]
    %v6572 = vld [vmem:[%s6353 + $0x368] sm:$0xf]
    %v6573 = vld [vmem:[%s6353 + $0x36c] sm:$0xf]
    %v6574 = vld [vmem:[%s6353 + $0x370] sm:$0xf]
    %v6575 = vld [vmem:[%s6353 + $0x374] sm:$0xf]
    %v6576 = vld [vmem:[%s6353 + $0x378] sm:$0xf]
    %v6577 = vld [vmem:[%s6353 + $0x37c] sm:$0xf]
    %v6578 = vld [vmem:[%s6353 + $0x380] sm:$0xf]
    %v6579 = vld [vmem:[%s6353 + $0x384] sm:$0xf]
    %v6580 = vld [vmem:[%s6353 + $0x388] sm:$0xf]
    %v6581 = vld [vmem:[%s6353 + $0x38c] sm:$0xf]
    %v6582 = vld [vmem:[%s6353 + $0x390] sm:$0xf]
    %v6583 = vld [vmem:[%s6353 + $0x394] sm:$0xf]
    %v6584 = vld [vmem:[%s6353 + $0x398] sm:$0xf]
    %v6585 = vld [vmem:[%s6353 + $0x39c] sm:$0xf]
    %v6586 = vld [vmem:[%s6353 + $0x3a0] sm:$0xf]
    %v6587 = vld [vmem:[%s6353 + $0x3a4] sm:$0xf]
    %v6588 = vld [vmem:[%s6353 + $0x3a8] sm:$0xf]
    %v6589 = vld [vmem:[%s6353 + $0x3ac] sm:$0xf]
    %v6590 = vld [vmem:[%s6353 + $0x3b0] sm:$0xf]
    %v6591 = vld [vmem:[%s6353 + $0x3b4] sm:$0xf]
    %v6592 = vld [vmem:[%s6353 + $0x3b8] sm:$0xf]
    %v6593 = vld [vmem:[%s6353 + $0x3bc] sm:$0xf]
    %v6594 = vld [vmem:[%s6353 + $0x3c0] sm:$0xf]
    %v6595 = vld [vmem:[%s6353 + $0x3c4] sm:$0xf]
    %v6596 = vld [vmem:[%s6353 + $0x3c8] sm:$0xf]
    %v6597 = vld [vmem:[%s6353 + $0x3cc] sm:$0xf]
    %v6598 = vld [vmem:[%s6353 + $0x3d0] sm:$0xf]
    %v6599 = vld [vmem:[%s6353 + $0x3d4] sm:$0xf]
    %v6600 = vld [vmem:[%s6353 + $0x3d8] sm:$0xf]
    %v6601 = vld [vmem:[%s6353 + $0x3dc] sm:$0xf]
    %v6602 = vld [vmem:[%s6353 + $0x3e0] sm:$0xf]
    %v6603 = vld [vmem:[%s6353 + $0x3e4] sm:$0xf]
    %v6604 = vld [vmem:[%s6353 + $0x3e8] sm:$0xf]
    %v6605 = vld [vmem:[%s6353 + $0x3ec] sm:$0xf]
    %v6606 = vld [vmem:[%s6353 + $0x3f0] sm:$0xf]
    %v6607 = vld [vmem:[%s6353 + $0x3f4] sm:$0xf]
    %v6608 = vld [vmem:[%s6353 + $0x3f8] sm:$0xf]
    %v6609 = vld [vmem:[%s6353 + $0x3fc] sm:$0xf]
    %v6610 = vunpack.c.l.bf16 %v6354
    %v6611 = vunpack.c.l.bf16 %v6355
    %v6612 = vunpack.c.l.bf16 %v6356
    %v6613 = vunpack.c.l.bf16 %v6357
    %v6614 = vunpack.c.l.bf16 %v6358
    %v6615 = vunpack.c.l.bf16 %v6359
    %v6616 = vunpack.c.l.bf16 %v6360
    %v6617 = vunpack.c.l.bf16 %v6361
    %v6618 = vunpack.c.l.bf16 %v6362
    %v6619 = vunpack.c.l.bf16 %v6363
    %v6620 = vunpack.c.l.bf16 %v6364
    %v6621 = vunpack.c.l.bf16 %v6365
    %v6622 = vunpack.c.l.bf16 %v6366
    %v6623 = vunpack.c.l.bf16 %v6367
    %v6624 = vunpack.c.l.bf16 %v6368
    %v6625 = vunpack.c.l.bf16 %v6369
    %v6626 = vunpack.c.l.bf16 %v6370
    %v6627 = vunpack.c.l.bf16 %v6371
    %v6628 = vunpack.c.l.bf16 %v6372
    %v6629 = vunpack.c.l.bf16 %v6373
    %v6630 = vunpack.c.l.bf16 %v6374
    %v6631 = vunpack.c.l.bf16 %v6375
    %v6632 = vunpack.c.l.bf16 %v6376
    %v6633 = vunpack.c.l.bf16 %v6377
    %v6634 = vunpack.c.l.bf16 %v6378
    %v6635 = vunpack.c.l.bf16 %v6379
    %v6636 = vunpack.c.l.bf16 %v6380
    %v6637 = vunpack.c.l.bf16 %v6381
    %v6638 = vunpack.c.l.bf16 %v6382
    %v6639 = vunpack.c.l.bf16 %v6383
    %v6640 = vunpack.c.l.bf16 %v6384
    %v6641 = vunpack.c.l.bf16 %v6385
    %v6642 = vunpack.c.l.bf16 %v6386
    %v6643 = vunpack.c.l.bf16 %v6387
    %v6644 = vunpack.c.l.bf16 %v6388
    %v6645 = vunpack.c.l.bf16 %v6389
    %v6646 = vunpack.c.l.bf16 %v6390
    %v6647 = vunpack.c.l.bf16 %v6391
    %v6648 = vunpack.c.l.bf16 %v6392
    %v6649 = vunpack.c.l.bf16 %v6393
    %v6650 = vunpack.c.l.bf16 %v6394
    %v6651 = vunpack.c.l.bf16 %v6395
    %v6652 = vunpack.c.l.bf16 %v6396
    %v6653 = vunpack.c.l.bf16 %v6397
    %v6654 = vunpack.c.l.bf16 %v6398
    %v6655 = vunpack.c.l.bf16 %v6399
    %v6656 = vunpack.c.l.bf16 %v6400
    %v6657 = vunpack.c.l.bf16 %v6401
    %v6658 = vunpack.c.l.bf16 %v6402
    %v6659 = vunpack.c.l.bf16 %v6403
    %v6660 = vunpack.c.l.bf16 %v6404
    %v6661 = vunpack.c.l.bf16 %v6405
    %v6662 = vunpack.c.l.bf16 %v6406
    %v6663 = vunpack.c.l.bf16 %v6407
    %v6664 = vunpack.c.l.bf16 %v6408
    %v6665 = vunpack.c.l.bf16 %v6409
    %v6666 = vunpack.c.l.bf16 %v6410
    %v6667 = vunpack.c.l.bf16 %v6411
    %v6668 = vunpack.c.l.bf16 %v6412
    %v6669 = vunpack.c.l.bf16 %v6413
    %v6670 = vunpack.c.l.bf16 %v6414
    %v6671 = vunpack.c.l.bf16 %v6415
    %v6672 = vunpack.c.l.bf16 %v6416
    %v6673 = vunpack.c.l.bf16 %v6417
    %v6674 = vunpack.c.l.bf16 %v6418
    %v6675 = vunpack.c.l.bf16 %v6419
    %v6676 = vunpack.c.l.bf16 %v6420
    %v6677 = vunpack.c.l.bf16 %v6421
    %v6678 = vunpack.c.l.bf16 %v6422
    %v6679 = vunpack.c.l.bf16 %v6423
    %v6680 = vunpack.c.l.bf16 %v6424
    %v6681 = vunpack.c.l.bf16 %v6425
    %v6682 = vunpack.c.l.bf16 %v6426
    %v6683 = vunpack.c.l.bf16 %v6427
    %v6684 = vunpack.c.l.bf16 %v6428
    %v6685 = vunpack.c.l.bf16 %v6429
    %v6686 = vunpack.c.l.bf16 %v6430
    %v6687 = vunpack.c.l.bf16 %v6431
    %v6688 = vunpack.c.l.bf16 %v6432
    %v6689 = vunpack.c.l.bf16 %v6433
    %v6690 = vunpack.c.l.bf16 %v6434
    %v6691 = vunpack.c.l.bf16 %v6435
    %v6692 = vunpack.c.l.bf16 %v6436
    %v6693 = vunpack.c.l.bf16 %v6437
    %v6694 = vunpack.c.l.bf16 %v6438
    %v6695 = vunpack.c.l.bf16 %v6439
    %v6696 = vunpack.c.l.bf16 %v6440
    %v6697 = vunpack.c.l.bf16 %v6441
    %v6698 = vunpack.c.l.bf16 %v6442
    %v6699 = vunpack.c.l.bf16 %v6443
    %v6700 = vunpack.c.l.bf16 %v6444
    %v6701 = vunpack.c.l.bf16 %v6445
    %v6702 = vunpack.c.l.bf16 %v6446
    %v6703 = vunpack.c.l.bf16 %v6447
    %v6704 = vunpack.c.l.bf16 %v6448
    %v6705 = vunpack.c.l.bf16 %v6449
    %v6706 = vunpack.c.l.bf16 %v6450
    %v6707 = vunpack.c.l.bf16 %v6451
    %v6708 = vunpack.c.l.bf16 %v6452
    %v6709 = vunpack.c.l.bf16 %v6453
    %v6710 = vunpack.c.l.bf16 %v6454
    %v6711 = vunpack.c.l.bf16 %v6455
    %v6712 = vunpack.c.l.bf16 %v6456
    %v6713 = vunpack.c.l.bf16 %v6457
    %v6714 = vunpack.c.l.bf16 %v6458
    %v6715 = vunpack.c.l.bf16 %v6459
    %v6716 = vunpack.c.l.bf16 %v6460
    %v6717 = vunpack.c.l.bf16 %v6461
    %v6718 = vunpack.c.l.bf16 %v6462
    %v6719 = vunpack.c.l.bf16 %v6463
    %v6720 = vunpack.c.l.bf16 %v6464
    %v6721 = vunpack.c.l.bf16 %v6465
    %v6722 = vunpack.c.l.bf16 %v6466
    %v6723 = vunpack.c.l.bf16 %v6467
    %v6724 = vunpack.c.l.bf16 %v6468
    %v6725 = vunpack.c.l.bf16 %v6469
    %v6726 = vunpack.c.l.bf16 %v6470
    %v6727 = vunpack.c.l.bf16 %v6471
    %v6728 = vunpack.c.l.bf16 %v6472
    %v6729 = vunpack.c.l.bf16 %v6473
    %v6730 = vunpack.c.l.bf16 %v6474
    %v6731 = vunpack.c.l.bf16 %v6475
    %v6732 = vunpack.c.l.bf16 %v6476
    %v6733 = vunpack.c.l.bf16 %v6477
    %v6734 = vunpack.c.l.bf16 %v6478
    %v6735 = vunpack.c.l.bf16 %v6479
    %v6736 = vunpack.c.l.bf16 %v6480
    %v6737 = vunpack.c.l.bf16 %v6481
    %v6738 = vunpack.c.l.bf16 %v6482
    %v6739 = vunpack.c.l.bf16 %v6483
    %v6740 = vunpack.c.l.bf16 %v6484
    %v6741 = vunpack.c.l.bf16 %v6485
    %v6742 = vunpack.c.l.bf16 %v6486
    %v6743 = vunpack.c.l.bf16 %v6487
    %v6744 = vunpack.c.l.bf16 %v6488
    %v6745 = vunpack.c.l.bf16 %v6489
    %v6746 = vunpack.c.l.bf16 %v6490
    %v6747 = vunpack.c.l.bf16 %v6491
    %v6748 = vunpack.c.l.bf16 %v6492
    %v6749 = vunpack.c.l.bf16 %v6493
    %v6750 = vunpack.c.l.bf16 %v6494
    %v6751 = vunpack.c.l.bf16 %v6495
    %v6752 = vunpack.c.l.bf16 %v6496
    %v6753 = vunpack.c.l.bf16 %v6497
    %v6754 = vunpack.c.l.bf16 %v6498
    %v6755 = vunpack.c.l.bf16 %v6499
    %v6756 = vunpack.c.l.bf16 %v6500
    %v6757 = vunpack.c.l.bf16 %v6501
    %v6758 = vunpack.c.l.bf16 %v6502
    %v6759 = vunpack.c.l.bf16 %v6503
    %v6760 = vunpack.c.l.bf16 %v6504
    %v6761 = vunpack.c.l.bf16 %v6505
    %v6762 = vunpack.c.l.bf16 %v6506
    %v6763 = vunpack.c.l.bf16 %v6507
    %v6764 = vunpack.c.l.bf16 %v6508
    %v6765 = vunpack.c.l.bf16 %v6509
    %v6766 = vunpack.c.l.bf16 %v6510
    %v6767 = vunpack.c.l.bf16 %v6511
    %v6768 = vunpack.c.l.bf16 %v6512
    %v6769 = vunpack.c.l.bf16 %v6513
    %v6770 = vunpack.c.l.bf16 %v6514
    %v6771 = vunpack.c.l.bf16 %v6515
    %v6772 = vunpack.c.l.bf16 %v6516
    %v6773 = vunpack.c.l.bf16 %v6517
    %v6774 = vunpack.c.l.bf16 %v6518
    %v6775 = vunpack.c.l.bf16 %v6519
    %v6776 = vunpack.c.l.bf16 %v6520
    %v6777 = vunpack.c.l.bf16 %v6521
    %v6778 = vunpack.c.l.bf16 %v6522
    %v6779 = vunpack.c.l.bf16 %v6523
    %v6780 = vunpack.c.l.bf16 %v6524
    %v6781 = vunpack.c.l.bf16 %v6525
    %v6782 = vunpack.c.l.bf16 %v6526
    %v6783 = vunpack.c.l.bf16 %v6527
    %v6784 = vunpack.c.l.bf16 %v6528
    %v6785 = vunpack.c.l.bf16 %v6529
    %v6786 = vunpack.c.l.bf16 %v6530
    %v6787 = vunpack.c.l.bf16 %v6531
    %v6788 = vunpack.c.l.bf16 %v6532
    %v6789 = vunpack.c.l.bf16 %v6533
    %v6790 = vunpack.c.l.bf16 %v6534
    %v6791 = vunpack.c.l.bf16 %v6535
    %v6792 = vunpack.c.l.bf16 %v6536
    %v6793 = vunpack.c.l.bf16 %v6537
    %v6794 = vunpack.c.l.bf16 %v6538
    %v6795 = vunpack.c.l.bf16 %v6539
    %v6796 = vunpack.c.l.bf16 %v6540
    %v6797 = vunpack.c.l.bf16 %v6541
    %v6798 = vunpack.c.l.bf16 %v6542
    %v6799 = vunpack.c.l.bf16 %v6543
    %v6800 = vunpack.c.l.bf16 %v6544
    %v6801 = vunpack.c.l.bf16 %v6545
    %v6802 = vunpack.c.l.bf16 %v6546
    %v6803 = vunpack.c.l.bf16 %v6547
    %v6804 = vunpack.c.l.bf16 %v6548
    %v6805 = vunpack.c.l.bf16 %v6549
    %v6806 = vunpack.c.l.bf16 %v6550
    %v6807 = vunpack.c.l.bf16 %v6551
    %v6808 = vunpack.c.l.bf16 %v6552
    %v6809 = vunpack.c.l.bf16 %v6553
    %v6810 = vunpack.c.l.bf16 %v6554
    %v6811 = vunpack.c.l.bf16 %v6555
    %v6812 = vunpack.c.l.bf16 %v6556
    %v6813 = vunpack.c.l.bf16 %v6557
    %v6814 = vunpack.c.l.bf16 %v6558
    %v6815 = vunpack.c.l.bf16 %v6559
    %v6816 = vunpack.c.l.bf16 %v6560
    %v6817 = vunpack.c.l.bf16 %v6561
    %v6818 = vunpack.c.l.bf16 %v6562
    %v6819 = vunpack.c.l.bf16 %v6563
    %v6820 = vunpack.c.l.bf16 %v6564
    %v6821 = vunpack.c.l.bf16 %v6565
    %v6822 = vunpack.c.l.bf16 %v6566
    %v6823 = vunpack.c.l.bf16 %v6567
    %v6824 = vunpack.c.l.bf16 %v6568
    %v6825 = vunpack.c.l.bf16 %v6569
    %v6826 = vunpack.c.l.bf16 %v6570
    %v6827 = vunpack.c.l.bf16 %v6571
    %v6828 = vunpack.c.l.bf16 %v6572
    %v6829 = vunpack.c.l.bf16 %v6573
    %v6830 = vunpack.c.l.bf16 %v6574
    %v6831 = vunpack.c.l.bf16 %v6575
    %v6832 = vunpack.c.l.bf16 %v6576
    %v6833 = vunpack.c.l.bf16 %v6577
    %v6834 = vunpack.c.l.bf16 %v6578
    %v6835 = vunpack.c.l.bf16 %v6579
    %v6836 = vunpack.c.l.bf16 %v6580
    %v6837 = vunpack.c.l.bf16 %v6581
    %v6838 = vunpack.c.l.bf16 %v6582
    %v6839 = vunpack.c.l.bf16 %v6583
    %v6840 = vunpack.c.l.bf16 %v6584
    %v6841 = vunpack.c.l.bf16 %v6585
    %v6842 = vunpack.c.l.bf16 %v6586
    %v6843 = vunpack.c.l.bf16 %v6587
    %v6844 = vunpack.c.l.bf16 %v6588
    %v6845 = vunpack.c.l.bf16 %v6589
    %v6846 = vunpack.c.l.bf16 %v6590
    %v6847 = vunpack.c.l.bf16 %v6591
    %v6848 = vunpack.c.l.bf16 %v6592
    %v6849 = vunpack.c.l.bf16 %v6593
    %v6850 = vunpack.c.l.bf16 %v6594
    %v6851 = vunpack.c.l.bf16 %v6595
    %v6852 = vunpack.c.l.bf16 %v6596
    %v6853 = vunpack.c.l.bf16 %v6597
    %v6854 = vunpack.c.l.bf16 %v6598
    %v6855 = vunpack.c.l.bf16 %v6599
    %v6856 = vunpack.c.l.bf16 %v6600
    %v6857 = vunpack.c.l.bf16 %v6601
    %v6858 = vunpack.c.l.bf16 %v6602
    %v6859 = vunpack.c.l.bf16 %v6603
    %v6860 = vunpack.c.l.bf16 %v6604
    %v6861 = vunpack.c.l.bf16 %v6605
    %v6862 = vunpack.c.l.bf16 %v6606
    %v6863 = vunpack.c.l.bf16 %v6607
    %v6864 = vunpack.c.l.bf16 %v6608
    %v6865 = vunpack.c.l.bf16 %v6609
    %s6866 = scalar_lea.vmem %s9, 16
    %v6867 = vld [vmem:[%s6866] sm:$0xff]
    %v6868 = vld [vmem:[%s6866 + $0x8] sm:$0xff]
    %v6871 = vlaneseq
    %v6872 = vshrl.u32 %v6871, 7
    %v6873 = vsub.s32 0, %v6872
    %v6874 = vrot.slane %v6867, %v6873
    %v6875 = vlaneseq
    %v6876 = vshrl.u32 %v6875, 7
    %v6877 = vsub.s32 1, %v6876
    %v6878 = vrot.slane %v6867, %v6877
    %v6879 = vlaneseq
    %v6880 = vshrl.u32 %v6879, 7
    %v6881 = vsub.s32 2, %v6880
    %v6882 = vrot.slane %v6867, %v6881
    %v6883 = vlaneseq
    %v6884 = vshrl.u32 %v6883, 7
    %v6885 = vsub.s32 3, %v6884
    %v6886 = vrot.slane %v6867, %v6885
    %v6887 = vlaneseq
    %v6888 = vshrl.u32 %v6887, 7
    %v6889 = vsub.s32 4, %v6888
    %v6890 = vrot.slane %v6867, %v6889
    %v6891 = vlaneseq
    %v6892 = vshrl.u32 %v6891, 7
    %v6893 = vsub.s32 5, %v6892
    %v6894 = vrot.slane %v6867, %v6893
    %v6895 = vlaneseq
    %v6896 = vshrl.u32 %v6895, 7
    %v6897 = vsub.s32 6, %v6896
    %v6898 = vrot.slane %v6867, %v6897
    %v6899 = vlaneseq
    %v6900 = vshrl.u32 %v6899, 7
    %v6901 = vsub.s32 7, %v6900
    %v6902 = vrot.slane %v6867, %v6901
    %v6903 = vlaneseq
    %v6904 = vshrl.u32 %v6903, 7
    %v6905 = vsub.s32 0, %v6904
    %v6906 = vrot.slane %v6868, %v6905
    %v6907 = vlaneseq
    %v6908 = vshrl.u32 %v6907, 7
    %v6909 = vsub.s32 1, %v6908
    %v6910 = vrot.slane %v6868, %v6909
    %v6911 = vlaneseq
    %v6912 = vshrl.u32 %v6911, 7
    %v6913 = vsub.s32 2, %v6912
    %v6914 = vrot.slane %v6868, %v6913
    %v6915 = vlaneseq
    %v6916 = vshrl.u32 %v6915, 7
    %v6917 = vsub.s32 3, %v6916
    %v6918 = vrot.slane %v6868, %v6917
    %v6919 = vlaneseq
    %v6920 = vshrl.u32 %v6919, 7
    %v6921 = vsub.s32 4, %v6920
    %v6922 = vrot.slane %v6868, %v6921
    %v6923 = vlaneseq
    %v6924 = vshrl.u32 %v6923, 7
    %v6925 = vsub.s32 5, %v6924
    %v6926 = vrot.slane %v6868, %v6925
    %v6927 = vlaneseq
    %v6928 = vshrl.u32 %v6927, 7
    %v6929 = vsub.s32 6, %v6928
    %v6930 = vrot.slane %v6868, %v6929
    %v6931 = vlaneseq
    %v6932 = vshrl.u32 %v6931, 7
    %v6933 = vsub.s32 7, %v6932
    %v6934 = vrot.slane %v6868, %v6933
    %v6952 = vsel %vm116, %v6254, 0
    %v6955 = vsel %vm116, %v6255, 0
    %6957 = vmatprep.subr.mxu0 0.0
    %6958 = vmatpush1.msra.mxu0 0.0
    %6959 = vmatprep.subr.mxu0 0.0
    %6960 = vmatpush1.msra.mxu0 0.0
    %6961 = vmatprep.subr.mxu0 0.0
    %6962 = vmatpush1.msra.mxu0 0.0
    %6963 = vmatprep.subr.mxu0 0.0
    %6964 = vmatpush1.msra.mxu0 0.0
    %6965 = vmatprep.subr.mxu0 0.0
    %6966 = vmatpush1.msra.mxu0 0.0
    %6967 = vmatprep.subr.mxu0 0.0
    %6968 = vmatpush1.msra.mxu0 0.0
    %6969 = vmatprep.subr.mxu0 0.0
    %6970 = vmatpush1.msra.mxu0 0.0
    %6971 = vmatprep.subr.mxu0 0.0
    %6972 = vmatpush1.msra.mxu0 0.0
    %6973 = vmatprep.subr.mxu0 0.0
    %6974 = vmatpush1.msra.mxu0 0.0
    %6975 = vmatprep.subr.mxu0 0.0
    %6976 = vmatpush1.msra.mxu0 0.0
    %6977 = vmatprep.subr.mxu0 0.0
    %6978 = vmatpush1.msra.mxu0 0.0
    %6979 = vmatprep.subr.mxu0 0.0
    %6980 = vmatpush1.msra.mxu0 0.0
    %6981 = vmatprep.subr.mxu0 %v6338
    %6982 = vmatpush1.msra.mxu0 %v6337
    %6983 = vmatprep.subr.mxu0 %v6322
    %6984 = vmatpush1.msra.mxu0 %v6321
    %6985 = vmatprep.subr.mxu0 %v6306
    %6986 = vmatpush1.msra.mxu0 %v6305
    %6987 = vmatprep.subr.mxu0 %v6290
    %6988 = vmatpush1.msra.mxu0 %v6289
    %6989 = vmatprep.subr.mxu0 0.0
    %6990 = vmatpush2.msra.mxu0 0.0
    %6991 = vmatprep.subr.mxu0 0.0
    %6992 = vmatpush2.msra.mxu0 0.0
    %6993 = vmatprep.subr.mxu0 0.0
    %6994 = vmatpush2.msra.mxu0 0.0
    %6995 = vmatprep.subr.mxu0 0.0
    %6996 = vmatpush2.msra.mxu0 0.0
    %6997 = vmatprep.subr.mxu0 0.0
    %6998 = vmatpush2.msra.mxu0 0.0
    %6999 = vmatprep.subr.mxu0 0.0
    %7000 = vmatpush2.msra.mxu0 0.0
    %7001 = vmatprep.subr.mxu0 0.0
    %7002 = vmatpush2.msra.mxu0 0.0
    %7003 = vmatprep.subr.mxu0 0.0
    %7004 = vmatpush2.msra.mxu0 0.0
    %7005 = vmatprep.subr.mxu0 0.0
    %7006 = vmatpush2.msra.mxu0 0.0
    %7007 = vmatprep.subr.mxu0 0.0
    %7008 = vmatpush2.msra.mxu0 0.0
    %7009 = vmatprep.subr.mxu0 0.0
    %7010 = vmatpush2.msra.mxu0 0.0
    %7011 = vmatprep.subr.mxu0 0.0
    %7012 = vmatpush2.msra.mxu0 0.0
    %7013 = vmatprep.subr.mxu0 0.0
    %7014 = vmatpush2.msra.mxu0 0.0
    %7015 = vmatprep.subr.mxu0 0.0
    %7016 = vmatpush2.msra.mxu0 0.0
    %7017 = vmatprep.subr.mxu0 0.0
    %7018 = vmatpush2.msra.mxu0 0.0
    %7019 = vmatprep.subr.mxu0 0.0
    %7020 = vmatpush2.msra.mxu0 0.0
    %7021 = vmatprep.mubr.f32.mxu0 0.0
    %7022 = vmatmul.mubr.f32.gmra.mxu0 %v6952
    %v7023 = vpop.f32.mrf.mxu0
    %v7024 = vadd.f32 %v6874, %v7023
    %v7025 = vpop.f32.mrf.mxu0
    %v7026 = vadd.f32 %v6878, %v7025
    %7027 = vmatprep.mubr.f32.mxu0 0.0
    %7028 = vmatmul.mubr.f32.gmra.mxu0 %v6955
    %v7029 = vpop.f32.mrf.mxu0
    %v7030 = vadd.f32 %v6874, %v7029
    %v7031 = vpop.f32.mrf.mxu0
    %v7032 = vadd.f32 %v6878, %v7031
    %7033 = vdwg.mxu0
    %7034 = vmatprep.subr.mxu0 0.0
    %7035 = vmatpush1.msra.mxu0 0.0
    %7036 = vmatprep.subr.mxu0 0.0
    %7037 = vmatpush1.msra.mxu0 0.0
    %7038 = vmatprep.subr.mxu0 0.0
    %7039 = vmatpush1.msra.mxu0 0.0
    %7040 = vmatprep.subr.mxu0 0.0
    %7041 = vmatpush1.msra.mxu0 0.0
    %7042 = vmatprep.subr.mxu0 0.0
    %7043 = vmatpush1.msra.mxu0 0.0
    %7044 = vmatprep.subr.mxu0 0.0
    %7045 = vmatpush1.msra.mxu0 0.0
    %7046 = vmatprep.subr.mxu0 0.0
    %7047 = vmatpush1.msra.mxu0 0.0
    %7048 = vmatprep.subr.mxu0 0.0
    %7049 = vmatpush1.msra.mxu0 0.0
    %7050 = vmatprep.subr.mxu0 0.0
    %7051 = vmatpush1.msra.mxu0 0.0
    %7052 = vmatprep.subr.mxu0 0.0
    %7053 = vmatpush1.msra.mxu0 0.0
    %7054 = vmatprep.subr.mxu0 0.0
    %7055 = vmatpush1.msra.mxu0 0.0
    %7056 = vmatprep.subr.mxu0 0.0
    %7057 = vmatpush1.msra.mxu0 0.0
    %7058 = vmatprep.subr.mxu0 %v6340
    %7059 = vmatpush1.msra.mxu0 %v6339
    %7060 = vmatprep.subr.mxu0 %v6324
    %7061 = vmatpush1.msra.mxu0 %v6323
    %7062 = vmatprep.subr.mxu0 %v6308
    %7063 = vmatpush1.msra.mxu0 %v6307
    %7064 = vmatprep.subr.mxu0 %v6292
    %7065 = vmatpush1.msra.mxu0 %v6291
    %7066 = vmatprep.subr.mxu0 0.0
    %7067 = vmatpush2.msra.mxu0 0.0
    %7068 = vmatprep.subr.mxu0 0.0
    %7069 = vmatpush2.msra.mxu0 0.0
    %7070 = vmatprep.subr.mxu0 0.0
    %7071 = vmatpush2.msra.mxu0 0.0
    %7072 = vmatprep.subr.mxu0 0.0
    %7073 = vmatpush2.msra.mxu0 0.0
    %7074 = vmatprep.subr.mxu0 0.0
    %7075 = vmatpush2.msra.mxu0 0.0
    %7076 = vmatprep.subr.mxu0 0.0
    %7077 = vmatpush2.msra.mxu0 0.0
    %7078 = vmatprep.subr.mxu0 0.0
    %7079 = vmatpush2.msra.mxu0 0.0
    %7080 = vmatprep.subr.mxu0 0.0
    %7081 = vmatpush2.msra.mxu0 0.0
    %7082 = vmatprep.subr.mxu0 0.0
    %7083 = vmatpush2.msra.mxu0 0.0
    %7084 = vmatprep.subr.mxu0 0.0
    %7085 = vmatpush2.msra.mxu0 0.0
    %7086 = vmatprep.subr.mxu0 0.0
    %7087 = vmatpush2.msra.mxu0 0.0
    %7088 = vmatprep.subr.mxu0 0.0
    %7089 = vmatpush2.msra.mxu0 0.0
    %7090 = vmatprep.subr.mxu0 0.0
    %7091 = vmatpush2.msra.mxu0 0.0
    %7092 = vmatprep.subr.mxu0 0.0
    %7093 = vmatpush2.msra.mxu0 0.0
    %7094 = vmatprep.subr.mxu0 0.0
    %7095 = vmatpush2.msra.mxu0 0.0
    %7096 = vmatprep.subr.mxu0 0.0
    %7097 = vmatpush2.msra.mxu0 0.0
    %7098 = vmatprep.mubr.f32.mxu0 0.0
    %7099 = vmatmul.mubr.f32.gmra.mxu0 %v6952
    %v7100 = vpop.f32.mrf.mxu0
    %v7101 = vadd.f32 %v6882, %v7100
    %v7102 = vpop.f32.mrf.mxu0
    %v7103 = vadd.f32 %v6886, %v7102
    %7104 = vmatprep.mubr.f32.mxu0 0.0
    %7105 = vmatmul.mubr.f32.gmra.mxu0 %v6955
    %v7106 = vpop.f32.mrf.mxu0
    %v7107 = vadd.f32 %v6882, %v7106
    %v7108 = vpop.f32.mrf.mxu0
    %v7109 = vadd.f32 %v6886, %v7108
    %7110 = vdwg.mxu0
    %7111 = vmatprep.subr.mxu0 0.0
    %7112 = vmatpush1.msra.mxu0 0.0
    %7113 = vmatprep.subr.mxu0 0.0
    %7114 = vmatpush1.msra.mxu0 0.0
    %7115 = vmatprep.subr.mxu0 0.0
    %7116 = vmatpush1.msra.mxu0 0.0
    %7117 = vmatprep.subr.mxu0 0.0
    %7118 = vmatpush1.msra.mxu0 0.0
    %7119 = vmatprep.subr.mxu0 0.0
    %7120 = vmatpush1.msra.mxu0 0.0
    %7121 = vmatprep.subr.mxu0 0.0
    %7122 = vmatpush1.msra.mxu0 0.0
    %7123 = vmatprep.subr.mxu0 0.0
    %7124 = vmatpush1.msra.mxu0 0.0
    %7125 = vmatprep.subr.mxu0 0.0
    %7126 = vmatpush1.msra.mxu0 0.0
    %7127 = vmatprep.subr.mxu0 0.0
    %7128 = vmatpush1.msra.mxu0 0.0
    %7129 = vmatprep.subr.mxu0 0.0
    %7130 = vmatpush1.msra.mxu0 0.0
    %7131 = vmatprep.subr.mxu0 0.0
    %7132 = vmatpush1.msra.mxu0 0.0
    %7133 = vmatprep.subr.mxu0 0.0
    %7134 = vmatpush1.msra.mxu0 0.0
    %7135 = vmatprep.subr.mxu0 %v6342
    %7136 = vmatpush1.msra.mxu0 %v6341
    %7137 = vmatprep.subr.mxu0 %v6326
    %7138 = vmatpush1.msra.mxu0 %v6325
    %7139 = vmatprep.subr.mxu0 %v6310
    %7140 = vmatpush1.msra.mxu0 %v6309
    %7141 = vmatprep.subr.mxu0 %v6294
    %7142 = vmatpush1.msra.mxu0 %v6293
    %7143 = vmatprep.subr.mxu0 0.0
    %7144 = vmatpush2.msra.mxu0 0.0
    %7145 = vmatprep.subr.mxu0 0.0
    %7146 = vmatpush2.msra.mxu0 0.0
    %7147 = vmatprep.subr.mxu0 0.0
    %7148 = vmatpush2.msra.mxu0 0.0
    %7149 = vmatprep.subr.mxu0 0.0
    %7150 = vmatpush2.msra.mxu0 0.0
    %7151 = vmatprep.subr.mxu0 0.0
    %7152 = vmatpush2.msra.mxu0 0.0
    %7153 = vmatprep.subr.mxu0 0.0
    %7154 = vmatpush2.msra.mxu0 0.0
    %7155 = vmatprep.subr.mxu0 0.0
    %7156 = vmatpush2.msra.mxu0 0.0
    %7157 = vmatprep.subr.mxu0 0.0
    %7158 = vmatpush2.msra.mxu0 0.0
    %7159 = vmatprep.subr.mxu0 0.0
    %7160 = vmatpush2.msra.mxu0 0.0
    %7161 = vmatprep.subr.mxu0 0.0
    %7162 = vmatpush2.msra.mxu0 0.0
    %7163 = vmatprep.subr.mxu0 0.0
    %7164 = vmatpush2.msra.mxu0 0.0
    %7165 = vmatprep.subr.mxu0 0.0
    %7166 = vmatpush2.msra.mxu0 0.0
    %7167 = vmatprep.subr.mxu0 0.0
    %7168 = vmatpush2.msra.mxu0 0.0
    %7169 = vmatprep.subr.mxu0 0.0
    %7170 = vmatpush2.msra.mxu0 0.0
    %7171 = vmatprep.subr.mxu0 0.0
    %7172 = vmatpush2.msra.mxu0 0.0
    %7173 = vmatprep.subr.mxu0 0.0
    %7174 = vmatpush2.msra.mxu0 0.0
    %7175 = vmatprep.mubr.f32.mxu0 0.0
    %7176 = vmatmul.mubr.f32.gmra.mxu0 %v6952
    %v7177 = vpop.f32.mrf.mxu0
    %v7178 = vadd.f32 %v6890, %v7177
    %v7179 = vpop.f32.mrf.mxu0
    %v7180 = vadd.f32 %v6894, %v7179
    %7181 = vmatprep.mubr.f32.mxu0 0.0
    %7182 = vmatmul.mubr.f32.gmra.mxu0 %v6955
    %v7183 = vpop.f32.mrf.mxu0
    %v7184 = vadd.f32 %v6890, %v7183
    %v7185 = vpop.f32.mrf.mxu0
    %v7186 = vadd.f32 %v6894, %v7185
    %7187 = vdwg.mxu0
    %7188 = vmatprep.subr.mxu0 0.0
    %7189 = vmatpush1.msra.mxu0 0.0
    %7190 = vmatprep.subr.mxu0 0.0
    %7191 = vmatpush1.msra.mxu0 0.0
    %7192 = vmatprep.subr.mxu0 0.0
    %7193 = vmatpush1.msra.mxu0 0.0
    %7194 = vmatprep.subr.mxu0 0.0
    %7195 = vmatpush1.msra.mxu0 0.0
    %7196 = vmatprep.subr.mxu0 0.0
    %7197 = vmatpush1.msra.mxu0 0.0
    %7198 = vmatprep.subr.mxu0 0.0
    %7199 = vmatpush1.msra.mxu0 0.0
    %7200 = vmatprep.subr.mxu0 0.0
    %7201 = vmatpush1.msra.mxu0 0.0
    %7202 = vmatprep.subr.mxu0 0.0
    %7203 = vmatpush1.msra.mxu0 0.0
    %7204 = vmatprep.subr.mxu0 0.0
    %7205 = vmatpush1.msra.mxu0 0.0
    %7206 = vmatprep.subr.mxu0 0.0
    %7207 = vmatpush1.msra.mxu0 0.0
    %7208 = vmatprep.subr.mxu0 0.0
    %7209 = vmatpush1.msra.mxu0 0.0
    %7210 = vmatprep.subr.mxu0 0.0
    %7211 = vmatpush1.msra.mxu0 0.0
    %7212 = vmatprep.subr.mxu0 %v6344
    %7213 = vmatpush1.msra.mxu0 %v6343
    %7214 = vmatprep.subr.mxu0 %v6328
    %7215 = vmatpush1.msra.mxu0 %v6327
    %7216 = vmatprep.subr.mxu0 %v6312
    %7217 = vmatpush1.msra.mxu0 %v6311
    %7218 = vmatprep.subr.mxu0 %v6296
    %7219 = vmatpush1.msra.mxu0 %v6295
    %7220 = vmatprep.subr.mxu0 0.0
    %7221 = vmatpush2.msra.mxu0 0.0
    %7222 = vmatprep.subr.mxu0 0.0
    %7223 = vmatpush2.msra.mxu0 0.0
    %7224 = vmatprep.subr.mxu0 0.0
    %7225 = vmatpush2.msra.mxu0 0.0
    %7226 = vmatprep.subr.mxu0 0.0
    %7227 = vmatpush2.msra.mxu0 0.0
    %7228 = vmatprep.subr.mxu0 0.0
    %7229 = vmatpush2.msra.mxu0 0.0
    %7230 = vmatprep.subr.mxu0 0.0
    %7231 = vmatpush2.msra.mxu0 0.0
    %7232 = vmatprep.subr.mxu0 0.0
    %7233 = vmatpush2.msra.mxu0 0.0
    %7234 = vmatprep.subr.mxu0 0.0
    %7235 = vmatpush2.msra.mxu0 0.0
    %7236 = vmatprep.subr.mxu0 0.0
    %7237 = vmatpush2.msra.mxu0 0.0
    %7238 = vmatprep.subr.mxu0 0.0
    %7239 = vmatpush2.msra.mxu0 0.0
    %7240 = vmatprep.subr.mxu0 0.0
    %7241 = vmatpush2.msra.mxu0 0.0
    %7242 = vmatprep.subr.mxu0 0.0
    %7243 = vmatpush2.msra.mxu0 0.0
    %7244 = vmatprep.subr.mxu0 0.0
    %7245 = vmatpush2.msra.mxu0 0.0
    %7246 = vmatprep.subr.mxu0 0.0
    %7247 = vmatpush2.msra.mxu0 0.0
    %7248 = vmatprep.subr.mxu0 0.0
    %7249 = vmatpush2.msra.mxu0 0.0
    %7250 = vmatprep.subr.mxu0 0.0
    %7251 = vmatpush2.msra.mxu0 0.0
    %7252 = vmatprep.mubr.f32.mxu0 0.0
    %7253 = vmatmul.mubr.f32.gmra.mxu0 %v6952
    %v7254 = vpop.f32.mrf.mxu0
    %v7255 = vadd.f32 %v6898, %v7254
    %v7256 = vpop.f32.mrf.mxu0
    %v7257 = vadd.f32 %v6902, %v7256
    %7258 = vmatprep.mubr.f32.mxu0 0.0
    %7259 = vmatmul.mubr.f32.gmra.mxu0 %v6955
    %v7260 = vpop.f32.mrf.mxu0
    %v7261 = vadd.f32 %v6898, %v7260
    %v7262 = vpop.f32.mrf.mxu0
    %v7263 = vadd.f32 %v6902, %v7262
    %7264 = vdwg.mxu0
    %7265 = vmatprep.subr.mxu0 0.0
    %7266 = vmatpush1.msra.mxu0 0.0
    %7267 = vmatprep.subr.mxu0 0.0
    %7268 = vmatpush1.msra.mxu0 0.0
    %7269 = vmatprep.subr.mxu0 0.0
    %7270 = vmatpush1.msra.mxu0 0.0
    %7271 = vmatprep.subr.mxu0 0.0
    %7272 = vmatpush1.msra.mxu0 0.0
    %7273 = vmatprep.subr.mxu0 0.0
    %7274 = vmatpush1.msra.mxu0 0.0
    %7275 = vmatprep.subr.mxu0 0.0
    %7276 = vmatpush1.msra.mxu0 0.0
    %7277 = vmatprep.subr.mxu0 0.0
    %7278 = vmatpush1.msra.mxu0 0.0
    %7279 = vmatprep.subr.mxu0 0.0
    %7280 = vmatpush1.msra.mxu0 0.0
    %7281 = vmatprep.subr.mxu0 0.0
    %7282 = vmatpush1.msra.mxu0 0.0
    %7283 = vmatprep.subr.mxu0 0.0
    %7284 = vmatpush1.msra.mxu0 0.0
    %7285 = vmatprep.subr.mxu0 0.0
    %7286 = vmatpush1.msra.mxu0 0.0
    %7287 = vmatprep.subr.mxu0 0.0
    %7288 = vmatpush1.msra.mxu0 0.0
    %7289 = vmatprep.subr.mxu0 %v6346
    %7290 = vmatpush1.msra.mxu0 %v6345
    %7291 = vmatprep.subr.mxu0 %v6330
    %7292 = vmatpush1.msra.mxu0 %v6329
    %7293 = vmatprep.subr.mxu0 %v6314
    %7294 = vmatpush1.msra.mxu0 %v6313
    %7295 = vmatprep.subr.mxu0 %v6298
    %7296 = vmatpush1.msra.mxu0 %v6297
    %7297 = vmatprep.subr.mxu0 0.0
    %7298 = vmatpush2.msra.mxu0 0.0
    %7299 = vmatprep.subr.mxu0 0.0
    %7300 = vmatpush2.msra.mxu0 0.0
    %7301 = vmatprep.subr.mxu0 0.0
    %7302 = vmatpush2.msra.mxu0 0.0
    %7303 = vmatprep.subr.mxu0 0.0
    %7304 = vmatpush2.msra.mxu0 0.0
    %7305 = vmatprep.subr.mxu0 0.0
    %7306 = vmatpush2.msra.mxu0 0.0
    %7307 = vmatprep.subr.mxu0 0.0
    %7308 = vmatpush2.msra.mxu0 0.0
    %7309 = vmatprep.subr.mxu0 0.0
    %7310 = vmatpush2.msra.mxu0 0.0
    %7311 = vmatprep.subr.mxu0 0.0
    %7312 = vmatpush2.msra.mxu0 0.0
    %7313 = vmatprep.subr.mxu0 0.0
    %7314 = vmatpush2.msra.mxu0 0.0
    %7315 = vmatprep.subr.mxu0 0.0
    %7316 = vmatpush2.msra.mxu0 0.0
    %7317 = vmatprep.subr.mxu0 0.0
    %7318 = vmatpush2.msra.mxu0 0.0
    %7319 = vmatprep.subr.mxu0 0.0
    %7320 = vmatpush2.msra.mxu0 0.0
    %7321 = vmatprep.subr.mxu0 0.0
    %7322 = vmatpush2.msra.mxu0 0.0
    %7323 = vmatprep.subr.mxu0 0.0
    %7324 = vmatpush2.msra.mxu0 0.0
    %7325 = vmatprep.subr.mxu0 0.0
    %7326 = vmatpush2.msra.mxu0 0.0
    %7327 = vmatprep.subr.mxu0 0.0
    %7328 = vmatpush2.msra.mxu0 0.0
    %7329 = vmatprep.mubr.f32.mxu0 0.0
    %7330 = vmatmul.mubr.f32.gmra.mxu0 %v6952
    %v7331 = vpop.f32.mrf.mxu0
    %v7332 = vadd.f32 %v6906, %v7331
    %v7333 = vpop.f32.mrf.mxu0
    %v7334 = vadd.f32 %v6910, %v7333
    %7335 = vmatprep.mubr.f32.mxu0 0.0
    %7336 = vmatmul.mubr.f32.gmra.mxu0 %v6955
    %v7337 = vpop.f32.mrf.mxu0
    %v7338 = vadd.f32 %v6906, %v7337
    %v7339 = vpop.f32.mrf.mxu0
    %v7340 = vadd.f32 %v6910, %v7339
    %7341 = vdwg.mxu0
    %7342 = vmatprep.subr.mxu0 0.0
    %7343 = vmatpush1.msra.mxu0 0.0
    %7344 = vmatprep.subr.mxu0 0.0
    %7345 = vmatpush1.msra.mxu0 0.0
    %7346 = vmatprep.subr.mxu0 0.0
    %7347 = vmatpush1.msra.mxu0 0.0
    %7348 = vmatprep.subr.mxu0 0.0
    %7349 = vmatpush1.msra.mxu0 0.0
    %7350 = vmatprep.subr.mxu0 0.0
    %7351 = vmatpush1.msra.mxu0 0.0
    %7352 = vmatprep.subr.mxu0 0.0
    %7353 = vmatpush1.msra.mxu0 0.0
    %7354 = vmatprep.subr.mxu0 0.0
    %7355 = vmatpush1.msra.mxu0 0.0
    %7356 = vmatprep.subr.mxu0 0.0
    %7357 = vmatpush1.msra.mxu0 0.0
    %7358 = vmatprep.subr.mxu0 0.0
    %7359 = vmatpush1.msra.mxu0 0.0
    %7360 = vmatprep.subr.mxu0 0.0
    %7361 = vmatpush1.msra.mxu0 0.0
    %7362 = vmatprep.subr.mxu0 0.0
    %7363 = vmatpush1.msra.mxu0 0.0
    %7364 = vmatprep.subr.mxu0 0.0
    %7365 = vmatpush1.msra.mxu0 0.0
    %7366 = vmatprep.subr.mxu0 %v6348
    %7367 = vmatpush1.msra.mxu0 %v6347
    %7368 = vmatprep.subr.mxu0 %v6332
    %7369 = vmatpush1.msra.mxu0 %v6331
    %7370 = vmatprep.subr.mxu0 %v6316
    %7371 = vmatpush1.msra.mxu0 %v6315
    %7372 = vmatprep.subr.mxu0 %v6300
    %7373 = vmatpush1.msra.mxu0 %v6299
    %7374 = vmatprep.subr.mxu0 0.0
    %7375 = vmatpush2.msra.mxu0 0.0
    %7376 = vmatprep.subr.mxu0 0.0
    %7377 = vmatpush2.msra.mxu0 0.0
    %7378 = vmatprep.subr.mxu0 0.0
    %7379 = vmatpush2.msra.mxu0 0.0
    %7380 = vmatprep.subr.mxu0 0.0
    %7381 = vmatpush2.msra.mxu0 0.0
    %7382 = vmatprep.subr.mxu0 0.0
    %7383 = vmatpush2.msra.mxu0 0.0
    %7384 = vmatprep.subr.mxu0 0.0
    %7385 = vmatpush2.msra.mxu0 0.0
    %7386 = vmatprep.subr.mxu0 0.0
    %7387 = vmatpush2.msra.mxu0 0.0
    %7388 = vmatprep.subr.mxu0 0.0
    %7389 = vmatpush2.msra.mxu0 0.0
    %7390 = vmatprep.subr.mxu0 0.0
    %7391 = vmatpush2.msra.mxu0 0.0
    %7392 = vmatprep.subr.mxu0 0.0
    %7393 = vmatpush2.msra.mxu0 0.0
    %7394 = vmatprep.subr.mxu0 0.0
    %7395 = vmatpush2.msra.mxu0 0.0
    %7396 = vmatprep.subr.mxu0 0.0
    %7397 = vmatpush2.msra.mxu0 0.0
    %7398 = vmatprep.subr.mxu0 0.0
    %7399 = vmatpush2.msra.mxu0 0.0
    %7400 = vmatprep.subr.mxu0 0.0
    %7401 = vmatpush2.msra.mxu0 0.0
    %7402 = vmatprep.subr.mxu0 0.0
    %7403 = vmatpush2.msra.mxu0 0.0
    %7404 = vmatprep.subr.mxu0 0.0
    %7405 = vmatpush2.msra.mxu0 0.0
    %7406 = vmatprep.mubr.f32.mxu0 0.0
    %7407 = vmatmul.mubr.f32.gmra.mxu0 %v6952
    %v7408 = vpop.f32.mrf.mxu0
    %v7409 = vadd.f32 %v6914, %v7408
    %v7410 = vpop.f32.mrf.mxu0
    %v7411 = vadd.f32 %v6918, %v7410
    %7412 = vmatprep.mubr.f32.mxu0 0.0
    %7413 = vmatmul.mubr.f32.gmra.mxu0 %v6955
    %v7414 = vpop.f32.mrf.mxu0
    %v7415 = vadd.f32 %v6914, %v7414
    %v7416 = vpop.f32.mrf.mxu0
    %v7417 = vadd.f32 %v6918, %v7416
    %7418 = vdwg.mxu0
    %7419 = vmatprep.subr.mxu0 0.0
    %7420 = vmatpush1.msra.mxu0 0.0
    %7421 = vmatprep.subr.mxu0 0.0
    %7422 = vmatpush1.msra.mxu0 0.0
    %7423 = vmatprep.subr.mxu0 0.0
    %7424 = vmatpush1.msra.mxu0 0.0
    %7425 = vmatprep.subr.mxu0 0.0
    %7426 = vmatpush1.msra.mxu0 0.0
    %7427 = vmatprep.subr.mxu0 0.0
    %7428 = vmatpush1.msra.mxu0 0.0
    %7429 = vmatprep.subr.mxu0 0.0
    %7430 = vmatpush1.msra.mxu0 0.0
    %7431 = vmatprep.subr.mxu0 0.0
    %7432 = vmatpush1.msra.mxu0 0.0
    %7433 = vmatprep.subr.mxu0 0.0
    %7434 = vmatpush1.msra.mxu0 0.0
    %7435 = vmatprep.subr.mxu0 0.0
    %7436 = vmatpush1.msra.mxu0 0.0
    %7437 = vmatprep.subr.mxu0 0.0
    %7438 = vmatpush1.msra.mxu0 0.0
    %7439 = vmatprep.subr.mxu0 0.0
    %7440 = vmatpush1.msra.mxu0 0.0
    %7441 = vmatprep.subr.mxu0 0.0
    %7442 = vmatpush1.msra.mxu0 0.0
    %7443 = vmatprep.subr.mxu0 %v6350
    %7444 = vmatpush1.msra.mxu0 %v6349
    %7445 = vmatprep.subr.mxu0 %v6334
    %7446 = vmatpush1.msra.mxu0 %v6333
    %7447 = vmatprep.subr.mxu0 %v6318
    %7448 = vmatpush1.msra.mxu0 %v6317
    %7449 = vmatprep.subr.mxu0 %v6302
    %7450 = vmatpush1.msra.mxu0 %v6301
    %7451 = vmatprep.subr.mxu0 0.0
    %7452 = vmatpush2.msra.mxu0 0.0
    %7453 = vmatprep.subr.mxu0 0.0
    %7454 = vmatpush2.msra.mxu0 0.0
    %7455 = vmatprep.subr.mxu0 0.0
    %7456 = vmatpush2.msra.mxu0 0.0
    %7457 = vmatprep.subr.mxu0 0.0
    %7458 = vmatpush2.msra.mxu0 0.0
    %7459 = vmatprep.subr.mxu0 0.0
    %7460 = vmatpush2.msra.mxu0 0.0
    %7461 = vmatprep.subr.mxu0 0.0
    %7462 = vmatpush2.msra.mxu0 0.0
    %7463 = vmatprep.subr.mxu0 0.0
    %7464 = vmatpush2.msra.mxu0 0.0
    %7465 = vmatprep.subr.mxu0 0.0
    %7466 = vmatpush2.msra.mxu0 0.0
    %7467 = vmatprep.subr.mxu0 0.0
    %7468 = vmatpush2.msra.mxu0 0.0
    %7469 = vmatprep.subr.mxu0 0.0
    %7470 = vmatpush2.msra.mxu0 0.0
    %7471 = vmatprep.subr.mxu0 0.0
    %7472 = vmatpush2.msra.mxu0 0.0
    %7473 = vmatprep.subr.mxu0 0.0
    %7474 = vmatpush2.msra.mxu0 0.0
    %7475 = vmatprep.subr.mxu0 0.0
    %7476 = vmatpush2.msra.mxu0 0.0
    %7477 = vmatprep.subr.mxu0 0.0
    %7478 = vmatpush2.msra.mxu0 0.0
    %7479 = vmatprep.subr.mxu0 0.0
    %7480 = vmatpush2.msra.mxu0 0.0
    %7481 = vmatprep.subr.mxu0 0.0
    %7482 = vmatpush2.msra.mxu0 0.0
    %7483 = vmatprep.mubr.f32.mxu0 0.0
    %7484 = vmatmul.mubr.f32.gmra.mxu0 %v6952
    %v7485 = vpop.f32.mrf.mxu0
    %v7486 = vadd.f32 %v6922, %v7485
    %v7487 = vpop.f32.mrf.mxu0
    %v7488 = vadd.f32 %v6926, %v7487
    %7489 = vmatprep.mubr.f32.mxu0 0.0
    %7490 = vmatmul.mubr.f32.gmra.mxu0 %v6955
    %v7491 = vpop.f32.mrf.mxu0
    %v7492 = vadd.f32 %v6922, %v7491
    %v7493 = vpop.f32.mrf.mxu0
    %v7494 = vadd.f32 %v6926, %v7493
    %7495 = vdwg.mxu0
    %7496 = vmatprep.subr.mxu0 0.0
    %7497 = vmatpush1.msra.mxu0 0.0
    %7498 = vmatprep.subr.mxu0 0.0
    %7499 = vmatpush1.msra.mxu0 0.0
    %7500 = vmatprep.subr.mxu0 0.0
    %7501 = vmatpush1.msra.mxu0 0.0
    %7502 = vmatprep.subr.mxu0 0.0
    %7503 = vmatpush1.msra.mxu0 0.0
    %7504 = vmatprep.subr.mxu0 0.0
    %7505 = vmatpush1.msra.mxu0 0.0
    %7506 = vmatprep.subr.mxu0 0.0
    %7507 = vmatpush1.msra.mxu0 0.0
    %7508 = vmatprep.subr.mxu0 0.0
    %7509 = vmatpush1.msra.mxu0 0.0
    %7510 = vmatprep.subr.mxu0 0.0
    %7511 = vmatpush1.msra.mxu0 0.0
    %7512 = vmatprep.subr.mxu0 0.0
    %7513 = vmatpush1.msra.mxu0 0.0
    %7514 = vmatprep.subr.mxu0 0.0
    %7515 = vmatpush1.msra.mxu0 0.0
    %7516 = vmatprep.subr.mxu0 0.0
    %7517 = vmatpush1.msra.mxu0 0.0
    %7518 = vmatprep.subr.mxu0 0.0
    %7519 = vmatpush1.msra.mxu0 0.0
    %7520 = vmatprep.subr.mxu0 %v6352
    %7521 = vmatpush1.msra.mxu0 %v6351
    %7522 = vmatprep.subr.mxu0 %v6336
    %7523 = vmatpush1.msra.mxu0 %v6335
    %7524 = vmatprep.subr.mxu0 %v6320
    %7525 = vmatpush1.msra.mxu0 %v6319
    %7526 = vmatprep.subr.mxu0 %v6304
    %7527 = vmatpush1.msra.mxu0 %v6303
    %7528 = vmatprep.subr.mxu0 0.0
    %7529 = vmatpush2.msra.mxu0 0.0
    %7530 = vmatprep.subr.mxu0 0.0
    %7531 = vmatpush2.msra.mxu0 0.0
    %7532 = vmatprep.subr.mxu0 0.0
    %7533 = vmatpush2.msra.mxu0 0.0
    %7534 = vmatprep.subr.mxu0 0.0
    %7535 = vmatpush2.msra.mxu0 0.0
    %7536 = vmatprep.subr.mxu0 0.0
    %7537 = vmatpush2.msra.mxu0 0.0
    %7538 = vmatprep.subr.mxu0 0.0
    %7539 = vmatpush2.msra.mxu0 0.0
    %7540 = vmatprep.subr.mxu0 0.0
    %7541 = vmatpush2.msra.mxu0 0.0
    %7542 = vmatprep.subr.mxu0 0.0
    %7543 = vmatpush2.msra.mxu0 0.0
    %7544 = vmatprep.subr.mxu0 0.0
    %7545 = vmatpush2.msra.mxu0 0.0
    %7546 = vmatprep.subr.mxu0 0.0
    %7547 = vmatpush2.msra.mxu0 0.0
    %7548 = vmatprep.subr.mxu0 0.0
    %7549 = vmatpush2.msra.mxu0 0.0
    %7550 = vmatprep.subr.mxu0 0.0
    %7551 = vmatpush2.msra.mxu0 0.0
    %7552 = vmatprep.subr.mxu0 0.0
    %7553 = vmatpush2.msra.mxu0 0.0
    %7554 = vmatprep.subr.mxu0 0.0
    %7555 = vmatpush2.msra.mxu0 0.0
    %7556 = vmatprep.subr.mxu0 0.0
    %7557 = vmatpush2.msra.mxu0 0.0
    %7558 = vmatprep.subr.mxu0 0.0
    %7559 = vmatpush2.msra.mxu0 0.0
    %7560 = vmatprep.mubr.f32.mxu0 0.0
    %7561 = vmatmul.mubr.f32.gmra.mxu0 %v6952
    %v7562 = vpop.f32.mrf.mxu0
    %v7563 = vadd.f32 %v6930, %v7562
    %v7564 = vpop.f32.mrf.mxu0
    %v7565 = vadd.f32 %v6934, %v7564
    %7566 = vmatprep.mubr.f32.mxu0 0.0
    %7567 = vmatmul.mubr.f32.gmra.mxu0 %v6955
    %v7568 = vpop.f32.mrf.mxu0
    %v7569 = vadd.f32 %v6930, %v7568
    %v7570 = vpop.f32.mrf.mxu0
    %v7571 = vadd.f32 %v6934, %v7570
    %7572 = vdwg.mxu0
    %v7573 = vmax.f32 %v7024, 0.0
    %v7574 = vmax.f32 %v7026, 0.0
    %v7575 = vmax.f32 %v7101, 0.0
    %v7576 = vmax.f32 %v7103, 0.0
    %v7577 = vmax.f32 %v7178, 0.0
    %v7578 = vmax.f32 %v7180, 0.0
    %v7579 = vmax.f32 %v7255, 0.0
    %v7580 = vmax.f32 %v7257, 0.0
    %v7581 = vmax.f32 %v7332, 0.0
    %v7582 = vmax.f32 %v7334, 0.0
    %v7583 = vmax.f32 %v7409, 0.0
    %v7584 = vmax.f32 %v7411, 0.0
    %v7585 = vmax.f32 %v7486, 0.0
    %v7586 = vmax.f32 %v7488, 0.0
    %v7587 = vmax.f32 %v7563, 0.0
    %v7588 = vmax.f32 %v7565, 0.0
    %v7589 = vmax.f32 %v7030, 0.0
    %v7590 = vmax.f32 %v7032, 0.0
    %v7591 = vmax.f32 %v7107, 0.0
    %v7592 = vmax.f32 %v7109, 0.0
    %v7593 = vmax.f32 %v7184, 0.0
    %v7594 = vmax.f32 %v7186, 0.0
    %v7595 = vmax.f32 %v7261, 0.0
    %v7596 = vmax.f32 %v7263, 0.0
    %v7597 = vmax.f32 %v7338, 0.0
    %v7598 = vmax.f32 %v7340, 0.0
    %v7599 = vmax.f32 %v7415, 0.0
    %v7600 = vmax.f32 %v7417, 0.0
    %v7601 = vmax.f32 %v7492, 0.0
    %v7602 = vmax.f32 %v7494, 0.0
    %v7603 = vmax.f32 %v7569, 0.0
    %v7604 = vmax.f32 %v7571, 0.0
    %s7605 = scalar_lea.vmem %s11, 1
    %v7606 = vld [vmem:[%s7605] sm:$0x1]
    %v7608 = vlaneseq
    %v7609 = vshrl.u32 %v7608, 7
    %v7610 = vsub.s32 0, %v7609
    %v7611 = vrot.slane %v7606, %v7610
    %7613 = vmatprep.subr.mxu0 0.0
    %7614 = vmatpush1.msra.mxu0 %v6625
    %7615 = vmatprep.subr.mxu0 0.0
    %7616 = vmatpush1.msra.mxu0 %v6624
    %7617 = vmatprep.subr.mxu0 0.0
    %7618 = vmatpush1.msra.mxu0 %v6623
    %7619 = vmatprep.subr.mxu0 0.0
    %7620 = vmatpush1.msra.mxu0 %v6622
    %7621 = vmatprep.subr.mxu0 0.0
    %7622 = vmatpush1.msra.mxu0 %v6621
    %7623 = vmatprep.subr.mxu0 0.0
    %7624 = vmatpush1.msra.mxu0 %v6620
    %7625 = vmatprep.subr.mxu0 0.0
    %7626 = vmatpush1.msra.mxu0 %v6619
    %7627 = vmatprep.subr.mxu0 0.0
    %7628 = vmatpush1.msra.mxu0 %v6618
    %7629 = vmatprep.subr.mxu0 0.0
    %7630 = vmatpush1.msra.mxu0 %v6617
    %7631 = vmatprep.subr.mxu0 0.0
    %7632 = vmatpush1.msra.mxu0 %v6616
    %7633 = vmatprep.subr.mxu0 0.0
    %7634 = vmatpush1.msra.mxu0 %v6615
    %7635 = vmatprep.subr.mxu0 0.0
    %7636 = vmatpush1.msra.mxu0 %v6614
    %7637 = vmatprep.subr.mxu0 0.0
    %7638 = vmatpush1.msra.mxu0 %v6613
    %7639 = vmatprep.subr.mxu0 0.0
    %7640 = vmatpush1.msra.mxu0 %v6612
    %7641 = vmatprep.subr.mxu0 0.0
    %7642 = vmatpush1.msra.mxu0 %v6611
    %7643 = vmatprep.subr.mxu0 0.0
    %7644 = vmatpush1.msra.mxu0 %v6610
    %7645 = vmatprep.subr.mxu0 0.0
    %7646 = vmatpush2.msra.mxu0 %v6641
    %7647 = vmatprep.subr.mxu0 0.0
    %7648 = vmatpush2.msra.mxu0 %v6640
    %7649 = vmatprep.subr.mxu0 0.0
    %7650 = vmatpush2.msra.mxu0 %v6639
    %7651 = vmatprep.subr.mxu0 0.0
    %7652 = vmatpush2.msra.mxu0 %v6638
    %7653 = vmatprep.subr.mxu0 0.0
    %7654 = vmatpush2.msra.mxu0 %v6637
    %7655 = vmatprep.subr.mxu0 0.0
    %7656 = vmatpush2.msra.mxu0 %v6636
    %7657 = vmatprep.subr.mxu0 0.0
    %7658 = vmatpush2.msra.mxu0 %v6635
    %7659 = vmatprep.subr.mxu0 0.0
    %7660 = vmatpush2.msra.mxu0 %v6634
    %7661 = vmatprep.subr.mxu0 0.0
    %7662 = vmatpush2.msra.mxu0 %v6633
    %7663 = vmatprep.subr.mxu0 0.0
    %7664 = vmatpush2.msra.mxu0 %v6632
    %7665 = vmatprep.subr.mxu0 0.0
    %7666 = vmatpush2.msra.mxu0 %v6631
    %7667 = vmatprep.subr.mxu0 0.0
    %7668 = vmatpush2.msra.mxu0 %v6630
    %7669 = vmatprep.subr.mxu0 0.0
    %7670 = vmatpush2.msra.mxu0 %v6629
    %7671 = vmatprep.subr.mxu0 0.0
    %7672 = vmatpush2.msra.mxu0 %v6628
    %7673 = vmatprep.subr.mxu0 0.0
    %7674 = vmatpush2.msra.mxu0 %v6627
    %7675 = vmatprep.subr.mxu0 0.0
    %7676 = vmatpush2.msra.mxu0 %v6626
    %7677 = vmatprep.mubr.f32.mxu0 %v7574
    %7678 = vmatmul.mubr.f32.gmra.mxu0 %v7573
    %v7679 = vpop.f32.mrf.mxu0
    %v7680 = vadd.f32 %v7611, %v7679
    %v7681 = vpop.f32.mrf.mxu0
    %7682 = vmatprep.mubr.f32.mxu0 %v7590
    %7683 = vmatmul.mubr.f32.gmra.mxu0 %v7589
    %v7684 = vpop.f32.mrf.mxu0
    %v7685 = vadd.f32 %v7611, %v7684
    %v7686 = vpop.f32.mrf.mxu0
    %7687 = vdwg.mxu0
    %7688 = vmatprep.subr.mxu0 0.0
    %7689 = vmatpush1.msra.mxu0 %v6657
    %7690 = vmatprep.subr.mxu0 0.0
    %7691 = vmatpush1.msra.mxu0 %v6656
    %7692 = vmatprep.subr.mxu0 0.0
    %7693 = vmatpush1.msra.mxu0 %v6655
    %7694 = vmatprep.subr.mxu0 0.0
    %7695 = vmatpush1.msra.mxu0 %v6654
    %7696 = vmatprep.subr.mxu0 0.0
    %7697 = vmatpush1.msra.mxu0 %v6653
    %7698 = vmatprep.subr.mxu0 0.0
    %7699 = vmatpush1.msra.mxu0 %v6652
    %7700 = vmatprep.subr.mxu0 0.0
    %7701 = vmatpush1.msra.mxu0 %v6651
    %7702 = vmatprep.subr.mxu0 0.0
    %7703 = vmatpush1.msra.mxu0 %v6650
    %7704 = vmatprep.subr.mxu0 0.0
    %7705 = vmatpush1.msra.mxu0 %v6649
    %7706 = vmatprep.subr.mxu0 0.0
    %7707 = vmatpush1.msra.mxu0 %v6648
    %7708 = vmatprep.subr.mxu0 0.0
    %7709 = vmatpush1.msra.mxu0 %v6647
    %7710 = vmatprep.subr.mxu0 0.0
    %7711 = vmatpush1.msra.mxu0 %v6646
    %7712 = vmatprep.subr.mxu0 0.0
    %7713 = vmatpush1.msra.mxu0 %v6645
    %7714 = vmatprep.subr.mxu0 0.0
    %7715 = vmatpush1.msra.mxu0 %v6644
    %7716 = vmatprep.subr.mxu0 0.0
    %7717 = vmatpush1.msra.mxu0 %v6643
    %7718 = vmatprep.subr.mxu0 0.0
    %7719 = vmatpush1.msra.mxu0 %v6642
    %7720 = vmatprep.subr.mxu0 0.0
    %7721 = vmatpush2.msra.mxu0 %v6673
    %7722 = vmatprep.subr.mxu0 0.0
    %7723 = vmatpush2.msra.mxu0 %v6672
    %7724 = vmatprep.subr.mxu0 0.0
    %7725 = vmatpush2.msra.mxu0 %v6671
    %7726 = vmatprep.subr.mxu0 0.0
    %7727 = vmatpush2.msra.mxu0 %v6670
    %7728 = vmatprep.subr.mxu0 0.0
    %7729 = vmatpush2.msra.mxu0 %v6669
    %7730 = vmatprep.subr.mxu0 0.0
    %7731 = vmatpush2.msra.mxu0 %v6668
    %7732 = vmatprep.subr.mxu0 0.0
    %7733 = vmatpush2.msra.mxu0 %v6667
    %7734 = vmatprep.subr.mxu0 0.0
    %7735 = vmatpush2.msra.mxu0 %v6666
    %7736 = vmatprep.subr.mxu0 0.0
    %7737 = vmatpush2.msra.mxu0 %v6665
    %7738 = vmatprep.subr.mxu0 0.0
    %7739 = vmatpush2.msra.mxu0 %v6664
    %7740 = vmatprep.subr.mxu0 0.0
    %7741 = vmatpush2.msra.mxu0 %v6663
    %7742 = vmatprep.subr.mxu0 0.0
    %7743 = vmatpush2.msra.mxu0 %v6662
    %7744 = vmatprep.subr.mxu0 0.0
    %7745 = vmatpush2.msra.mxu0 %v6661
    %7746 = vmatprep.subr.mxu0 0.0
    %7747 = vmatpush2.msra.mxu0 %v6660
    %7748 = vmatprep.subr.mxu0 0.0
    %7749 = vmatpush2.msra.mxu0 %v6659
    %7750 = vmatprep.subr.mxu0 0.0
    %7751 = vmatpush2.msra.mxu0 %v6658
    %7752 = vmatprep.mubr.f32.mxu0 %v7576
    %7753 = vmatmul.mubr.f32.gmra.mxu0 %v7575
    %v7754 = vpop.f32.mrf.mxu0
    %v7755 = vadd.f32 %v7680, %v7754
    %v7756 = vpop.f32.mrf.mxu0
    %7757 = vmatprep.mubr.f32.mxu0 %v7592
    %7758 = vmatmul.mubr.f32.gmra.mxu0 %v7591
    %v7759 = vpop.f32.mrf.mxu0
    %v7760 = vadd.f32 %v7685, %v7759
    %v7761 = vpop.f32.mrf.mxu0
    %7762 = vdwg.mxu0
    %7763 = vmatprep.subr.mxu0 0.0
    %7764 = vmatpush1.msra.mxu0 %v6689
    %7765 = vmatprep.subr.mxu0 0.0
    %7766 = vmatpush1.msra.mxu0 %v6688
    %7767 = vmatprep.subr.mxu0 0.0
    %7768 = vmatpush1.msra.mxu0 %v6687
    %7769 = vmatprep.subr.mxu0 0.0
    %7770 = vmatpush1.msra.mxu0 %v6686
    %7771 = vmatprep.subr.mxu0 0.0
    %7772 = vmatpush1.msra.mxu0 %v6685
    %7773 = vmatprep.subr.mxu0 0.0
    %7774 = vmatpush1.msra.mxu0 %v6684
    %7775 = vmatprep.subr.mxu0 0.0
    %7776 = vmatpush1.msra.mxu0 %v6683
    %7777 = vmatprep.subr.mxu0 0.0
    %7778 = vmatpush1.msra.mxu0 %v6682
    %7779 = vmatprep.subr.mxu0 0.0
    %7780 = vmatpush1.msra.mxu0 %v6681
    %7781 = vmatprep.subr.mxu0 0.0
    %7782 = vmatpush1.msra.mxu0 %v6680
    %7783 = vmatprep.subr.mxu0 0.0
    %7784 = vmatpush1.msra.mxu0 %v6679
    %7785 = vmatprep.subr.mxu0 0.0
    %7786 = vmatpush1.msra.mxu0 %v6678
    %7787 = vmatprep.subr.mxu0 0.0
    %7788 = vmatpush1.msra.mxu0 %v6677
    %7789 = vmatprep.subr.mxu0 0.0
    %7790 = vmatpush1.msra.mxu0 %v6676
    %7791 = vmatprep.subr.mxu0 0.0
    %7792 = vmatpush1.msra.mxu0 %v6675
    %7793 = vmatprep.subr.mxu0 0.0
    %7794 = vmatpush1.msra.mxu0 %v6674
    %7795 = vmatprep.subr.mxu0 0.0
    %7796 = vmatpush2.msra.mxu0 %v6705
    %7797 = vmatprep.subr.mxu0 0.0
    %7798 = vmatpush2.msra.mxu0 %v6704
    %7799 = vmatprep.subr.mxu0 0.0
    %7800 = vmatpush2.msra.mxu0 %v6703
    %7801 = vmatprep.subr.mxu0 0.0
    %7802 = vmatpush2.msra.mxu0 %v6702
    %7803 = vmatprep.subr.mxu0 0.0
    %7804 = vmatpush2.msra.mxu0 %v6701
    %7805 = vmatprep.subr.mxu0 0.0
    %7806 = vmatpush2.msra.mxu0 %v6700
    %7807 = vmatprep.subr.mxu0 0.0
    %7808 = vmatpush2.msra.mxu0 %v6699
    %7809 = vmatprep.subr.mxu0 0.0
    %7810 = vmatpush2.msra.mxu0 %v6698
    %7811 = vmatprep.subr.mxu0 0.0
    %7812 = vmatpush2.msra.mxu0 %v6697
    %7813 = vmatprep.subr.mxu0 0.0
    %7814 = vmatpush2.msra.mxu0 %v6696
    %7815 = vmatprep.subr.mxu0 0.0
    %7816 = vmatpush2.msra.mxu0 %v6695
    %7817 = vmatprep.subr.mxu0 0.0
    %7818 = vmatpush2.msra.mxu0 %v6694
    %7819 = vmatprep.subr.mxu0 0.0
    %7820 = vmatpush2.msra.mxu0 %v6693
    %7821 = vmatprep.subr.mxu0 0.0
    %7822 = vmatpush2.msra.mxu0 %v6692
    %7823 = vmatprep.subr.mxu0 0.0
    %7824 = vmatpush2.msra.mxu0 %v6691
    %7825 = vmatprep.subr.mxu0 0.0
    %7826 = vmatpush2.msra.mxu0 %v6690
    %7827 = vmatprep.mubr.f32.mxu0 %v7578
    %7828 = vmatmul.mubr.f32.gmra.mxu0 %v7577
    %v7829 = vpop.f32.mrf.mxu0
    %v7830 = vadd.f32 %v7755, %v7829
    %v7831 = vpop.f32.mrf.mxu0
    %7832 = vmatprep.mubr.f32.mxu0 %v7594
    %7833 = vmatmul.mubr.f32.gmra.mxu0 %v7593
    %v7834 = vpop.f32.mrf.mxu0
    %v7835 = vadd.f32 %v7760, %v7834
    %v7836 = vpop.f32.mrf.mxu0
    %7837 = vdwg.mxu0
    %7838 = vmatprep.subr.mxu0 0.0
    %7839 = vmatpush1.msra.mxu0 %v6721
    %7840 = vmatprep.subr.mxu0 0.0
    %7841 = vmatpush1.msra.mxu0 %v6720
    %7842 = vmatprep.subr.mxu0 0.0
    %7843 = vmatpush1.msra.mxu0 %v6719
    %7844 = vmatprep.subr.mxu0 0.0
    %7845 = vmatpush1.msra.mxu0 %v6718
    %7846 = vmatprep.subr.mxu0 0.0
    %7847 = vmatpush1.msra.mxu0 %v6717
    %7848 = vmatprep.subr.mxu0 0.0
    %7849 = vmatpush1.msra.mxu0 %v6716
    %7850 = vmatprep.subr.mxu0 0.0
    %7851 = vmatpush1.msra.mxu0 %v6715
    %7852 = vmatprep.subr.mxu0 0.0
    %7853 = vmatpush1.msra.mxu0 %v6714
    %7854 = vmatprep.subr.mxu0 0.0
    %7855 = vmatpush1.msra.mxu0 %v6713
    %7856 = vmatprep.subr.mxu0 0.0
    %7857 = vmatpush1.msra.mxu0 %v6712
    %7858 = vmatprep.subr.mxu0 0.0
    %7859 = vmatpush1.msra.mxu0 %v6711
    %7860 = vmatprep.subr.mxu0 0.0
    %7861 = vmatpush1.msra.mxu0 %v6710
    %7862 = vmatprep.subr.mxu0 0.0
    %7863 = vmatpush1.msra.mxu0 %v6709
    %7864 = vmatprep.subr.mxu0 0.0
    %7865 = vmatpush1.msra.mxu0 %v6708
    %7866 = vmatprep.subr.mxu0 0.0
    %7867 = vmatpush1.msra.mxu0 %v6707
    %7868 = vmatprep.subr.mxu0 0.0
    %7869 = vmatpush1.msra.mxu0 %v6706
    %7870 = vmatprep.subr.mxu0 0.0
    %7871 = vmatpush2.msra.mxu0 %v6737
    %7872 = vmatprep.subr.mxu0 0.0
    %7873 = vmatpush2.msra.mxu0 %v6736
    %7874 = vmatprep.subr.mxu0 0.0
    %7875 = vmatpush2.msra.mxu0 %v6735
    %7876 = vmatprep.subr.mxu0 0.0
    %7877 = vmatpush2.msra.mxu0 %v6734
    %7878 = vmatprep.subr.mxu0 0.0
    %7879 = vmatpush2.msra.mxu0 %v6733
    %7880 = vmatprep.subr.mxu0 0.0
    %7881 = vmatpush2.msra.mxu0 %v6732
    %7882 = vmatprep.subr.mxu0 0.0
    %7883 = vmatpush2.msra.mxu0 %v6731
    %7884 = vmatprep.subr.mxu0 0.0
    %7885 = vmatpush2.msra.mxu0 %v6730
    %7886 = vmatprep.subr.mxu0 0.0
    %7887 = vmatpush2.msra.mxu0 %v6729
    %7888 = vmatprep.subr.mxu0 0.0
    %7889 = vmatpush2.msra.mxu0 %v6728
    %7890 = vmatprep.subr.mxu0 0.0
    %7891 = vmatpush2.msra.mxu0 %v6727
    %7892 = vmatprep.subr.mxu0 0.0
    %7893 = vmatpush2.msra.mxu0 %v6726
    %7894 = vmatprep.subr.mxu0 0.0
    %7895 = vmatpush2.msra.mxu0 %v6725
    %7896 = vmatprep.subr.mxu0 0.0
    %7897 = vmatpush2.msra.mxu0 %v6724
    %7898 = vmatprep.subr.mxu0 0.0
    %7899 = vmatpush2.msra.mxu0 %v6723
    %7900 = vmatprep.subr.mxu0 0.0
    %7901 = vmatpush2.msra.mxu0 %v6722
    %7902 = vmatprep.mubr.f32.mxu0 %v7580
    %7903 = vmatmul.mubr.f32.gmra.mxu0 %v7579
    %v7904 = vpop.f32.mrf.mxu0
    %v7905 = vadd.f32 %v7830, %v7904
    %v7906 = vpop.f32.mrf.mxu0
    %7907 = vmatprep.mubr.f32.mxu0 %v7596
    %7908 = vmatmul.mubr.f32.gmra.mxu0 %v7595
    %v7909 = vpop.f32.mrf.mxu0
    %v7910 = vadd.f32 %v7835, %v7909
    %v7911 = vpop.f32.mrf.mxu0
    %7912 = vdwg.mxu0
    %7913 = vmatprep.subr.mxu0 0.0
    %7914 = vmatpush1.msra.mxu0 %v6753
    %7915 = vmatprep.subr.mxu0 0.0
    %7916 = vmatpush1.msra.mxu0 %v6752
    %7917 = vmatprep.subr.mxu0 0.0
    %7918 = vmatpush1.msra.mxu0 %v6751
    %7919 = vmatprep.subr.mxu0 0.0
    %7920 = vmatpush1.msra.mxu0 %v6750
    %7921 = vmatprep.subr.mxu0 0.0
    %7922 = vmatpush1.msra.mxu0 %v6749
    %7923 = vmatprep.subr.mxu0 0.0
    %7924 = vmatpush1.msra.mxu0 %v6748
    %7925 = vmatprep.subr.mxu0 0.0
    %7926 = vmatpush1.msra.mxu0 %v6747
    %7927 = vmatprep.subr.mxu0 0.0
    %7928 = vmatpush1.msra.mxu0 %v6746
    %7929 = vmatprep.subr.mxu0 0.0
    %7930 = vmatpush1.msra.mxu0 %v6745
    %7931 = vmatprep.subr.mxu0 0.0
    %7932 = vmatpush1.msra.mxu0 %v6744
    %7933 = vmatprep.subr.mxu0 0.0
    %7934 = vmatpush1.msra.mxu0 %v6743
    %7935 = vmatprep.subr.mxu0 0.0
    %7936 = vmatpush1.msra.mxu0 %v6742
    %7937 = vmatprep.subr.mxu0 0.0
    %7938 = vmatpush1.msra.mxu0 %v6741
    %7939 = vmatprep.subr.mxu0 0.0
    %7940 = vmatpush1.msra.mxu0 %v6740
    %7941 = vmatprep.subr.mxu0 0.0
    %7942 = vmatpush1.msra.mxu0 %v6739
    %7943 = vmatprep.subr.mxu0 0.0
    %7944 = vmatpush1.msra.mxu0 %v6738
    %7945 = vmatprep.subr.mxu0 0.0
    %7946 = vmatpush2.msra.mxu0 %v6769
    %7947 = vmatprep.subr.mxu0 0.0
    %7948 = vmatpush2.msra.mxu0 %v6768
    %7949 = vmatprep.subr.mxu0 0.0
    %7950 = vmatpush2.msra.mxu0 %v6767
    %7951 = vmatprep.subr.mxu0 0.0
    %7952 = vmatpush2.msra.mxu0 %v6766
    %7953 = vmatprep.subr.mxu0 0.0
    %7954 = vmatpush2.msra.mxu0 %v6765
    %7955 = vmatprep.subr.mxu0 0.0
    %7956 = vmatpush2.msra.mxu0 %v6764
    %7957 = vmatprep.subr.mxu0 0.0
    %7958 = vmatpush2.msra.mxu0 %v6763
    %7959 = vmatprep.subr.mxu0 0.0
    %7960 = vmatpush2.msra.mxu0 %v6762
    %7961 = vmatprep.subr.mxu0 0.0
    %7962 = vmatpush2.msra.mxu0 %v6761
    %7963 = vmatprep.subr.mxu0 0.0
    %7964 = vmatpush2.msra.mxu0 %v6760
    %7965 = vmatprep.subr.mxu0 0.0
    %7966 = vmatpush2.msra.mxu0 %v6759
    %7967 = vmatprep.subr.mxu0 0.0
    %7968 = vmatpush2.msra.mxu0 %v6758
    %7969 = vmatprep.subr.mxu0 0.0
    %7970 = vmatpush2.msra.mxu0 %v6757
    %7971 = vmatprep.subr.mxu0 0.0
    %7972 = vmatpush2.msra.mxu0 %v6756
    %7973 = vmatprep.subr.mxu0 0.0
    %7974 = vmatpush2.msra.mxu0 %v6755
    %7975 = vmatprep.subr.mxu0 0.0
    %7976 = vmatpush2.msra.mxu0 %v6754
    %7977 = vmatprep.mubr.f32.mxu0 %v7582
    %7978 = vmatmul.mubr.f32.gmra.mxu0 %v7581
    %v7979 = vpop.f32.mrf.mxu0
    %v7980 = vadd.f32 %v7905, %v7979
    %v7981 = vpop.f32.mrf.mxu0
    %7982 = vmatprep.mubr.f32.mxu0 %v7598
    %7983 = vmatmul.mubr.f32.gmra.mxu0 %v7597
    %v7984 = vpop.f32.mrf.mxu0
    %v7985 = vadd.f32 %v7910, %v7984
    %v7986 = vpop.f32.mrf.mxu0
    %7987 = vdwg.mxu0
    %7988 = vmatprep.subr.mxu0 0.0
    %7989 = vmatpush1.msra.mxu0 %v6785
    %7990 = vmatprep.subr.mxu0 0.0
    %7991 = vmatpush1.msra.mxu0 %v6784
    %7992 = vmatprep.subr.mxu0 0.0
    %7993 = vmatpush1.msra.mxu0 %v6783
    %7994 = vmatprep.subr.mxu0 0.0
    %7995 = vmatpush1.msra.mxu0 %v6782
    %7996 = vmatprep.subr.mxu0 0.0
    %7997 = vmatpush1.msra.mxu0 %v6781
    %7998 = vmatprep.subr.mxu0 0.0
    %7999 = vmatpush1.msra.mxu0 %v6780
    %8000 = vmatprep.subr.mxu0 0.0
    %8001 = vmatpush1.msra.mxu0 %v6779
    %8002 = vmatprep.subr.mxu0 0.0
    %8003 = vmatpush1.msra.mxu0 %v6778
    %8004 = vmatprep.subr.mxu0 0.0
    %8005 = vmatpush1.msra.mxu0 %v6777
    %8006 = vmatprep.subr.mxu0 0.0
    %8007 = vmatpush1.msra.mxu0 %v6776
    %8008 = vmatprep.subr.mxu0 0.0
    %8009 = vmatpush1.msra.mxu0 %v6775
    %8010 = vmatprep.subr.mxu0 0.0
    %8011 = vmatpush1.msra.mxu0 %v6774
    %8012 = vmatprep.subr.mxu0 0.0
    %8013 = vmatpush1.msra.mxu0 %v6773
    %8014 = vmatprep.subr.mxu0 0.0
    %8015 = vmatpush1.msra.mxu0 %v6772
    %8016 = vmatprep.subr.mxu0 0.0
    %8017 = vmatpush1.msra.mxu0 %v6771
    %8018 = vmatprep.subr.mxu0 0.0
    %8019 = vmatpush1.msra.mxu0 %v6770
    %8020 = vmatprep.subr.mxu0 0.0
    %8021 = vmatpush2.msra.mxu0 %v6801
    %8022 = vmatprep.subr.mxu0 0.0
    %8023 = vmatpush2.msra.mxu0 %v6800
    %8024 = vmatprep.subr.mxu0 0.0
    %8025 = vmatpush2.msra.mxu0 %v6799
    %8026 = vmatprep.subr.mxu0 0.0
    %8027 = vmatpush2.msra.mxu0 %v6798
    %8028 = vmatprep.subr.mxu0 0.0
    %8029 = vmatpush2.msra.mxu0 %v6797
    %8030 = vmatprep.subr.mxu0 0.0
    %8031 = vmatpush2.msra.mxu0 %v6796
    %8032 = vmatprep.subr.mxu0 0.0
    %8033 = vmatpush2.msra.mxu0 %v6795
    %8034 = vmatprep.subr.mxu0 0.0
    %8035 = vmatpush2.msra.mxu0 %v6794
    %8036 = vmatprep.subr.mxu0 0.0
    %8037 = vmatpush2.msra.mxu0 %v6793
    %8038 = vmatprep.subr.mxu0 0.0
    %8039 = vmatpush2.msra.mxu0 %v6792
    %8040 = vmatprep.subr.mxu0 0.0
    %8041 = vmatpush2.msra.mxu0 %v6791
    %8042 = vmatprep.subr.mxu0 0.0
    %8043 = vmatpush2.msra.mxu0 %v6790
    %8044 = vmatprep.subr.mxu0 0.0
    %8045 = vmatpush2.msra.mxu0 %v6789
    %8046 = vmatprep.subr.mxu0 0.0
    %8047 = vmatpush2.msra.mxu0 %v6788
    %8048 = vmatprep.subr.mxu0 0.0
    %8049 = vmatpush2.msra.mxu0 %v6787
    %8050 = vmatprep.subr.mxu0 0.0
    %8051 = vmatpush2.msra.mxu0 %v6786
    %8052 = vmatprep.mubr.f32.mxu0 %v7584
    %8053 = vmatmul.mubr.f32.gmra.mxu0 %v7583
    %v8054 = vpop.f32.mrf.mxu0
    %v8055 = vadd.f32 %v7980, %v8054
    %v8056 = vpop.f32.mrf.mxu0
    %8057 = vmatprep.mubr.f32.mxu0 %v7600
    %8058 = vmatmul.mubr.f32.gmra.mxu0 %v7599
    %v8059 = vpop.f32.mrf.mxu0
    %v8060 = vadd.f32 %v7985, %v8059
    %v8061 = vpop.f32.mrf.mxu0
    %8062 = vdwg.mxu0
    %8063 = vmatprep.subr.mxu0 0.0
    %8064 = vmatpush1.msra.mxu0 %v6817
    %8065 = vmatprep.subr.mxu0 0.0
    %8066 = vmatpush1.msra.mxu0 %v6816
    %8067 = vmatprep.subr.mxu0 0.0
    %8068 = vmatpush1.msra.mxu0 %v6815
    %8069 = vmatprep.subr.mxu0 0.0
    %8070 = vmatpush1.msra.mxu0 %v6814
    %8071 = vmatprep.subr.mxu0 0.0
    %8072 = vmatpush1.msra.mxu0 %v6813
    %8073 = vmatprep.subr.mxu0 0.0
    %8074 = vmatpush1.msra.mxu0 %v6812
    %8075 = vmatprep.subr.mxu0 0.0
    %8076 = vmatpush1.msra.mxu0 %v6811
    %8077 = vmatprep.subr.mxu0 0.0
    %8078 = vmatpush1.msra.mxu0 %v6810
    %8079 = vmatprep.subr.mxu0 0.0
    %8080 = vmatpush1.msra.mxu0 %v6809
    %8081 = vmatprep.subr.mxu0 0.0
    %8082 = vmatpush1.msra.mxu0 %v6808
    %8083 = vmatprep.subr.mxu0 0.0
    %8084 = vmatpush1.msra.mxu0 %v6807
    %8085 = vmatprep.subr.mxu0 0.0
    %8086 = vmatpush1.msra.mxu0 %v6806
    %8087 = vmatprep.subr.mxu0 0.0
    %8088 = vmatpush1.msra.mxu0 %v6805
    %8089 = vmatprep.subr.mxu0 0.0
    %8090 = vmatpush1.msra.mxu0 %v6804
    %8091 = vmatprep.subr.mxu0 0.0
    %8092 = vmatpush1.msra.mxu0 %v6803
    %8093 = vmatprep.subr.mxu0 0.0
    %8094 = vmatpush1.msra.mxu0 %v6802
    %8095 = vmatprep.subr.mxu0 0.0
    %8096 = vmatpush2.msra.mxu0 %v6833
    %8097 = vmatprep.subr.mxu0 0.0
    %8098 = vmatpush2.msra.mxu0 %v6832
    %8099 = vmatprep.subr.mxu0 0.0
    %8100 = vmatpush2.msra.mxu0 %v6831
    %8101 = vmatprep.subr.mxu0 0.0
    %8102 = vmatpush2.msra.mxu0 %v6830
    %8103 = vmatprep.subr.mxu0 0.0
    %8104 = vmatpush2.msra.mxu0 %v6829
    %8105 = vmatprep.subr.mxu0 0.0
    %8106 = vmatpush2.msra.mxu0 %v6828
    %8107 = vmatprep.subr.mxu0 0.0
    %8108 = vmatpush2.msra.mxu0 %v6827
    %8109 = vmatprep.subr.mxu0 0.0
    %8110 = vmatpush2.msra.mxu0 %v6826
    %8111 = vmatprep.subr.mxu0 0.0
    %8112 = vmatpush2.msra.mxu0 %v6825
    %8113 = vmatprep.subr.mxu0 0.0
    %8114 = vmatpush2.msra.mxu0 %v6824
    %8115 = vmatprep.subr.mxu0 0.0
    %8116 = vmatpush2.msra.mxu0 %v6823
    %8117 = vmatprep.subr.mxu0 0.0
    %8118 = vmatpush2.msra.mxu0 %v6822
    %8119 = vmatprep.subr.mxu0 0.0
    %8120 = vmatpush2.msra.mxu0 %v6821
    %8121 = vmatprep.subr.mxu0 0.0
    %8122 = vmatpush2.msra.mxu0 %v6820
    %8123 = vmatprep.subr.mxu0 0.0
    %8124 = vmatpush2.msra.mxu0 %v6819
    %8125 = vmatprep.subr.mxu0 0.0
    %8126 = vmatpush2.msra.mxu0 %v6818
    %8127 = vmatprep.mubr.f32.mxu0 %v7586
    %8128 = vmatmul.mubr.f32.gmra.mxu0 %v7585
    %v8129 = vpop.f32.mrf.mxu0
    %v8130 = vadd.f32 %v8055, %v8129
    %v8131 = vpop.f32.mrf.mxu0
    %8132 = vmatprep.mubr.f32.mxu0 %v7602
    %8133 = vmatmul.mubr.f32.gmra.mxu0 %v7601
    %v8134 = vpop.f32.mrf.mxu0
    %v8135 = vadd.f32 %v8060, %v8134
    %v8136 = vpop.f32.mrf.mxu0
    %8137 = vdwg.mxu0
    %8138 = vmatprep.subr.mxu0 0.0
    %8139 = vmatpush1.msra.mxu0 %v6849
    %8140 = vmatprep.subr.mxu0 0.0
    %8141 = vmatpush1.msra.mxu0 %v6848
    %8142 = vmatprep.subr.mxu0 0.0
    %8143 = vmatpush1.msra.mxu0 %v6847
    %8144 = vmatprep.subr.mxu0 0.0
    %8145 = vmatpush1.msra.mxu0 %v6846
    %8146 = vmatprep.subr.mxu0 0.0
    %8147 = vmatpush1.msra.mxu0 %v6845
    %8148 = vmatprep.subr.mxu0 0.0
    %8149 = vmatpush1.msra.mxu0 %v6844
    %8150 = vmatprep.subr.mxu0 0.0
    %8151 = vmatpush1.msra.mxu0 %v6843
    %8152 = vmatprep.subr.mxu0 0.0
    %8153 = vmatpush1.msra.mxu0 %v6842
    %8154 = vmatprep.subr.mxu0 0.0
    %8155 = vmatpush1.msra.mxu0 %v6841
    %8156 = vmatprep.subr.mxu0 0.0
    %8157 = vmatpush1.msra.mxu0 %v6840
    %8158 = vmatprep.subr.mxu0 0.0
    %8159 = vmatpush1.msra.mxu0 %v6839
    %8160 = vmatprep.subr.mxu0 0.0
    %8161 = vmatpush1.msra.mxu0 %v6838
    %8162 = vmatprep.subr.mxu0 0.0
    %8163 = vmatpush1.msra.mxu0 %v6837
    %8164 = vmatprep.subr.mxu0 0.0
    %8165 = vmatpush1.msra.mxu0 %v6836
    %8166 = vmatprep.subr.mxu0 0.0
    %8167 = vmatpush1.msra.mxu0 %v6835
    %8168 = vmatprep.subr.mxu0 0.0
    %8169 = vmatpush1.msra.mxu0 %v6834
    %8170 = vmatprep.subr.mxu0 0.0
    %8171 = vmatpush2.msra.mxu0 %v6865
    %8172 = vmatprep.subr.mxu0 0.0
    %8173 = vmatpush2.msra.mxu0 %v6864
    %8174 = vmatprep.subr.mxu0 0.0
    %8175 = vmatpush2.msra.mxu0 %v6863
    %8176 = vmatprep.subr.mxu0 0.0
    %8177 = vmatpush2.msra.mxu0 %v6862
    %8178 = vmatprep.subr.mxu0 0.0
    %8179 = vmatpush2.msra.mxu0 %v6861
    %8180 = vmatprep.subr.mxu0 0.0
    %8181 = vmatpush2.msra.mxu0 %v6860
    %8182 = vmatprep.subr.mxu0 0.0
    %8183 = vmatpush2.msra.mxu0 %v6859
    %8184 = vmatprep.subr.mxu0 0.0
    %8185 = vmatpush2.msra.mxu0 %v6858
    %8186 = vmatprep.subr.mxu0 0.0
    %8187 = vmatpush2.msra.mxu0 %v6857
    %8188 = vmatprep.subr.mxu0 0.0
    %8189 = vmatpush2.msra.mxu0 %v6856
    %8190 = vmatprep.subr.mxu0 0.0
    %8191 = vmatpush2.msra.mxu0 %v6855
    %8192 = vmatprep.subr.mxu0 0.0
    %8193 = vmatpush2.msra.mxu0 %v6854
    %8194 = vmatprep.subr.mxu0 0.0
    %8195 = vmatpush2.msra.mxu0 %v6853
    %8196 = vmatprep.subr.mxu0 0.0
    %8197 = vmatpush2.msra.mxu0 %v6852
    %8198 = vmatprep.subr.mxu0 0.0
    %8199 = vmatpush2.msra.mxu0 %v6851
    %8200 = vmatprep.subr.mxu0 0.0
    %8201 = vmatpush2.msra.mxu0 %v6850
    %8202 = vmatprep.mubr.f32.mxu0 %v7588
    %8203 = vmatmul.mubr.f32.gmra.mxu0 %v7587
    %v8204 = vpop.f32.mrf.mxu0
    %v8205 = vadd.f32 %v8130, %v8204
    %v8206 = vpop.f32.mrf.mxu0
    %8207 = vmatprep.mubr.f32.mxu0 %v7604
    %8208 = vmatmul.mubr.f32.gmra.mxu0 %v7603
    %v8209 = vpop.f32.mrf.mxu0
    %v8210 = vadd.f32 %v8135, %v8209
    %v8211 = vpop.f32.mrf.mxu0
    %8212 = vdwg.mxu0
    %v8213 = vadd.f32 %v6254, %v8205
    %v8214 = vadd.f32 %v6255, %v8210
    %v8215 = vsel %vm116, %v8213, 0.0
    %8216 = vadd.xlane.f32.xlu0 %v8215
    %v8217 = vpop.xlane.xlu0 %8216
    %v8218 = vsel %vm116, %v8214, 0.0
    %8219 = vadd.xlane.f32.xlu0 %v8218
    %v8220 = vpop.xlane.xlu0 %8219
    %v8221 = vmul.f32 %v8217, %v2116
    %v8222 = vmul.f32 %v8220, %v2116
    %v8223 = vsub.f32 %v8213, %v8221
    %v8224 = vsub.f32 %v8214, %v8222
    %v8225 = vmul.f32 %v8223, %v8223
    %v8226 = vmul.f32 %v8224, %v8224
    %v8227 = vsel %vm116, %v8225, 0.0
    %8228 = vadd.xlane.f32.xlu0 %v8227
    %v8229 = vpop.xlane.xlu0 %8228
    %v8230 = vsel %vm116, %v8226, 0.0
    %8231 = vadd.xlane.f32.xlu0 %v8230
    %v8232 = vpop.xlane.xlu0 %8231
    %v8233 = vmul.f32 %v8229, %v2116
    %v8234 = vmul.f32 %v8232, %v2116
    %v8235 = vadd.f32 %v8233, 1e-05
    %v8236 = vadd.f32 %v8234, 1e-05
    %v8237 = vrsqrt.pop %v8235
    %v8238 = vrsqrt.pop %v8236
    %v8239 = vmul.f32 %v8223, %v8237
    %v8240 = vmul.f32 %v8224, %v8238
    %s8241 = scalar_lea.vmem %s14, 1
    %v8242 = vld [vmem:[%s8241] sm:$0x1]
    %v8244 = vlaneseq
    %v8245 = vshrl.u32 %v8244, 7
    %v8246 = vsub.s32 0, %v8245
    %v8247 = vrot.slane %v8242, %v8246
    %v8249 = vmul.f32 %v8239, %v8247
    %v8250 = vmul.f32 %v8240, %v8247
    %s8251 = scalar_lea.vmem %s15, 1
    %v8252 = vld [vmem:[%s8251] sm:$0x1]
    %v8254 = vlaneseq
    %v8255 = vshrl.u32 %v8254, 7
    %v8256 = vsub.s32 0, %v8255
    %v8257 = vrot.slane %v8252, %v8256
    %v8259 = vadd.f32 %v8249, %v8257
    %v8260 = vadd.f32 %v8250, %v8257
    %8261 = vst.msk [vmem:[#allocation2] sm:$0xff] %vm116, %v8259
    %8262 = vst.msk [vmem:[#allocation2 + $0x8] sm:$0xff] %vm116, %v8260
    // Predicated region
    $region66: #{tpu_custom_call.1} parent=1 // pred_check
      _
    $region67: #{tpu_custom_call.1} parent=1 // pred_check_branch
      %8264 = sbr.rel (0) target = $region69
    $region68: #{tpu_custom_call.1} parent=1 // pred_region
      %s8266 = ssub.s32 256, 256
      %8267 = vsyncadd [#allocation3], %s8266
      %s8268 = sshll.u32 [#allocation2], 4
      %s8269 = int_to_ptr.vmem [resolvable:$true] %s8268
      %8274 = dma.vmem_to_hbm [thread:$0]  %s8269, 256, %s16, [#allocation3], 128, 128, 8
    $region69: #{tpu_custom_call.1} parent=1 // pred_fallthru
      _
    // Predicated region
    $region70: #{tpu_custom_call.1} parent=1 // pred_check
      _
    $region71: #{tpu_custom_call.1} parent=1 // pred_check_branch
      %8276 = sbr.rel (0) target = $region73
    $region72: #{tpu_custom_call.1} parent=1 // pred_region
      %8277 = dma.done [#allocation3], 256
    $region73: #{tpu_custom_call.1} parent=1 // pred_fallthru
      _
    %8278 = vsyncpa [#allocation3], 1

</llo_original>
